<compile_context>
chip_gen: v7x
topology: tpu7x:2x2x1
jax: 0.10.0
libtpu: 0.0.40
codegen_flags: <defaults>
</compile_context>

<pallas_src>
import functools

import jax
import jax.numpy as jnp
from jax import lax
from jax.experimental import pallas as pl
from jax.experimental.pallas import tpu as pltpu


# ----------------------------- shared helpers ------------------------------

def _layer_norm(x, g, b, eps=1e-5):
    mu = jnp.mean(x, axis=-1, keepdims=True)
    xc = x - mu
    var = jnp.mean(xc * xc, axis=-1, keepdims=True)
    return xc * lax.rsqrt(var + eps) * g + b


# ----------------------------- Pallas kernels ------------------------------

def _make_attn_kernel(num_heads, window_size, head_dim, scale, use_mask):
    """qkv projection + windowed multi-head attention, all heads/windows in one call."""
    dim = num_heads * head_dim

    def kernel(*refs):
        if use_mask:
            x_ref, mask_ref, w_ref, b_ref, o_ref, qkv_s = refs
        else:
            x_ref, w_ref, b_ref, o_ref, qkv_s = refs
            mask_ref = None

        x = x_ref[...]                               # (M, D), rows ordered (b_, n, w)
        M = x.shape[0]
        G = M // window_size                         # (window, series) groups

        # One big (M, D) @ (D, 3D) matmul feeds every head.
        qkv_s[...] = (jnp.dot(x, w_ref[...], preferred_element_type=jnp.float32)
                      + b_ref[...])

        for h in range(num_heads):                   # static loop, H small
            lo = h * head_dim
            qh = (qkv_s[:, lo:lo + head_dim] * scale
                  ).reshape(G, window_size, head_dim)
            kh = qkv_s[:, dim + lo:dim + lo + head_dim
                       ].reshape(G, window_size, head_dim)
            vh = qkv_s[:, 2 * dim + lo:2 * dim + lo + head_dim
                       ].reshape(G, window_size, head_dim)

            s = jnp.einsum('gwd,gud->gwu', qh, kh,
                           preferred_element_type=jnp.float32)
            if use_mask:
                s = s + mask_ref[...]                # (G, ws, ws), same for all heads
            s = s - jnp.max(s, axis=-1, keepdims=True)
            p = jnp.exp(s)
            # divide -> EUP reciprocal (its own VLIW slot)
            p = p * pl.reciprocal(jnp.sum(p, axis=-1, keepdims=True), approx=True)
            av = jnp.einsum('gwu,gud->gwd', p, vh,
                            preferred_element_type=jnp.float32)
            # natural head-concat layout: columns [h*dh, (h+1)*dh)
            o_ref[:, lo:lo + head_dim] = av.reshape(M, head_dim).astype(o_ref.dtype)

    return kernel


def window_attention_core(xw_flat, mask_g, qkv_w, qkv_b, *,
                          num_heads, window_size, scale):
    """xw_flat: (M, D) windowed tokens -> (M, D) per-head context (head-concat columns)."""
    M, D = xw_flat.shape
    dh = D // num_heads
    G = M // window_size
    use_mask = mask_g is not None
    kern = _make_attn_kernel(num_heads, window_size, dh, float(scale), use_mask)

    in_specs = [pl.BlockSpec((M, D), lambda i: (0, 0))]
    args = [xw_flat]
    if use_mask:
        in_specs.append(pl.BlockSpec((G, window_size, window_size),
                                     lambda i: (0, 0, 0)))
        args.append(mask_g)
    in_specs += [pl.BlockSpec((D, 3 * D), lambda i: (0, 0)),
                 pl.BlockSpec((1, 3 * D), lambda i: (0, 0))]
    args += [qkv_w, qkv_b.reshape(1, 3 * D)]

    return pl.pallas_call(
        kern,
        out_shape=jax.ShapeDtypeStruct((M, D), xw_flat.dtype),
        grid=(1,),                                   # single grid step (no split overhead)
        in_specs=in_specs,
        out_specs=pl.BlockSpec((M, D), lambda i: (0, 0)),
        scratch_shapes=[pltpu.VMEM((M, 3 * D), jnp.float32)],
        compiler_params=pltpu.CompilerParams(
            dimension_semantics=("arbitrary",)),
    )(*args)


def _tail_kernel(ctx_ref, res_ref, pw_ref, pb_ref, g1_ref, b1_ref,
                 w1_ref, c1_ref, w2_ref, c2_ref, g2_ref, b2_ref, o_ref):
    # proj -> residual + LN1 -> MLP(fc1+GELU+fc2) -> LN2 + residual, all fused.
    attn_out = (jnp.dot(ctx_ref[...], pw_ref[...],
                        preferred_element_type=jnp.float32) + pb_ref[...])
    y = res_ref[...] + _layer_norm(attn_out, g1_ref[...], b1_ref[...])
    h = jnp.dot(y, w1_ref[...], preferred_element_type=jnp.float32) + c1_ref[...]
    h = 0.5 * h * (1.0 + lax.erf(h * 0.7071067811865476))        # exact (erf) GELU
    m = jnp.dot(h, w2_ref[...], preferred_element_type=jnp.float32) + c2_ref[...]
    o_ref[...] = (y + _layer_norm(m, g2_ref[...], b2_ref[...])).astype(o_ref.dtype)


def block_tail(ctx_flat, res_flat, proj_w, proj_b, ln1_w, ln1_b,
               fc1_w, fc1_b, fc2_w, fc2_b, ln2_w, ln2_b):
    M, D = ctx_flat.shape
    Dh = fc1_w.shape[1]

    def full2(shape):
        return pl.BlockSpec(shape, lambda i: (0, 0))

    return pl.pallas_call(
        _tail_kernel,
        out_shape=jax.ShapeDtypeStruct((M, D), ctx_flat.dtype),
        grid=(1,),
        in_specs=[full2((M, D)), full2((M, D)),
                  full2((D, D)), full2((1, D)),
                  full2((1, D)), full2((1, D)),
                  full2((D, Dh)), full2((1, Dh)),
                  full2((Dh, D)), full2((1, D)),
                  full2((1, D)), full2((1, D))],
        out_specs=full2((M, D)),
        compiler_params=pltpu.CompilerParams(
            dimension_semantics=("arbitrary",)),
    )(ctx_flat, res_flat, proj_w, proj_b.reshape(1, D),
      ln1_w.reshape(1, D), ln1_b.reshape(1, D),
      fc1_w, fc1_b.reshape(1, Dh), fc2_w, fc2_b.reshape(1, D),
      ln2_w.reshape(1, D), ln2_b.reshape(1, D))


# ------------------------------- JAX glue -----------------------------------

def window_partition(x, window_size):
    # x: (B, N, L, D) -> (B*nW, N, window_size, D)   (matches torch helper)
    B, N, L, D = x.shape
    x = x.reshape(B, N, L // window_size, window_size, D)
    x = jnp.transpose(x, (0, 2, 1, 3, 4))
    return x.reshape(-1, N, window_size, D)


def window_reverse(windows, window_size, L):
    # windows: (B*nW, N, window_size, D) -> (B, N, L, D)
    nW = L // window_size
    NwB, N, ws, D = windows.shape
    B = NwB // nW
    x = windows.reshape(B, nW, N, ws, D)
    x = jnp.transpose(x, (0, 2, 1, 3, 4))
    return x.reshape(B, N, L, D)


def build_attn_mask(L, window_size, shift_size):
    # Reproduces the __init__ mask construction (series_mask labelling).
    labels = jnp.concatenate([
        jnp.full((shift_size,), 0.0, jnp.float32),
        jnp.full((window_size - shift_size,), 1.0, jnp.float32),
        jnp.full((L - window_size,), 2.0, jnp.float32)])
    mw = labels.reshape(L // window_size, window_size)       # (nW, ws)
    diff = mw[:, None, :] - mw[:, :, None]                   # unsqueeze(1) - unsqueeze(2)
    return jnp.where(diff != 0, -100.0, 0.0).astype(jnp.float32)


def swin_block_forward(x, params, *, num_heads, window_size, shift_size):
    """Pallas-backed SwinTransformerBlock.forward.  x: (B, L, N, D)."""
    B, L, N, D = x.shape
    if L <= window_size:                      # mirrors module __init__ adjustment
        shift_size, window_size = 0, L
    ws, H = window_size, num_heads
    dh = D // H
    nW = L // ws
    scale = dh ** (-0.5)

    xt = jnp.transpose(x, (0, 2, 1, 3))                        # (B, N, L, D)
    shifted = jnp.roll(xt, shift_size, axis=2) if shift_size > 0 else xt
    xw = window_partition(shifted, ws)                         # (B_, N, ws, D)
    B_ = xw.shape[0]
    G = B_ * N
    M = G * ws
    # rows ordered (b_, n, w); this is ALSO the residual in windowed order
    xw_flat = xw.reshape(M, D)

    if shift_size > 0:
        # per-(window, series) mask; window index of group g = (g // N) % nW.
        # Single fused broadcast instead of tile+repeat (pure layout, ~4 KB).
        mask_w = params['attn_mask']                           # (nW, ws, ws)
        mask_g = jnp.broadcast_to(mask_w[None, :, None, :, :],
                                  (B, nW, N, ws, ws)).reshape(G, ws, ws)
    else:
        mask_g = None                                          # mask-free kernel variant

    # ---- fused qkv + windowed multi-head attention (Pallas kernel 1) ----
    ctx = window_attention_core(xw_flat, mask_g, params['qkv_w'], params['qkv_b'],
                                num_heads=H, window_size=ws, scale=scale)  # (M, D)

    # torch: (attn @ v).transpose(1, 2).reshape(B_, N, W, D) -> flat (H, ws, dh)
    # reinterpreted as (ws, D); tiny permutation done as XLA glue (a genuine
    # cross-sublane/lane relayout; cheaper & safer outside the kernel at this size).
    ctx_t = ctx.reshape(G, ws, H, dh).transpose(0, 2, 1, 3).reshape(M, D)

    # ---- fused proj + residual + LN1 + MLP + LN2 (Pallas kernel 2),
    #      computed in windowed row order (per-token ops commute with the permutation)
    out_flat = block_tail(ctx_t, xw_flat,
                          params['proj_w'], params['proj_b'],
                          params['ln1_w'], params['ln1_b'],
                          params['fc1_w'], params['fc1_b'],
                          params['fc2_w'], params['fc2_b'],
                          params['ln2_w'], params['ln2_b'])    # (M, D)

    out_w = out_flat.reshape(B_, N, ws, D)
    shifted_back = window_reverse(out_w, ws, L)                # (B, N, L, D)
    out = (jnp.roll(shifted_back, -shift_size, axis=2)
           if shift_size > 0 else shifted_back)
    return jnp.transpose(out, (0, 2, 1, 3))                    # back to (B, L, N, D)


# ------------------------- pure-JAX reference (check) ------------------------

def swin_block_reference(x, params, *, num_heads, window_size, shift_size):
    B, L, N, D = x.shape
    if L <= window_size:
        shift_size, window_size = 0, L
    ws, H = window_size, num_heads
    dh = D // H
    scale = dh ** (-0.5)
    xt = jnp.transpose(x, (0, 2, 1, 3))
    residual = xt
    shifted = jnp.roll(xt, shift_size, axis=2) if shift_size > 0 else xt
    xw = window_partition(shifted, ws)
    B_ = xw.shape[0]
    qkv = xw @ params['qkv_w'] + params['qkv_b']
    qkv = jnp.transpose(qkv.reshape(B_, N, ws, 3, H, dh), (3, 0, 4, 1, 2, 5))
    q, k, v = qkv[0] * scale, qkv[1], qkv[2]
    attn = jnp.einsum('bhnwd,bhnud->bhnwu', q, k)
    if shift_size > 0:
        mask_b = jnp.tile(params['attn_mask'], (B, 1, 1))
        attn = attn + mask_b[:, None, None, :, :]
    attn = jax.nn.softmax(attn, axis=-1)
    av = jnp.einsum('bhnwu,bhnud->bhnwd', attn, v)
    av = jnp.transpose(av, (0, 2, 1, 3, 4)).reshape(B_, N, ws, D)
    proj = av @ params['proj_w'] + params['proj_b']
    shifted_back = window_reverse(proj, ws, L)
    xo = (jnp.roll(shifted_back, -shift_size, axis=2)
          if shift_size > 0 else shifted_back)
    y = residual + _layer_norm(xo, params['ln1_w'], params['ln1_b'])
    h = y @ params['fc1_w'] + params['fc1_b']
    h = 0.5 * h * (1.0 + lax.erf(h * 0.7071067811865476))
    m = h @ params['fc2_w'] + params['fc2_b']
    out = y + _layer_norm(m, params['ln2_w'], params['ln2_b'])
    return jnp.transpose(out, (0, 2, 1, 3))


# ----------------------------------- main ------------------------------------

if __name__ == "__main__":
    # Module config: dim=32, input_resolution=16, num_heads=4, window_size=8,
    # shift_size=4, mlp_ratio=4.0  (all drop rates 0.0 -> identity).
    B, L, N, D = 2, 16, 4, 32
    num_heads, window_size, shift_size = 4, 8, 4
    Dh = int(D * 4.0)

    key = jax.random.PRNGKey(0)
    ks = jax.random.split(key, 9)
    params = {
        'qkv_w': 0.05 * jax.random.normal(ks[0], (D, 3 * D), jnp.float32),
        'qkv_b': 0.05 * jax.random.normal(ks[1], (3 * D,), jnp.float32),
        'proj_w': 0.05 * jax.random.normal(ks[2], (D, D), jnp.float32),
        'proj_b': 0.05 * jax.random.normal(ks[3], (D,), jnp.float32),
        'ln1_w': jnp.ones((D,), jnp.float32),
        'ln1_b': jnp.zeros((D,), jnp.float32),
        'ln2_w': jnp.ones((D,), jnp.float32),
        'ln2_b': jnp.zeros((D,), jnp.float32),
        'fc1_w': 0.05 * jax.random.normal(ks[4], (D, Dh), jnp.float32),
        'fc1_b': 0.05 * jax.random.normal(ks[5], (Dh,), jnp.float32),
        'fc2_w': 0.05 * jax.random.normal(ks[6], (Dh, D), jnp.float32),
        'fc2_b': 0.05 * jax.random.normal(ks[7], (D,), jnp.float32),
        'attn_mask': build_attn_mask(L, window_size, shift_size),
    }
    x = jax.random.normal(ks[8], (B, L, N, D), jnp.float32)

    fwd = jax.jit(functools.partial(swin_block_forward, num_heads=num_heads,
                                    window_size=window_size,
                                    shift_size=shift_size))
    out = jax.block_until_ready(fwd(x, params))

    ref = swin_block_reference(x, params, num_heads=num_heads,
                               window_size=window_size, shift_size=shift_size)
    assert out.shape == (B, L, N, D)
    assert bool(jnp.all(jnp.isfinite(out)))
    max_err = float(jnp.max(jnp.abs(out - ref)))
    assert max_err < 2e-2, f"mismatch vs reference: max abs err = {max_err}"
    print("KERNEL_OK")
</pallas_src>

<mosaic_0001>
module attributes {stable_mosaic.version = 11 : i64} {
  func.func @kernel(%arg0: i32, %arg1: memref<128x32xf32, #tpu.memory_space<vmem>>, %arg2: memref<16x8x8xf32, #tpu.memory_space<vmem>>, %arg3: memref<32x96xf32, #tpu.memory_space<vmem>>, %arg4: memref<1x96xf32, #tpu.memory_space<vmem>>, %arg5: memref<128x32xf32, #tpu.memory_space<vmem>>, %arg6: memref<128x96xf32, #tpu.memory_space<vmem>>) attributes {dimension_semantics = [#tpu.dimension_semantics<arbitrary>], iteration_bounds = array<i64: 1>, scalar_prefetch = 0 : i64, scratch_operands = 1 : i64, tpu.core_type = #tpu.core_type<tc>, window_params = [{pipeline_mode = #tpu.pipeline_mode<synchronous>, transform_indices = @transform_0, window_bounds = array<i64: 128, 32>}, {pipeline_mode = #tpu.pipeline_mode<synchronous>, transform_indices = @transform_1, window_bounds = array<i64: 16, 8, 8>}, {pipeline_mode = #tpu.pipeline_mode<synchronous>, transform_indices = @transform_2, window_bounds = array<i64: 32, 96>}, {pipeline_mode = #tpu.pipeline_mode<synchronous>, transform_indices = @transform_3, window_bounds = array<i64: 1, 96>}, {pipeline_mode = #tpu.pipeline_mode<synchronous>, transform_indices = @transform_4, window_bounds = array<i64: 128, 32>}]} {
    %c0 = arith.constant 0 : index
    %c0_0 = arith.constant 0 : index
    %0 = vector.load %arg1[%c0, %c0_0] : memref<128x32xf32, #tpu.memory_space<vmem>>, vector<128x32xf32>
    %c0_1 = arith.constant 0 : index
    %c0_2 = arith.constant 0 : index
    %1 = vector.load %arg3[%c0_1, %c0_2] : memref<32x96xf32, #tpu.memory_space<vmem>>, vector<32x96xf32>
    %cst = arith.constant dense<0.000000e+00> : vector<128x96xf32>
    %2 = tpu.matmul %0, %1, %cst {dimension_numbers = #tpu.dot_dimension_numbers<[1], [0], [0], [1], [0, 0, 1, 1], [], []>} : vector<128x32xf32>, vector<32x96xf32>, vector<128x96xf32> -> vector<128x96xf32>
    %c0_3 = arith.constant 0 : index
    %c0_4 = arith.constant 0 : index
    %3 = vector.load %arg4[%c0_3, %c0_4] : memref<1x96xf32, #tpu.memory_space<vmem>>, vector<1x96xf32>
    %4 = vector.broadcast %3 : vector<1x96xf32> to vector<128x96xf32>
    %5 = arith.addf %2, %4 : vector<128x96xf32>
    %c0_5 = arith.constant 0 : index
    %c0_6 = arith.constant 0 : index
    %6 = vector.load %arg6[%c0_5, %c0_6] : memref<128x96xf32, #tpu.memory_space<vmem>>, vector<128x96xf32>
    tpu.vector_store %arg6[%c0_5, %c0_6], %5 {strides = array<i32>} : memref<128x96xf32, #tpu.memory_space<vmem>>, vector<128x96xf32>,
    %c0_7 = arith.constant 0 : index
    %c0_8 = arith.constant 0 : index
    %7 = vector.load %arg6[%c0_7, %c0_8] : memref<128x96xf32, #tpu.memory_space<vmem>>, vector<128x8xf32>
    %cst_9 = arith.constant 0.353553385 : f32
    %8 = vector.broadcast %cst_9 : f32 to vector<128x8xf32>
    %9 = arith.mulf %7, %8 : vector<128x8xf32>
    %10 = vector.shape_cast %9 : vector<128x8xf32> to vector<16x8x8xf32>
    %c0_10 = arith.constant 0 : index
    %c32 = arith.constant 32 : index
    %11 = vector.load %arg6[%c0_10, %c32] : memref<128x96xf32, #tpu.memory_space<vmem>>, vector<128x8xf32>
    %12 = vector.shape_cast %11 : vector<128x8xf32> to vector<16x8x8xf32>
    %c0_11 = arith.constant 0 : index
    %c64 = arith.constant 64 : index
    %13 = vector.load %arg6[%c0_11, %c64] : memref<128x96xf32, #tpu.memory_space<vmem>>, vector<128x8xf32>
    %14 = vector.shape_cast %13 : vector<128x8xf32> to vector<16x8x8xf32>
    "tpu.trace_start"() <{level = 10 : i32, message = "gwd,gud->gwu"}> : () -> ()
    %cst_12 = arith.constant dense<0.000000e+00> : vector<16x8x8xf32>
    %15 = tpu.matmul %10, %12, %cst_12 {dimension_numbers = #tpu.dot_dimension_numbers<[2], [2], [1], [1], [0, 0, 0, 1, 1, 1], [0], [0]>} : vector<16x8x8xf32>, vector<16x8x8xf32>, vector<16x8x8xf32> -> vector<16x8x8xf32>
    "tpu.trace_stop"() : () -> ()
    %c0_13 = arith.constant 0 : index
    %c0_14 = arith.constant 0 : index
    %c0_15 = arith.constant 0 : index
    %16 = vector.load %arg2[%c0_13, %c0_14, %c0_15] : memref<16x8x8xf32, #tpu.memory_space<vmem>>, vector<16x8x8xf32>
    %17 = arith.addf %15, %16 : vector<16x8x8xf32>
    %cst_16 = arith.constant dense<0xFF800000> : vector<16x8xf32>
    %18 = vector.multi_reduction <maximumf>, %17, %cst_16 [2] : vector<16x8x8xf32> to vector<16x8xf32>
    %19 = vector.shape_cast %18 : vector<16x8xf32> to vector<16x8x1xf32>
    %20 = vector.broadcast %19 : vector<16x8x1xf32> to vector<16x8x8xf32>
    %21 = arith.subf %17, %20 : vector<16x8x8xf32>
    %22 = math.exp %21 : vector<16x8x8xf32>
    %cst_17 = arith.constant dense<0.000000e+00> : vector<16x8xf32>
    %23 = vector.multi_reduction <add>, %22, %cst_17 [2] : vector<16x8x8xf32> to vector<16x8xf32>
    %24 = vector.shape_cast %23 : vector<16x8xf32> to vector<16x8x1xf32>
    %25 = tpu.reciprocal %24 {approx = true} : vector<16x8x1xf32> -> vector<16x8x1xf32>
    %26 = vector.broadcast %25 : vector<16x8x1xf32> to vector<16x8x8xf32>
    %27 = arith.mulf %22, %26 : vector<16x8x8xf32>
    "tpu.trace_start"() <{level = 10 : i32, message = "gwu,gud->gwd"}> : () -> ()
    %cst_18 = arith.constant dense<0.000000e+00> : vector<16x8x8xf32>
    %28 = tpu.matmul %27, %14, %cst_18 {dimension_numbers = #tpu.dot_dimension_numbers<[2], [1], [1], [2], [0, 0, 0, 1, 1, 2], [0], [0]>} : vector<16x8x8xf32>, vector<16x8x8xf32>, vector<16x8x8xf32> -> vector<16x8x8xf32>
    "tpu.trace_stop"() : () -> ()
    %29 = vector.shape_cast %28 : vector<16x8x8xf32> to vector<128x8xf32>
    %c0_19 = arith.constant 0 : index
    %c0_20 = arith.constant 0 : index
    %30 = vector.load %arg5[%c0_19, %c0_20] : memref<128x32xf32, #tpu.memory_space<vmem>>, vector<128x8xf32>
    tpu.vector_store %arg5[%c0_19, %c0_20], %29 {strides = array<i32>} : memref<128x32xf32, #tpu.memory_space<vmem>>, vector<128x8xf32>,
    %c0_21 = arith.constant 0 : index
    %c8 = arith.constant 8 : index
    %31 = vector.load %arg6[%c0_21, %c8] : memref<128x96xf32, #tpu.memory_space<vmem>>, vector<128x8xf32>
    %cst_22 = arith.constant 0.353553385 : f32
    %32 = vector.broadcast %cst_22 : f32 to vector<128x8xf32>
    %33 = arith.mulf %31, %32 : vector<128x8xf32>
    %34 = vector.shape_cast %33 : vector<128x8xf32> to vector<16x8x8xf32>
    %c0_23 = arith.constant 0 : index
    %c40 = arith.constant 40 : index
    %35 = vector.load %arg6[%c0_23, %c40] : memref<128x96xf32, #tpu.memory_space<vmem>>, vector<128x8xf32>
    %36 = vector.shape_cast %35 : vector<128x8xf32> to vector<16x8x8xf32>
    %c0_24 = arith.constant 0 : index
    %c72 = arith.constant 72 : index
    %37 = vector.load %arg6[%c0_24, %c72] : memref<128x96xf32, #tpu.memory_space<vmem>>, vector<128x8xf32>
    %38 = vector.shape_cast %37 : vector<128x8xf32> to vector<16x8x8xf32>
    "tpu.trace_start"() <{level = 10 : i32, message = "gwd,gud->gwu"}> : () -> ()
    %cst_25 = arith.constant dense<0.000000e+00> : vector<16x8x8xf32>
    %39 = tpu.matmul %34, %36, %cst_25 {dimension_numbers = #tpu.dot_dimension_numbers<[2], [2], [1], [1], [0, 0, 0, 1, 1, 1], [0], [0]>} : vector<16x8x8xf32>, vector<16x8x8xf32>, vector<16x8x8xf32> -> vector<16x8x8xf32>
    "tpu.trace_stop"() : () -> ()
    %c0_26 = arith.constant 0 : index
    %c0_27 = arith.constant 0 : index
    %c0_28 = arith.constant 0 : index
    %40 = vector.load %arg2[%c0_26, %c0_27, %c0_28] : memref<16x8x8xf32, #tpu.memory_space<vmem>>, vector<16x8x8xf32>
    %41 = arith.addf %39, %40 : vector<16x8x8xf32>
    %cst_29 = arith.constant dense<0xFF800000> : vector<16x8xf32>
    %42 = vector.multi_reduction <maximumf>, %41, %cst_29 [2] : vector<16x8x8xf32> to vector<16x8xf32>
    %43 = vector.shape_cast %42 : vector<16x8xf32> to vector<16x8x1xf32>
    %44 = vector.broadcast %43 : vector<16x8x1xf32> to vector<16x8x8xf32>
    %45 = arith.subf %41, %44 : vector<16x8x8xf32>
    %46 = math.exp %45 : vector<16x8x8xf32>
    %cst_30 = arith.constant dense<0.000000e+00> : vector<16x8xf32>
    %47 = vector.multi_reduction <add>, %46, %cst_30 [2] : vector<16x8x8xf32> to vector<16x8xf32>
    %48 = vector.shape_cast %47 : vector<16x8xf32> to vector<16x8x1xf32>
    %49 = tpu.reciprocal %48 {approx = true} : vector<16x8x1xf32> -> vector<16x8x1xf32>
    %50 = vector.broadcast %49 : vector<16x8x1xf32> to vector<16x8x8xf32>
    %51 = arith.mulf %46, %50 : vector<16x8x8xf32>
    "tpu.trace_start"() <{level = 10 : i32, message = "gwu,gud->gwd"}> : () -> ()
    %cst_31 = arith.constant dense<0.000000e+00> : vector<16x8x8xf32>
    %52 = tpu.matmul %51, %38, %cst_31 {dimension_numbers = #tpu.dot_dimension_numbers<[2], [1], [1], [2], [0, 0, 0, 1, 1, 2], [0], [0]>} : vector<16x8x8xf32>, vector<16x8x8xf32>, vector<16x8x8xf32> -> vector<16x8x8xf32>
    "tpu.trace_stop"() : () -> ()
    %53 = vector.shape_cast %52 : vector<16x8x8xf32> to vector<128x8xf32>
    %c0_32 = arith.constant 0 : index
    %c8_33 = arith.constant 8 : index
    %54 = vector.load %arg5[%c0_32, %c8_33] : memref<128x32xf32, #tpu.memory_space<vmem>>, vector<128x8xf32>
    tpu.vector_store %arg5[%c0_32, %c8_33], %53 {strides = array<i32>} : memref<128x32xf32, #tpu.memory_space<vmem>>, vector<128x8xf32>,
    %c0_34 = arith.constant 0 : index
    %c16 = arith.constant 16 : index
    %55 = vector.load %arg6[%c0_34, %c16] : memref<128x96xf32, #tpu.memory_space<vmem>>, vector<128x8xf32>
    %cst_35 = arith.constant 0.353553385 : f32
    %56 = vector.broadcast %cst_35 : f32 to vector<128x8xf32>
    %57 = arith.mulf %55, %56 : vector<128x8xf32>
    %58 = vector.shape_cast %57 : vector<128x8xf32> to vector<16x8x8xf32>
    %c0_36 = arith.constant 0 : index
    %c48 = arith.constant 48 : index
    %59 = vector.load %arg6[%c0_36, %c48] : memref<128x96xf32, #tpu.memory_space<vmem>>, vector<128x8xf32>
    %60 = vector.shape_cast %59 : vector<128x8xf32> to vector<16x8x8xf32>
    %c0_37 = arith.constant 0 : index
    %c80 = arith.constant 80 : index
    %61 = vector.load %arg6[%c0_37, %c80] : memref<128x96xf32, #tpu.memory_space<vmem>>, vector<128x8xf32>
    %62 = vector.shape_cast %61 : vector<128x8xf32> to vector<16x8x8xf32>
    "tpu.trace_start"() <{level = 10 : i32, message = "gwd,gud->gwu"}> : () -> ()
    %cst_38 = arith.constant dense<0.000000e+00> : vector<16x8x8xf32>
    %63 = tpu.matmul %58, %60, %cst_38 {dimension_numbers = #tpu.dot_dimension_numbers<[2], [2], [1], [1], [0, 0, 0, 1, 1, 1], [0], [0]>} : vector<16x8x8xf32>, vector<16x8x8xf32>, vector<16x8x8xf32> -> vector<16x8x8xf32>
    "tpu.trace_stop"() : () -> ()
    %c0_39 = arith.constant 0 : index
    %c0_40 = arith.constant 0 : index
    %c0_41 = arith.constant 0 : index
    %64 = vector.load %arg2[%c0_39, %c0_40, %c0_41] : memref<16x8x8xf32, #tpu.memory_space<vmem>>, vector<16x8x8xf32>
    %65 = arith.addf %63, %64 : vector<16x8x8xf32>
    %cst_42 = arith.constant dense<0xFF800000> : vector<16x8xf32>
    %66 = vector.multi_reduction <maximumf>, %65, %cst_42 [2] : vector<16x8x8xf32> to vector<16x8xf32>
    %67 = vector.shape_cast %66 : vector<16x8xf32> to vector<16x8x1xf32>
    %68 = vector.broadcast %67 : vector<16x8x1xf32> to vector<16x8x8xf32>
    %69 = arith.subf %65, %68 : vector<16x8x8xf32>
    %70 = math.exp %69 : vector<16x8x8xf32>
    %cst_43 = arith.constant dense<0.000000e+00> : vector<16x8xf32>
    %71 = vector.multi_reduction <add>, %70, %cst_43 [2] : vector<16x8x8xf32> to vector<16x8xf32>
    %72 = vector.shape_cast %71 : vector<16x8xf32> to vector<16x8x1xf32>
    %73 = tpu.reciprocal %72 {approx = true} : vector<16x8x1xf32> -> vector<16x8x1xf32>
    %74 = vector.broadcast %73 : vector<16x8x1xf32> to vector<16x8x8xf32>
    %75 = arith.mulf %70, %74 : vector<16x8x8xf32>
    "tpu.trace_start"() <{level = 10 : i32, message = "gwu,gud->gwd"}> : () -> ()
    %cst_44 = arith.constant dense<0.000000e+00> : vector<16x8x8xf32>
    %76 = tpu.matmul %75, %62, %cst_44 {dimension_numbers = #tpu.dot_dimension_numbers<[2], [1], [1], [2], [0, 0, 0, 1, 1, 2], [0], [0]>} : vector<16x8x8xf32>, vector<16x8x8xf32>, vector<16x8x8xf32> -> vector<16x8x8xf32>
    "tpu.trace_stop"() : () -> ()
    %77 = vector.shape_cast %76 : vector<16x8x8xf32> to vector<128x8xf32>
    %c0_45 = arith.constant 0 : index
    %c16_46 = arith.constant 16 : index
    %78 = vector.load %arg5[%c0_45, %c16_46] : memref<128x32xf32, #tpu.memory_space<vmem>>, vector<128x8xf32>
    tpu.vector_store %arg5[%c0_45, %c16_46], %77 {strides = array<i32>} : memref<128x32xf32, #tpu.memory_space<vmem>>, vector<128x8xf32>,
    %c0_47 = arith.constant 0 : index
    %c24 = arith.constant 24 : index
    %79 = vector.load %arg6[%c0_47, %c24] : memref<128x96xf32, #tpu.memory_space<vmem>>, vector<128x8xf32>
    %cst_48 = arith.constant 0.353553385 : f32
    %80 = vector.broadcast %cst_48 : f32 to vector<128x8xf32>
    %81 = arith.mulf %79, %80 : vector<128x8xf32>
    %82 = vector.shape_cast %81 : vector<128x8xf32> to vector<16x8x8xf32>
    %c0_49 = arith.constant 0 : index
    %c56 = arith.constant 56 : index
    %83 = vector.load %arg6[%c0_49, %c56] : memref<128x96xf32, #tpu.memory_space<vmem>>, vector<128x8xf32>
    %84 = vector.shape_cast %83 : vector<128x8xf32> to vector<16x8x8xf32>
    %c0_50 = arith.constant 0 : index
    %c88 = arith.constant 88 : index
    %85 = vector.load %arg6[%c0_50, %c88] : memref<128x96xf32, #tpu.memory_space<vmem>>, vector<128x8xf32>
    %86 = vector.shape_cast %85 : vector<128x8xf32> to vector<16x8x8xf32>
    "tpu.trace_start"() <{level = 10 : i32, message = "gwd,gud->gwu"}> : () -> ()
    %cst_51 = arith.constant dense<0.000000e+00> : vector<16x8x8xf32>
    %87 = tpu.matmul %82, %84, %cst_51 {dimension_numbers = #tpu.dot_dimension_numbers<[2], [2], [1], [1], [0, 0, 0, 1, 1, 1], [0], [0]>} : vector<16x8x8xf32>, vector<16x8x8xf32>, vector<16x8x8xf32> -> vector<16x8x8xf32>
    "tpu.trace_stop"() : () -> ()
    %c0_52 = arith.constant 0 : index
    %c0_53 = arith.constant 0 : index
    %c0_54 = arith.constant 0 : index
    %88 = vector.load %arg2[%c0_52, %c0_53, %c0_54] : memref<16x8x8xf32, #tpu.memory_space<vmem>>, vector<16x8x8xf32>
    %89 = arith.addf %87, %88 : vector<16x8x8xf32>
    %cst_55 = arith.constant dense<0xFF800000> : vector<16x8xf32>
    %90 = vector.multi_reduction <maximumf>, %89, %cst_55 [2] : vector<16x8x8xf32> to vector<16x8xf32>
    %91 = vector.shape_cast %90 : vector<16x8xf32> to vector<16x8x1xf32>
    %92 = vector.broadcast %91 : vector<16x8x1xf32> to vector<16x8x8xf32>
    %93 = arith.subf %89, %92 : vector<16x8x8xf32>
    %94 = math.exp %93 : vector<16x8x8xf32>
    %cst_56 = arith.constant dense<0.000000e+00> : vector<16x8xf32>
    %95 = vector.multi_reduction <add>, %94, %cst_56 [2] : vector<16x8x8xf32> to vector<16x8xf32>
    %96 = vector.shape_cast %95 : vector<16x8xf32> to vector<16x8x1xf32>
    %97 = tpu.reciprocal %96 {approx = true} : vector<16x8x1xf32> -> vector<16x8x1xf32>
    %98 = vector.broadcast %97 : vector<16x8x1xf32> to vector<16x8x8xf32>
    %99 = arith.mulf %94, %98 : vector<16x8x8xf32>
    "tpu.trace_start"() <{level = 10 : i32, message = "gwu,gud->gwd"}> : () -> ()
    %cst_57 = arith.constant dense<0.000000e+00> : vector<16x8x8xf32>
    %100 = tpu.matmul %99, %86, %cst_57 {dimension_numbers = #tpu.dot_dimension_numbers<[2], [1], [1], [2], [0, 0, 0, 1, 1, 2], [0], [0]>} : vector<16x8x8xf32>, vector<16x8x8xf32>, vector<16x8x8xf32> -> vector<16x8x8xf32>
    "tpu.trace_stop"() : () -> ()
    %101 = vector.shape_cast %100 : vector<16x8x8xf32> to vector<128x8xf32>
    %c0_58 = arith.constant 0 : index
    %c24_59 = arith.constant 24 : index
    %102 = vector.load %arg5[%c0_58, %c24_59] : memref<128x32xf32, #tpu.memory_space<vmem>>, vector<128x8xf32>
    tpu.vector_store %arg5[%c0_58, %c24_59], %101 {strides = array<i32>} : memref<128x32xf32, #tpu.memory_space<vmem>>, vector<128x8xf32>,
    return
  }
  func.func @transform_0(%arg0: i32) -> (i32, i32) {
    %c0_i32 = arith.constant 0 : i32
    %c0_i32_0 = arith.constant 0 : i32
    %c0_i32_1 = arith.constant 0 : i32
    return %c0_i32, %c0_i32_0 : i32, i32
  }
  func.func @transform_1(%arg0: i32) -> (i32, i32, i32) {
    %c0_i32 = arith.constant 0 : i32
    %c0_i32_0 = arith.constant 0 : i32
    %c0_i32_1 = arith.constant 0 : i32
    %c0_i32_2 = arith.constant 0 : i32
    return %c0_i32, %c0_i32_0, %c0_i32_1 : i32, i32, i32
  }
  func.func @transform_2(%arg0: i32) -> (i32, i32) {
    %c0_i32 = arith.constant 0 : i32
    %c0_i32_0 = arith.constant 0 : i32
    %c0_i32_1 = arith.constant 0 : i32
    return %c0_i32, %c0_i32_0 : i32, i32
  }
  func.func @transform_3(%arg0: i32) -> (i32, i32) {
    %c0_i32 = arith.constant 0 : i32
    %c0_i32_0 = arith.constant 0 : i32
    %c0_i32_1 = arith.constant 0 : i32
    return %c0_i32, %c0_i32_0 : i32, i32
  }
  func.func @transform_4(%arg0: i32) -> (i32, i32) {
    %c0_i32 = arith.constant 0 : i32
    %c0_i32_0 = arith.constant 0 : i32
    %c0_i32_1 = arith.constant 0 : i32
    return %c0_i32, %c0_i32_0 : i32, i32
  }
}

module attributes {stable_mosaic.version = 11 : i64} {
  func.func @_tail_kernel(%arg0: i32, %arg1: memref<128x32xf32, #tpu.memory_space<vmem>>, %arg2: memref<128x32xf32, #tpu.memory_space<vmem>>, %arg3: memref<32x32xf32, #tpu.memory_space<vmem>>, %arg4: memref<1x32xf32, #tpu.memory_space<vmem>>, %arg5: memref<1x32xf32, #tpu.memory_space<vmem>>, %arg6: memref<1x32xf32, #tpu.memory_space<vmem>>, %arg7: memref<32x128xf32, #tpu.memory_space<vmem>>, %arg8: memref<1x128xf32, #tpu.memory_space<vmem>>, %arg9: memref<128x32xf32, #tpu.memory_space<vmem>>, %arg10: memref<1x32xf32, #tpu.memory_space<vmem>>, %arg11: memref<1x32xf32, #tpu.memory_space<vmem>>, %arg12: memref<1x32xf32, #tpu.memory_space<vmem>>, %arg13: memref<128x32xf32, #tpu.memory_space<vmem>>) attributes {dimension_semantics = [#tpu.dimension_semantics<arbitrary>], iteration_bounds = array<i64: 1>, scalar_prefetch = 0 : i64, scratch_operands = 0 : i64, tpu.core_type = #tpu.core_type<tc>, window_params = [{pipeline_mode = #tpu.pipeline_mode<synchronous>, transform_indices = @transform_0, window_bounds = array<i64: 128, 32>}, {pipeline_mode = #tpu.pipeline_mode<synchronous>, transform_indices = @transform_1, window_bounds = array<i64: 128, 32>}, {pipeline_mode = #tpu.pipeline_mode<synchronous>, transform_indices = @transform_2, window_bounds = array<i64: 32, 32>}, {pipeline_mode = #tpu.pipeline_mode<synchronous>, transform_indices = @transform_3, window_bounds = array<i64: 1, 32>}, {pipeline_mode = #tpu.pipeline_mode<synchronous>, transform_indices = @transform_4, window_bounds = array<i64: 1, 32>}, {pipeline_mode = #tpu.pipeline_mode<synchronous>, transform_indices = @transform_5, window_bounds = array<i64: 1, 32>}, {pipeline_mode = #tpu.pipeline_mode<synchronous>, transform_indices = @transform_6, window_bounds = array<i64: 32, 128>}, {pipeline_mode = #tpu.pipeline_mode<synchronous>, transform_indices = @transform_7, window_bounds = array<i64: 1, 128>}, {pipeline_mode = #tpu.pipeline_mode<synchronous>, transform_indices = @transform_8, window_bounds = array<i64: 128, 32>}, {pipeline_mode = #tpu.pipeline_mode<synchronous>, transform_indices = @transform_9, window_bounds = array<i64: 1, 32>}, {pipeline_mode = #tpu.pipeline_mode<synchronous>, transform_indices = @transform_10, window_bounds = array<i64: 1, 32>}, {pipeline_mode = #tpu.pipeline_mode<synchronous>, transform_indices = @transform_11, window_bounds = array<i64: 1, 32>}, {pipeline_mode = #tpu.pipeline_mode<synchronous>, transform_indices = @transform_12, window_bounds = array<i64: 128, 32>}]} {
    %c0 = arith.constant 0 : index
    %c0_0 = arith.constant 0 : index
    %0 = vector.load %arg1[%c0, %c0_0] : memref<128x32xf32, #tpu.memory_space<vmem>>, vector<128x32xf32>
    %c0_1 = arith.constant 0 : index
    %c0_2 = arith.constant 0 : index
    %1 = vector.load %arg3[%c0_1, %c0_2] : memref<32x32xf32, #tpu.memory_space<vmem>>, vector<32x32xf32>
    %cst = arith.constant dense<0.000000e+00> : vector<128x32xf32>
    %2 = tpu.matmul %0, %1, %cst {dimension_numbers = #tpu.dot_dimension_numbers<[1], [0], [0], [1], [0, 0, 1, 1], [], []>} : vector<128x32xf32>, vector<32x32xf32>, vector<128x32xf32> -> vector<128x32xf32>
    %c0_3 = arith.constant 0 : index
    %c0_4 = arith.constant 0 : index
    %3 = vector.load %arg4[%c0_3, %c0_4] : memref<1x32xf32, #tpu.memory_space<vmem>>, vector<1x32xf32>
    %4 = vector.broadcast %3 : vector<1x32xf32> to vector<128x32xf32>
    %5 = arith.addf %2, %4 : vector<128x32xf32>
    %c0_5 = arith.constant 0 : index
    %c0_6 = arith.constant 0 : index
    %6 = vector.load %arg2[%c0_5, %c0_6] : memref<128x32xf32, #tpu.memory_space<vmem>>, vector<128x32xf32>
    %c0_7 = arith.constant 0 : index
    %c0_8 = arith.constant 0 : index
    %7 = vector.load %arg5[%c0_7, %c0_8] : memref<1x32xf32, #tpu.memory_space<vmem>>, vector<1x32xf32>
    %c0_9 = arith.constant 0 : index
    %c0_10 = arith.constant 0 : index
    %8 = vector.load %arg6[%c0_9, %c0_10] : memref<1x32xf32, #tpu.memory_space<vmem>>, vector<1x32xf32>
    %cst_11 = arith.constant dense<0.000000e+00> : vector<128xf32>
    %9 = vector.multi_reduction <add>, %5, %cst_11 [1] : vector<128x32xf32> to vector<128xf32>
    %10 = vector.shape_cast %9 : vector<128xf32> to vector<128x1xf32>
    %cst_12 = arith.constant 3.200000e+01 : f32
    %11 = vector.broadcast %cst_12 : f32 to vector<128x1xf32>
    %12 = arith.divf %10, %11 : vector<128x1xf32>
    %13 = vector.broadcast %12 : vector<128x1xf32> to vector<128x32xf32>
    %14 = arith.subf %5, %13 : vector<128x32xf32>
    %15 = arith.mulf %14, %14 : vector<128x32xf32>
    %cst_13 = arith.constant dense<0.000000e+00> : vector<128xf32>
    %16 = vector.multi_reduction <add>, %15, %cst_13 [1] : vector<128x32xf32> to vector<128xf32>
    %17 = vector.shape_cast %16 : vector<128xf32> to vector<128x1xf32>
    %cst_14 = arith.constant 3.200000e+01 : f32
    %18 = vector.broadcast %cst_14 : f32 to vector<128x1xf32>
    %19 = arith.divf %17, %18 : vector<128x1xf32>
    %cst_15 = arith.constant 9.99999974E-6 : f32
    %20 = vector.broadcast %cst_15 : f32 to vector<128x1xf32>
    %21 = arith.addf %19, %20 : vector<128x1xf32>
    %22 = math.rsqrt %21 : vector<128x1xf32>
    %23 = vector.broadcast %22 : vector<128x1xf32> to vector<128x32xf32>
    %24 = arith.mulf %14, %23 : vector<128x32xf32>
    %25 = vector.broadcast %7 : vector<1x32xf32> to vector<128x32xf32>
    %26 = arith.mulf %24, %25 : vector<128x32xf32>
    %27 = vector.broadcast %8 : vector<1x32xf32> to vector<128x32xf32>
    %28 = arith.addf %26, %27 : vector<128x32xf32>
    %29 = arith.addf %6, %28 : vector<128x32xf32>
    %c0_16 = arith.constant 0 : index
    %c0_17 = arith.constant 0 : index
    %30 = vector.load %arg7[%c0_16, %c0_17] : memref<32x128xf32, #tpu.memory_space<vmem>>, vector<32x128xf32>
    %cst_18 = arith.constant dense<0.000000e+00> : vector<128x128xf32>
    %31 = tpu.matmul %29, %30, %cst_18 {dimension_numbers = #tpu.dot_dimension_numbers<[1], [0], [0], [1], [0, 0, 1, 1], [], []>} : vector<128x32xf32>, vector<32x128xf32>, vector<128x128xf32> -> vector<128x128xf32>
    %c0_19 = arith.constant 0 : index
    %c0_20 = arith.constant 0 : index
    %32 = vector.load %arg8[%c0_19, %c0_20] : memref<1x128xf32, #tpu.memory_space<vmem>>, vector<1x128xf32>
    %33 = vector.broadcast %32 : vector<1x128xf32> to vector<128x128xf32>
    %34 = arith.addf %31, %33 : vector<128x128xf32>
    %cst_21 = arith.constant 5.000000e-01 : f32
    %35 = vector.broadcast %cst_21 : f32 to vector<128x128xf32>
    %36 = arith.mulf %35, %34 : vector<128x128xf32>
    %cst_22 = arith.constant 0.707106769 : f32
    %37 = vector.broadcast %cst_22 : f32 to vector<128x128xf32>
    %38 = arith.mulf %34, %37 : vector<128x128xf32>
    %39 = math.erf %38 : vector<128x128xf32>
    %cst_23 = arith.constant 1.000000e+00 : f32
    %40 = vector.broadcast %cst_23 : f32 to vector<128x128xf32>
    %41 = arith.addf %40, %39 : vector<128x128xf32>
    %42 = arith.mulf %36, %41 : vector<128x128xf32>
    %c0_24 = arith.constant 0 : index
    %c0_25 = arith.constant 0 : index
    %43 = vector.load %arg9[%c0_24, %c0_25] : memref<128x32xf32, #tpu.memory_space<vmem>>, vector<128x32xf32>
    %cst_26 = arith.constant dense<0.000000e+00> : vector<128x32xf32>
    %44 = tpu.matmul %42, %43, %cst_26 {dimension_numbers = #tpu.dot_dimension_numbers<[1], [0], [0], [1], [0, 0, 1, 1], [], []>} : vector<128x128xf32>, vector<128x32xf32>, vector<128x32xf32> -> vector<128x32xf32>
    %c0_27 = arith.constant 0 : index
    %c0_28 = arith.constant 0 : index
    %45 = vector.load %arg10[%c0_27, %c0_28] : memref<1x32xf32, #tpu.memory_space<vmem>>, vector<1x32xf32>
    %46 = vector.broadcast %45 : vector<1x32xf32> to vector<128x32xf32>
    %47 = arith.addf %44, %46 : vector<128x32xf32>
    %c0_29 = arith.constant 0 : index
    %c0_30 = arith.constant 0 : index
    %48 = vector.load %arg11[%c0_29, %c0_30] : memref<1x32xf32, #tpu.memory_space<vmem>>, vector<1x32xf32>
    %c0_31 = arith.constant 0 : index
    %c0_32 = arith.constant 0 : index
    %49 = vector.load %arg12[%c0_31, %c0_32] : memref<1x32xf32, #tpu.memory_space<vmem>>, vector<1x32xf32>
    %cst_33 = arith.constant dense<0.000000e+00> : vector<128xf32>
    %50 = vector.multi_reduction <add>, %47, %cst_33 [1] : vector<128x32xf32> to vector<128xf32>
    %51 = vector.shape_cast %50 : vector<128xf32> to vector<128x1xf32>
    %cst_34 = arith.constant 3.200000e+01 : f32
    %52 = vector.broadcast %cst_34 : f32 to vector<128x1xf32>
    %53 = arith.divf %51, %52 : vector<128x1xf32>
    %54 = vector.broadcast %53 : vector<128x1xf32> to vector<128x32xf32>
    %55 = arith.subf %47, %54 : vector<128x32xf32>
    %56 = arith.mulf %55, %55 : vector<128x32xf32>
    %cst_35 = arith.constant dense<0.000000e+00> : vector<128xf32>
    %57 = vector.multi_reduction <add>, %56, %cst_35 [1] : vector<128x32xf32> to vector<128xf32>
    %58 = vector.shape_cast %57 : vector<128xf32> to vector<128x1xf32>
    %cst_36 = arith.constant 3.200000e+01 : f32
    %59 = vector.broadcast %cst_36 : f32 to vector<128x1xf32>
    %60 = arith.divf %58, %59 : vector<128x1xf32>
    %cst_37 = arith.constant 9.99999974E-6 : f32
    %61 = vector.broadcast %cst_37 : f32 to vector<128x1xf32>
    %62 = arith.addf %60, %61 : vector<128x1xf32>
    %63 = math.rsqrt %62 : vector<128x1xf32>
    %64 = vector.broadcast %63 : vector<128x1xf32> to vector<128x32xf32>
    %65 = arith.mulf %55, %64 : vector<128x32xf32>
    %66 = vector.broadcast %48 : vector<1x32xf32> to vector<128x32xf32>
    %67 = arith.mulf %65, %66 : vector<128x32xf32>
    %68 = vector.broadcast %49 : vector<1x32xf32> to vector<128x32xf32>
    %69 = arith.addf %67, %68 : vector<128x32xf32>
    %70 = arith.addf %29, %69 : vector<128x32xf32>
    %c0_38 = arith.constant 0 : index
    %c0_39 = arith.constant 0 : index
    %71 = vector.load %arg13[%c0_38, %c0_39] : memref<128x32xf32, #tpu.memory_space<vmem>>, vector<128x32xf32>
    tpu.vector_store %arg13[%c0_38, %c0_39], %70 {strides = array<i32>} : memref<128x32xf32, #tpu.memory_space<vmem>>, vector<128x32xf32>,
    return
  }
  func.func @transform_0(%arg0: i32) -> (i32, i32) {
    %c0_i32 = arith.constant 0 : i32
    %c0_i32_0 = arith.constant 0 : i32
    %c0_i32_1 = arith.constant 0 : i32
    return %c0_i32, %c0_i32_0 : i32, i32
  }
  func.func @transform_1(%arg0: i32) -> (i32, i32) {
    %c0_i32 = arith.constant 0 : i32
    %c0_i32_0 = arith.constant 0 : i32
    %c0_i32_1 = arith.constant 0 : i32
    return %c0_i32, %c0_i32_0 : i32, i32
  }
  func.func @transform_2(%arg0: i32) -> (i32, i32) {
    %c0_i32 = arith.constant 0 : i32
    %c0_i32_0 = arith.constant 0 : i32
    %c0_i32_1 = arith.constant 0 : i32
    return %c0_i32, %c0_i32_0 : i32, i32
  }
  func.func @transform_3(%arg0: i32) -> (i32, i32) {
    %c0_i32 = arith.constant 0 : i32
    %c0_i32_0 = arith.constant 0 : i32
    %c0_i32_1 = arith.constant 0 : i32
    return %c0_i32, %c0_i32_0 : i32, i32
  }
  func.func @transform_4(%arg0: i32) -> (i32, i32) {
    %c0_i32 = arith.constant 0 : i32
    %c0_i32_0 = arith.constant 0 : i32
    %c0_i32_1 = arith.constant 0 : i32
    return %c0_i32, %c0_i32_0 : i32, i32
  }
  func.func @transform_5(%arg0: i32) -> (i32, i32) {
    %c0_i32 = arith.constant 0 : i32
    %c0_i32_0 = arith.constant 0 : i32
    %c0_i32_1 = arith.constant 0 : i32
    return %c0_i32, %c0_i32_0 : i32, i32
  }
  func.func @transform_6(%arg0: i32) -> (i32, i32) {
    %c0_i32 = arith.constant 0 : i32
    %c0_i32_0 = arith.constant 0 : i32
    %c0_i32_1 = arith.constant 0 : i32
    return %c0_i32, %c0_i32_0 : i32, i32
  }
  func.func @transform_7(%arg0: i32) -> (i32, i32) {
    %c0_i32 = arith.constant 0 : i32
    %c0_i32_0 = arith.constant 0 : i32
    %c0_i32_1 = arith.constant 0 : i32
    return %c0_i32, %c0_i32_0 : i32, i32
  }
  func.func @transform_8(%arg0: i32) -> (i32, i32) {
    %c0_i32 = arith.constant 0 : i32
    %c0_i32_0 = arith.constant 0 : i32
    %c0_i32_1 = arith.constant 0 : i32
    return %c0_i32, %c0_i32_0 : i32, i32
  }
  func.func @transform_9(%arg0: i32) -> (i32, i32) {
    %c0_i32 = arith.constant 0 : i32
    %c0_i32_0 = arith.constant 0 : i32
    %c0_i32_1 = arith.constant 0 : i32
    return %c0_i32, %c0_i32_0 : i32, i32
  }
  func.func @transform_10(%arg0: i32) -> (i32, i32) {
    %c0_i32 = arith.constant 0 : i32
    %c0_i32_0 = arith.constant 0 : i32
    %c0_i32_1 = arith.constant 0 : i32
    return %c0_i32, %c0_i32_0 : i32, i32
  }
  func.func @transform_11(%arg0: i32) -> (i32, i32) {
    %c0_i32 = arith.constant 0 : i32
    %c0_i32_0 = arith.constant 0 : i32
    %c0_i32_1 = arith.constant 0 : i32
    return %c0_i32, %c0_i32_0 : i32, i32
  }
  func.func @transform_12(%arg0: i32) -> (i32, i32) {
    %c0_i32 = arith.constant 0 : i32
    %c0_i32_0 = arith.constant 0 : i32
    %c0_i32_1 = arith.constant 0 : i32
    return %c0_i32, %c0_i32_0 : i32, i32
  }
}

</mosaic_0001>

<llo_original>
// kernel: swin_block_forward.3
$region0: #{swin_block_forward.3}
  #allocation0 [shape = 'u32[]', space=smem, size = 0x4, offset = 0x4, fixed_abs, tag = 'smem constant byte address 0x4 - core index']
  #allocation1 [shape = 'u32[144,128]{1,0:T(1,128)}', space=vmem, size = 0x12000, scoped, tag = 'internal scratch']
  %s0 = inlined_call_operand.vmem [shape: f32[128,32], index: 0, kind: input, shape index: {}]
  %s1 = inlined_call_operand.vmem [shape: f32[128,32], index: 1, kind: input, shape index: {}]
  %s2 = inlined_call_operand.vmem [shape: f32[32,32], index: 2, kind: input, shape index: {}]
  %s3 = inlined_call_operand.vmem [shape: f32[1,32], index: 3, kind: input, shape index: {}]
  %s4 = inlined_call_operand.vmem [shape: f32[1,32], index: 4, kind: input, shape index: {}]
  %s5 = inlined_call_operand.vmem [shape: f32[1,32], index: 5, kind: input, shape index: {}]
  %s6 = inlined_call_operand.vmem [shape: f32[32,128], index: 6, kind: input, shape index: {}]
  %s7 = inlined_call_operand.vmem [shape: f32[1,128], index: 7, kind: input, shape index: {}]
  %s8 = inlined_call_operand.vmem [shape: f32[128,32], index: 8, kind: input, shape index: {}]
  %s9 = inlined_call_operand.vmem [shape: f32[1,32], index: 9, kind: input, shape index: {}]
  %s10 = inlined_call_operand.vmem [shape: f32[1,32], index: 10, kind: input, shape index: {}]
  %s11 = inlined_call_operand.vmem [shape: f32[1,32], index: 11, kind: input, shape index: {}]
  %s12 = inlined_call_operand.vmem [shape: f32[128,32], index: 12, kind: output, shape index: {}]
  %s13 = sld [smem:[#allocation0]]
  $region58: #{swin_block_forward.3} parent=0
    _
  %s15 = ssub.s32 1, %s13
  %s16 = scalar_select 0, %s15, %s13
  // Predicated region
  $region2: #{swin_block_forward.3} parent=0 // pred_check
    _
  $region3: #{swin_block_forward.3} parent=0 // pred_check_branch
    %18 = sbr.rel (0) target = $region5
  $region4: #{swin_block_forward.3} parent=0 // pred_region
    _
  $region5: #{swin_block_forward.3} parent=0 // pred_fallthru
    _
  // Predicated region
  $region6: #{swin_block_forward.3} parent=0 // pred_check
    _
  $region7: #{swin_block_forward.3} parent=0 // pred_check_branch
    %20 = sbr.rel (0) target = $region9
  $region8: #{swin_block_forward.3} parent=0 // pred_region
    _
  $region9: #{swin_block_forward.3} parent=0 // pred_fallthru
    _
  // Predicated region
  $region10: #{swin_block_forward.3} parent=0 // pred_check
    _
  $region11: #{swin_block_forward.3} parent=0 // pred_check_branch
    %22 = sbr.rel (0) target = $region13
  $region12: #{swin_block_forward.3} parent=0 // pred_region
    _
  $region13: #{swin_block_forward.3} parent=0 // pred_fallthru
    _
  // Predicated region
  $region14: #{swin_block_forward.3} parent=0 // pred_check
    _
  $region15: #{swin_block_forward.3} parent=0 // pred_check_branch
    %24 = sbr.rel (0) target = $region17
  $region16: #{swin_block_forward.3} parent=0 // pred_region
    _
  $region17: #{swin_block_forward.3} parent=0 // pred_fallthru
    _
  // Predicated region
  $region18: #{swin_block_forward.3} parent=0 // pred_check
    _
  $region19: #{swin_block_forward.3} parent=0 // pred_check_branch
    %26 = sbr.rel (0) target = $region21
  $region20: #{swin_block_forward.3} parent=0 // pred_region
    _
  $region21: #{swin_block_forward.3} parent=0 // pred_fallthru
    _
  // Predicated region
  $region22: #{swin_block_forward.3} parent=0 // pred_check
    _
  $region23: #{swin_block_forward.3} parent=0 // pred_check_branch
    %28 = sbr.rel (0) target = $region25
  $region24: #{swin_block_forward.3} parent=0 // pred_region
    _
  $region25: #{swin_block_forward.3} parent=0 // pred_fallthru
    _
  // Predicated region
  $region26: #{swin_block_forward.3} parent=0 // pred_check
    _
  $region27: #{swin_block_forward.3} parent=0 // pred_check_branch
    %30 = sbr.rel (0) target = $region29
  $region28: #{swin_block_forward.3} parent=0 // pred_region
    _
  $region29: #{swin_block_forward.3} parent=0 // pred_fallthru
    _
  // Predicated region
  $region30: #{swin_block_forward.3} parent=0 // pred_check
    _
  $region31: #{swin_block_forward.3} parent=0 // pred_check_branch
    %32 = sbr.rel (0) target = $region33
  $region32: #{swin_block_forward.3} parent=0 // pred_region
    _
  $region33: #{swin_block_forward.3} parent=0 // pred_fallthru
    _
  // Predicated region
  $region34: #{swin_block_forward.3} parent=0 // pred_check
    _
  $region35: #{swin_block_forward.3} parent=0 // pred_check_branch
    %34 = sbr.rel (0) target = $region37
  $region36: #{swin_block_forward.3} parent=0 // pred_region
    _
  $region37: #{swin_block_forward.3} parent=0 // pred_fallthru
    _
  // Predicated region
  $region38: #{swin_block_forward.3} parent=0 // pred_check
    _
  $region39: #{swin_block_forward.3} parent=0 // pred_check_branch
    %36 = sbr.rel (0) target = $region41
  $region40: #{swin_block_forward.3} parent=0 // pred_region
    _
  $region41: #{swin_block_forward.3} parent=0 // pred_fallthru
    _
  // Predicated region
  $region42: #{swin_block_forward.3} parent=0 // pred_check
    _
  $region43: #{swin_block_forward.3} parent=0 // pred_check_branch
    %38 = sbr.rel (0) target = $region45
  $region44: #{swin_block_forward.3} parent=0 // pred_region
    _
  $region45: #{swin_block_forward.3} parent=0 // pred_fallthru
    _
  // Predicated region
  $region46: #{swin_block_forward.3} parent=0 // pred_check
    _
  $region47: #{swin_block_forward.3} parent=0 // pred_check_branch
    %40 = sbr.rel (0) target = $region49
  $region48: #{swin_block_forward.3} parent=0 // pred_region
    _
  $region49: #{swin_block_forward.3} parent=0 // pred_fallthru
    _
  %v41 = vld [vmem:[%s0] sm:$0xff]
  %v42 = vld [vmem:[%s0 + $0x8] sm:$0xff]
  %v43 = vld [vmem:[%s0 + $0x10] sm:$0xff]
  %v44 = vld [vmem:[%s0 + $0x18] sm:$0xff]
  %v45 = vld [vmem:[%s0 + $0x20] sm:$0xff]
  %v46 = vld [vmem:[%s0 + $0x28] sm:$0xff]
  %v47 = vld [vmem:[%s0 + $0x30] sm:$0xff]
  %v48 = vld [vmem:[%s0 + $0x38] sm:$0xff]
  %v49 = vld [vmem:[%s0 + $0x40] sm:$0xff]
  %v50 = vld [vmem:[%s0 + $0x48] sm:$0xff]
  %v51 = vld [vmem:[%s0 + $0x50] sm:$0xff]
  %v52 = vld [vmem:[%s0 + $0x58] sm:$0xff]
  %v53 = vld [vmem:[%s0 + $0x60] sm:$0xff]
  %v54 = vld [vmem:[%s0 + $0x68] sm:$0xff]
  %v55 = vld [vmem:[%s0 + $0x70] sm:$0xff]
  %v56 = vld [vmem:[%s0 + $0x78] sm:$0xff]
  %v57 = vld [vmem:[%s2] sm:$0xff]
  %v58 = vld [vmem:[%s2 + $0x8] sm:$0xff]
  %v59 = vld [vmem:[%s2 + $0x10] sm:$0xff]
  %v60 = vld [vmem:[%s2 + $0x18] sm:$0xff]
  %v61 = vld [vmem:[%s3] sm:$0x1]
  %v63 = vlaneseq
  %v64 = vshrl.u32 %v63, 7
  %v65 = vsub.s32 0, %v64
  %v66 = vrot.slane %v61, %v65
  %vm68 = vcmask 261120
  %v70 = vsel %vm68, %v41, 0
  %v73 = vsel %vm68, %v42, 0
  %v76 = vsel %vm68, %v43, 0
  %v79 = vsel %vm68, %v44, 0
  %v82 = vsel %vm68, %v45, 0
  %v85 = vsel %vm68, %v46, 0
  %v88 = vsel %vm68, %v47, 0
  %v91 = vsel %vm68, %v48, 0
  %v94 = vsel %vm68, %v49, 0
  %v97 = vsel %vm68, %v50, 0
  %v100 = vsel %vm68, %v51, 0
  %v103 = vsel %vm68, %v52, 0
  %v106 = vsel %vm68, %v53, 0
  %v109 = vsel %vm68, %v54, 0
  %v112 = vsel %vm68, %v55, 0
  %v115 = vsel %vm68, %v56, 0
  %117 = vmatprep.subr.mxu0 0.0
  %118 = vmatpush1.msra.mxu0 %v57
  %119 = vmatprep.subr.mxu0 0.0
  %120 = vmatpush1.msra.mxu0 %v58
  %121 = vmatprep.subr.mxu0 0.0
  %122 = vmatpush1.msra.mxu0 %v59
  %123 = vmatprep.subr.mxu0 0.0
  %124 = vmatpush1.msra.mxu0 %v60
  %125 = vmatprep.subr.mxu0 0.0
  %126 = vmatpush1.msra.mxu0 0.0
  %127 = vmatprep.subr.mxu0 0.0
  %128 = vmatpush1.msra.mxu0 0.0
  %129 = vmatprep.subr.mxu0 0.0
  %130 = vmatpush1.msra.mxu0 0.0
  %131 = vmatprep.subr.mxu0 0.0
  %132 = vmatpush1.msra.mxu0 0.0
  %133 = vmatprep.subr.mxu0 0.0
  %134 = vmatpush1.msra.mxu0 0.0
  %135 = vmatprep.subr.mxu0 0.0
  %136 = vmatpush1.msra.mxu0 0.0
  %137 = vmatprep.subr.mxu0 0.0
  %138 = vmatpush1.msra.mxu0 0.0
  %139 = vmatprep.subr.mxu0 0.0
  %140 = vmatpush1.msra.mxu0 0.0
  %141 = vmatprep.subr.mxu0 0.0
  %142 = vmatpush1.msra.mxu0 0.0
  %143 = vmatprep.subr.mxu0 0.0
  %144 = vmatpush1.msra.mxu0 0.0
  %145 = vmatprep.subr.mxu0 0.0
  %146 = vmatpush1.msra.mxu0 0.0
  %147 = vmatprep.subr.mxu0 0.0
  %148 = vmatpush1.msra.mxu0 0.0
  %149 = vmatprep.subr.mxu0 0.0
  %150 = vmatpush1.msra.mxu0 0.0
  %151 = vmatprep.subr.mxu0 0.0
  %152 = vmatpush1.msra.mxu0 0.0
  %153 = vmatprep.subr.mxu0 0.0
  %154 = vmatpush1.msra.mxu0 0.0
  %155 = vmatprep.subr.mxu0 0.0
  %156 = vmatpush1.msra.mxu0 0.0
  %157 = vmatprep.subr.mxu0 0.0
  %158 = vmatpush1.msra.mxu0 0.0
  %159 = vmatprep.subr.mxu0 0.0
  %160 = vmatpush1.msra.mxu0 0.0
  %161 = vmatprep.subr.mxu0 0.0
  %162 = vmatpush1.msra.mxu0 0.0
  %163 = vmatprep.subr.mxu0 0.0
  %164 = vmatpush1.msra.mxu0 0.0
  %165 = vmatprep.subr.mxu0 0.0
  %166 = vmatpush1.msra.mxu0 0.0
  %167 = vmatprep.subr.mxu0 0.0
  %168 = vmatpush1.msra.mxu0 0.0
  %169 = vmatprep.subr.mxu0 0.0
  %170 = vmatpush1.msra.mxu0 0.0
  %171 = vmatprep.subr.mxu0 0.0
  %172 = vmatpush1.msra.mxu0 0.0
  %173 = vmatprep.subr.mxu0 0.0
  %174 = vmatpush1.msra.mxu0 0.0
  %175 = vmatprep.subr.mxu0 0.0
  %176 = vmatpush1.msra.mxu0 0.0
  %177 = vmatprep.subr.mxu0 0.0
  %178 = vmatpush1.msra.mxu0 0.0
  %179 = vmatprep.subr.mxu0 0.0
  %180 = vmatpush1.msra.mxu0 0.0
  %181 = vmatprep.mubr.f32.mxu0 0.0
  %182 = vmatmul.mubr.f32.gmra.mrb[0].mxu0 %v70
  %v183 = vpop.f32.mrb[0].mxu0
  %v184 = vadd.f32 %v66, %v183
  %v185 = vpop.f32.mrb[0].mxu0
  %186 = vmatprep.mubr.f32.mxu0 0.0
  %187 = vmatmul.mubr.f32.gmra.mrb[0].mxu0 %v73
  %v188 = vpop.f32.mrb[0].mxu0
  %v189 = vadd.f32 %v66, %v188
  %v190 = vpop.f32.mrb[0].mxu0
  %191 = vmatprep.mubr.f32.mxu0 0.0
  %192 = vmatmul.mubr.f32.gmra.mrb[0].mxu0 %v76
  %v193 = vpop.f32.mrb[0].mxu0
  %v194 = vadd.f32 %v66, %v193
  %v195 = vpop.f32.mrb[0].mxu0
  %196 = vmatprep.mubr.f32.mxu0 0.0
  %197 = vmatmul.mubr.f32.gmra.mrb[0].mxu0 %v79
  %v198 = vpop.f32.mrb[0].mxu0
  %v199 = vadd.f32 %v66, %v198
  %v200 = vpop.f32.mrb[0].mxu0
  %201 = vmatprep.mubr.f32.mxu0 0.0
  %202 = vmatmul.mubr.f32.gmra.mrb[0].mxu0 %v82
  %v203 = vpop.f32.mrb[0].mxu0
  %v204 = vadd.f32 %v66, %v203
  %v205 = vpop.f32.mrb[0].mxu0
  %206 = vmatprep.mubr.f32.mxu0 0.0
  %207 = vmatmul.mubr.f32.gmra.mrb[0].mxu0 %v85
  %v208 = vpop.f32.mrb[0].mxu0
  %v209 = vadd.f32 %v66, %v208
  %v210 = vpop.f32.mrb[0].mxu0
  %211 = vmatprep.mubr.f32.mxu0 0.0
  %212 = vmatmul.mubr.f32.gmra.mrb[0].mxu0 %v88
  %v213 = vpop.f32.mrb[0].mxu0
  %v214 = vadd.f32 %v66, %v213
  %v215 = vpop.f32.mrb[0].mxu0
  %216 = vmatprep.mubr.f32.mxu0 0.0
  %217 = vmatmul.mubr.f32.gmra.mrb[0].mxu0 %v91
  %v218 = vpop.f32.mrb[0].mxu0
  %v219 = vadd.f32 %v66, %v218
  %v220 = vpop.f32.mrb[0].mxu0
  %221 = vmatprep.mubr.f32.mxu0 0.0
  %222 = vmatmul.mubr.f32.gmra.mrb[0].mxu0 %v94
  %v223 = vpop.f32.mrb[0].mxu0
  %v224 = vadd.f32 %v66, %v223
  %v225 = vpop.f32.mrb[0].mxu0
  %226 = vmatprep.mubr.f32.mxu0 0.0
  %227 = vmatmul.mubr.f32.gmra.mrb[0].mxu0 %v97
  %v228 = vpop.f32.mrb[0].mxu0
  %v229 = vadd.f32 %v66, %v228
  %v230 = vpop.f32.mrb[0].mxu0
  %231 = vmatprep.mubr.f32.mxu0 0.0
  %232 = vmatmul.mubr.f32.gmra.mrb[0].mxu0 %v100
  %v233 = vpop.f32.mrb[0].mxu0
  %v234 = vadd.f32 %v66, %v233
  %v235 = vpop.f32.mrb[0].mxu0
  %236 = vmatprep.mubr.f32.mxu0 0.0
  %237 = vmatmul.mubr.f32.gmra.mrb[0].mxu0 %v103
  %v238 = vpop.f32.mrb[0].mxu0
  %v239 = vadd.f32 %v66, %v238
  %v240 = vpop.f32.mrb[0].mxu0
  %241 = vmatprep.mubr.f32.mxu0 0.0
  %242 = vmatmul.mubr.f32.gmra.mrb[0].mxu0 %v106
  %v243 = vpop.f32.mrb[0].mxu0
  %v244 = vadd.f32 %v66, %v243
  %v245 = vpop.f32.mrb[0].mxu0
  %246 = vmatprep.mubr.f32.mxu0 0.0
  %247 = vmatmul.mubr.f32.gmra.mrb[0].mxu0 %v109
  %v248 = vpop.f32.mrb[0].mxu0
  %v249 = vadd.f32 %v66, %v248
  %v250 = vpop.f32.mrb[0].mxu0
  %251 = vmatprep.mubr.f32.mxu0 0.0
  %252 = vmatmul.mubr.f32.gmra.mrb[0].mxu0 %v112
  %v253 = vpop.f32.mrb[0].mxu0
  %v254 = vadd.f32 %v66, %v253
  %v255 = vpop.f32.mrb[0].mxu0
  %256 = vmatprep.mubr.f32.mxu0 0.0
  %257 = vmatmul.mubr.f32.gmra.mrb[0].mxu0 %v115
  %v258 = vpop.f32.mrb[0].mxu0
  %v259 = vadd.f32 %v66, %v258
  %v260 = vpop.f32.mrb[0].mxu0
  %261 = vdwg.mxu0
  %v262 = vld [vmem:[%s1] sm:$0xff]
  %v263 = vld [vmem:[%s1 + $0x8] sm:$0xff]
  %v264 = vld [vmem:[%s1 + $0x10] sm:$0xff]
  %v265 = vld [vmem:[%s1 + $0x18] sm:$0xff]
  %v266 = vld [vmem:[%s1 + $0x20] sm:$0xff]
  %v267 = vld [vmem:[%s1 + $0x28] sm:$0xff]
  %v268 = vld [vmem:[%s1 + $0x30] sm:$0xff]
  %v269 = vld [vmem:[%s1 + $0x38] sm:$0xff]
  %v270 = vld [vmem:[%s1 + $0x40] sm:$0xff]
  %v271 = vld [vmem:[%s1 + $0x48] sm:$0xff]
  %v272 = vld [vmem:[%s1 + $0x50] sm:$0xff]
  %v273 = vld [vmem:[%s1 + $0x58] sm:$0xff]
  %v274 = vld [vmem:[%s1 + $0x60] sm:$0xff]
  %v275 = vld [vmem:[%s1 + $0x68] sm:$0xff]
  %v276 = vld [vmem:[%s1 + $0x70] sm:$0xff]
  %v277 = vld [vmem:[%s1 + $0x78] sm:$0xff]
  %v278 = vld [vmem:[%s4] sm:$0x1]
  %v279 = vld [vmem:[%s5] sm:$0x1]
  %v280 = vsel %vm68, %v184, 0.0
  %281 = vadd.xlane.f32.xlu0 %v280
  %v282 = vpop.xlane.xlu0 %281
  %v283 = vsel %vm68, %v189, 0.0
  %284 = vadd.xlane.f32.xlu0 %v283
  %v285 = vpop.xlane.xlu0 %284
  %v286 = vsel %vm68, %v194, 0.0
  %287 = vadd.xlane.f32.xlu0 %v286
  %v288 = vpop.xlane.xlu0 %287
  %v289 = vsel %vm68, %v199, 0.0
  %290 = vadd.xlane.f32.xlu0 %v289
  %v291 = vpop.xlane.xlu0 %290
  %v292 = vsel %vm68, %v204, 0.0
  %293 = vadd.xlane.f32.xlu0 %v292
  %v294 = vpop.xlane.xlu0 %293
  %v295 = vsel %vm68, %v209, 0.0
  %296 = vadd.xlane.f32.xlu0 %v295
  %v297 = vpop.xlane.xlu0 %296
  %v298 = vsel %vm68, %v214, 0.0
  %299 = vadd.xlane.f32.xlu0 %v298
  %v300 = vpop.xlane.xlu0 %299
  %v301 = vsel %vm68, %v219, 0.0
  %302 = vadd.xlane.f32.xlu0 %v301
  %v303 = vpop.xlane.xlu0 %302
  %v304 = vsel %vm68, %v224, 0.0
  %305 = vadd.xlane.f32.xlu0 %v304
  %v306 = vpop.xlane.xlu0 %305
  %v307 = vsel %vm68, %v229, 0.0
  %308 = vadd.xlane.f32.xlu0 %v307
  %v309 = vpop.xlane.xlu0 %308
  %v310 = vsel %vm68, %v234, 0.0
  %311 = vadd.xlane.f32.xlu0 %v310
  %v312 = vpop.xlane.xlu0 %311
  %v313 = vsel %vm68, %v239, 0.0
  %314 = vadd.xlane.f32.xlu0 %v313
  %v315 = vpop.xlane.xlu0 %314
  %v316 = vsel %vm68, %v244, 0.0
  %317 = vadd.xlane.f32.xlu0 %v316
  %v318 = vpop.xlane.xlu0 %317
  %v319 = vsel %vm68, %v249, 0.0
  %320 = vadd.xlane.f32.xlu0 %v319
  %v321 = vpop.xlane.xlu0 %320
  %v322 = vsel %vm68, %v254, 0.0
  %323 = vadd.xlane.f32.xlu0 %v322
  %v324 = vpop.xlane.xlu0 %323
  %v325 = vsel %vm68, %v259, 0.0
  %326 = vadd.xlane.f32.xlu0 %v325
  %v327 = vpop.xlane.xlu0 %326
  %v328 = vrcp.pop 32.0
  %v329 = vmul.f32 %v282, %v328
  %v330 = vmul.f32 %v285, %v328
  %v331 = vmul.f32 %v288, %v328
  %v332 = vmul.f32 %v291, %v328
  %v333 = vmul.f32 %v294, %v328
  %v334 = vmul.f32 %v297, %v328
  %v335 = vmul.f32 %v300, %v328
  %v336 = vmul.f32 %v303, %v328
  %v337 = vmul.f32 %v306, %v328
  %v338 = vmul.f32 %v309, %v328
  %v339 = vmul.f32 %v312, %v328
  %v340 = vmul.f32 %v315, %v328
  %v341 = vmul.f32 %v318, %v328
  %v342 = vmul.f32 %v321, %v328
  %v343 = vmul.f32 %v324, %v328
  %v344 = vmul.f32 %v327, %v328
  %v345 = vsub.f32 %v184, %v329
  %v346 = vsub.f32 %v189, %v330
  %v347 = vsub.f32 %v194, %v331
  %v348 = vsub.f32 %v199, %v332
  %v349 = vsub.f32 %v204, %v333
  %v350 = vsub.f32 %v209, %v334
  %v351 = vsub.f32 %v214, %v335
  %v352 = vsub.f32 %v219, %v336
  %v353 = vsub.f32 %v224, %v337
  %v354 = vsub.f32 %v229, %v338
  %v355 = vsub.f32 %v234, %v339
  %v356 = vsub.f32 %v239, %v340
  %v357 = vsub.f32 %v244, %v341
  %v358 = vsub.f32 %v249, %v342
  %v359 = vsub.f32 %v254, %v343
  %v360 = vsub.f32 %v259, %v344
  %v361 = vmul.f32 %v345, %v345
  %v362 = vmul.f32 %v346, %v346
  %v363 = vmul.f32 %v347, %v347
  %v364 = vmul.f32 %v348, %v348
  %v365 = vmul.f32 %v349, %v349
  %v366 = vmul.f32 %v350, %v350
  %v367 = vmul.f32 %v351, %v351
  %v368 = vmul.f32 %v352, %v352
  %v369 = vmul.f32 %v353, %v353
  %v370 = vmul.f32 %v354, %v354
  %v371 = vmul.f32 %v355, %v355
  %v372 = vmul.f32 %v356, %v356
  %v373 = vmul.f32 %v357, %v357
  %v374 = vmul.f32 %v358, %v358
  %v375 = vmul.f32 %v359, %v359
  %v376 = vmul.f32 %v360, %v360
  %v377 = vsel %vm68, %v361, 0.0
  %378 = vadd.xlane.f32.xlu0 %v377
  %v379 = vpop.xlane.xlu0 %378
  %v380 = vsel %vm68, %v362, 0.0
  %381 = vadd.xlane.f32.xlu0 %v380
  %v382 = vpop.xlane.xlu0 %381
  %v383 = vsel %vm68, %v363, 0.0
  %384 = vadd.xlane.f32.xlu0 %v383
  %v385 = vpop.xlane.xlu0 %384
  %v386 = vsel %vm68, %v364, 0.0
  %387 = vadd.xlane.f32.xlu0 %v386
  %v388 = vpop.xlane.xlu0 %387
  %v389 = vsel %vm68, %v365, 0.0
  %390 = vadd.xlane.f32.xlu0 %v389
  %v391 = vpop.xlane.xlu0 %390
  %v392 = vsel %vm68, %v366, 0.0
  %393 = vadd.xlane.f32.xlu0 %v392
  %v394 = vpop.xlane.xlu0 %393
  %v395 = vsel %vm68, %v367, 0.0
  %396 = vadd.xlane.f32.xlu0 %v395
  %v397 = vpop.xlane.xlu0 %396
  %v398 = vsel %vm68, %v368, 0.0
  %399 = vadd.xlane.f32.xlu0 %v398
  %v400 = vpop.xlane.xlu0 %399
  %v401 = vsel %vm68, %v369, 0.0
  %402 = vadd.xlane.f32.xlu0 %v401
  %v403 = vpop.xlane.xlu0 %402
  %v404 = vsel %vm68, %v370, 0.0
  %405 = vadd.xlane.f32.xlu0 %v404
  %v406 = vpop.xlane.xlu0 %405
  %v407 = vsel %vm68, %v371, 0.0
  %408 = vadd.xlane.f32.xlu0 %v407
  %v409 = vpop.xlane.xlu0 %408
  %v410 = vsel %vm68, %v372, 0.0
  %411 = vadd.xlane.f32.xlu0 %v410
  %v412 = vpop.xlane.xlu0 %411
  %v413 = vsel %vm68, %v373, 0.0
  %414 = vadd.xlane.f32.xlu0 %v413
  %v415 = vpop.xlane.xlu0 %414
  %v416 = vsel %vm68, %v374, 0.0
  %417 = vadd.xlane.f32.xlu0 %v416
  %v418 = vpop.xlane.xlu0 %417
  %v419 = vsel %vm68, %v375, 0.0
  %420 = vadd.xlane.f32.xlu0 %v419
  %v421 = vpop.xlane.xlu0 %420
  %v422 = vsel %vm68, %v376, 0.0
  %423 = vadd.xlane.f32.xlu0 %v422
  %v424 = vpop.xlane.xlu0 %423
  %v425 = vmul.f32 %v379, %v328
  %v426 = vmul.f32 %v382, %v328
  %v427 = vmul.f32 %v385, %v328
  %v428 = vmul.f32 %v388, %v328
  %v429 = vmul.f32 %v391, %v328
  %v430 = vmul.f32 %v394, %v328
  %v431 = vmul.f32 %v397, %v328
  %v432 = vmul.f32 %v400, %v328
  %v433 = vmul.f32 %v403, %v328
  %v434 = vmul.f32 %v406, %v328
  %v435 = vmul.f32 %v409, %v328
  %v436 = vmul.f32 %v412, %v328
  %v437 = vmul.f32 %v415, %v328
  %v438 = vmul.f32 %v418, %v328
  %v439 = vmul.f32 %v421, %v328
  %v440 = vmul.f32 %v424, %v328
  %v441 = vadd.f32 %v425, 1e-05
  %v442 = vadd.f32 %v426, 1e-05
  %v443 = vadd.f32 %v427, 1e-05
  %v444 = vadd.f32 %v428, 1e-05
  %v445 = vadd.f32 %v429, 1e-05
  %v446 = vadd.f32 %v430, 1e-05
  %v447 = vadd.f32 %v431, 1e-05
  %v448 = vadd.f32 %v432, 1e-05
  %v449 = vadd.f32 %v433, 1e-05
  %v450 = vadd.f32 %v434, 1e-05
  %v451 = vadd.f32 %v435, 1e-05
  %v452 = vadd.f32 %v436, 1e-05
  %v453 = vadd.f32 %v437, 1e-05
  %v454 = vadd.f32 %v438, 1e-05
  %v455 = vadd.f32 %v439, 1e-05
  %v456 = vadd.f32 %v440, 1e-05
  %v457 = vrsqrt.pop %v441
  %v458 = vrsqrt.pop %v442
  %v459 = vrsqrt.pop %v443
  %v460 = vrsqrt.pop %v444
  %v461 = vrsqrt.pop %v445
  %v462 = vrsqrt.pop %v446
  %v463 = vrsqrt.pop %v447
  %v464 = vrsqrt.pop %v448
  %v465 = vrsqrt.pop %v449
  %v466 = vrsqrt.pop %v450
  %v467 = vrsqrt.pop %v451
  %v468 = vrsqrt.pop %v452
  %v469 = vrsqrt.pop %v453
  %v470 = vrsqrt.pop %v454
  %v471 = vrsqrt.pop %v455
  %v472 = vrsqrt.pop %v456
  %v473 = vmul.f32 %v345, %v457
  %v474 = vmul.f32 %v346, %v458
  %v475 = vmul.f32 %v347, %v459
  %v476 = vmul.f32 %v348, %v460
  %v477 = vmul.f32 %v349, %v461
  %v478 = vmul.f32 %v350, %v462
  %v479 = vmul.f32 %v351, %v463
  %v480 = vmul.f32 %v352, %v464
  %v481 = vmul.f32 %v353, %v465
  %v482 = vmul.f32 %v354, %v466
  %v483 = vmul.f32 %v355, %v467
  %v484 = vmul.f32 %v356, %v468
  %v485 = vmul.f32 %v357, %v469
  %v486 = vmul.f32 %v358, %v470
  %v487 = vmul.f32 %v359, %v471
  %v488 = vmul.f32 %v360, %v472
  %v490 = vlaneseq
  %v491 = vshrl.u32 %v490, 7
  %v492 = vsub.s32 0, %v491
  %v493 = vrot.slane %v278, %v492
  %v495 = vmul.f32 %v473, %v493
  %v496 = vmul.f32 %v474, %v493
  %v497 = vmul.f32 %v475, %v493
  %v498 = vmul.f32 %v476, %v493
  %v499 = vmul.f32 %v477, %v493
  %v500 = vmul.f32 %v478, %v493
  %v501 = vmul.f32 %v479, %v493
  %v502 = vmul.f32 %v480, %v493
  %v503 = vmul.f32 %v481, %v493
  %v504 = vmul.f32 %v482, %v493
  %v505 = vmul.f32 %v483, %v493
  %v506 = vmul.f32 %v484, %v493
  %v507 = vmul.f32 %v485, %v493
  %v508 = vmul.f32 %v486, %v493
  %v509 = vmul.f32 %v487, %v493
  %v510 = vmul.f32 %v488, %v493
  %v512 = vlaneseq
  %v513 = vshrl.u32 %v512, 7
  %v514 = vsub.s32 0, %v513
  %v515 = vrot.slane %v279, %v514
  %v517 = vadd.f32 %v495, %v515
  %v518 = vadd.f32 %v496, %v515
  %v519 = vadd.f32 %v497, %v515
  %v520 = vadd.f32 %v498, %v515
  %v521 = vadd.f32 %v499, %v515
  %v522 = vadd.f32 %v500, %v515
  %v523 = vadd.f32 %v501, %v515
  %v524 = vadd.f32 %v502, %v515
  %v525 = vadd.f32 %v503, %v515
  %v526 = vadd.f32 %v504, %v515
  %v527 = vadd.f32 %v505, %v515
  %v528 = vadd.f32 %v506, %v515
  %v529 = vadd.f32 %v507, %v515
  %v530 = vadd.f32 %v508, %v515
  %v531 = vadd.f32 %v509, %v515
  %v532 = vadd.f32 %v510, %v515
  %v533 = vadd.f32 %v262, %v517
  %v534 = vadd.f32 %v263, %v518
  %v535 = vadd.f32 %v264, %v519
  %v536 = vadd.f32 %v265, %v520
  %v537 = vadd.f32 %v266, %v521
  %v538 = vadd.f32 %v267, %v522
  %v539 = vadd.f32 %v268, %v523
  %v540 = vadd.f32 %v269, %v524
  %v541 = vadd.f32 %v270, %v525
  %v542 = vadd.f32 %v271, %v526
  %v543 = vadd.f32 %v272, %v527
  %v544 = vadd.f32 %v273, %v528
  %v545 = vadd.f32 %v274, %v529
  %v546 = vadd.f32 %v275, %v530
  %v547 = vadd.f32 %v276, %v531
  %v548 = vadd.f32 %v277, %v532
  %v549 = vld [vmem:[%s6] sm:$0xff]
  %v550 = vld [vmem:[%s6 + $0x8] sm:$0xff]
  %v551 = vld [vmem:[%s6 + $0x10] sm:$0xff]
  %v552 = vld [vmem:[%s6 + $0x18] sm:$0xff]
  %v553 = vld [vmem:[%s7] sm:$0x1]
  %v555 = vlaneseq
  %v556 = vshrl.u32 %v555, 7
  %v557 = vsub.s32 0, %v556
  %v558 = vrot.slane %v553, %v557
  %v561 = vsel %vm68, %v533, 0
  %v564 = vsel %vm68, %v534, 0
  %v567 = vsel %vm68, %v535, 0
  %v570 = vsel %vm68, %v536, 0
  %v573 = vsel %vm68, %v537, 0
  %v576 = vsel %vm68, %v538, 0
  %v579 = vsel %vm68, %v539, 0
  %v582 = vsel %vm68, %v540, 0
  %v585 = vsel %vm68, %v541, 0
  %v588 = vsel %vm68, %v542, 0
  %v591 = vsel %vm68, %v543, 0
  %v594 = vsel %vm68, %v544, 0
  %v597 = vsel %vm68, %v545, 0
  %v600 = vsel %vm68, %v546, 0
  %v603 = vsel %vm68, %v547, 0
  %v606 = vsel %vm68, %v548, 0
  %608 = vmatprep.subr.mxu0 0.0
  %609 = vmatpush1.msra.mxu0 %v549
  %610 = vmatprep.subr.mxu0 0.0
  %611 = vmatpush1.msra.mxu0 %v550
  %612 = vmatprep.subr.mxu0 0.0
  %613 = vmatpush1.msra.mxu0 %v551
  %614 = vmatprep.subr.mxu0 0.0
  %615 = vmatpush1.msra.mxu0 %v552
  %616 = vmatprep.subr.mxu0 0.0
  %617 = vmatpush1.msra.mxu0 0.0
  %618 = vmatprep.subr.mxu0 0.0
  %619 = vmatpush1.msra.mxu0 0.0
  %620 = vmatprep.subr.mxu0 0.0
  %621 = vmatpush1.msra.mxu0 0.0
  %622 = vmatprep.subr.mxu0 0.0
  %623 = vmatpush1.msra.mxu0 0.0
  %624 = vmatprep.subr.mxu0 0.0
  %625 = vmatpush1.msra.mxu0 0.0
  %626 = vmatprep.subr.mxu0 0.0
  %627 = vmatpush1.msra.mxu0 0.0
  %628 = vmatprep.subr.mxu0 0.0
  %629 = vmatpush1.msra.mxu0 0.0
  %630 = vmatprep.subr.mxu0 0.0
  %631 = vmatpush1.msra.mxu0 0.0
  %632 = vmatprep.subr.mxu0 0.0
  %633 = vmatpush1.msra.mxu0 0.0
  %634 = vmatprep.subr.mxu0 0.0
  %635 = vmatpush1.msra.mxu0 0.0
  %636 = vmatprep.subr.mxu0 0.0
  %637 = vmatpush1.msra.mxu0 0.0
  %638 = vmatprep.subr.mxu0 0.0
  %639 = vmatpush1.msra.mxu0 0.0
  %640 = vmatprep.subr.mxu0 0.0
  %641 = vmatpush1.msra.mxu0 0.0
  %642 = vmatprep.subr.mxu0 0.0
  %643 = vmatpush1.msra.mxu0 0.0
  %644 = vmatprep.subr.mxu0 0.0
  %645 = vmatpush1.msra.mxu0 0.0
  %646 = vmatprep.subr.mxu0 0.0
  %647 = vmatpush1.msra.mxu0 0.0
  %648 = vmatprep.subr.mxu0 0.0
  %649 = vmatpush1.msra.mxu0 0.0
  %650 = vmatprep.subr.mxu0 0.0
  %651 = vmatpush1.msra.mxu0 0.0
  %652 = vmatprep.subr.mxu0 0.0
  %653 = vmatpush1.msra.mxu0 0.0
  %654 = vmatprep.subr.mxu0 0.0
  %655 = vmatpush1.msra.mxu0 0.0
  %656 = vmatprep.subr.mxu0 0.0
  %657 = vmatpush1.msra.mxu0 0.0
  %658 = vmatprep.subr.mxu0 0.0
  %659 = vmatpush1.msra.mxu0 0.0
  %660 = vmatprep.subr.mxu0 0.0
  %661 = vmatpush1.msra.mxu0 0.0
  %662 = vmatprep.subr.mxu0 0.0
  %663 = vmatpush1.msra.mxu0 0.0
  %664 = vmatprep.subr.mxu0 0.0
  %665 = vmatpush1.msra.mxu0 0.0
  %666 = vmatprep.subr.mxu0 0.0
  %667 = vmatpush1.msra.mxu0 0.0
  %668 = vmatprep.subr.mxu0 0.0
  %669 = vmatpush1.msra.mxu0 0.0
  %670 = vmatprep.subr.mxu0 0.0
  %671 = vmatpush1.msra.mxu0 0.0
  %672 = vmatprep.mubr.f32.mxu0 0.0
  %673 = vmatmul.mubr.f32.gmra.mrb[0].mxu0 %v561
  %v674 = vpop.f32.mrb[0].mxu0
  %v675 = vadd.f32 %v558, %v674
  %v676 = vpop.f32.mrb[0].mxu0
  %677 = vmatprep.mubr.f32.mxu0 0.0
  %678 = vmatmul.mubr.f32.gmra.mrb[0].mxu0 %v564
  %v679 = vpop.f32.mrb[0].mxu0
  %v680 = vadd.f32 %v558, %v679
  %v681 = vpop.f32.mrb[0].mxu0
  %682 = vmatprep.mubr.f32.mxu0 0.0
  %683 = vmatmul.mubr.f32.gmra.mrb[0].mxu0 %v567
  %v684 = vpop.f32.mrb[0].mxu0
  %v685 = vadd.f32 %v558, %v684
  %v686 = vpop.f32.mrb[0].mxu0
  %687 = vmatprep.mubr.f32.mxu0 0.0
  %688 = vmatmul.mubr.f32.gmra.mrb[0].mxu0 %v570
  %v689 = vpop.f32.mrb[0].mxu0
  %v690 = vadd.f32 %v558, %v689
  %v691 = vpop.f32.mrb[0].mxu0
  %692 = vmatprep.mubr.f32.mxu0 0.0
  %693 = vmatmul.mubr.f32.gmra.mrb[0].mxu0 %v573
  %v694 = vpop.f32.mrb[0].mxu0
  %v695 = vadd.f32 %v558, %v694
  %v696 = vpop.f32.mrb[0].mxu0
  %697 = vmatprep.mubr.f32.mxu0 0.0
  %698 = vmatmul.mubr.f32.gmra.mrb[0].mxu0 %v576
  %v699 = vpop.f32.mrb[0].mxu0
  %v700 = vadd.f32 %v558, %v699
  %v701 = vpop.f32.mrb[0].mxu0
  %702 = vmatprep.mubr.f32.mxu0 0.0
  %703 = vmatmul.mubr.f32.gmra.mrb[0].mxu0 %v579
  %v704 = vpop.f32.mrb[0].mxu0
  %v705 = vadd.f32 %v558, %v704
  %v706 = vpop.f32.mrb[0].mxu0
  %707 = vmatprep.mubr.f32.mxu0 0.0
  %708 = vmatmul.mubr.f32.gmra.mrb[0].mxu0 %v582
  %v709 = vpop.f32.mrb[0].mxu0
  %v710 = vadd.f32 %v558, %v709
  %v711 = vpop.f32.mrb[0].mxu0
  %712 = vmatprep.mubr.f32.mxu0 0.0
  %713 = vmatmul.mubr.f32.gmra.mrb[0].mxu0 %v585
  %v714 = vpop.f32.mrb[0].mxu0
  %v715 = vadd.f32 %v558, %v714
  %v716 = vpop.f32.mrb[0].mxu0
  %717 = vmatprep.mubr.f32.mxu0 0.0
  %718 = vmatmul.mubr.f32.gmra.mrb[0].mxu0 %v588
  %v719 = vpop.f32.mrb[0].mxu0
  %v720 = vadd.f32 %v558, %v719
  %v721 = vpop.f32.mrb[0].mxu0
  %722 = vmatprep.mubr.f32.mxu0 0.0
  %723 = vmatmul.mubr.f32.gmra.mrb[0].mxu0 %v591
  %v724 = vpop.f32.mrb[0].mxu0
  %v725 = vadd.f32 %v558, %v724
  %v726 = vpop.f32.mrb[0].mxu0
  %727 = vmatprep.mubr.f32.mxu0 0.0
  %728 = vmatmul.mubr.f32.gmra.mrb[0].mxu0 %v594
  %v729 = vpop.f32.mrb[0].mxu0
  %v730 = vadd.f32 %v558, %v729
  %v731 = vpop.f32.mrb[0].mxu0
  %732 = vmatprep.mubr.f32.mxu0 0.0
  %733 = vmatmul.mubr.f32.gmra.mrb[0].mxu0 %v597
  %v734 = vpop.f32.mrb[0].mxu0
  %v735 = vadd.f32 %v558, %v734
  %v736 = vpop.f32.mrb[0].mxu0
  %737 = vmatprep.mubr.f32.mxu0 0.0
  %738 = vmatmul.mubr.f32.gmra.mrb[0].mxu0 %v600
  %v739 = vpop.f32.mrb[0].mxu0
  %v740 = vadd.f32 %v558, %v739
  %v741 = vpop.f32.mrb[0].mxu0
  %742 = vmatprep.mubr.f32.mxu0 0.0
  %743 = vmatmul.mubr.f32.gmra.mrb[0].mxu0 %v603
  %v744 = vpop.f32.mrb[0].mxu0
  %v745 = vadd.f32 %v558, %v744
  %v746 = vpop.f32.mrb[0].mxu0
  %747 = vmatprep.mubr.f32.mxu0 0.0
  %748 = vmatmul.mubr.f32.gmra.mrb[0].mxu0 %v606
  %v749 = vpop.f32.mrb[0].mxu0
  %v750 = vadd.f32 %v558, %v749
  %v751 = vpop.f32.mrb[0].mxu0
  %752 = vdwg.mxu0
  %v753 = vmul.f32 %v675, 0.5
  %v754 = vmul.f32 %v680, 0.5
  %v755 = vmul.f32 %v685, 0.5
  %v756 = vmul.f32 %v690, 0.5
  %v757 = vmul.f32 %v695, 0.5
  %v758 = vmul.f32 %v700, 0.5
  %v759 = vmul.f32 %v705, 0.5
  %v760 = vmul.f32 %v710, 0.5
  %v761 = vmul.f32 %v715, 0.5
  %v762 = vmul.f32 %v720, 0.5
  %v763 = vmul.f32 %v725, 0.5
  %v764 = vmul.f32 %v730, 0.5
  %v765 = vmul.f32 %v735, 0.5
  %v766 = vmul.f32 %v740, 0.5
  %v767 = vmul.f32 %v745, 0.5
  %v768 = vmul.f32 %v750, 0.5
  %v769 = vmul.f32 %v675, 0.70710677
  %v770 = vmul.f32 %v680, 0.70710677
  %v771 = vmul.f32 %v685, 0.70710677
  %v772 = vmul.f32 %v690, 0.70710677
  %v773 = vmul.f32 %v695, 0.70710677
  %v774 = vmul.f32 %v700, 0.70710677
  %v775 = vmul.f32 %v705, 0.70710677
  %v776 = vmul.f32 %v710, 0.70710677
  %v777 = vmul.f32 %v715, 0.70710677
  %v778 = vmul.f32 %v720, 0.70710677
  %v779 = vmul.f32 %v725, 0.70710677
  %v780 = vmul.f32 %v730, 0.70710677
  %v781 = vmul.f32 %v735, 0.70710677
  %v782 = vmul.f32 %v740, 0.70710677
  %v783 = vmul.f32 %v745, 0.70710677
  %v784 = vmul.f32 %v750, 0.70710677
  %v785 = verf.f32.pop %v769
  %v786 = verf.f32.pop %v770
  %v787 = verf.f32.pop %v771
  %v788 = verf.f32.pop %v772
  %v789 = verf.f32.pop %v773
  %v790 = verf.f32.pop %v774
  %v791 = verf.f32.pop %v775
  %v792 = verf.f32.pop %v776
  %v793 = verf.f32.pop %v777
  %v794 = verf.f32.pop %v778
  %v795 = verf.f32.pop %v779
  %v796 = verf.f32.pop %v780
  %v797 = verf.f32.pop %v781
  %v798 = verf.f32.pop %v782
  %v799 = verf.f32.pop %v783
  %v800 = verf.f32.pop %v784
  %v801 = vadd.f32 %v785, 1.0
  %v802 = vadd.f32 %v786, 1.0
  %v803 = vadd.f32 %v787, 1.0
  %v804 = vadd.f32 %v788, 1.0
  %v805 = vadd.f32 %v789, 1.0
  %v806 = vadd.f32 %v790, 1.0
  %v807 = vadd.f32 %v791, 1.0
  %v808 = vadd.f32 %v792, 1.0
  %v809 = vadd.f32 %v793, 1.0
  %v810 = vadd.f32 %v794, 1.0
  %v811 = vadd.f32 %v795, 1.0
  %v812 = vadd.f32 %v796, 1.0
  %v813 = vadd.f32 %v797, 1.0
  %v814 = vadd.f32 %v798, 1.0
  %v815 = vadd.f32 %v799, 1.0
  %v816 = vadd.f32 %v800, 1.0
  %v817 = vmul.f32 %v753, %v801
  %v818 = vmul.f32 %v754, %v802
  %v819 = vmul.f32 %v755, %v803
  %v820 = vmul.f32 %v756, %v804
  %v821 = vmul.f32 %v757, %v805
  %v822 = vmul.f32 %v758, %v806
  %v823 = vmul.f32 %v759, %v807
  %v824 = vmul.f32 %v760, %v808
  %v825 = vmul.f32 %v761, %v809
  %v826 = vmul.f32 %v762, %v810
  %v827 = vmul.f32 %v763, %v811
  %v828 = vmul.f32 %v764, %v812
  %v829 = vmul.f32 %v765, %v813
  %v830 = vmul.f32 %v766, %v814
  %v831 = vmul.f32 %v767, %v815
  %v832 = vmul.f32 %v768, %v816
  %v833 = vld [vmem:[%s8] sm:$0xff]
  %v834 = vld [vmem:[%s8 + $0x8] sm:$0xff]
  %v835 = vld [vmem:[%s8 + $0x10] sm:$0xff]
  %v836 = vld [vmem:[%s8 + $0x18] sm:$0xff]
  %v837 = vld [vmem:[%s8 + $0x20] sm:$0xff]
  %v838 = vld [vmem:[%s8 + $0x28] sm:$0xff]
  %v839 = vld [vmem:[%s8 + $0x30] sm:$0xff]
  %v840 = vld [vmem:[%s8 + $0x38] sm:$0xff]
  %v841 = vld [vmem:[%s8 + $0x40] sm:$0xff]
  %v842 = vld [vmem:[%s8 + $0x48] sm:$0xff]
  %v843 = vld [vmem:[%s8 + $0x50] sm:$0xff]
  %v844 = vld [vmem:[%s8 + $0x58] sm:$0xff]
  %v845 = vld [vmem:[%s8 + $0x60] sm:$0xff]
  %v846 = vld [vmem:[%s8 + $0x68] sm:$0xff]
  %v847 = vld [vmem:[%s8 + $0x70] sm:$0xff]
  %v848 = vld [vmem:[%s8 + $0x78] sm:$0xff]
  %v849 = vld [vmem:[%s9] sm:$0x1]
  %v851 = vlaneseq
  %v852 = vshrl.u32 %v851, 7
  %v853 = vsub.s32 0, %v852
  %v854 = vrot.slane %v849, %v853
  %856 = vmatprep.subr.mxu0 0.0
  %857 = vmatpush1.msra.mxu0 %v833
  %858 = vmatprep.subr.mxu0 0.0
  %859 = vmatpush1.msra.mxu0 %v834
  %860 = vmatprep.subr.mxu0 0.0
  %861 = vmatpush1.msra.mxu0 %v835
  %862 = vmatprep.subr.mxu0 0.0
  %863 = vmatpush1.msra.mxu0 %v836
  %864 = vmatprep.subr.mxu0 0.0
  %865 = vmatpush1.msra.mxu0 %v837
  %866 = vmatprep.subr.mxu0 0.0
  %867 = vmatpush1.msra.mxu0 %v838
  %868 = vmatprep.subr.mxu0 0.0
  %869 = vmatpush1.msra.mxu0 %v839
  %870 = vmatprep.subr.mxu0 0.0
  %871 = vmatpush1.msra.mxu0 %v840
  %872 = vmatprep.subr.mxu0 0.0
  %873 = vmatpush1.msra.mxu0 %v841
  %874 = vmatprep.subr.mxu0 0.0
  %875 = vmatpush1.msra.mxu0 %v842
  %876 = vmatprep.subr.mxu0 0.0
  %877 = vmatpush1.msra.mxu0 %v843
  %878 = vmatprep.subr.mxu0 0.0
  %879 = vmatpush1.msra.mxu0 %v844
  %880 = vmatprep.subr.mxu0 0.0
  %881 = vmatpush1.msra.mxu0 %v845
  %882 = vmatprep.subr.mxu0 0.0
  %883 = vmatpush1.msra.mxu0 %v846
  %884 = vmatprep.subr.mxu0 0.0
  %885 = vmatpush1.msra.mxu0 %v847
  %886 = vmatprep.subr.mxu0 0.0
  %887 = vmatpush1.msra.mxu0 %v848
  %888 = vmatprep.subr.mxu0 0.0
  %889 = vmatpush1.msra.mxu0 0.0
  %890 = vmatprep.subr.mxu0 0.0
  %891 = vmatpush1.msra.mxu0 0.0
  %892 = vmatprep.subr.mxu0 0.0
  %893 = vmatpush1.msra.mxu0 0.0
  %894 = vmatprep.subr.mxu0 0.0
  %895 = vmatpush1.msra.mxu0 0.0
  %896 = vmatprep.subr.mxu0 0.0
  %897 = vmatpush1.msra.mxu0 0.0
  %898 = vmatprep.subr.mxu0 0.0
  %899 = vmatpush1.msra.mxu0 0.0
  %900 = vmatprep.subr.mxu0 0.0
  %901 = vmatpush1.msra.mxu0 0.0
  %902 = vmatprep.subr.mxu0 0.0
  %903 = vmatpush1.msra.mxu0 0.0
  %904 = vmatprep.subr.mxu0 0.0
  %905 = vmatpush1.msra.mxu0 0.0
  %906 = vmatprep.subr.mxu0 0.0
  %907 = vmatpush1.msra.mxu0 0.0
  %908 = vmatprep.subr.mxu0 0.0
  %909 = vmatpush1.msra.mxu0 0.0
  %910 = vmatprep.subr.mxu0 0.0
  %911 = vmatpush1.msra.mxu0 0.0
  %912 = vmatprep.subr.mxu0 0.0
  %913 = vmatpush1.msra.mxu0 0.0
  %914 = vmatprep.subr.mxu0 0.0
  %915 = vmatpush1.msra.mxu0 0.0
  %916 = vmatprep.subr.mxu0 0.0
  %917 = vmatpush1.msra.mxu0 0.0
  %918 = vmatprep.subr.mxu0 0.0
  %919 = vmatpush1.msra.mxu0 0.0
  %920 = vmatprep.mubr.f32.mxu0 0.0
  %921 = vmatmul.mubr.f32.gmra.mrb[0].mxu0 %v817
  %v922 = vpop.f32.mrb[0].mxu0
  %v923 = vadd.f32 %v854, %v922
  %v924 = vpop.f32.mrb[0].mxu0
  %925 = vmatprep.mubr.f32.mxu0 0.0
  %926 = vmatmul.mubr.f32.gmra.mrb[0].mxu0 %v818
  %v927 = vpop.f32.mrb[0].mxu0
  %v928 = vadd.f32 %v854, %v927
  %v929 = vpop.f32.mrb[0].mxu0
  %930 = vmatprep.mubr.f32.mxu0 0.0
  %931 = vmatmul.mubr.f32.gmra.mrb[0].mxu0 %v819
  %v932 = vpop.f32.mrb[0].mxu0
  %v933 = vadd.f32 %v854, %v932
  %v934 = vpop.f32.mrb[0].mxu0
  %935 = vmatprep.mubr.f32.mxu0 0.0
  %936 = vmatmul.mubr.f32.gmra.mrb[0].mxu0 %v820
  %v937 = vpop.f32.mrb[0].mxu0
  %v938 = vadd.f32 %v854, %v937
  %v939 = vpop.f32.mrb[0].mxu0
  %940 = vmatprep.mubr.f32.mxu0 0.0
  %941 = vmatmul.mubr.f32.gmra.mrb[0].mxu0 %v821
  %v942 = vpop.f32.mrb[0].mxu0
  %v943 = vadd.f32 %v854, %v942
  %v944 = vpop.f32.mrb[0].mxu0
  %945 = vmatprep.mubr.f32.mxu0 0.0
  %946 = vmatmul.mubr.f32.gmra.mrb[0].mxu0 %v822
  %v947 = vpop.f32.mrb[0].mxu0
  %v948 = vadd.f32 %v854, %v947
  %v949 = vpop.f32.mrb[0].mxu0
  %950 = vmatprep.mubr.f32.mxu0 0.0
  %951 = vmatmul.mubr.f32.gmra.mrb[0].mxu0 %v823
  %v952 = vpop.f32.mrb[0].mxu0
  %v953 = vadd.f32 %v854, %v952
  %v954 = vpop.f32.mrb[0].mxu0
  %955 = vmatprep.mubr.f32.mxu0 0.0
  %956 = vmatmul.mubr.f32.gmra.mrb[0].mxu0 %v824
  %v957 = vpop.f32.mrb[0].mxu0
  %v958 = vadd.f32 %v854, %v957
  %v959 = vpop.f32.mrb[0].mxu0
  %960 = vmatprep.mubr.f32.mxu0 0.0
  %961 = vmatmul.mubr.f32.gmra.mrb[0].mxu0 %v825
  %v962 = vpop.f32.mrb[0].mxu0
  %v963 = vadd.f32 %v854, %v962
  %v964 = vpop.f32.mrb[0].mxu0
  %965 = vmatprep.mubr.f32.mxu0 0.0
  %966 = vmatmul.mubr.f32.gmra.mrb[0].mxu0 %v826
  %v967 = vpop.f32.mrb[0].mxu0
  %v968 = vadd.f32 %v854, %v967
  %v969 = vpop.f32.mrb[0].mxu0
  %970 = vmatprep.mubr.f32.mxu0 0.0
  %971 = vmatmul.mubr.f32.gmra.mrb[0].mxu0 %v827
  %v972 = vpop.f32.mrb[0].mxu0
  %v973 = vadd.f32 %v854, %v972
  %v974 = vpop.f32.mrb[0].mxu0
  %975 = vmatprep.mubr.f32.mxu0 0.0
  %976 = vmatmul.mubr.f32.gmra.mrb[0].mxu0 %v828
  %v977 = vpop.f32.mrb[0].mxu0
  %v978 = vadd.f32 %v854, %v977
  %v979 = vpop.f32.mrb[0].mxu0
  %980 = vmatprep.mubr.f32.mxu0 0.0
  %981 = vmatmul.mubr.f32.gmra.mrb[0].mxu0 %v829
  %v982 = vpop.f32.mrb[0].mxu0
  %v983 = vadd.f32 %v854, %v982
  %v984 = vpop.f32.mrb[0].mxu0
  %985 = vmatprep.mubr.f32.mxu0 0.0
  %986 = vmatmul.mubr.f32.gmra.mrb[0].mxu0 %v830
  %v987 = vpop.f32.mrb[0].mxu0
  %v988 = vadd.f32 %v854, %v987
  %v989 = vpop.f32.mrb[0].mxu0
  %990 = vmatprep.mubr.f32.mxu0 0.0
  %991 = vmatmul.mubr.f32.gmra.mrb[0].mxu0 %v831
  %v992 = vpop.f32.mrb[0].mxu0
  %v993 = vadd.f32 %v854, %v992
  %v994 = vpop.f32.mrb[0].mxu0
  %995 = vmatprep.mubr.f32.mxu0 0.0
  %996 = vmatmul.mubr.f32.gmra.mrb[0].mxu0 %v832
  %v997 = vpop.f32.mrb[0].mxu0
  %v998 = vadd.f32 %v854, %v997
  %v999 = vpop.f32.mrb[0].mxu0
  %1000 = vdwg.mxu0
  %v1001 = vld [vmem:[%s10] sm:$0x1]
  %v1002 = vld [vmem:[%s11] sm:$0x1]
  %v1003 = vsel %vm68, %v923, 0.0
  %1004 = vadd.xlane.f32.xlu0 %v1003
  %v1005 = vpop.xlane.xlu0 %1004
  %v1006 = vsel %vm68, %v928, 0.0
  %1007 = vadd.xlane.f32.xlu0 %v1006
  %v1008 = vpop.xlane.xlu0 %1007
  %v1009 = vsel %vm68, %v933, 0.0
  %1010 = vadd.xlane.f32.xlu0 %v1009
  %v1011 = vpop.xlane.xlu0 %1010
  %v1012 = vsel %vm68, %v938, 0.0
  %1013 = vadd.xlane.f32.xlu0 %v1012
  %v1014 = vpop.xlane.xlu0 %1013
  %v1015 = vsel %vm68, %v943, 0.0
  %1016 = vadd.xlane.f32.xlu0 %v1015
  %v1017 = vpop.xlane.xlu0 %1016
  %v1018 = vsel %vm68, %v948, 0.0
  %1019 = vadd.xlane.f32.xlu0 %v1018
  %v1020 = vpop.xlane.xlu0 %1019
  %v1021 = vsel %vm68, %v953, 0.0
  %1022 = vadd.xlane.f32.xlu0 %v1021
  %v1023 = vpop.xlane.xlu0 %1022
  %v1024 = vsel %vm68, %v958, 0.0
  %1025 = vadd.xlane.f32.xlu0 %v1024
  %v1026 = vpop.xlane.xlu0 %1025
  %v1027 = vsel %vm68, %v963, 0.0
  %1028 = vadd.xlane.f32.xlu0 %v1027
  %v1029 = vpop.xlane.xlu0 %1028
  %v1030 = vsel %vm68, %v968, 0.0
  %1031 = vadd.xlane.f32.xlu0 %v1030
  %v1032 = vpop.xlane.xlu0 %1031
  %v1033 = vsel %vm68, %v973, 0.0
  %1034 = vadd.xlane.f32.xlu0 %v1033
  %v1035 = vpop.xlane.xlu0 %1034
  %v1036 = vsel %vm68, %v978, 0.0
  %1037 = vadd.xlane.f32.xlu0 %v1036
  %v1038 = vpop.xlane.xlu0 %1037
  %v1039 = vsel %vm68, %v983, 0.0
  %1040 = vadd.xlane.f32.xlu0 %v1039
  %v1041 = vpop.xlane.xlu0 %1040
  %v1042 = vsel %vm68, %v988, 0.0
  %1043 = vadd.xlane.f32.xlu0 %v1042
  %v1044 = vpop.xlane.xlu0 %1043
  %v1045 = vsel %vm68, %v993, 0.0
  %1046 = vadd.xlane.f32.xlu0 %v1045
  %v1047 = vpop.xlane.xlu0 %1046
  %v1048 = vsel %vm68, %v998, 0.0
  %1049 = vadd.xlane.f32.xlu0 %v1048
  %v1050 = vpop.xlane.xlu0 %1049
  %v1051 = vmul.f32 %v1005, %v328
  %v1052 = vmul.f32 %v1008, %v328
  %v1053 = vmul.f32 %v1011, %v328
  %v1054 = vmul.f32 %v1014, %v328
  %v1055 = vmul.f32 %v1017, %v328
  %v1056 = vmul.f32 %v1020, %v328
  %v1057 = vmul.f32 %v1023, %v328
  %v1058 = vmul.f32 %v1026, %v328
  %v1059 = vmul.f32 %v1029, %v328
  %v1060 = vmul.f32 %v1032, %v328
  %v1061 = vmul.f32 %v1035, %v328
  %v1062 = vmul.f32 %v1038, %v328
  %v1063 = vmul.f32 %v1041, %v328
  %v1064 = vmul.f32 %v1044, %v328
  %v1065 = vmul.f32 %v1047, %v328
  %v1066 = vmul.f32 %v1050, %v328
  %v1067 = vsub.f32 %v923, %v1051
  %v1068 = vsub.f32 %v928, %v1052
  %v1069 = vsub.f32 %v933, %v1053
  %v1070 = vsub.f32 %v938, %v1054
  %v1071 = vsub.f32 %v943, %v1055
  %v1072 = vsub.f32 %v948, %v1056
  %v1073 = vsub.f32 %v953, %v1057
  %v1074 = vsub.f32 %v958, %v1058
  %v1075 = vsub.f32 %v963, %v1059
  %v1076 = vsub.f32 %v968, %v1060
  %v1077 = vsub.f32 %v973, %v1061
  %v1078 = vsub.f32 %v978, %v1062
  %v1079 = vsub.f32 %v983, %v1063
  %v1080 = vsub.f32 %v988, %v1064
  %v1081 = vsub.f32 %v993, %v1065
  %v1082 = vsub.f32 %v998, %v1066
  %v1083 = vmul.f32 %v1067, %v1067
  %v1084 = vmul.f32 %v1068, %v1068
  %v1085 = vmul.f32 %v1069, %v1069
  %v1086 = vmul.f32 %v1070, %v1070
  %v1087 = vmul.f32 %v1071, %v1071
  %v1088 = vmul.f32 %v1072, %v1072
  %v1089 = vmul.f32 %v1073, %v1073
  %v1090 = vmul.f32 %v1074, %v1074
  %v1091 = vmul.f32 %v1075, %v1075
  %v1092 = vmul.f32 %v1076, %v1076
  %v1093 = vmul.f32 %v1077, %v1077
  %v1094 = vmul.f32 %v1078, %v1078
  %v1095 = vmul.f32 %v1079, %v1079
  %v1096 = vmul.f32 %v1080, %v1080
  %v1097 = vmul.f32 %v1081, %v1081
  %v1098 = vmul.f32 %v1082, %v1082
  %v1099 = vsel %vm68, %v1083, 0.0
  %1100 = vadd.xlane.f32.xlu0 %v1099
  %v1101 = vpop.xlane.xlu0 %1100
  %v1102 = vsel %vm68, %v1084, 0.0
  %1103 = vadd.xlane.f32.xlu0 %v1102
  %v1104 = vpop.xlane.xlu0 %1103
  %v1105 = vsel %vm68, %v1085, 0.0
  %1106 = vadd.xlane.f32.xlu0 %v1105
  %v1107 = vpop.xlane.xlu0 %1106
  %v1108 = vsel %vm68, %v1086, 0.0
  %1109 = vadd.xlane.f32.xlu0 %v1108
  %v1110 = vpop.xlane.xlu0 %1109
  %v1111 = vsel %vm68, %v1087, 0.0
  %1112 = vadd.xlane.f32.xlu0 %v1111
  %v1113 = vpop.xlane.xlu0 %1112
  %v1114 = vsel %vm68, %v1088, 0.0
  %1115 = vadd.xlane.f32.xlu0 %v1114
  %v1116 = vpop.xlane.xlu0 %1115
  %v1117 = vsel %vm68, %v1089, 0.0
  %1118 = vadd.xlane.f32.xlu0 %v1117
  %v1119 = vpop.xlane.xlu0 %1118
  %v1120 = vsel %vm68, %v1090, 0.0
  %1121 = vadd.xlane.f32.xlu0 %v1120
  %v1122 = vpop.xlane.xlu0 %1121
  %v1123 = vsel %vm68, %v1091, 0.0
  %1124 = vadd.xlane.f32.xlu0 %v1123
  %v1125 = vpop.xlane.xlu0 %1124
  %v1126 = vsel %vm68, %v1092, 0.0
  %1127 = vadd.xlane.f32.xlu0 %v1126
  %v1128 = vpop.xlane.xlu0 %1127
  %v1129 = vsel %vm68, %v1093, 0.0
  %1130 = vadd.xlane.f32.xlu0 %v1129
  %v1131 = vpop.xlane.xlu0 %1130
  %v1132 = vsel %vm68, %v1094, 0.0
  %1133 = vadd.xlane.f32.xlu0 %v1132
  %v1134 = vpop.xlane.xlu0 %1133
  %v1135 = vsel %vm68, %v1095, 0.0
  %1136 = vadd.xlane.f32.xlu0 %v1135
  %v1137 = vpop.xlane.xlu0 %1136
  %v1138 = vsel %vm68, %v1096, 0.0
  %1139 = vadd.xlane.f32.xlu0 %v1138
  %v1140 = vpop.xlane.xlu0 %1139
  %v1141 = vsel %vm68, %v1097, 0.0
  %1142 = vadd.xlane.f32.xlu0 %v1141
  %v1143 = vpop.xlane.xlu0 %1142
  %v1144 = vsel %vm68, %v1098, 0.0
  %1145 = vadd.xlane.f32.xlu0 %v1144
  %v1146 = vpop.xlane.xlu0 %1145
  %v1147 = vmul.f32 %v1101, %v328
  %v1148 = vmul.f32 %v1104, %v328
  %v1149 = vmul.f32 %v1107, %v328
  %v1150 = vmul.f32 %v1110, %v328
  %v1151 = vmul.f32 %v1113, %v328
  %v1152 = vmul.f32 %v1116, %v328
  %v1153 = vmul.f32 %v1119, %v328
  %v1154 = vmul.f32 %v1122, %v328
  %v1155 = vmul.f32 %v1125, %v328
  %v1156 = vmul.f32 %v1128, %v328
  %v1157 = vmul.f32 %v1131, %v328
  %v1158 = vmul.f32 %v1134, %v328
  %v1159 = vmul.f32 %v1137, %v328
  %v1160 = vmul.f32 %v1140, %v328
  %v1161 = vmul.f32 %v1143, %v328
  %v1162 = vmul.f32 %v1146, %v328
  %v1163 = vadd.f32 %v1147, 1e-05
  %v1164 = vadd.f32 %v1148, 1e-05
  %v1165 = vadd.f32 %v1149, 1e-05
  %v1166 = vadd.f32 %v1150, 1e-05
  %v1167 = vadd.f32 %v1151, 1e-05
  %v1168 = vadd.f32 %v1152, 1e-05
  %v1169 = vadd.f32 %v1153, 1e-05
  %v1170 = vadd.f32 %v1154, 1e-05
  %v1171 = vadd.f32 %v1155, 1e-05
  %v1172 = vadd.f32 %v1156, 1e-05
  %v1173 = vadd.f32 %v1157, 1e-05
  %v1174 = vadd.f32 %v1158, 1e-05
  %v1175 = vadd.f32 %v1159, 1e-05
  %v1176 = vadd.f32 %v1160, 1e-05
  %v1177 = vadd.f32 %v1161, 1e-05
  %v1178 = vadd.f32 %v1162, 1e-05
  %v1179 = vrsqrt.pop %v1163
  %v1180 = vrsqrt.pop %v1164
  %v1181 = vrsqrt.pop %v1165
  %v1182 = vrsqrt.pop %v1166
  %v1183 = vrsqrt.pop %v1167
  %v1184 = vrsqrt.pop %v1168
  %v1185 = vrsqrt.pop %v1169
  %v1186 = vrsqrt.pop %v1170
  %v1187 = vrsqrt.pop %v1171
  %v1188 = vrsqrt.pop %v1172
  %v1189 = vrsqrt.pop %v1173
  %v1190 = vrsqrt.pop %v1174
  %v1191 = vrsqrt.pop %v1175
  %v1192 = vrsqrt.pop %v1176
  %v1193 = vrsqrt.pop %v1177
  %v1194 = vrsqrt.pop %v1178
  %v1195 = vmul.f32 %v1067, %v1179
  %v1196 = vmul.f32 %v1068, %v1180
  %v1197 = vmul.f32 %v1069, %v1181
  %v1198 = vmul.f32 %v1070, %v1182
  %v1199 = vmul.f32 %v1071, %v1183
  %v1200 = vmul.f32 %v1072, %v1184
  %v1201 = vmul.f32 %v1073, %v1185
  %v1202 = vmul.f32 %v1074, %v1186
  %v1203 = vmul.f32 %v1075, %v1187
  %v1204 = vmul.f32 %v1076, %v1188
  %v1205 = vmul.f32 %v1077, %v1189
  %v1206 = vmul.f32 %v1078, %v1190
  %v1207 = vmul.f32 %v1079, %v1191
  %v1208 = vmul.f32 %v1080, %v1192
  %v1209 = vmul.f32 %v1081, %v1193
  %v1210 = vmul.f32 %v1082, %v1194
  %v1212 = vlaneseq
  %v1213 = vshrl.u32 %v1212, 7
  %v1214 = vsub.s32 0, %v1213
  %v1215 = vrot.slane %v1001, %v1214
  %v1217 = vmul.f32 %v1195, %v1215
  %v1218 = vmul.f32 %v1196, %v1215
  %v1219 = vmul.f32 %v1197, %v1215
  %v1220 = vmul.f32 %v1198, %v1215
  %v1221 = vmul.f32 %v1199, %v1215
  %v1222 = vmul.f32 %v1200, %v1215
  %v1223 = vmul.f32 %v1201, %v1215
  %v1224 = vmul.f32 %v1202, %v1215
  %v1225 = vmul.f32 %v1203, %v1215
  %v1226 = vmul.f32 %v1204, %v1215
  %v1227 = vmul.f32 %v1205, %v1215
  %v1228 = vmul.f32 %v1206, %v1215
  %v1229 = vmul.f32 %v1207, %v1215
  %v1230 = vmul.f32 %v1208, %v1215
  %v1231 = vmul.f32 %v1209, %v1215
  %v1232 = vmul.f32 %v1210, %v1215
  %v1234 = vlaneseq
  %v1235 = vshrl.u32 %v1234, 7
  %v1236 = vsub.s32 0, %v1235
  %v1237 = vrot.slane %v1002, %v1236
  %v1239 = vadd.f32 %v1217, %v1237
  %v1240 = vadd.f32 %v1218, %v1237
  %v1241 = vadd.f32 %v1219, %v1237
  %v1242 = vadd.f32 %v1220, %v1237
  %v1243 = vadd.f32 %v1221, %v1237
  %v1244 = vadd.f32 %v1222, %v1237
  %v1245 = vadd.f32 %v1223, %v1237
  %v1246 = vadd.f32 %v1224, %v1237
  %v1247 = vadd.f32 %v1225, %v1237
  %v1248 = vadd.f32 %v1226, %v1237
  %v1249 = vadd.f32 %v1227, %v1237
  %v1250 = vadd.f32 %v1228, %v1237
  %v1251 = vadd.f32 %v1229, %v1237
  %v1252 = vadd.f32 %v1230, %v1237
  %v1253 = vadd.f32 %v1231, %v1237
  %v1254 = vadd.f32 %v1232, %v1237
  %v1255 = vadd.f32 %v533, %v1239
  %v1256 = vadd.f32 %v534, %v1240
  %v1257 = vadd.f32 %v535, %v1241
  %v1258 = vadd.f32 %v536, %v1242
  %v1259 = vadd.f32 %v537, %v1243
  %v1260 = vadd.f32 %v538, %v1244
  %v1261 = vadd.f32 %v539, %v1245
  %v1262 = vadd.f32 %v540, %v1246
  %v1263 = vadd.f32 %v541, %v1247
  %v1264 = vadd.f32 %v542, %v1248
  %v1265 = vadd.f32 %v543, %v1249
  %v1266 = vadd.f32 %v544, %v1250
  %v1267 = vadd.f32 %v545, %v1251
  %v1268 = vadd.f32 %v546, %v1252
  %v1269 = vadd.f32 %v547, %v1253
  %v1270 = vadd.f32 %v548, %v1254
  %1271 = vst.msk [vmem:[%s12] sm:$0xff] %vm68, %v1255
  %1272 = vst.msk [vmem:[%s12 + $0x8] sm:$0xff] %vm68, %v1256
  %1273 = vst.msk [vmem:[%s12 + $0x10] sm:$0xff] %vm68, %v1257
  %1274 = vst.msk [vmem:[%s12 + $0x18] sm:$0xff] %vm68, %v1258
  %1275 = vst.msk [vmem:[%s12 + $0x20] sm:$0xff] %vm68, %v1259
  %1276 = vst.msk [vmem:[%s12 + $0x28] sm:$0xff] %vm68, %v1260
  %1277 = vst.msk [vmem:[%s12 + $0x30] sm:$0xff] %vm68, %v1261
  %1278 = vst.msk [vmem:[%s12 + $0x38] sm:$0xff] %vm68, %v1262
  %1279 = vst.msk [vmem:[%s12 + $0x40] sm:$0xff] %vm68, %v1263
  %1280 = vst.msk [vmem:[%s12 + $0x48] sm:$0xff] %vm68, %v1264
  %1281 = vst.msk [vmem:[%s12 + $0x50] sm:$0xff] %vm68, %v1265
  %1282 = vst.msk [vmem:[%s12 + $0x58] sm:$0xff] %vm68, %v1266
  %1283 = vst.msk [vmem:[%s12 + $0x60] sm:$0xff] %vm68, %v1267
  %1284 = vst.msk [vmem:[%s12 + $0x68] sm:$0xff] %vm68, %v1268
  %1285 = vst.msk [vmem:[%s12 + $0x70] sm:$0xff] %vm68, %v1269
  %1286 = vst.msk [vmem:[%s12 + $0x78] sm:$0xff] %vm68, %v1270
  // Predicated region
  $region50: #{swin_block_forward.3} parent=0 // pred_check
    _
  $region51: #{swin_block_forward.3} parent=0 // pred_check_branch
    %1288 = sbr.rel (0) target = $region53
  $region52: #{swin_block_forward.3} parent=0 // pred_region
    _
  $region53: #{swin_block_forward.3} parent=0 // pred_fallthru
    _
  // Predicated region
  $region54: #{swin_block_forward.3} parent=0 // pred_check
    _
  $region55: #{swin_block_forward.3} parent=0 // pred_check_branch
    %1290 = sbr.rel (0) target = $region57
  $region56: #{swin_block_forward.3} parent=0 // pred_region
    _
  $region57: #{swin_block_forward.3} parent=0 // pred_fallthru
    _

// kernel: swin_block_forward.2
$region0: #{swin_block_forward.2}
  #allocation0 [shape = 'u32[]', space=smem, size = 0x4, offset = 0x4, fixed_abs, tag = 'smem constant byte address 0x4 - core index']
  #allocation1 [shape = 'u32[144,128]{1,0:T(1,128)}', space=vmem, size = 0x12000, scoped, tag = 'internal scratch']
  #allocation2 [shape = 'f32[128,96]{1,0:T(8,128)}', space=vmem, size = 0x10000, scoped, tag = 'scratch operand']
  %s0 = inlined_call_operand.vmem [shape: f32[128,32], index: 0, kind: input, shape index: {}]
  %s1 = inlined_call_operand.vmem [shape: f32[16,8,8], index: 1, kind: input, shape index: {}]
  %s2 = inlined_call_operand.vmem [shape: f32[32,96], index: 2, kind: input, shape index: {}]
  %s3 = inlined_call_operand.vmem [shape: f32[1,96], index: 3, kind: input, shape index: {}]
  %s4 = inlined_call_operand.vmem [shape: f32[128,32], index: 4, kind: output, shape index: {}]
  %s5 = sld [smem:[#allocation0]]
  $region26: #{swin_block_forward.2} parent=0
    _
  %s7 = ssub.s32 1, %s5
  %s8 = scalar_select 0, %s7, %s5
  // Predicated region
  $region2: #{swin_block_forward.2} parent=0 // pred_check
    _
  $region3: #{swin_block_forward.2} parent=0 // pred_check_branch
    %10 = sbr.rel (0) target = $region5
  $region4: #{swin_block_forward.2} parent=0 // pred_region
    _
  $region5: #{swin_block_forward.2} parent=0 // pred_fallthru
    _
  // Predicated region
  $region6: #{swin_block_forward.2} parent=0 // pred_check
    _
  $region7: #{swin_block_forward.2} parent=0 // pred_check_branch
    %12 = sbr.rel (0) target = $region9
  $region8: #{swin_block_forward.2} parent=0 // pred_region
    _
  $region9: #{swin_block_forward.2} parent=0 // pred_fallthru
    _
  // Predicated region
  $region10: #{swin_block_forward.2} parent=0 // pred_check
    _
  $region11: #{swin_block_forward.2} parent=0 // pred_check_branch
    %14 = sbr.rel (0) target = $region13
  $region12: #{swin_block_forward.2} parent=0 // pred_region
    _
  $region13: #{swin_block_forward.2} parent=0 // pred_fallthru
    _
  // Predicated region
  $region14: #{swin_block_forward.2} parent=0 // pred_check
    _
  $region15: #{swin_block_forward.2} parent=0 // pred_check_branch
    %16 = sbr.rel (0) target = $region17
  $region16: #{swin_block_forward.2} parent=0 // pred_region
    _
  $region17: #{swin_block_forward.2} parent=0 // pred_fallthru
    _
  %v17 = vld [vmem:[%s0] sm:$0xff]
  %v18 = vld [vmem:[%s0 + $0x8] sm:$0xff]
  %v19 = vld [vmem:[%s0 + $0x10] sm:$0xff]
  %v20 = vld [vmem:[%s0 + $0x18] sm:$0xff]
  %v21 = vld [vmem:[%s0 + $0x20] sm:$0xff]
  %v22 = vld [vmem:[%s0 + $0x28] sm:$0xff]
  %v23 = vld [vmem:[%s0 + $0x30] sm:$0xff]
  %v24 = vld [vmem:[%s0 + $0x38] sm:$0xff]
  %v25 = vld [vmem:[%s0 + $0x40] sm:$0xff]
  %v26 = vld [vmem:[%s0 + $0x48] sm:$0xff]
  %v27 = vld [vmem:[%s0 + $0x50] sm:$0xff]
  %v28 = vld [vmem:[%s0 + $0x58] sm:$0xff]
  %v29 = vld [vmem:[%s0 + $0x60] sm:$0xff]
  %v30 = vld [vmem:[%s0 + $0x68] sm:$0xff]
  %v31 = vld [vmem:[%s0 + $0x70] sm:$0xff]
  %v32 = vld [vmem:[%s0 + $0x78] sm:$0xff]
  %v33 = vld [vmem:[%s2] sm:$0xff]
  %v34 = vld [vmem:[%s2 + $0x8] sm:$0xff]
  %v35 = vld [vmem:[%s2 + $0x10] sm:$0xff]
  %v36 = vld [vmem:[%s2 + $0x18] sm:$0xff]
  %v37 = vld [vmem:[%s3] sm:$0x1]
  %v39 = vlaneseq
  %v40 = vshrl.u32 %v39, 7
  %v41 = vsub.s32 0, %v40
  %v42 = vrot.slane %v37, %v41
  %vm44 = vcmask 261120
  %v46 = vsel %vm44, %v17, 0
  %v49 = vsel %vm44, %v18, 0
  %v52 = vsel %vm44, %v19, 0
  %v55 = vsel %vm44, %v20, 0
  %v58 = vsel %vm44, %v21, 0
  %v61 = vsel %vm44, %v22, 0
  %v64 = vsel %vm44, %v23, 0
  %v67 = vsel %vm44, %v24, 0
  %v70 = vsel %vm44, %v25, 0
  %v73 = vsel %vm44, %v26, 0
  %v76 = vsel %vm44, %v27, 0
  %v79 = vsel %vm44, %v28, 0
  %v82 = vsel %vm44, %v29, 0
  %v85 = vsel %vm44, %v30, 0
  %v88 = vsel %vm44, %v31, 0
  %v91 = vsel %vm44, %v32, 0
  %93 = vmatprep.subr.mxu0 0.0
  %94 = vmatpush1.msra.mxu0 %v33
  %95 = vmatprep.subr.mxu0 0.0
  %96 = vmatpush1.msra.mxu0 %v34
  %97 = vmatprep.subr.mxu0 0.0
  %98 = vmatpush1.msra.mxu0 %v35
  %99 = vmatprep.subr.mxu0 0.0
  %100 = vmatpush1.msra.mxu0 %v36
  %101 = vmatprep.subr.mxu0 0.0
  %102 = vmatpush1.msra.mxu0 0.0
  %103 = vmatprep.subr.mxu0 0.0
  %104 = vmatpush1.msra.mxu0 0.0
  %105 = vmatprep.subr.mxu0 0.0
  %106 = vmatpush1.msra.mxu0 0.0
  %107 = vmatprep.subr.mxu0 0.0
  %108 = vmatpush1.msra.mxu0 0.0
  %109 = vmatprep.subr.mxu0 0.0
  %110 = vmatpush1.msra.mxu0 0.0
  %111 = vmatprep.subr.mxu0 0.0
  %112 = vmatpush1.msra.mxu0 0.0
  %113 = vmatprep.subr.mxu0 0.0
  %114 = vmatpush1.msra.mxu0 0.0
  %115 = vmatprep.subr.mxu0 0.0
  %116 = vmatpush1.msra.mxu0 0.0
  %117 = vmatprep.subr.mxu0 0.0
  %118 = vmatpush1.msra.mxu0 0.0
  %119 = vmatprep.subr.mxu0 0.0
  %120 = vmatpush1.msra.mxu0 0.0
  %121 = vmatprep.subr.mxu0 0.0
  %122 = vmatpush1.msra.mxu0 0.0
  %123 = vmatprep.subr.mxu0 0.0
  %124 = vmatpush1.msra.mxu0 0.0
  %125 = vmatprep.subr.mxu0 0.0
  %126 = vmatpush1.msra.mxu0 0.0
  %127 = vmatprep.subr.mxu0 0.0
  %128 = vmatpush1.msra.mxu0 0.0
  %129 = vmatprep.subr.mxu0 0.0
  %130 = vmatpush1.msra.mxu0 0.0
  %131 = vmatprep.subr.mxu0 0.0
  %132 = vmatpush1.msra.mxu0 0.0
  %133 = vmatprep.subr.mxu0 0.0
  %134 = vmatpush1.msra.mxu0 0.0
  %135 = vmatprep.subr.mxu0 0.0
  %136 = vmatpush1.msra.mxu0 0.0
  %137 = vmatprep.subr.mxu0 0.0
  %138 = vmatpush1.msra.mxu0 0.0
  %139 = vmatprep.subr.mxu0 0.0
  %140 = vmatpush1.msra.mxu0 0.0
  %141 = vmatprep.subr.mxu0 0.0
  %142 = vmatpush1.msra.mxu0 0.0
  %143 = vmatprep.subr.mxu0 0.0
  %144 = vmatpush1.msra.mxu0 0.0
  %145 = vmatprep.subr.mxu0 0.0
  %146 = vmatpush1.msra.mxu0 0.0
  %147 = vmatprep.subr.mxu0 0.0
  %148 = vmatpush1.msra.mxu0 0.0
  %149 = vmatprep.subr.mxu0 0.0
  %150 = vmatpush1.msra.mxu0 0.0
  %151 = vmatprep.subr.mxu0 0.0
  %152 = vmatpush1.msra.mxu0 0.0
  %153 = vmatprep.subr.mxu0 0.0
  %154 = vmatpush1.msra.mxu0 0.0
  %155 = vmatprep.subr.mxu0 0.0
  %156 = vmatpush1.msra.mxu0 0.0
  %157 = vmatprep.mubr.f32.mxu0 0.0
  %158 = vmatmul.mubr.f32.gmra.mrb[0].mxu0 %v46
  %v159 = vpop.f32.mrb[0].mxu0
  %v160 = vadd.f32 %v42, %v159
  %v161 = vpop.f32.mrb[0].mxu0
  %162 = vmatprep.mubr.f32.mxu0 0.0
  %163 = vmatmul.mubr.f32.gmra.mrb[0].mxu0 %v49
  %v164 = vpop.f32.mrb[0].mxu0
  %v165 = vadd.f32 %v42, %v164
  %v166 = vpop.f32.mrb[0].mxu0
  %167 = vmatprep.mubr.f32.mxu0 0.0
  %168 = vmatmul.mubr.f32.gmra.mrb[0].mxu0 %v52
  %v169 = vpop.f32.mrb[0].mxu0
  %v170 = vadd.f32 %v42, %v169
  %v171 = vpop.f32.mrb[0].mxu0
  %172 = vmatprep.mubr.f32.mxu0 0.0
  %173 = vmatmul.mubr.f32.gmra.mrb[0].mxu0 %v55
  %v174 = vpop.f32.mrb[0].mxu0
  %v175 = vadd.f32 %v42, %v174
  %v176 = vpop.f32.mrb[0].mxu0
  %177 = vmatprep.mubr.f32.mxu0 0.0
  %178 = vmatmul.mubr.f32.gmra.mrb[0].mxu0 %v58
  %v179 = vpop.f32.mrb[0].mxu0
  %v180 = vadd.f32 %v42, %v179
  %v181 = vpop.f32.mrb[0].mxu0
  %182 = vmatprep.mubr.f32.mxu0 0.0
  %183 = vmatmul.mubr.f32.gmra.mrb[0].mxu0 %v61
  %v184 = vpop.f32.mrb[0].mxu0
  %v185 = vadd.f32 %v42, %v184
  %v186 = vpop.f32.mrb[0].mxu0
  %187 = vmatprep.mubr.f32.mxu0 0.0
  %188 = vmatmul.mubr.f32.gmra.mrb[0].mxu0 %v64
  %v189 = vpop.f32.mrb[0].mxu0
  %v190 = vadd.f32 %v42, %v189
  %v191 = vpop.f32.mrb[0].mxu0
  %192 = vmatprep.mubr.f32.mxu0 0.0
  %193 = vmatmul.mubr.f32.gmra.mrb[0].mxu0 %v67
  %v194 = vpop.f32.mrb[0].mxu0
  %v195 = vadd.f32 %v42, %v194
  %v196 = vpop.f32.mrb[0].mxu0
  %197 = vmatprep.mubr.f32.mxu0 0.0
  %198 = vmatmul.mubr.f32.gmra.mrb[0].mxu0 %v70
  %v199 = vpop.f32.mrb[0].mxu0
  %v200 = vadd.f32 %v42, %v199
  %v201 = vpop.f32.mrb[0].mxu0
  %202 = vmatprep.mubr.f32.mxu0 0.0
  %203 = vmatmul.mubr.f32.gmra.mrb[0].mxu0 %v73
  %v204 = vpop.f32.mrb[0].mxu0
  %v205 = vadd.f32 %v42, %v204
  %v206 = vpop.f32.mrb[0].mxu0
  %207 = vmatprep.mubr.f32.mxu0 0.0
  %208 = vmatmul.mubr.f32.gmra.mrb[0].mxu0 %v76
  %v209 = vpop.f32.mrb[0].mxu0
  %v210 = vadd.f32 %v42, %v209
  %v211 = vpop.f32.mrb[0].mxu0
  %212 = vmatprep.mubr.f32.mxu0 0.0
  %213 = vmatmul.mubr.f32.gmra.mrb[0].mxu0 %v79
  %v214 = vpop.f32.mrb[0].mxu0
  %v215 = vadd.f32 %v42, %v214
  %v216 = vpop.f32.mrb[0].mxu0
  %217 = vmatprep.mubr.f32.mxu0 0.0
  %218 = vmatmul.mubr.f32.gmra.mrb[0].mxu0 %v82
  %v219 = vpop.f32.mrb[0].mxu0
  %v220 = vadd.f32 %v42, %v219
  %v221 = vpop.f32.mrb[0].mxu0
  %222 = vmatprep.mubr.f32.mxu0 0.0
  %223 = vmatmul.mubr.f32.gmra.mrb[0].mxu0 %v85
  %v224 = vpop.f32.mrb[0].mxu0
  %v225 = vadd.f32 %v42, %v224
  %v226 = vpop.f32.mrb[0].mxu0
  %227 = vmatprep.mubr.f32.mxu0 0.0
  %228 = vmatmul.mubr.f32.gmra.mrb[0].mxu0 %v88
  %v229 = vpop.f32.mrb[0].mxu0
  %v230 = vadd.f32 %v42, %v229
  %v231 = vpop.f32.mrb[0].mxu0
  %232 = vmatprep.mubr.f32.mxu0 0.0
  %233 = vmatmul.mubr.f32.gmra.mrb[0].mxu0 %v91
  %v234 = vpop.f32.mrb[0].mxu0
  %v235 = vadd.f32 %v42, %v234
  %v236 = vpop.f32.mrb[0].mxu0
  %237 = vdwg.mxu0
  %vm238 = vcmask 785408
  %239 = vst.msk [vmem:[#allocation2] sm:$0xff] %vm238, %v160
  %240 = vst.msk [vmem:[#allocation2 + $0x8] sm:$0xff] %vm238, %v165
  %241 = vst.msk [vmem:[#allocation2 + $0x10] sm:$0xff] %vm238, %v170
  %242 = vst.msk [vmem:[#allocation2 + $0x18] sm:$0xff] %vm238, %v175
  %243 = vst.msk [vmem:[#allocation2 + $0x20] sm:$0xff] %vm238, %v180
  %244 = vst.msk [vmem:[#allocation2 + $0x28] sm:$0xff] %vm238, %v185
  %245 = vst.msk [vmem:[#allocation2 + $0x30] sm:$0xff] %vm238, %v190
  %246 = vst.msk [vmem:[#allocation2 + $0x38] sm:$0xff] %vm238, %v195
  %247 = vst.msk [vmem:[#allocation2 + $0x40] sm:$0xff] %vm238, %v200
  %248 = vst.msk [vmem:[#allocation2 + $0x48] sm:$0xff] %vm238, %v205
  %249 = vst.msk [vmem:[#allocation2 + $0x50] sm:$0xff] %vm238, %v210
  %250 = vst.msk [vmem:[#allocation2 + $0x58] sm:$0xff] %vm238, %v215
  %251 = vst.msk [vmem:[#allocation2 + $0x60] sm:$0xff] %vm238, %v220
  %252 = vst.msk [vmem:[#allocation2 + $0x68] sm:$0xff] %vm238, %v225
  %253 = vst.msk [vmem:[#allocation2 + $0x70] sm:$0xff] %vm238, %v230
  %254 = vst.msk [vmem:[#allocation2 + $0x78] sm:$0xff] %vm238, %v235
  %v255 = vld [vmem:[#allocation2] sm:$0xff]
  %v256 = vld [vmem:[#allocation2 + $0x8] sm:$0xff]
  %v257 = vld [vmem:[#allocation2 + $0x10] sm:$0xff]
  %v258 = vld [vmem:[#allocation2 + $0x18] sm:$0xff]
  %v259 = vld [vmem:[#allocation2 + $0x20] sm:$0xff]
  %v260 = vld [vmem:[#allocation2 + $0x28] sm:$0xff]
  %v261 = vld [vmem:[#allocation2 + $0x30] sm:$0xff]
  %v262 = vld [vmem:[#allocation2 + $0x38] sm:$0xff]
  %v263 = vld [vmem:[#allocation2 + $0x40] sm:$0xff]
  %v264 = vld [vmem:[#allocation2 + $0x48] sm:$0xff]
  %v265 = vld [vmem:[#allocation2 + $0x50] sm:$0xff]
  %v266 = vld [vmem:[#allocation2 + $0x58] sm:$0xff]
  %v267 = vld [vmem:[#allocation2 + $0x60] sm:$0xff]
  %v268 = vld [vmem:[#allocation2 + $0x68] sm:$0xff]
  %v269 = vld [vmem:[#allocation2 + $0x70] sm:$0xff]
  %v270 = vld [vmem:[#allocation2 + $0x78] sm:$0xff]
  %v271 = vmul.f32 %v255, 0.35355338
  %v272 = vmul.f32 %v256, 0.35355338
  %v273 = vmul.f32 %v257, 0.35355338
  %v274 = vmul.f32 %v258, 0.35355338
  %v275 = vmul.f32 %v259, 0.35355338
  %v276 = vmul.f32 %v260, 0.35355338
  %v277 = vmul.f32 %v261, 0.35355338
  %v278 = vmul.f32 %v262, 0.35355338
  %v279 = vmul.f32 %v263, 0.35355338
  %v280 = vmul.f32 %v264, 0.35355338
  %v281 = vmul.f32 %v265, 0.35355338
  %v282 = vmul.f32 %v266, 0.35355338
  %v283 = vmul.f32 %v267, 0.35355338
  %v284 = vmul.f32 %v268, 0.35355338
  %v285 = vmul.f32 %v269, 0.35355338
  %v286 = vmul.f32 %v270, 0.35355338
  %v287 = vld [vmem:[%s1] sm:$0xff]
  %v288 = vld [vmem:[%s1 + $0x8] sm:$0xff]
  %v289 = vld [vmem:[%s1 + $0x10] sm:$0xff]
  %v290 = vld [vmem:[%s1 + $0x18] sm:$0xff]
  %v291 = vld [vmem:[%s1 + $0x20] sm:$0xff]
  %v292 = vld [vmem:[%s1 + $0x28] sm:$0xff]
  %v293 = vld [vmem:[%s1 + $0x30] sm:$0xff]
  %v294 = vld [vmem:[%s1 + $0x38] sm:$0xff]
  %v295 = vld [vmem:[%s1 + $0x40] sm:$0xff]
  %v296 = vld [vmem:[%s1 + $0x48] sm:$0xff]
  %v297 = vld [vmem:[%s1 + $0x50] sm:$0xff]
  %v298 = vld [vmem:[%s1 + $0x58] sm:$0xff]
  %v299 = vld [vmem:[%s1 + $0x60] sm:$0xff]
  %v300 = vld [vmem:[%s1 + $0x68] sm:$0xff]
  %v301 = vld [vmem:[%s1 + $0x70] sm:$0xff]
  %v302 = vld [vmem:[%s1 + $0x78] sm:$0xff]
  %304 = vrot.lane.b32.xlu0 %v255, 96
  %v305 = vpop.permute.xlu0 %304
  %vm306 = vcmask 64512
  %v308 = vsel %vm306, %v271, 0
  %v310 = vsel %vm306, %v305, 0
  %312 = vmatprep.subr.mxu0 0.0
  %313 = vmatpush1.xpose.msra.mxu0 %v310
  %314 = vmatprep.subr.mxu0 0.0
  %315 = vmatpush1.xpose.msra.mxu0 0.0
  %316 = vmatprep.subr.mxu0 0.0
  %317 = vmatpush1.xpose.msra.mxu0 0.0
  %318 = vmatprep.subr.mxu0 0.0
  %319 = vmatpush1.xpose.msra.mxu0 0.0
  %320 = vmatprep.subr.mxu0 0.0
  %321 = vmatpush1.xpose.msra.mxu0 0.0
  %322 = vmatprep.subr.mxu0 0.0
  %323 = vmatpush1.xpose.msra.mxu0 0.0
  %324 = vmatprep.subr.mxu0 0.0
  %325 = vmatpush1.xpose.msra.mxu0 0.0
  %326 = vmatprep.subr.mxu0 0.0
  %327 = vmatpush1.xpose.msra.mxu0 0.0
  %328 = vmatprep.subr.mxu0 0.0
  %329 = vmatpush1.xpose.msra.mxu0 0.0
  %330 = vmatprep.subr.mxu0 0.0
  %331 = vmatpush1.xpose.msra.mxu0 0.0
  %332 = vmatprep.subr.mxu0 0.0
  %333 = vmatpush1.xpose.msra.mxu0 0.0
  %334 = vmatprep.subr.mxu0 0.0
  %335 = vmatpush1.xpose.msra.mxu0 0.0
  %336 = vmatprep.subr.mxu0 0.0
  %337 = vmatpush1.xpose.msra.mxu0 0.0
  %338 = vmatprep.subr.mxu0 0.0
  %339 = vmatpush1.xpose.msra.mxu0 0.0
  %340 = vmatprep.subr.mxu0 0.0
  %341 = vmatpush1.xpose.msra.mxu0 0.0
  %342 = vmatprep.subr.mxu0 0.0
  %343 = vmatpush1.xpose.msra.mxu0 0.0
  %344 = vmatprep.subr.mxu0 0.0
  %345 = vmatpush1.xpose.msra.mxu0 0.0
  %346 = vmatprep.subr.mxu0 0.0
  %347 = vmatpush1.xpose.msra.mxu0 0.0
  %348 = vmatprep.subr.mxu0 0.0
  %349 = vmatpush1.xpose.msra.mxu0 0.0
  %350 = vmatprep.subr.mxu0 0.0
  %351 = vmatpush1.xpose.msra.mxu0 0.0
  %352 = vmatprep.subr.mxu0 0.0
  %353 = vmatpush1.xpose.msra.mxu0 0.0
  %354 = vmatprep.subr.mxu0 0.0
  %355 = vmatpush1.xpose.msra.mxu0 0.0
  %356 = vmatprep.subr.mxu0 0.0
  %357 = vmatpush1.xpose.msra.mxu0 0.0
  %358 = vmatprep.subr.mxu0 0.0
  %359 = vmatpush1.xpose.msra.mxu0 0.0
  %360 = vmatprep.subr.mxu0 0.0
  %361 = vmatpush1.xpose.msra.mxu0 0.0
  %362 = vmatprep.subr.mxu0 0.0
  %363 = vmatpush1.xpose.msra.mxu0 0.0
  %364 = vmatprep.subr.mxu0 0.0
  %365 = vmatpush1.xpose.msra.mxu0 0.0
  %366 = vmatprep.subr.mxu0 0.0
  %367 = vmatpush1.xpose.msra.mxu0 0.0
  %368 = vmatprep.subr.mxu0 0.0
  %369 = vmatpush1.xpose.msra.mxu0 0.0
  %370 = vmatprep.subr.mxu0 0.0
  %371 = vmatpush1.xpose.msra.mxu0 0.0
  %372 = vmatprep.subr.mxu0 0.0
  %373 = vmatpush1.xpose.msra.mxu0 0.0
  %374 = vmatprep.subr.mxu0 0.0
  %375 = vmatpush1.xpose.msra.mxu0 0.0
  %376 = vmatprep.mubr.f32.mxu0 0.0
  %377 = vmatmul.mubr.f32.gmra.mrb[0].mxu0 %v308
  %v378 = vpop.f32.mrb[0].mxu0
  %v379 = vadd.f32 %v287, %v378
  %v380 = vpop.f32.mrb[0].mxu0
  %381 = vdwg.mxu0
  %383 = vrot.lane.b32.xlu0 %v256, 96
  %v384 = vpop.permute.xlu0 %383
  %v386 = vsel %vm306, %v272, 0
  %v388 = vsel %vm306, %v384, 0
  %390 = vmatprep.subr.mxu0 0.0
  %391 = vmatpush1.xpose.msra.mxu0 %v388
  %392 = vmatprep.subr.mxu0 0.0
  %393 = vmatpush1.xpose.msra.mxu0 0.0
  %394 = vmatprep.subr.mxu0 0.0
  %395 = vmatpush1.xpose.msra.mxu0 0.0
  %396 = vmatprep.subr.mxu0 0.0
  %397 = vmatpush1.xpose.msra.mxu0 0.0
  %398 = vmatprep.subr.mxu0 0.0
  %399 = vmatpush1.xpose.msra.mxu0 0.0
  %400 = vmatprep.subr.mxu0 0.0
  %401 = vmatpush1.xpose.msra.mxu0 0.0
  %402 = vmatprep.subr.mxu0 0.0
  %403 = vmatpush1.xpose.msra.mxu0 0.0
  %404 = vmatprep.subr.mxu0 0.0
  %405 = vmatpush1.xpose.msra.mxu0 0.0
  %406 = vmatprep.subr.mxu0 0.0
  %407 = vmatpush1.xpose.msra.mxu0 0.0
  %408 = vmatprep.subr.mxu0 0.0
  %409 = vmatpush1.xpose.msra.mxu0 0.0
  %410 = vmatprep.subr.mxu0 0.0
  %411 = vmatpush1.xpose.msra.mxu0 0.0
  %412 = vmatprep.subr.mxu0 0.0
  %413 = vmatpush1.xpose.msra.mxu0 0.0
  %414 = vmatprep.subr.mxu0 0.0
  %415 = vmatpush1.xpose.msra.mxu0 0.0
  %416 = vmatprep.subr.mxu0 0.0
  %417 = vmatpush1.xpose.msra.mxu0 0.0
  %418 = vmatprep.subr.mxu0 0.0
  %419 = vmatpush1.xpose.msra.mxu0 0.0
  %420 = vmatprep.subr.mxu0 0.0
  %421 = vmatpush1.xpose.msra.mxu0 0.0
  %422 = vmatprep.subr.mxu0 0.0
  %423 = vmatpush1.xpose.msra.mxu0 0.0
  %424 = vmatprep.subr.mxu0 0.0
  %425 = vmatpush1.xpose.msra.mxu0 0.0
  %426 = vmatprep.subr.mxu0 0.0
  %427 = vmatpush1.xpose.msra.mxu0 0.0
  %428 = vmatprep.subr.mxu0 0.0
  %429 = vmatpush1.xpose.msra.mxu0 0.0
  %430 = vmatprep.subr.mxu0 0.0
  %431 = vmatpush1.xpose.msra.mxu0 0.0
  %432 = vmatprep.subr.mxu0 0.0
  %433 = vmatpush1.xpose.msra.mxu0 0.0
  %434 = vmatprep.subr.mxu0 0.0
  %435 = vmatpush1.xpose.msra.mxu0 0.0
  %436 = vmatprep.subr.mxu0 0.0
  %437 = vmatpush1.xpose.msra.mxu0 0.0
  %438 = vmatprep.subr.mxu0 0.0
  %439 = vmatpush1.xpose.msra.mxu0 0.0
  %440 = vmatprep.subr.mxu0 0.0
  %441 = vmatpush1.xpose.msra.mxu0 0.0
  %442 = vmatprep.subr.mxu0 0.0
  %443 = vmatpush1.xpose.msra.mxu0 0.0
  %444 = vmatprep.subr.mxu0 0.0
  %445 = vmatpush1.xpose.msra.mxu0 0.0
  %446 = vmatprep.subr.mxu0 0.0
  %447 = vmatpush1.xpose.msra.mxu0 0.0
  %448 = vmatprep.subr.mxu0 0.0
  %449 = vmatpush1.xpose.msra.mxu0 0.0
  %450 = vmatprep.subr.mxu0 0.0
  %451 = vmatpush1.xpose.msra.mxu0 0.0
  %452 = vmatprep.subr.mxu0 0.0
  %453 = vmatpush1.xpose.msra.mxu0 0.0
  %454 = vmatprep.mubr.f32.mxu0 0.0
  %455 = vmatmul.mubr.f32.gmra.mrb[0].mxu0 %v386
  %v456 = vpop.f32.mrb[0].mxu0
  %v457 = vadd.f32 %v288, %v456
  %v458 = vpop.f32.mrb[0].mxu0
  %459 = vdwg.mxu0
  %461 = vrot.lane.b32.xlu0 %v257, 96
  %v462 = vpop.permute.xlu0 %461
  %v464 = vsel %vm306, %v273, 0
  %v466 = vsel %vm306, %v462, 0
  %468 = vmatprep.subr.mxu0 0.0
  %469 = vmatpush1.xpose.msra.mxu0 %v466
  %470 = vmatprep.subr.mxu0 0.0
  %471 = vmatpush1.xpose.msra.mxu0 0.0
  %472 = vmatprep.subr.mxu0 0.0
  %473 = vmatpush1.xpose.msra.mxu0 0.0
  %474 = vmatprep.subr.mxu0 0.0
  %475 = vmatpush1.xpose.msra.mxu0 0.0
  %476 = vmatprep.subr.mxu0 0.0
  %477 = vmatpush1.xpose.msra.mxu0 0.0
  %478 = vmatprep.subr.mxu0 0.0
  %479 = vmatpush1.xpose.msra.mxu0 0.0
  %480 = vmatprep.subr.mxu0 0.0
  %481 = vmatpush1.xpose.msra.mxu0 0.0
  %482 = vmatprep.subr.mxu0 0.0
  %483 = vmatpush1.xpose.msra.mxu0 0.0
  %484 = vmatprep.subr.mxu0 0.0
  %485 = vmatpush1.xpose.msra.mxu0 0.0
  %486 = vmatprep.subr.mxu0 0.0
  %487 = vmatpush1.xpose.msra.mxu0 0.0
  %488 = vmatprep.subr.mxu0 0.0
  %489 = vmatpush1.xpose.msra.mxu0 0.0
  %490 = vmatprep.subr.mxu0 0.0
  %491 = vmatpush1.xpose.msra.mxu0 0.0
  %492 = vmatprep.subr.mxu0 0.0
  %493 = vmatpush1.xpose.msra.mxu0 0.0
  %494 = vmatprep.subr.mxu0 0.0
  %495 = vmatpush1.xpose.msra.mxu0 0.0
  %496 = vmatprep.subr.mxu0 0.0
  %497 = vmatpush1.xpose.msra.mxu0 0.0
  %498 = vmatprep.subr.mxu0 0.0
  %499 = vmatpush1.xpose.msra.mxu0 0.0
  %500 = vmatprep.subr.mxu0 0.0
  %501 = vmatpush1.xpose.msra.mxu0 0.0
  %502 = vmatprep.subr.mxu0 0.0
  %503 = vmatpush1.xpose.msra.mxu0 0.0
  %504 = vmatprep.subr.mxu0 0.0
  %505 = vmatpush1.xpose.msra.mxu0 0.0
  %506 = vmatprep.subr.mxu0 0.0
  %507 = vmatpush1.xpose.msra.mxu0 0.0
  %508 = vmatprep.subr.mxu0 0.0
  %509 = vmatpush1.xpose.msra.mxu0 0.0
  %510 = vmatprep.subr.mxu0 0.0
  %511 = vmatpush1.xpose.msra.mxu0 0.0
  %512 = vmatprep.subr.mxu0 0.0
  %513 = vmatpush1.xpose.msra.mxu0 0.0
  %514 = vmatprep.subr.mxu0 0.0
  %515 = vmatpush1.xpose.msra.mxu0 0.0
  %516 = vmatprep.subr.mxu0 0.0
  %517 = vmatpush1.xpose.msra.mxu0 0.0
  %518 = vmatprep.subr.mxu0 0.0
  %519 = vmatpush1.xpose.msra.mxu0 0.0
  %520 = vmatprep.subr.mxu0 0.0
  %521 = vmatpush1.xpose.msra.mxu0 0.0
  %522 = vmatprep.subr.mxu0 0.0
  %523 = vmatpush1.xpose.msra.mxu0 0.0
  %524 = vmatprep.subr.mxu0 0.0
  %525 = vmatpush1.xpose.msra.mxu0 0.0
  %526 = vmatprep.subr.mxu0 0.0
  %527 = vmatpush1.xpose.msra.mxu0 0.0
  %528 = vmatprep.subr.mxu0 0.0
  %529 = vmatpush1.xpose.msra.mxu0 0.0
  %530 = vmatprep.subr.mxu0 0.0
  %531 = vmatpush1.xpose.msra.mxu0 0.0
  %532 = vmatprep.mubr.f32.mxu0 0.0
  %533 = vmatmul.mubr.f32.gmra.mrb[0].mxu0 %v464
  %v534 = vpop.f32.mrb[0].mxu0
  %v535 = vadd.f32 %v289, %v534
  %v536 = vpop.f32.mrb[0].mxu0
  %537 = vdwg.mxu0
  %539 = vrot.lane.b32.xlu0 %v258, 96
  %v540 = vpop.permute.xlu0 %539
  %v542 = vsel %vm306, %v274, 0
  %v544 = vsel %vm306, %v540, 0
  %546 = vmatprep.subr.mxu0 0.0
  %547 = vmatpush1.xpose.msra.mxu0 %v544
  %548 = vmatprep.subr.mxu0 0.0
  %549 = vmatpush1.xpose.msra.mxu0 0.0
  %550 = vmatprep.subr.mxu0 0.0
  %551 = vmatpush1.xpose.msra.mxu0 0.0
  %552 = vmatprep.subr.mxu0 0.0
  %553 = vmatpush1.xpose.msra.mxu0 0.0
  %554 = vmatprep.subr.mxu0 0.0
  %555 = vmatpush1.xpose.msra.mxu0 0.0
  %556 = vmatprep.subr.mxu0 0.0
  %557 = vmatpush1.xpose.msra.mxu0 0.0
  %558 = vmatprep.subr.mxu0 0.0
  %559 = vmatpush1.xpose.msra.mxu0 0.0
  %560 = vmatprep.subr.mxu0 0.0
  %561 = vmatpush1.xpose.msra.mxu0 0.0
  %562 = vmatprep.subr.mxu0 0.0
  %563 = vmatpush1.xpose.msra.mxu0 0.0
  %564 = vmatprep.subr.mxu0 0.0
  %565 = vmatpush1.xpose.msra.mxu0 0.0
  %566 = vmatprep.subr.mxu0 0.0
  %567 = vmatpush1.xpose.msra.mxu0 0.0
  %568 = vmatprep.subr.mxu0 0.0
  %569 = vmatpush1.xpose.msra.mxu0 0.0
  %570 = vmatprep.subr.mxu0 0.0
  %571 = vmatpush1.xpose.msra.mxu0 0.0
  %572 = vmatprep.subr.mxu0 0.0
  %573 = vmatpush1.xpose.msra.mxu0 0.0
  %574 = vmatprep.subr.mxu0 0.0
  %575 = vmatpush1.xpose.msra.mxu0 0.0
  %576 = vmatprep.subr.mxu0 0.0
  %577 = vmatpush1.xpose.msra.mxu0 0.0
  %578 = vmatprep.subr.mxu0 0.0
  %579 = vmatpush1.xpose.msra.mxu0 0.0
  %580 = vmatprep.subr.mxu0 0.0
  %581 = vmatpush1.xpose.msra.mxu0 0.0
  %582 = vmatprep.subr.mxu0 0.0
  %583 = vmatpush1.xpose.msra.mxu0 0.0
  %584 = vmatprep.subr.mxu0 0.0
  %585 = vmatpush1.xpose.msra.mxu0 0.0
  %586 = vmatprep.subr.mxu0 0.0
  %587 = vmatpush1.xpose.msra.mxu0 0.0
  %588 = vmatprep.subr.mxu0 0.0
  %589 = vmatpush1.xpose.msra.mxu0 0.0
  %590 = vmatprep.subr.mxu0 0.0
  %591 = vmatpush1.xpose.msra.mxu0 0.0
  %592 = vmatprep.subr.mxu0 0.0
  %593 = vmatpush1.xpose.msra.mxu0 0.0
  %594 = vmatprep.subr.mxu0 0.0
  %595 = vmatpush1.xpose.msra.mxu0 0.0
  %596 = vmatprep.subr.mxu0 0.0
  %597 = vmatpush1.xpose.msra.mxu0 0.0
  %598 = vmatprep.subr.mxu0 0.0
  %599 = vmatpush1.xpose.msra.mxu0 0.0
  %600 = vmatprep.subr.mxu0 0.0
  %601 = vmatpush1.xpose.msra.mxu0 0.0
  %602 = vmatprep.subr.mxu0 0.0
  %603 = vmatpush1.xpose.msra.mxu0 0.0
  %604 = vmatprep.subr.mxu0 0.0
  %605 = vmatpush1.xpose.msra.mxu0 0.0
  %606 = vmatprep.subr.mxu0 0.0
  %607 = vmatpush1.xpose.msra.mxu0 0.0
  %608 = vmatprep.subr.mxu0 0.0
  %609 = vmatpush1.xpose.msra.mxu0 0.0
  %610 = vmatprep.mubr.f32.mxu0 0.0
  %611 = vmatmul.mubr.f32.gmra.mrb[0].mxu0 %v542
  %v612 = vpop.f32.mrb[0].mxu0
  %v613 = vadd.f32 %v290, %v612
  %v614 = vpop.f32.mrb[0].mxu0
  %615 = vdwg.mxu0
  %617 = vrot.lane.b32.xlu0 %v259, 96
  %v618 = vpop.permute.xlu0 %617
  %v620 = vsel %vm306, %v275, 0
  %v622 = vsel %vm306, %v618, 0
  %624 = vmatprep.subr.mxu0 0.0
  %625 = vmatpush1.xpose.msra.mxu0 %v622
  %626 = vmatprep.subr.mxu0 0.0
  %627 = vmatpush1.xpose.msra.mxu0 0.0
  %628 = vmatprep.subr.mxu0 0.0
  %629 = vmatpush1.xpose.msra.mxu0 0.0
  %630 = vmatprep.subr.mxu0 0.0
  %631 = vmatpush1.xpose.msra.mxu0 0.0
  %632 = vmatprep.subr.mxu0 0.0
  %633 = vmatpush1.xpose.msra.mxu0 0.0
  %634 = vmatprep.subr.mxu0 0.0
  %635 = vmatpush1.xpose.msra.mxu0 0.0
  %636 = vmatprep.subr.mxu0 0.0
  %637 = vmatpush1.xpose.msra.mxu0 0.0
  %638 = vmatprep.subr.mxu0 0.0
  %639 = vmatpush1.xpose.msra.mxu0 0.0
  %640 = vmatprep.subr.mxu0 0.0
  %641 = vmatpush1.xpose.msra.mxu0 0.0
  %642 = vmatprep.subr.mxu0 0.0
  %643 = vmatpush1.xpose.msra.mxu0 0.0
  %644 = vmatprep.subr.mxu0 0.0
  %645 = vmatpush1.xpose.msra.mxu0 0.0
  %646 = vmatprep.subr.mxu0 0.0
  %647 = vmatpush1.xpose.msra.mxu0 0.0
  %648 = vmatprep.subr.mxu0 0.0
  %649 = vmatpush1.xpose.msra.mxu0 0.0
  %650 = vmatprep.subr.mxu0 0.0
  %651 = vmatpush1.xpose.msra.mxu0 0.0
  %652 = vmatprep.subr.mxu0 0.0
  %653 = vmatpush1.xpose.msra.mxu0 0.0
  %654 = vmatprep.subr.mxu0 0.0
  %655 = vmatpush1.xpose.msra.mxu0 0.0
  %656 = vmatprep.subr.mxu0 0.0
  %657 = vmatpush1.xpose.msra.mxu0 0.0
  %658 = vmatprep.subr.mxu0 0.0
  %659 = vmatpush1.xpose.msra.mxu0 0.0
  %660 = vmatprep.subr.mxu0 0.0
  %661 = vmatpush1.xpose.msra.mxu0 0.0
  %662 = vmatprep.subr.mxu0 0.0
  %663 = vmatpush1.xpose.msra.mxu0 0.0
  %664 = vmatprep.subr.mxu0 0.0
  %665 = vmatpush1.xpose.msra.mxu0 0.0
  %666 = vmatprep.subr.mxu0 0.0
  %667 = vmatpush1.xpose.msra.mxu0 0.0
  %668 = vmatprep.subr.mxu0 0.0
  %669 = vmatpush1.xpose.msra.mxu0 0.0
  %670 = vmatprep.subr.mxu0 0.0
  %671 = vmatpush1.xpose.msra.mxu0 0.0
  %672 = vmatprep.subr.mxu0 0.0
  %673 = vmatpush1.xpose.msra.mxu0 0.0
  %674 = vmatprep.subr.mxu0 0.0
  %675 = vmatpush1.xpose.msra.mxu0 0.0
  %676 = vmatprep.subr.mxu0 0.0
  %677 = vmatpush1.xpose.msra.mxu0 0.0
  %678 = vmatprep.subr.mxu0 0.0
  %679 = vmatpush1.xpose.msra.mxu0 0.0
  %680 = vmatprep.subr.mxu0 0.0
  %681 = vmatpush1.xpose.msra.mxu0 0.0
  %682 = vmatprep.subr.mxu0 0.0
  %683 = vmatpush1.xpose.msra.mxu0 0.0
  %684 = vmatprep.subr.mxu0 0.0
  %685 = vmatpush1.xpose.msra.mxu0 0.0
  %686 = vmatprep.subr.mxu0 0.0
  %687 = vmatpush1.xpose.msra.mxu0 0.0
  %688 = vmatprep.mubr.f32.mxu0 0.0
  %689 = vmatmul.mubr.f32.gmra.mrb[0].mxu0 %v620
  %v690 = vpop.f32.mrb[0].mxu0
  %v691 = vadd.f32 %v291, %v690
  %v692 = vpop.f32.mrb[0].mxu0
  %693 = vdwg.mxu0
  %695 = vrot.lane.b32.xlu0 %v260, 96
  %v696 = vpop.permute.xlu0 %695
  %v698 = vsel %vm306, %v276, 0
  %v700 = vsel %vm306, %v696, 0
  %702 = vmatprep.subr.mxu0 0.0
  %703 = vmatpush1.xpose.msra.mxu0 %v700
  %704 = vmatprep.subr.mxu0 0.0
  %705 = vmatpush1.xpose.msra.mxu0 0.0
  %706 = vmatprep.subr.mxu0 0.0
  %707 = vmatpush1.xpose.msra.mxu0 0.0
  %708 = vmatprep.subr.mxu0 0.0
  %709 = vmatpush1.xpose.msra.mxu0 0.0
  %710 = vmatprep.subr.mxu0 0.0
  %711 = vmatpush1.xpose.msra.mxu0 0.0
  %712 = vmatprep.subr.mxu0 0.0
  %713 = vmatpush1.xpose.msra.mxu0 0.0
  %714 = vmatprep.subr.mxu0 0.0
  %715 = vmatpush1.xpose.msra.mxu0 0.0
  %716 = vmatprep.subr.mxu0 0.0
  %717 = vmatpush1.xpose.msra.mxu0 0.0
  %718 = vmatprep.subr.mxu0 0.0
  %719 = vmatpush1.xpose.msra.mxu0 0.0
  %720 = vmatprep.subr.mxu0 0.0
  %721 = vmatpush1.xpose.msra.mxu0 0.0
  %722 = vmatprep.subr.mxu0 0.0
  %723 = vmatpush1.xpose.msra.mxu0 0.0
  %724 = vmatprep.subr.mxu0 0.0
  %725 = vmatpush1.xpose.msra.mxu0 0.0
  %726 = vmatprep.subr.mxu0 0.0
  %727 = vmatpush1.xpose.msra.mxu0 0.0
  %728 = vmatprep.subr.mxu0 0.0
  %729 = vmatpush1.xpose.msra.mxu0 0.0
  %730 = vmatprep.subr.mxu0 0.0
  %731 = vmatpush1.xpose.msra.mxu0 0.0
  %732 = vmatprep.subr.mxu0 0.0
  %733 = vmatpush1.xpose.msra.mxu0 0.0
  %734 = vmatprep.subr.mxu0 0.0
  %735 = vmatpush1.xpose.msra.mxu0 0.0
  %736 = vmatprep.subr.mxu0 0.0
  %737 = vmatpush1.xpose.msra.mxu0 0.0
  %738 = vmatprep.subr.mxu0 0.0
  %739 = vmatpush1.xpose.msra.mxu0 0.0
  %740 = vmatprep.subr.mxu0 0.0
  %741 = vmatpush1.xpose.msra.mxu0 0.0
  %742 = vmatprep.subr.mxu0 0.0
  %743 = vmatpush1.xpose.msra.mxu0 0.0
  %744 = vmatprep.subr.mxu0 0.0
  %745 = vmatpush1.xpose.msra.mxu0 0.0
  %746 = vmatprep.subr.mxu0 0.0
  %747 = vmatpush1.xpose.msra.mxu0 0.0
  %748 = vmatprep.subr.mxu0 0.0
  %749 = vmatpush1.xpose.msra.mxu0 0.0
  %750 = vmatprep.subr.mxu0 0.0
  %751 = vmatpush1.xpose.msra.mxu0 0.0
  %752 = vmatprep.subr.mxu0 0.0
  %753 = vmatpush1.xpose.msra.mxu0 0.0
  %754 = vmatprep.subr.mxu0 0.0
  %755 = vmatpush1.xpose.msra.mxu0 0.0
  %756 = vmatprep.subr.mxu0 0.0
  %757 = vmatpush1.xpose.msra.mxu0 0.0
  %758 = vmatprep.subr.mxu0 0.0
  %759 = vmatpush1.xpose.msra.mxu0 0.0
  %760 = vmatprep.subr.mxu0 0.0
  %761 = vmatpush1.xpose.msra.mxu0 0.0
  %762 = vmatprep.subr.mxu0 0.0
  %763 = vmatpush1.xpose.msra.mxu0 0.0
  %764 = vmatprep.subr.mxu0 0.0
  %765 = vmatpush1.xpose.msra.mxu0 0.0
  %766 = vmatprep.mubr.f32.mxu0 0.0
  %767 = vmatmul.mubr.f32.gmra.mrb[0].mxu0 %v698
  %v768 = vpop.f32.mrb[0].mxu0
  %v769 = vadd.f32 %v292, %v768
  %v770 = vpop.f32.mrb[0].mxu0
  %771 = vdwg.mxu0
  %773 = vrot.lane.b32.xlu0 %v261, 96
  %v774 = vpop.permute.xlu0 %773
  %v776 = vsel %vm306, %v277, 0
  %v778 = vsel %vm306, %v774, 0
  %780 = vmatprep.subr.mxu0 0.0
  %781 = vmatpush1.xpose.msra.mxu0 %v778
  %782 = vmatprep.subr.mxu0 0.0
  %783 = vmatpush1.xpose.msra.mxu0 0.0
  %784 = vmatprep.subr.mxu0 0.0
  %785 = vmatpush1.xpose.msra.mxu0 0.0
  %786 = vmatprep.subr.mxu0 0.0
  %787 = vmatpush1.xpose.msra.mxu0 0.0
  %788 = vmatprep.subr.mxu0 0.0
  %789 = vmatpush1.xpose.msra.mxu0 0.0
  %790 = vmatprep.subr.mxu0 0.0
  %791 = vmatpush1.xpose.msra.mxu0 0.0
  %792 = vmatprep.subr.mxu0 0.0
  %793 = vmatpush1.xpose.msra.mxu0 0.0
  %794 = vmatprep.subr.mxu0 0.0
  %795 = vmatpush1.xpose.msra.mxu0 0.0
  %796 = vmatprep.subr.mxu0 0.0
  %797 = vmatpush1.xpose.msra.mxu0 0.0
  %798 = vmatprep.subr.mxu0 0.0
  %799 = vmatpush1.xpose.msra.mxu0 0.0
  %800 = vmatprep.subr.mxu0 0.0
  %801 = vmatpush1.xpose.msra.mxu0 0.0
  %802 = vmatprep.subr.mxu0 0.0
  %803 = vmatpush1.xpose.msra.mxu0 0.0
  %804 = vmatprep.subr.mxu0 0.0
  %805 = vmatpush1.xpose.msra.mxu0 0.0
  %806 = vmatprep.subr.mxu0 0.0
  %807 = vmatpush1.xpose.msra.mxu0 0.0
  %808 = vmatprep.subr.mxu0 0.0
  %809 = vmatpush1.xpose.msra.mxu0 0.0
  %810 = vmatprep.subr.mxu0 0.0
  %811 = vmatpush1.xpose.msra.mxu0 0.0
  %812 = vmatprep.subr.mxu0 0.0
  %813 = vmatpush1.xpose.msra.mxu0 0.0
  %814 = vmatprep.subr.mxu0 0.0
  %815 = vmatpush1.xpose.msra.mxu0 0.0
  %816 = vmatprep.subr.mxu0 0.0
  %817 = vmatpush1.xpose.msra.mxu0 0.0
  %818 = vmatprep.subr.mxu0 0.0
  %819 = vmatpush1.xpose.msra.mxu0 0.0
  %820 = vmatprep.subr.mxu0 0.0
  %821 = vmatpush1.xpose.msra.mxu0 0.0
  %822 = vmatprep.subr.mxu0 0.0
  %823 = vmatpush1.xpose.msra.mxu0 0.0
  %824 = vmatprep.subr.mxu0 0.0
  %825 = vmatpush1.xpose.msra.mxu0 0.0
  %826 = vmatprep.subr.mxu0 0.0
  %827 = vmatpush1.xpose.msra.mxu0 0.0
  %828 = vmatprep.subr.mxu0 0.0
  %829 = vmatpush1.xpose.msra.mxu0 0.0
  %830 = vmatprep.subr.mxu0 0.0
  %831 = vmatpush1.xpose.msra.mxu0 0.0
  %832 = vmatprep.subr.mxu0 0.0
  %833 = vmatpush1.xpose.msra.mxu0 0.0
  %834 = vmatprep.subr.mxu0 0.0
  %835 = vmatpush1.xpose.msra.mxu0 0.0
  %836 = vmatprep.subr.mxu0 0.0
  %837 = vmatpush1.xpose.msra.mxu0 0.0
  %838 = vmatprep.subr.mxu0 0.0
  %839 = vmatpush1.xpose.msra.mxu0 0.0
  %840 = vmatprep.subr.mxu0 0.0
  %841 = vmatpush1.xpose.msra.mxu0 0.0
  %842 = vmatprep.subr.mxu0 0.0
  %843 = vmatpush1.xpose.msra.mxu0 0.0
  %844 = vmatprep.mubr.f32.mxu0 0.0
  %845 = vmatmul.mubr.f32.gmra.mrb[0].mxu0 %v776
  %v846 = vpop.f32.mrb[0].mxu0
  %v847 = vadd.f32 %v293, %v846
  %v848 = vpop.f32.mrb[0].mxu0
  %849 = vdwg.mxu0
  %851 = vrot.lane.b32.xlu0 %v262, 96
  %v852 = vpop.permute.xlu0 %851
  %v854 = vsel %vm306, %v278, 0
  %v856 = vsel %vm306, %v852, 0
  %858 = vmatprep.subr.mxu0 0.0
  %859 = vmatpush1.xpose.msra.mxu0 %v856
  %860 = vmatprep.subr.mxu0 0.0
  %861 = vmatpush1.xpose.msra.mxu0 0.0
  %862 = vmatprep.subr.mxu0 0.0
  %863 = vmatpush1.xpose.msra.mxu0 0.0
  %864 = vmatprep.subr.mxu0 0.0
  %865 = vmatpush1.xpose.msra.mxu0 0.0
  %866 = vmatprep.subr.mxu0 0.0
  %867 = vmatpush1.xpose.msra.mxu0 0.0
  %868 = vmatprep.subr.mxu0 0.0
  %869 = vmatpush1.xpose.msra.mxu0 0.0
  %870 = vmatprep.subr.mxu0 0.0
  %871 = vmatpush1.xpose.msra.mxu0 0.0
  %872 = vmatprep.subr.mxu0 0.0
  %873 = vmatpush1.xpose.msra.mxu0 0.0
  %874 = vmatprep.subr.mxu0 0.0
  %875 = vmatpush1.xpose.msra.mxu0 0.0
  %876 = vmatprep.subr.mxu0 0.0
  %877 = vmatpush1.xpose.msra.mxu0 0.0
  %878 = vmatprep.subr.mxu0 0.0
  %879 = vmatpush1.xpose.msra.mxu0 0.0
  %880 = vmatprep.subr.mxu0 0.0
  %881 = vmatpush1.xpose.msra.mxu0 0.0
  %882 = vmatprep.subr.mxu0 0.0
  %883 = vmatpush1.xpose.msra.mxu0 0.0
  %884 = vmatprep.subr.mxu0 0.0
  %885 = vmatpush1.xpose.msra.mxu0 0.0
  %886 = vmatprep.subr.mxu0 0.0
  %887 = vmatpush1.xpose.msra.mxu0 0.0
  %888 = vmatprep.subr.mxu0 0.0
  %889 = vmatpush1.xpose.msra.mxu0 0.0
  %890 = vmatprep.subr.mxu0 0.0
  %891 = vmatpush1.xpose.msra.mxu0 0.0
  %892 = vmatprep.subr.mxu0 0.0
  %893 = vmatpush1.xpose.msra.mxu0 0.0
  %894 = vmatprep.subr.mxu0 0.0
  %895 = vmatpush1.xpose.msra.mxu0 0.0
  %896 = vmatprep.subr.mxu0 0.0
  %897 = vmatpush1.xpose.msra.mxu0 0.0
  %898 = vmatprep.subr.mxu0 0.0
  %899 = vmatpush1.xpose.msra.mxu0 0.0
  %900 = vmatprep.subr.mxu0 0.0
  %901 = vmatpush1.xpose.msra.mxu0 0.0
  %902 = vmatprep.subr.mxu0 0.0
  %903 = vmatpush1.xpose.msra.mxu0 0.0
  %904 = vmatprep.subr.mxu0 0.0
  %905 = vmatpush1.xpose.msra.mxu0 0.0
  %906 = vmatprep.subr.mxu0 0.0
  %907 = vmatpush1.xpose.msra.mxu0 0.0
  %908 = vmatprep.subr.mxu0 0.0
  %909 = vmatpush1.xpose.msra.mxu0 0.0
  %910 = vmatprep.subr.mxu0 0.0
  %911 = vmatpush1.xpose.msra.mxu0 0.0
  %912 = vmatprep.subr.mxu0 0.0
  %913 = vmatpush1.xpose.msra.mxu0 0.0
  %914 = vmatprep.subr.mxu0 0.0
  %915 = vmatpush1.xpose.msra.mxu0 0.0
  %916 = vmatprep.subr.mxu0 0.0
  %917 = vmatpush1.xpose.msra.mxu0 0.0
  %918 = vmatprep.subr.mxu0 0.0
  %919 = vmatpush1.xpose.msra.mxu0 0.0
  %920 = vmatprep.subr.mxu0 0.0
  %921 = vmatpush1.xpose.msra.mxu0 0.0
  %922 = vmatprep.mubr.f32.mxu0 0.0
  %923 = vmatmul.mubr.f32.gmra.mrb[0].mxu0 %v854
  %v924 = vpop.f32.mrb[0].mxu0
  %v925 = vadd.f32 %v294, %v924
  %v926 = vpop.f32.mrb[0].mxu0
  %927 = vdwg.mxu0
  %929 = vrot.lane.b32.xlu0 %v263, 96
  %v930 = vpop.permute.xlu0 %929
  %v932 = vsel %vm306, %v279, 0
  %v934 = vsel %vm306, %v930, 0
  %936 = vmatprep.subr.mxu0 0.0
  %937 = vmatpush1.xpose.msra.mxu0 %v934
  %938 = vmatprep.subr.mxu0 0.0
  %939 = vmatpush1.xpose.msra.mxu0 0.0
  %940 = vmatprep.subr.mxu0 0.0
  %941 = vmatpush1.xpose.msra.mxu0 0.0
  %942 = vmatprep.subr.mxu0 0.0
  %943 = vmatpush1.xpose.msra.mxu0 0.0
  %944 = vmatprep.subr.mxu0 0.0
  %945 = vmatpush1.xpose.msra.mxu0 0.0
  %946 = vmatprep.subr.mxu0 0.0
  %947 = vmatpush1.xpose.msra.mxu0 0.0
  %948 = vmatprep.subr.mxu0 0.0
  %949 = vmatpush1.xpose.msra.mxu0 0.0
  %950 = vmatprep.subr.mxu0 0.0
  %951 = vmatpush1.xpose.msra.mxu0 0.0
  %952 = vmatprep.subr.mxu0 0.0
  %953 = vmatpush1.xpose.msra.mxu0 0.0
  %954 = vmatprep.subr.mxu0 0.0
  %955 = vmatpush1.xpose.msra.mxu0 0.0
  %956 = vmatprep.subr.mxu0 0.0
  %957 = vmatpush1.xpose.msra.mxu0 0.0
  %958 = vmatprep.subr.mxu0 0.0
  %959 = vmatpush1.xpose.msra.mxu0 0.0
  %960 = vmatprep.subr.mxu0 0.0
  %961 = vmatpush1.xpose.msra.mxu0 0.0
  %962 = vmatprep.subr.mxu0 0.0
  %963 = vmatpush1.xpose.msra.mxu0 0.0
  %964 = vmatprep.subr.mxu0 0.0
  %965 = vmatpush1.xpose.msra.mxu0 0.0
  %966 = vmatprep.subr.mxu0 0.0
  %967 = vmatpush1.xpose.msra.mxu0 0.0
  %968 = vmatprep.subr.mxu0 0.0
  %969 = vmatpush1.xpose.msra.mxu0 0.0
  %970 = vmatprep.subr.mxu0 0.0
  %971 = vmatpush1.xpose.msra.mxu0 0.0
  %972 = vmatprep.subr.mxu0 0.0
  %973 = vmatpush1.xpose.msra.mxu0 0.0
  %974 = vmatprep.subr.mxu0 0.0
  %975 = vmatpush1.xpose.msra.mxu0 0.0
  %976 = vmatprep.subr.mxu0 0.0
  %977 = vmatpush1.xpose.msra.mxu0 0.0
  %978 = vmatprep.subr.mxu0 0.0
  %979 = vmatpush1.xpose.msra.mxu0 0.0
  %980 = vmatprep.subr.mxu0 0.0
  %981 = vmatpush1.xpose.msra.mxu0 0.0
  %982 = vmatprep.subr.mxu0 0.0
  %983 = vmatpush1.xpose.msra.mxu0 0.0
  %984 = vmatprep.subr.mxu0 0.0
  %985 = vmatpush1.xpose.msra.mxu0 0.0
  %986 = vmatprep.subr.mxu0 0.0
  %987 = vmatpush1.xpose.msra.mxu0 0.0
  %988 = vmatprep.subr.mxu0 0.0
  %989 = vmatpush1.xpose.msra.mxu0 0.0
  %990 = vmatprep.subr.mxu0 0.0
  %991 = vmatpush1.xpose.msra.mxu0 0.0
  %992 = vmatprep.subr.mxu0 0.0
  %993 = vmatpush1.xpose.msra.mxu0 0.0
  %994 = vmatprep.subr.mxu0 0.0
  %995 = vmatpush1.xpose.msra.mxu0 0.0
  %996 = vmatprep.subr.mxu0 0.0
  %997 = vmatpush1.xpose.msra.mxu0 0.0
  %998 = vmatprep.subr.mxu0 0.0
  %999 = vmatpush1.xpose.msra.mxu0 0.0
  %1000 = vmatprep.mubr.f32.mxu0 0.0
  %1001 = vmatmul.mubr.f32.gmra.mrb[0].mxu0 %v932
  %v1002 = vpop.f32.mrb[0].mxu0
  %v1003 = vadd.f32 %v295, %v1002
  %v1004 = vpop.f32.mrb[0].mxu0
  %1005 = vdwg.mxu0
  %1007 = vrot.lane.b32.xlu0 %v264, 96
  %v1008 = vpop.permute.xlu0 %1007
  %v1010 = vsel %vm306, %v280, 0
  %v1012 = vsel %vm306, %v1008, 0
  %1014 = vmatprep.subr.mxu0 0.0
  %1015 = vmatpush1.xpose.msra.mxu0 %v1012
  %1016 = vmatprep.subr.mxu0 0.0
  %1017 = vmatpush1.xpose.msra.mxu0 0.0
  %1018 = vmatprep.subr.mxu0 0.0
  %1019 = vmatpush1.xpose.msra.mxu0 0.0
  %1020 = vmatprep.subr.mxu0 0.0
  %1021 = vmatpush1.xpose.msra.mxu0 0.0
  %1022 = vmatprep.subr.mxu0 0.0
  %1023 = vmatpush1.xpose.msra.mxu0 0.0
  %1024 = vmatprep.subr.mxu0 0.0
  %1025 = vmatpush1.xpose.msra.mxu0 0.0
  %1026 = vmatprep.subr.mxu0 0.0
  %1027 = vmatpush1.xpose.msra.mxu0 0.0
  %1028 = vmatprep.subr.mxu0 0.0
  %1029 = vmatpush1.xpose.msra.mxu0 0.0
  %1030 = vmatprep.subr.mxu0 0.0
  %1031 = vmatpush1.xpose.msra.mxu0 0.0
  %1032 = vmatprep.subr.mxu0 0.0
  %1033 = vmatpush1.xpose.msra.mxu0 0.0
  %1034 = vmatprep.subr.mxu0 0.0
  %1035 = vmatpush1.xpose.msra.mxu0 0.0
  %1036 = vmatprep.subr.mxu0 0.0
  %1037 = vmatpush1.xpose.msra.mxu0 0.0
  %1038 = vmatprep.subr.mxu0 0.0
  %1039 = vmatpush1.xpose.msra.mxu0 0.0
  %1040 = vmatprep.subr.mxu0 0.0
  %1041 = vmatpush1.xpose.msra.mxu0 0.0
  %1042 = vmatprep.subr.mxu0 0.0
  %1043 = vmatpush1.xpose.msra.mxu0 0.0
  %1044 = vmatprep.subr.mxu0 0.0
  %1045 = vmatpush1.xpose.msra.mxu0 0.0
  %1046 = vmatprep.subr.mxu0 0.0
  %1047 = vmatpush1.xpose.msra.mxu0 0.0
  %1048 = vmatprep.subr.mxu0 0.0
  %1049 = vmatpush1.xpose.msra.mxu0 0.0
  %1050 = vmatprep.subr.mxu0 0.0
  %1051 = vmatpush1.xpose.msra.mxu0 0.0
  %1052 = vmatprep.subr.mxu0 0.0
  %1053 = vmatpush1.xpose.msra.mxu0 0.0
  %1054 = vmatprep.subr.mxu0 0.0
  %1055 = vmatpush1.xpose.msra.mxu0 0.0
  %1056 = vmatprep.subr.mxu0 0.0
  %1057 = vmatpush1.xpose.msra.mxu0 0.0
  %1058 = vmatprep.subr.mxu0 0.0
  %1059 = vmatpush1.xpose.msra.mxu0 0.0
  %1060 = vmatprep.subr.mxu0 0.0
  %1061 = vmatpush1.xpose.msra.mxu0 0.0
  %1062 = vmatprep.subr.mxu0 0.0
  %1063 = vmatpush1.xpose.msra.mxu0 0.0
  %1064 = vmatprep.subr.mxu0 0.0
  %1065 = vmatpush1.xpose.msra.mxu0 0.0
  %1066 = vmatprep.subr.mxu0 0.0
  %1067 = vmatpush1.xpose.msra.mxu0 0.0
  %1068 = vmatprep.subr.mxu0 0.0
  %1069 = vmatpush1.xpose.msra.mxu0 0.0
  %1070 = vmatprep.subr.mxu0 0.0
  %1071 = vmatpush1.xpose.msra.mxu0 0.0
  %1072 = vmatprep.subr.mxu0 0.0
  %1073 = vmatpush1.xpose.msra.mxu0 0.0
  %1074 = vmatprep.subr.mxu0 0.0
  %1075 = vmatpush1.xpose.msra.mxu0 0.0
  %1076 = vmatprep.subr.mxu0 0.0
  %1077 = vmatpush1.xpose.msra.mxu0 0.0
  %1078 = vmatprep.mubr.f32.mxu0 0.0
  %1079 = vmatmul.mubr.f32.gmra.mrb[0].mxu0 %v1010
  %v1080 = vpop.f32.mrb[0].mxu0
  %v1081 = vadd.f32 %v296, %v1080
  %v1082 = vpop.f32.mrb[0].mxu0
  %1083 = vdwg.mxu0
  %1085 = vrot.lane.b32.xlu0 %v265, 96
  %v1086 = vpop.permute.xlu0 %1085
  %v1088 = vsel %vm306, %v281, 0
  %v1090 = vsel %vm306, %v1086, 0
  %1092 = vmatprep.subr.mxu0 0.0
  %1093 = vmatpush1.xpose.msra.mxu0 %v1090
  %1094 = vmatprep.subr.mxu0 0.0
  %1095 = vmatpush1.xpose.msra.mxu0 0.0
  %1096 = vmatprep.subr.mxu0 0.0
  %1097 = vmatpush1.xpose.msra.mxu0 0.0
  %1098 = vmatprep.subr.mxu0 0.0
  %1099 = vmatpush1.xpose.msra.mxu0 0.0
  %1100 = vmatprep.subr.mxu0 0.0
  %1101 = vmatpush1.xpose.msra.mxu0 0.0
  %1102 = vmatprep.subr.mxu0 0.0
  %1103 = vmatpush1.xpose.msra.mxu0 0.0
  %1104 = vmatprep.subr.mxu0 0.0
  %1105 = vmatpush1.xpose.msra.mxu0 0.0
  %1106 = vmatprep.subr.mxu0 0.0
  %1107 = vmatpush1.xpose.msra.mxu0 0.0
  %1108 = vmatprep.subr.mxu0 0.0
  %1109 = vmatpush1.xpose.msra.mxu0 0.0
  %1110 = vmatprep.subr.mxu0 0.0
  %1111 = vmatpush1.xpose.msra.mxu0 0.0
  %1112 = vmatprep.subr.mxu0 0.0
  %1113 = vmatpush1.xpose.msra.mxu0 0.0
  %1114 = vmatprep.subr.mxu0 0.0
  %1115 = vmatpush1.xpose.msra.mxu0 0.0
  %1116 = vmatprep.subr.mxu0 0.0
  %1117 = vmatpush1.xpose.msra.mxu0 0.0
  %1118 = vmatprep.subr.mxu0 0.0
  %1119 = vmatpush1.xpose.msra.mxu0 0.0
  %1120 = vmatprep.subr.mxu0 0.0
  %1121 = vmatpush1.xpose.msra.mxu0 0.0
  %1122 = vmatprep.subr.mxu0 0.0
  %1123 = vmatpush1.xpose.msra.mxu0 0.0
  %1124 = vmatprep.subr.mxu0 0.0
  %1125 = vmatpush1.xpose.msra.mxu0 0.0
  %1126 = vmatprep.subr.mxu0 0.0
  %1127 = vmatpush1.xpose.msra.mxu0 0.0
  %1128 = vmatprep.subr.mxu0 0.0
  %1129 = vmatpush1.xpose.msra.mxu0 0.0
  %1130 = vmatprep.subr.mxu0 0.0
  %1131 = vmatpush1.xpose.msra.mxu0 0.0
  %1132 = vmatprep.subr.mxu0 0.0
  %1133 = vmatpush1.xpose.msra.mxu0 0.0
  %1134 = vmatprep.subr.mxu0 0.0
  %1135 = vmatpush1.xpose.msra.mxu0 0.0
  %1136 = vmatprep.subr.mxu0 0.0
  %1137 = vmatpush1.xpose.msra.mxu0 0.0
  %1138 = vmatprep.subr.mxu0 0.0
  %1139 = vmatpush1.xpose.msra.mxu0 0.0
  %1140 = vmatprep.subr.mxu0 0.0
  %1141 = vmatpush1.xpose.msra.mxu0 0.0
  %1142 = vmatprep.subr.mxu0 0.0
  %1143 = vmatpush1.xpose.msra.mxu0 0.0
  %1144 = vmatprep.subr.mxu0 0.0
  %1145 = vmatpush1.xpose.msra.mxu0 0.0
  %1146 = vmatprep.subr.mxu0 0.0
  %1147 = vmatpush1.xpose.msra.mxu0 0.0
  %1148 = vmatprep.subr.mxu0 0.0
  %1149 = vmatpush1.xpose.msra.mxu0 0.0
  %1150 = vmatprep.subr.mxu0 0.0
  %1151 = vmatpush1.xpose.msra.mxu0 0.0
  %1152 = vmatprep.subr.mxu0 0.0
  %1153 = vmatpush1.xpose.msra.mxu0 0.0
  %1154 = vmatprep.subr.mxu0 0.0
  %1155 = vmatpush1.xpose.msra.mxu0 0.0
  %1156 = vmatprep.mubr.f32.mxu0 0.0
  %1157 = vmatmul.mubr.f32.gmra.mrb[0].mxu0 %v1088
  %v1158 = vpop.f32.mrb[0].mxu0
  %v1159 = vadd.f32 %v297, %v1158
  %v1160 = vpop.f32.mrb[0].mxu0
  %1161 = vdwg.mxu0
  %1163 = vrot.lane.b32.xlu0 %v266, 96
  %v1164 = vpop.permute.xlu0 %1163
  %v1166 = vsel %vm306, %v282, 0
  %v1168 = vsel %vm306, %v1164, 0
  %1170 = vmatprep.subr.mxu0 0.0
  %1171 = vmatpush1.xpose.msra.mxu0 %v1168
  %1172 = vmatprep.subr.mxu0 0.0
  %1173 = vmatpush1.xpose.msra.mxu0 0.0
  %1174 = vmatprep.subr.mxu0 0.0
  %1175 = vmatpush1.xpose.msra.mxu0 0.0
  %1176 = vmatprep.subr.mxu0 0.0
  %1177 = vmatpush1.xpose.msra.mxu0 0.0
  %1178 = vmatprep.subr.mxu0 0.0
  %1179 = vmatpush1.xpose.msra.mxu0 0.0
  %1180 = vmatprep.subr.mxu0 0.0
  %1181 = vmatpush1.xpose.msra.mxu0 0.0
  %1182 = vmatprep.subr.mxu0 0.0
  %1183 = vmatpush1.xpose.msra.mxu0 0.0
  %1184 = vmatprep.subr.mxu0 0.0
  %1185 = vmatpush1.xpose.msra.mxu0 0.0
  %1186 = vmatprep.subr.mxu0 0.0
  %1187 = vmatpush1.xpose.msra.mxu0 0.0
  %1188 = vmatprep.subr.mxu0 0.0
  %1189 = vmatpush1.xpose.msra.mxu0 0.0
  %1190 = vmatprep.subr.mxu0 0.0
  %1191 = vmatpush1.xpose.msra.mxu0 0.0
  %1192 = vmatprep.subr.mxu0 0.0
  %1193 = vmatpush1.xpose.msra.mxu0 0.0
  %1194 = vmatprep.subr.mxu0 0.0
  %1195 = vmatpush1.xpose.msra.mxu0 0.0
  %1196 = vmatprep.subr.mxu0 0.0
  %1197 = vmatpush1.xpose.msra.mxu0 0.0
  %1198 = vmatprep.subr.mxu0 0.0
  %1199 = vmatpush1.xpose.msra.mxu0 0.0
  %1200 = vmatprep.subr.mxu0 0.0
  %1201 = vmatpush1.xpose.msra.mxu0 0.0
  %1202 = vmatprep.subr.mxu0 0.0
  %1203 = vmatpush1.xpose.msra.mxu0 0.0
  %1204 = vmatprep.subr.mxu0 0.0
  %1205 = vmatpush1.xpose.msra.mxu0 0.0
  %1206 = vmatprep.subr.mxu0 0.0
  %1207 = vmatpush1.xpose.msra.mxu0 0.0
  %1208 = vmatprep.subr.mxu0 0.0
  %1209 = vmatpush1.xpose.msra.mxu0 0.0
  %1210 = vmatprep.subr.mxu0 0.0
  %1211 = vmatpush1.xpose.msra.mxu0 0.0
  %1212 = vmatprep.subr.mxu0 0.0
  %1213 = vmatpush1.xpose.msra.mxu0 0.0
  %1214 = vmatprep.subr.mxu0 0.0
  %1215 = vmatpush1.xpose.msra.mxu0 0.0
  %1216 = vmatprep.subr.mxu0 0.0
  %1217 = vmatpush1.xpose.msra.mxu0 0.0
  %1218 = vmatprep.subr.mxu0 0.0
  %1219 = vmatpush1.xpose.msra.mxu0 0.0
  %1220 = vmatprep.subr.mxu0 0.0
  %1221 = vmatpush1.xpose.msra.mxu0 0.0
  %1222 = vmatprep.subr.mxu0 0.0
  %1223 = vmatpush1.xpose.msra.mxu0 0.0
  %1224 = vmatprep.subr.mxu0 0.0
  %1225 = vmatpush1.xpose.msra.mxu0 0.0
  %1226 = vmatprep.subr.mxu0 0.0
  %1227 = vmatpush1.xpose.msra.mxu0 0.0
  %1228 = vmatprep.subr.mxu0 0.0
  %1229 = vmatpush1.xpose.msra.mxu0 0.0
  %1230 = vmatprep.subr.mxu0 0.0
  %1231 = vmatpush1.xpose.msra.mxu0 0.0
  %1232 = vmatprep.subr.mxu0 0.0
  %1233 = vmatpush1.xpose.msra.mxu0 0.0
  %1234 = vmatprep.mubr.f32.mxu0 0.0
  %1235 = vmatmul.mubr.f32.gmra.mrb[0].mxu0 %v1166
  %v1236 = vpop.f32.mrb[0].mxu0
  %v1237 = vadd.f32 %v298, %v1236
  %v1238 = vpop.f32.mrb[0].mxu0
  %1239 = vdwg.mxu0
  %1241 = vrot.lane.b32.xlu0 %v267, 96
  %v1242 = vpop.permute.xlu0 %1241
  %v1244 = vsel %vm306, %v283, 0
  %v1246 = vsel %vm306, %v1242, 0
  %1248 = vmatprep.subr.mxu0 0.0
  %1249 = vmatpush1.xpose.msra.mxu0 %v1246
  %1250 = vmatprep.subr.mxu0 0.0
  %1251 = vmatpush1.xpose.msra.mxu0 0.0
  %1252 = vmatprep.subr.mxu0 0.0
  %1253 = vmatpush1.xpose.msra.mxu0 0.0
  %1254 = vmatprep.subr.mxu0 0.0
  %1255 = vmatpush1.xpose.msra.mxu0 0.0
  %1256 = vmatprep.subr.mxu0 0.0
  %1257 = vmatpush1.xpose.msra.mxu0 0.0
  %1258 = vmatprep.subr.mxu0 0.0
  %1259 = vmatpush1.xpose.msra.mxu0 0.0
  %1260 = vmatprep.subr.mxu0 0.0
  %1261 = vmatpush1.xpose.msra.mxu0 0.0
  %1262 = vmatprep.subr.mxu0 0.0
  %1263 = vmatpush1.xpose.msra.mxu0 0.0
  %1264 = vmatprep.subr.mxu0 0.0
  %1265 = vmatpush1.xpose.msra.mxu0 0.0
  %1266 = vmatprep.subr.mxu0 0.0
  %1267 = vmatpush1.xpose.msra.mxu0 0.0
  %1268 = vmatprep.subr.mxu0 0.0
  %1269 = vmatpush1.xpose.msra.mxu0 0.0
  %1270 = vmatprep.subr.mxu0 0.0
  %1271 = vmatpush1.xpose.msra.mxu0 0.0
  %1272 = vmatprep.subr.mxu0 0.0
  %1273 = vmatpush1.xpose.msra.mxu0 0.0
  %1274 = vmatprep.subr.mxu0 0.0
  %1275 = vmatpush1.xpose.msra.mxu0 0.0
  %1276 = vmatprep.subr.mxu0 0.0
  %1277 = vmatpush1.xpose.msra.mxu0 0.0
  %1278 = vmatprep.subr.mxu0 0.0
  %1279 = vmatpush1.xpose.msra.mxu0 0.0
  %1280 = vmatprep.subr.mxu0 0.0
  %1281 = vmatpush1.xpose.msra.mxu0 0.0
  %1282 = vmatprep.subr.mxu0 0.0
  %1283 = vmatpush1.xpose.msra.mxu0 0.0
  %1284 = vmatprep.subr.mxu0 0.0
  %1285 = vmatpush1.xpose.msra.mxu0 0.0
  %1286 = vmatprep.subr.mxu0 0.0
  %1287 = vmatpush1.xpose.msra.mxu0 0.0
  %1288 = vmatprep.subr.mxu0 0.0
  %1289 = vmatpush1.xpose.msra.mxu0 0.0
  %1290 = vmatprep.subr.mxu0 0.0
  %1291 = vmatpush1.xpose.msra.mxu0 0.0
  %1292 = vmatprep.subr.mxu0 0.0
  %1293 = vmatpush1.xpose.msra.mxu0 0.0
  %1294 = vmatprep.subr.mxu0 0.0
  %1295 = vmatpush1.xpose.msra.mxu0 0.0
  %1296 = vmatprep.subr.mxu0 0.0
  %1297 = vmatpush1.xpose.msra.mxu0 0.0
  %1298 = vmatprep.subr.mxu0 0.0
  %1299 = vmatpush1.xpose.msra.mxu0 0.0
  %1300 = vmatprep.subr.mxu0 0.0
  %1301 = vmatpush1.xpose.msra.mxu0 0.0
  %1302 = vmatprep.subr.mxu0 0.0
  %1303 = vmatpush1.xpose.msra.mxu0 0.0
  %1304 = vmatprep.subr.mxu0 0.0
  %1305 = vmatpush1.xpose.msra.mxu0 0.0
  %1306 = vmatprep.subr.mxu0 0.0
  %1307 = vmatpush1.xpose.msra.mxu0 0.0
  %1308 = vmatprep.subr.mxu0 0.0
  %1309 = vmatpush1.xpose.msra.mxu0 0.0
  %1310 = vmatprep.subr.mxu0 0.0
  %1311 = vmatpush1.xpose.msra.mxu0 0.0
  %1312 = vmatprep.mubr.f32.mxu0 0.0
  %1313 = vmatmul.mubr.f32.gmra.mrb[0].mxu0 %v1244
  %v1314 = vpop.f32.mrb[0].mxu0
  %v1315 = vadd.f32 %v299, %v1314
  %v1316 = vpop.f32.mrb[0].mxu0
  %1317 = vdwg.mxu0
  %1319 = vrot.lane.b32.xlu0 %v268, 96
  %v1320 = vpop.permute.xlu0 %1319
  %v1322 = vsel %vm306, %v284, 0
  %v1324 = vsel %vm306, %v1320, 0
  %1326 = vmatprep.subr.mxu0 0.0
  %1327 = vmatpush1.xpose.msra.mxu0 %v1324
  %1328 = vmatprep.subr.mxu0 0.0
  %1329 = vmatpush1.xpose.msra.mxu0 0.0
  %1330 = vmatprep.subr.mxu0 0.0
  %1331 = vmatpush1.xpose.msra.mxu0 0.0
  %1332 = vmatprep.subr.mxu0 0.0
  %1333 = vmatpush1.xpose.msra.mxu0 0.0
  %1334 = vmatprep.subr.mxu0 0.0
  %1335 = vmatpush1.xpose.msra.mxu0 0.0
  %1336 = vmatprep.subr.mxu0 0.0
  %1337 = vmatpush1.xpose.msra.mxu0 0.0
  %1338 = vmatprep.subr.mxu0 0.0
  %1339 = vmatpush1.xpose.msra.mxu0 0.0
  %1340 = vmatprep.subr.mxu0 0.0
  %1341 = vmatpush1.xpose.msra.mxu0 0.0
  %1342 = vmatprep.subr.mxu0 0.0
  %1343 = vmatpush1.xpose.msra.mxu0 0.0
  %1344 = vmatprep.subr.mxu0 0.0
  %1345 = vmatpush1.xpose.msra.mxu0 0.0
  %1346 = vmatprep.subr.mxu0 0.0
  %1347 = vmatpush1.xpose.msra.mxu0 0.0
  %1348 = vmatprep.subr.mxu0 0.0
  %1349 = vmatpush1.xpose.msra.mxu0 0.0
  %1350 = vmatprep.subr.mxu0 0.0
  %1351 = vmatpush1.xpose.msra.mxu0 0.0
  %1352 = vmatprep.subr.mxu0 0.0
  %1353 = vmatpush1.xpose.msra.mxu0 0.0
  %1354 = vmatprep.subr.mxu0 0.0
  %1355 = vmatpush1.xpose.msra.mxu0 0.0
  %1356 = vmatprep.subr.mxu0 0.0
  %1357 = vmatpush1.xpose.msra.mxu0 0.0
  %1358 = vmatprep.subr.mxu0 0.0
  %1359 = vmatpush1.xpose.msra.mxu0 0.0
  %1360 = vmatprep.subr.mxu0 0.0
  %1361 = vmatpush1.xpose.msra.mxu0 0.0
  %1362 = vmatprep.subr.mxu0 0.0
  %1363 = vmatpush1.xpose.msra.mxu0 0.0
  %1364 = vmatprep.subr.mxu0 0.0
  %1365 = vmatpush1.xpose.msra.mxu0 0.0
  %1366 = vmatprep.subr.mxu0 0.0
  %1367 = vmatpush1.xpose.msra.mxu0 0.0
  %1368 = vmatprep.subr.mxu0 0.0
  %1369 = vmatpush1.xpose.msra.mxu0 0.0
  %1370 = vmatprep.subr.mxu0 0.0
  %1371 = vmatpush1.xpose.msra.mxu0 0.0
  %1372 = vmatprep.subr.mxu0 0.0
  %1373 = vmatpush1.xpose.msra.mxu0 0.0
  %1374 = vmatprep.subr.mxu0 0.0
  %1375 = vmatpush1.xpose.msra.mxu0 0.0
  %1376 = vmatprep.subr.mxu0 0.0
  %1377 = vmatpush1.xpose.msra.mxu0 0.0
  %1378 = vmatprep.subr.mxu0 0.0
  %1379 = vmatpush1.xpose.msra.mxu0 0.0
  %1380 = vmatprep.subr.mxu0 0.0
  %1381 = vmatpush1.xpose.msra.mxu0 0.0
  %1382 = vmatprep.subr.mxu0 0.0
  %1383 = vmatpush1.xpose.msra.mxu0 0.0
  %1384 = vmatprep.subr.mxu0 0.0
  %1385 = vmatpush1.xpose.msra.mxu0 0.0
  %1386 = vmatprep.subr.mxu0 0.0
  %1387 = vmatpush1.xpose.msra.mxu0 0.0
  %1388 = vmatprep.subr.mxu0 0.0
  %1389 = vmatpush1.xpose.msra.mxu0 0.0
  %1390 = vmatprep.mubr.f32.mxu0 0.0
  %1391 = vmatmul.mubr.f32.gmra.mrb[0].mxu0 %v1322
  %v1392 = vpop.f32.mrb[0].mxu0
  %v1393 = vadd.f32 %v300, %v1392
  %v1394 = vpop.f32.mrb[0].mxu0
  %1395 = vdwg.mxu0
  %1397 = vrot.lane.b32.xlu0 %v269, 96
  %v1398 = vpop.permute.xlu0 %1397
  %v1400 = vsel %vm306, %v285, 0
  %v1402 = vsel %vm306, %v1398, 0
  %1404 = vmatprep.subr.mxu0 0.0
  %1405 = vmatpush1.xpose.msra.mxu0 %v1402
  %1406 = vmatprep.subr.mxu0 0.0
  %1407 = vmatpush1.xpose.msra.mxu0 0.0
  %1408 = vmatprep.subr.mxu0 0.0
  %1409 = vmatpush1.xpose.msra.mxu0 0.0
  %1410 = vmatprep.subr.mxu0 0.0
  %1411 = vmatpush1.xpose.msra.mxu0 0.0
  %1412 = vmatprep.subr.mxu0 0.0
  %1413 = vmatpush1.xpose.msra.mxu0 0.0
  %1414 = vmatprep.subr.mxu0 0.0
  %1415 = vmatpush1.xpose.msra.mxu0 0.0
  %1416 = vmatprep.subr.mxu0 0.0
  %1417 = vmatpush1.xpose.msra.mxu0 0.0
  %1418 = vmatprep.subr.mxu0 0.0
  %1419 = vmatpush1.xpose.msra.mxu0 0.0
  %1420 = vmatprep.subr.mxu0 0.0
  %1421 = vmatpush1.xpose.msra.mxu0 0.0
  %1422 = vmatprep.subr.mxu0 0.0
  %1423 = vmatpush1.xpose.msra.mxu0 0.0
  %1424 = vmatprep.subr.mxu0 0.0
  %1425 = vmatpush1.xpose.msra.mxu0 0.0
  %1426 = vmatprep.subr.mxu0 0.0
  %1427 = vmatpush1.xpose.msra.mxu0 0.0
  %1428 = vmatprep.subr.mxu0 0.0
  %1429 = vmatpush1.xpose.msra.mxu0 0.0
  %1430 = vmatprep.subr.mxu0 0.0
  %1431 = vmatpush1.xpose.msra.mxu0 0.0
  %1432 = vmatprep.subr.mxu0 0.0
  %1433 = vmatpush1.xpose.msra.mxu0 0.0
  %1434 = vmatprep.subr.mxu0 0.0
  %1435 = vmatpush1.xpose.msra.mxu0 0.0
  %1436 = vmatprep.subr.mxu0 0.0
  %1437 = vmatpush1.xpose.msra.mxu0 0.0
  %1438 = vmatprep.subr.mxu0 0.0
  %1439 = vmatpush1.xpose.msra.mxu0 0.0
  %1440 = vmatprep.subr.mxu0 0.0
  %1441 = vmatpush1.xpose.msra.mxu0 0.0
  %1442 = vmatprep.subr.mxu0 0.0
  %1443 = vmatpush1.xpose.msra.mxu0 0.0
  %1444 = vmatprep.subr.mxu0 0.0
  %1445 = vmatpush1.xpose.msra.mxu0 0.0
  %1446 = vmatprep.subr.mxu0 0.0
  %1447 = vmatpush1.xpose.msra.mxu0 0.0
  %1448 = vmatprep.subr.mxu0 0.0
  %1449 = vmatpush1.xpose.msra.mxu0 0.0
  %1450 = vmatprep.subr.mxu0 0.0
  %1451 = vmatpush1.xpose.msra.mxu0 0.0
  %1452 = vmatprep.subr.mxu0 0.0
  %1453 = vmatpush1.xpose.msra.mxu0 0.0
  %1454 = vmatprep.subr.mxu0 0.0
  %1455 = vmatpush1.xpose.msra.mxu0 0.0
  %1456 = vmatprep.subr.mxu0 0.0
  %1457 = vmatpush1.xpose.msra.mxu0 0.0
  %1458 = vmatprep.subr.mxu0 0.0
  %1459 = vmatpush1.xpose.msra.mxu0 0.0
  %1460 = vmatprep.subr.mxu0 0.0
  %1461 = vmatpush1.xpose.msra.mxu0 0.0
  %1462 = vmatprep.subr.mxu0 0.0
  %1463 = vmatpush1.xpose.msra.mxu0 0.0
  %1464 = vmatprep.subr.mxu0 0.0
  %1465 = vmatpush1.xpose.msra.mxu0 0.0
  %1466 = vmatprep.subr.mxu0 0.0
  %1467 = vmatpush1.xpose.msra.mxu0 0.0
  %1468 = vmatprep.mubr.f32.mxu0 0.0
  %1469 = vmatmul.mubr.f32.gmra.mrb[0].mxu0 %v1400
  %v1470 = vpop.f32.mrb[0].mxu0
  %v1471 = vadd.f32 %v301, %v1470
  %v1472 = vpop.f32.mrb[0].mxu0
  %1473 = vdwg.mxu0
  %1475 = vrot.lane.b32.xlu0 %v270, 96
  %v1476 = vpop.permute.xlu0 %1475
  %v1478 = vsel %vm306, %v286, 0
  %v1480 = vsel %vm306, %v1476, 0
  %1482 = vmatprep.subr.mxu0 0.0
  %1483 = vmatpush1.xpose.msra.mxu0 %v1480
  %1484 = vmatprep.subr.mxu0 0.0
  %1485 = vmatpush1.xpose.msra.mxu0 0.0
  %1486 = vmatprep.subr.mxu0 0.0
  %1487 = vmatpush1.xpose.msra.mxu0 0.0
  %1488 = vmatprep.subr.mxu0 0.0
  %1489 = vmatpush1.xpose.msra.mxu0 0.0
  %1490 = vmatprep.subr.mxu0 0.0
  %1491 = vmatpush1.xpose.msra.mxu0 0.0
  %1492 = vmatprep.subr.mxu0 0.0
  %1493 = vmatpush1.xpose.msra.mxu0 0.0
  %1494 = vmatprep.subr.mxu0 0.0
  %1495 = vmatpush1.xpose.msra.mxu0 0.0
  %1496 = vmatprep.subr.mxu0 0.0
  %1497 = vmatpush1.xpose.msra.mxu0 0.0
  %1498 = vmatprep.subr.mxu0 0.0
  %1499 = vmatpush1.xpose.msra.mxu0 0.0
  %1500 = vmatprep.subr.mxu0 0.0
  %1501 = vmatpush1.xpose.msra.mxu0 0.0
  %1502 = vmatprep.subr.mxu0 0.0
  %1503 = vmatpush1.xpose.msra.mxu0 0.0
  %1504 = vmatprep.subr.mxu0 0.0
  %1505 = vmatpush1.xpose.msra.mxu0 0.0
  %1506 = vmatprep.subr.mxu0 0.0
  %1507 = vmatpush1.xpose.msra.mxu0 0.0
  %1508 = vmatprep.subr.mxu0 0.0
  %1509 = vmatpush1.xpose.msra.mxu0 0.0
  %1510 = vmatprep.subr.mxu0 0.0
  %1511 = vmatpush1.xpose.msra.mxu0 0.0
  %1512 = vmatprep.subr.mxu0 0.0
  %1513 = vmatpush1.xpose.msra.mxu0 0.0
  %1514 = vmatprep.subr.mxu0 0.0
  %1515 = vmatpush1.xpose.msra.mxu0 0.0
  %1516 = vmatprep.subr.mxu0 0.0
  %1517 = vmatpush1.xpose.msra.mxu0 0.0
  %1518 = vmatprep.subr.mxu0 0.0
  %1519 = vmatpush1.xpose.msra.mxu0 0.0
  %1520 = vmatprep.subr.mxu0 0.0
  %1521 = vmatpush1.xpose.msra.mxu0 0.0
  %1522 = vmatprep.subr.mxu0 0.0
  %1523 = vmatpush1.xpose.msra.mxu0 0.0
  %1524 = vmatprep.subr.mxu0 0.0
  %1525 = vmatpush1.xpose.msra.mxu0 0.0
  %1526 = vmatprep.subr.mxu0 0.0
  %1527 = vmatpush1.xpose.msra.mxu0 0.0
  %1528 = vmatprep.subr.mxu0 0.0
  %1529 = vmatpush1.xpose.msra.mxu0 0.0
  %1530 = vmatprep.subr.mxu0 0.0
  %1531 = vmatpush1.xpose.msra.mxu0 0.0
  %1532 = vmatprep.subr.mxu0 0.0
  %1533 = vmatpush1.xpose.msra.mxu0 0.0
  %1534 = vmatprep.subr.mxu0 0.0
  %1535 = vmatpush1.xpose.msra.mxu0 0.0
  %1536 = vmatprep.subr.mxu0 0.0
  %1537 = vmatpush1.xpose.msra.mxu0 0.0
  %1538 = vmatprep.subr.mxu0 0.0
  %1539 = vmatpush1.xpose.msra.mxu0 0.0
  %1540 = vmatprep.subr.mxu0 0.0
  %1541 = vmatpush1.xpose.msra.mxu0 0.0
  %1542 = vmatprep.subr.mxu0 0.0
  %1543 = vmatpush1.xpose.msra.mxu0 0.0
  %1544 = vmatprep.subr.mxu0 0.0
  %1545 = vmatpush1.xpose.msra.mxu0 0.0
  %1546 = vmatprep.mubr.f32.mxu0 0.0
  %1547 = vmatmul.mubr.f32.gmra.mrb[0].mxu0 %v1478
  %v1548 = vpop.f32.mrb[0].mxu0
  %v1549 = vadd.f32 %v302, %v1548
  %v1550 = vpop.f32.mrb[0].mxu0
  %1551 = vdwg.mxu0
  %v1552 = vsel %vm306, %v379, -inf
  %1553 = vmax.xlane.f32.xlu0 %v1552
  %v1554 = vpop.xlane.xlu0 %1553
  %v1555 = vsel %vm306, %v457, -inf
  %1556 = vmax.xlane.f32.xlu0 %v1555
  %v1557 = vpop.xlane.xlu0 %1556
  %v1558 = vsel %vm306, %v535, -inf
  %1559 = vmax.xlane.f32.xlu0 %v1558
  %v1560 = vpop.xlane.xlu0 %1559
  %v1561 = vsel %vm306, %v613, -inf
  %1562 = vmax.xlane.f32.xlu0 %v1561
  %v1563 = vpop.xlane.xlu0 %1562
  %v1564 = vsel %vm306, %v691, -inf
  %1565 = vmax.xlane.f32.xlu0 %v1564
  %v1566 = vpop.xlane.xlu0 %1565
  %v1567 = vsel %vm306, %v769, -inf
  %1568 = vmax.xlane.f32.xlu0 %v1567
  %v1569 = vpop.xlane.xlu0 %1568
  %v1570 = vsel %vm306, %v847, -inf
  %1571 = vmax.xlane.f32.xlu0 %v1570
  %v1572 = vpop.xlane.xlu0 %1571
  %v1573 = vsel %vm306, %v925, -inf
  %1574 = vmax.xlane.f32.xlu0 %v1573
  %v1575 = vpop.xlane.xlu0 %1574
  %v1576 = vsel %vm306, %v1003, -inf
  %1577 = vmax.xlane.f32.xlu0 %v1576
  %v1578 = vpop.xlane.xlu0 %1577
  %v1579 = vsel %vm306, %v1081, -inf
  %1580 = vmax.xlane.f32.xlu0 %v1579
  %v1581 = vpop.xlane.xlu0 %1580
  %v1582 = vsel %vm306, %v1159, -inf
  %1583 = vmax.xlane.f32.xlu0 %v1582
  %v1584 = vpop.xlane.xlu0 %1583
  %v1585 = vsel %vm306, %v1237, -inf
  %1586 = vmax.xlane.f32.xlu0 %v1585
  %v1587 = vpop.xlane.xlu0 %1586
  %v1588 = vsel %vm306, %v1315, -inf
  %1589 = vmax.xlane.f32.xlu0 %v1588
  %v1590 = vpop.xlane.xlu0 %1589
  %v1591 = vsel %vm306, %v1393, -inf
  %1592 = vmax.xlane.f32.xlu0 %v1591
  %v1593 = vpop.xlane.xlu0 %1592
  %v1594 = vsel %vm306, %v1471, -inf
  %1595 = vmax.xlane.f32.xlu0 %v1594
  %v1596 = vpop.xlane.xlu0 %1595
  %v1597 = vsel %vm306, %v1549, -inf
  %1598 = vmax.xlane.f32.xlu0 %v1597
  %v1599 = vpop.xlane.xlu0 %1598
  %v1600 = vsub.f32 %v379, %v1554
  %v1601 = vsub.f32 %v457, %v1557
  %v1602 = vsub.f32 %v535, %v1560
  %v1603 = vsub.f32 %v613, %v1563
  %v1604 = vsub.f32 %v691, %v1566
  %v1605 = vsub.f32 %v769, %v1569
  %v1606 = vsub.f32 %v847, %v1572
  %v1607 = vsub.f32 %v925, %v1575
  %v1608 = vsub.f32 %v1003, %v1578
  %v1609 = vsub.f32 %v1081, %v1581
  %v1610 = vsub.f32 %v1159, %v1584
  %v1611 = vsub.f32 %v1237, %v1587
  %v1612 = vsub.f32 %v1315, %v1590
  %v1613 = vsub.f32 %v1393, %v1593
  %v1614 = vsub.f32 %v1471, %v1596
  %v1615 = vsub.f32 %v1549, %v1599
  %v1616 = vmul.f32 %v1600, 1.442695
  %v1617 = vpow.pop %v1616
  %v1618 = vmul.f32 %v1601, 1.442695
  %v1619 = vpow.pop %v1618
  %v1620 = vmul.f32 %v1602, 1.442695
  %v1621 = vpow.pop %v1620
  %v1622 = vmul.f32 %v1603, 1.442695
  %v1623 = vpow.pop %v1622
  %v1624 = vmul.f32 %v1604, 1.442695
  %v1625 = vpow.pop %v1624
  %v1626 = vmul.f32 %v1605, 1.442695
  %v1627 = vpow.pop %v1626
  %v1628 = vmul.f32 %v1606, 1.442695
  %v1629 = vpow.pop %v1628
  %v1630 = vmul.f32 %v1607, 1.442695
  %v1631 = vpow.pop %v1630
  %v1632 = vmul.f32 %v1608, 1.442695
  %v1633 = vpow.pop %v1632
  %v1634 = vmul.f32 %v1609, 1.442695
  %v1635 = vpow.pop %v1634
  %v1636 = vmul.f32 %v1610, 1.442695
  %v1637 = vpow.pop %v1636
  %v1638 = vmul.f32 %v1611, 1.442695
  %v1639 = vpow.pop %v1638
  %v1640 = vmul.f32 %v1612, 1.442695
  %v1641 = vpow.pop %v1640
  %v1642 = vmul.f32 %v1613, 1.442695
  %v1643 = vpow.pop %v1642
  %v1644 = vmul.f32 %v1614, 1.442695
  %v1645 = vpow.pop %v1644
  %v1646 = vmul.f32 %v1615, 1.442695
  %v1647 = vpow.pop %v1646
  %v1648 = vsel %vm306, %v1617, 0.0
  %1649 = vadd.xlane.f32.xlu0 %v1648
  %v1650 = vpop.xlane.xlu0 %1649
  %v1651 = vsel %vm306, %v1619, 0.0
  %1652 = vadd.xlane.f32.xlu0 %v1651
  %v1653 = vpop.xlane.xlu0 %1652
  %v1654 = vsel %vm306, %v1621, 0.0
  %1655 = vadd.xlane.f32.xlu0 %v1654
  %v1656 = vpop.xlane.xlu0 %1655
  %v1657 = vsel %vm306, %v1623, 0.0
  %1658 = vadd.xlane.f32.xlu0 %v1657
  %v1659 = vpop.xlane.xlu0 %1658
  %v1660 = vsel %vm306, %v1625, 0.0
  %1661 = vadd.xlane.f32.xlu0 %v1660
  %v1662 = vpop.xlane.xlu0 %1661
  %v1663 = vsel %vm306, %v1627, 0.0
  %1664 = vadd.xlane.f32.xlu0 %v1663
  %v1665 = vpop.xlane.xlu0 %1664
  %v1666 = vsel %vm306, %v1629, 0.0
  %1667 = vadd.xlane.f32.xlu0 %v1666
  %v1668 = vpop.xlane.xlu0 %1667
  %v1669 = vsel %vm306, %v1631, 0.0
  %1670 = vadd.xlane.f32.xlu0 %v1669
  %v1671 = vpop.xlane.xlu0 %1670
  %v1672 = vsel %vm306, %v1633, 0.0
  %1673 = vadd.xlane.f32.xlu0 %v1672
  %v1674 = vpop.xlane.xlu0 %1673
  %v1675 = vsel %vm306, %v1635, 0.0
  %1676 = vadd.xlane.f32.xlu0 %v1675
  %v1677 = vpop.xlane.xlu0 %1676
  %v1678 = vsel %vm306, %v1637, 0.0
  %1679 = vadd.xlane.f32.xlu0 %v1678
  %v1680 = vpop.xlane.xlu0 %1679
  %v1681 = vsel %vm306, %v1639, 0.0
  %1682 = vadd.xlane.f32.xlu0 %v1681
  %v1683 = vpop.xlane.xlu0 %1682
  %v1684 = vsel %vm306, %v1641, 0.0
  %1685 = vadd.xlane.f32.xlu0 %v1684
  %v1686 = vpop.xlane.xlu0 %1685
  %v1687 = vsel %vm306, %v1643, 0.0
  %1688 = vadd.xlane.f32.xlu0 %v1687
  %v1689 = vpop.xlane.xlu0 %1688
  %v1690 = vsel %vm306, %v1645, 0.0
  %1691 = vadd.xlane.f32.xlu0 %v1690
  %v1692 = vpop.xlane.xlu0 %1691
  %v1693 = vsel %vm306, %v1647, 0.0
  %1694 = vadd.xlane.f32.xlu0 %v1693
  %v1695 = vpop.xlane.xlu0 %1694
  %v1696 = vrcp.pop %v1650
  %v1697 = vrcp.pop %v1653
  %v1698 = vrcp.pop %v1656
  %v1699 = vrcp.pop %v1659
  %v1700 = vrcp.pop %v1662
  %v1701 = vrcp.pop %v1665
  %v1702 = vrcp.pop %v1668
  %v1703 = vrcp.pop %v1671
  %v1704 = vrcp.pop %v1674
  %v1705 = vrcp.pop %v1677
  %v1706 = vrcp.pop %v1680
  %v1707 = vrcp.pop %v1683
  %v1708 = vrcp.pop %v1686
  %v1709 = vrcp.pop %v1689
  %v1710 = vrcp.pop %v1692
  %v1711 = vrcp.pop %v1695
  %v1712 = vmul.f32 %v1617, %v1696
  %v1713 = vmul.f32 %v1619, %v1697
  %v1714 = vmul.f32 %v1621, %v1698
  %v1715 = vmul.f32 %v1623, %v1699
  %v1716 = vmul.f32 %v1625, %v1700
  %v1717 = vmul.f32 %v1627, %v1701
  %v1718 = vmul.f32 %v1629, %v1702
  %v1719 = vmul.f32 %v1631, %v1703
  %v1720 = vmul.f32 %v1633, %v1704
  %v1721 = vmul.f32 %v1635, %v1705
  %v1722 = vmul.f32 %v1637, %v1706
  %v1723 = vmul.f32 %v1639, %v1707
  %v1724 = vmul.f32 %v1641, %v1708
  %v1725 = vmul.f32 %v1643, %v1709
  %v1726 = vmul.f32 %v1645, %v1710
  %v1727 = vmul.f32 %v1647, %v1711
  %1728 = vrot.lane.b32.xlu0 %v255, 64
  %v1729 = vpop.permute.xlu0 %1728
  %v1732 = vsel %vm306, %v1712, 0
  %1734 = vmatprep.subr.mxu0 0.0
  %1735 = vmatpush1.msra.mxu0 %v1729
  %1736 = vmatprep.subr.mxu0 0.0
  %1737 = vmatpush1.msra.mxu0 0.0
  %1738 = vmatprep.subr.mxu0 0.0
  %1739 = vmatpush1.msra.mxu0 0.0
  %1740 = vmatprep.subr.mxu0 0.0
  %1741 = vmatpush1.msra.mxu0 0.0
  %1742 = vmatprep.subr.mxu0 0.0
  %1743 = vmatpush1.msra.mxu0 0.0
  %1744 = vmatprep.subr.mxu0 0.0
  %1745 = vmatpush1.msra.mxu0 0.0
  %1746 = vmatprep.subr.mxu0 0.0
  %1747 = vmatpush1.msra.mxu0 0.0
  %1748 = vmatprep.subr.mxu0 0.0
  %1749 = vmatpush1.msra.mxu0 0.0
  %1750 = vmatprep.subr.mxu0 0.0
  %1751 = vmatpush1.msra.mxu0 0.0
  %1752 = vmatprep.subr.mxu0 0.0
  %1753 = vmatpush1.msra.mxu0 0.0
  %1754 = vmatprep.subr.mxu0 0.0
  %1755 = vmatpush1.msra.mxu0 0.0
  %1756 = vmatprep.subr.mxu0 0.0
  %1757 = vmatpush1.msra.mxu0 0.0
  %1758 = vmatprep.subr.mxu0 0.0
  %1759 = vmatpush1.msra.mxu0 0.0
  %1760 = vmatprep.subr.mxu0 0.0
  %1761 = vmatpush1.msra.mxu0 0.0
  %1762 = vmatprep.subr.mxu0 0.0
  %1763 = vmatpush1.msra.mxu0 0.0
  %1764 = vmatprep.subr.mxu0 0.0
  %1765 = vmatpush1.msra.mxu0 0.0
  %1766 = vmatprep.subr.mxu0 0.0
  %1767 = vmatpush1.msra.mxu0 0.0
  %1768 = vmatprep.subr.mxu0 0.0
  %1769 = vmatpush1.msra.mxu0 0.0
  %1770 = vmatprep.subr.mxu0 0.0
  %1771 = vmatpush1.msra.mxu0 0.0
  %1772 = vmatprep.subr.mxu0 0.0
  %1773 = vmatpush1.msra.mxu0 0.0
  %1774 = vmatprep.subr.mxu0 0.0
  %1775 = vmatpush1.msra.mxu0 0.0
  %1776 = vmatprep.subr.mxu0 0.0
  %1777 = vmatpush1.msra.mxu0 0.0
  %1778 = vmatprep.subr.mxu0 0.0
  %1779 = vmatpush1.msra.mxu0 0.0
  %1780 = vmatprep.subr.mxu0 0.0
  %1781 = vmatpush1.msra.mxu0 0.0
  %1782 = vmatprep.subr.mxu0 0.0
  %1783 = vmatpush1.msra.mxu0 0.0
  %1784 = vmatprep.subr.mxu0 0.0
  %1785 = vmatpush1.msra.mxu0 0.0
  %1786 = vmatprep.subr.mxu0 0.0
  %1787 = vmatpush1.msra.mxu0 0.0
  %1788 = vmatprep.subr.mxu0 0.0
  %1789 = vmatpush1.msra.mxu0 0.0
  %1790 = vmatprep.subr.mxu0 0.0
  %1791 = vmatpush1.msra.mxu0 0.0
  %1792 = vmatprep.subr.mxu0 0.0
  %1793 = vmatpush1.msra.mxu0 0.0
  %1794 = vmatprep.subr.mxu0 0.0
  %1795 = vmatpush1.msra.mxu0 0.0
  %1796 = vmatprep.subr.mxu0 0.0
  %1797 = vmatpush1.msra.mxu0 0.0
  %1798 = vmatprep.mubr.f32.mxu0 0.0
  %1799 = vmatmul.mubr.f32.gmra.mrb[0].mxu0 %v1732
  %v1800 = vpop.f32.mrb[0].mxu0
  %v1801 = vadd.f32 0.0, %v1800
  %v1802 = vpop.f32.mrb[0].mxu0
  %1803 = vdwg.mxu0
  %1804 = vrot.lane.b32.xlu0 %v256, 64
  %v1805 = vpop.permute.xlu0 %1804
  %v1808 = vsel %vm306, %v1713, 0
  %1810 = vmatprep.subr.mxu0 0.0
  %1811 = vmatpush1.msra.mxu0 %v1805
  %1812 = vmatprep.subr.mxu0 0.0
  %1813 = vmatpush1.msra.mxu0 0.0
  %1814 = vmatprep.subr.mxu0 0.0
  %1815 = vmatpush1.msra.mxu0 0.0
  %1816 = vmatprep.subr.mxu0 0.0
  %1817 = vmatpush1.msra.mxu0 0.0
  %1818 = vmatprep.subr.mxu0 0.0
  %1819 = vmatpush1.msra.mxu0 0.0
  %1820 = vmatprep.subr.mxu0 0.0
  %1821 = vmatpush1.msra.mxu0 0.0
  %1822 = vmatprep.subr.mxu0 0.0
  %1823 = vmatpush1.msra.mxu0 0.0
  %1824 = vmatprep.subr.mxu0 0.0
  %1825 = vmatpush1.msra.mxu0 0.0
  %1826 = vmatprep.subr.mxu0 0.0
  %1827 = vmatpush1.msra.mxu0 0.0
  %1828 = vmatprep.subr.mxu0 0.0
  %1829 = vmatpush1.msra.mxu0 0.0
  %1830 = vmatprep.subr.mxu0 0.0
  %1831 = vmatpush1.msra.mxu0 0.0
  %1832 = vmatprep.subr.mxu0 0.0
  %1833 = vmatpush1.msra.mxu0 0.0
  %1834 = vmatprep.subr.mxu0 0.0
  %1835 = vmatpush1.msra.mxu0 0.0
  %1836 = vmatprep.subr.mxu0 0.0
  %1837 = vmatpush1.msra.mxu0 0.0
  %1838 = vmatprep.subr.mxu0 0.0
  %1839 = vmatpush1.msra.mxu0 0.0
  %1840 = vmatprep.subr.mxu0 0.0
  %1841 = vmatpush1.msra.mxu0 0.0
  %1842 = vmatprep.subr.mxu0 0.0
  %1843 = vmatpush1.msra.mxu0 0.0
  %1844 = vmatprep.subr.mxu0 0.0
  %1845 = vmatpush1.msra.mxu0 0.0
  %1846 = vmatprep.subr.mxu0 0.0
  %1847 = vmatpush1.msra.mxu0 0.0
  %1848 = vmatprep.subr.mxu0 0.0
  %1849 = vmatpush1.msra.mxu0 0.0
  %1850 = vmatprep.subr.mxu0 0.0
  %1851 = vmatpush1.msra.mxu0 0.0
  %1852 = vmatprep.subr.mxu0 0.0
  %1853 = vmatpush1.msra.mxu0 0.0
  %1854 = vmatprep.subr.mxu0 0.0
  %1855 = vmatpush1.msra.mxu0 0.0
  %1856 = vmatprep.subr.mxu0 0.0
  %1857 = vmatpush1.msra.mxu0 0.0
  %1858 = vmatprep.subr.mxu0 0.0
  %1859 = vmatpush1.msra.mxu0 0.0
  %1860 = vmatprep.subr.mxu0 0.0
  %1861 = vmatpush1.msra.mxu0 0.0
  %1862 = vmatprep.subr.mxu0 0.0
  %1863 = vmatpush1.msra.mxu0 0.0
  %1864 = vmatprep.subr.mxu0 0.0
  %1865 = vmatpush1.msra.mxu0 0.0
  %1866 = vmatprep.subr.mxu0 0.0
  %1867 = vmatpush1.msra.mxu0 0.0
  %1868 = vmatprep.subr.mxu0 0.0
  %1869 = vmatpush1.msra.mxu0 0.0
  %1870 = vmatprep.subr.mxu0 0.0
  %1871 = vmatpush1.msra.mxu0 0.0
  %1872 = vmatprep.subr.mxu0 0.0
  %1873 = vmatpush1.msra.mxu0 0.0
  %1874 = vmatprep.mubr.f32.mxu0 0.0
  %1875 = vmatmul.mubr.f32.gmra.mrb[0].mxu0 %v1808
  %v1876 = vpop.f32.mrb[0].mxu0
  %v1877 = vadd.f32 0.0, %v1876
  %v1878 = vpop.f32.mrb[0].mxu0
  %1879 = vdwg.mxu0
  %1880 = vrot.lane.b32.xlu0 %v257, 64
  %v1881 = vpop.permute.xlu0 %1880
  %v1884 = vsel %vm306, %v1714, 0
  %1886 = vmatprep.subr.mxu0 0.0
  %1887 = vmatpush1.msra.mxu0 %v1881
  %1888 = vmatprep.subr.mxu0 0.0
  %1889 = vmatpush1.msra.mxu0 0.0
  %1890 = vmatprep.subr.mxu0 0.0
  %1891 = vmatpush1.msra.mxu0 0.0
  %1892 = vmatprep.subr.mxu0 0.0
  %1893 = vmatpush1.msra.mxu0 0.0
  %1894 = vmatprep.subr.mxu0 0.0
  %1895 = vmatpush1.msra.mxu0 0.0
  %1896 = vmatprep.subr.mxu0 0.0
  %1897 = vmatpush1.msra.mxu0 0.0
  %1898 = vmatprep.subr.mxu0 0.0
  %1899 = vmatpush1.msra.mxu0 0.0
  %1900 = vmatprep.subr.mxu0 0.0
  %1901 = vmatpush1.msra.mxu0 0.0
  %1902 = vmatprep.subr.mxu0 0.0
  %1903 = vmatpush1.msra.mxu0 0.0
  %1904 = vmatprep.subr.mxu0 0.0
  %1905 = vmatpush1.msra.mxu0 0.0
  %1906 = vmatprep.subr.mxu0 0.0
  %1907 = vmatpush1.msra.mxu0 0.0
  %1908 = vmatprep.subr.mxu0 0.0
  %1909 = vmatpush1.msra.mxu0 0.0
  %1910 = vmatprep.subr.mxu0 0.0
  %1911 = vmatpush1.msra.mxu0 0.0
  %1912 = vmatprep.subr.mxu0 0.0
  %1913 = vmatpush1.msra.mxu0 0.0
  %1914 = vmatprep.subr.mxu0 0.0
  %1915 = vmatpush1.msra.mxu0 0.0
  %1916 = vmatprep.subr.mxu0 0.0
  %1917 = vmatpush1.msra.mxu0 0.0
  %1918 = vmatprep.subr.mxu0 0.0
  %1919 = vmatpush1.msra.mxu0 0.0
  %1920 = vmatprep.subr.mxu0 0.0
  %1921 = vmatpush1.msra.mxu0 0.0
  %1922 = vmatprep.subr.mxu0 0.0
  %1923 = vmatpush1.msra.mxu0 0.0
  %1924 = vmatprep.subr.mxu0 0.0
  %1925 = vmatpush1.msra.mxu0 0.0
  %1926 = vmatprep.subr.mxu0 0.0
  %1927 = vmatpush1.msra.mxu0 0.0
  %1928 = vmatprep.subr.mxu0 0.0
  %1929 = vmatpush1.msra.mxu0 0.0
  %1930 = vmatprep.subr.mxu0 0.0
  %1931 = vmatpush1.msra.mxu0 0.0
  %1932 = vmatprep.subr.mxu0 0.0
  %1933 = vmatpush1.msra.mxu0 0.0
  %1934 = vmatprep.subr.mxu0 0.0
  %1935 = vmatpush1.msra.mxu0 0.0
  %1936 = vmatprep.subr.mxu0 0.0
  %1937 = vmatpush1.msra.mxu0 0.0
  %1938 = vmatprep.subr.mxu0 0.0
  %1939 = vmatpush1.msra.mxu0 0.0
  %1940 = vmatprep.subr.mxu0 0.0
  %1941 = vmatpush1.msra.mxu0 0.0
  %1942 = vmatprep.subr.mxu0 0.0
  %1943 = vmatpush1.msra.mxu0 0.0
  %1944 = vmatprep.subr.mxu0 0.0
  %1945 = vmatpush1.msra.mxu0 0.0
  %1946 = vmatprep.subr.mxu0 0.0
  %1947 = vmatpush1.msra.mxu0 0.0
  %1948 = vmatprep.subr.mxu0 0.0
  %1949 = vmatpush1.msra.mxu0 0.0
  %1950 = vmatprep.mubr.f32.mxu0 0.0
  %1951 = vmatmul.mubr.f32.gmra.mrb[0].mxu0 %v1884
  %v1952 = vpop.f32.mrb[0].mxu0
  %v1953 = vadd.f32 0.0, %v1952
  %v1954 = vpop.f32.mrb[0].mxu0
  %1955 = vdwg.mxu0
  %1956 = vrot.lane.b32.xlu0 %v258, 64
  %v1957 = vpop.permute.xlu0 %1956
  %v1960 = vsel %vm306, %v1715, 0
  %1962 = vmatprep.subr.mxu0 0.0
  %1963 = vmatpush1.msra.mxu0 %v1957
  %1964 = vmatprep.subr.mxu0 0.0
  %1965 = vmatpush1.msra.mxu0 0.0
  %1966 = vmatprep.subr.mxu0 0.0
  %1967 = vmatpush1.msra.mxu0 0.0
  %1968 = vmatprep.subr.mxu0 0.0
  %1969 = vmatpush1.msra.mxu0 0.0
  %1970 = vmatprep.subr.mxu0 0.0
  %1971 = vmatpush1.msra.mxu0 0.0
  %1972 = vmatprep.subr.mxu0 0.0
  %1973 = vmatpush1.msra.mxu0 0.0
  %1974 = vmatprep.subr.mxu0 0.0
  %1975 = vmatpush1.msra.mxu0 0.0
  %1976 = vmatprep.subr.mxu0 0.0
  %1977 = vmatpush1.msra.mxu0 0.0
  %1978 = vmatprep.subr.mxu0 0.0
  %1979 = vmatpush1.msra.mxu0 0.0
  %1980 = vmatprep.subr.mxu0 0.0
  %1981 = vmatpush1.msra.mxu0 0.0
  %1982 = vmatprep.subr.mxu0 0.0
  %1983 = vmatpush1.msra.mxu0 0.0
  %1984 = vmatprep.subr.mxu0 0.0
  %1985 = vmatpush1.msra.mxu0 0.0
  %1986 = vmatprep.subr.mxu0 0.0
  %1987 = vmatpush1.msra.mxu0 0.0
  %1988 = vmatprep.subr.mxu0 0.0
  %1989 = vmatpush1.msra.mxu0 0.0
  %1990 = vmatprep.subr.mxu0 0.0
  %1991 = vmatpush1.msra.mxu0 0.0
  %1992 = vmatprep.subr.mxu0 0.0
  %1993 = vmatpush1.msra.mxu0 0.0
  %1994 = vmatprep.subr.mxu0 0.0
  %1995 = vmatpush1.msra.mxu0 0.0
  %1996 = vmatprep.subr.mxu0 0.0
  %1997 = vmatpush1.msra.mxu0 0.0
  %1998 = vmatprep.subr.mxu0 0.0
  %1999 = vmatpush1.msra.mxu0 0.0
  %2000 = vmatprep.subr.mxu0 0.0
  %2001 = vmatpush1.msra.mxu0 0.0
  %2002 = vmatprep.subr.mxu0 0.0
  %2003 = vmatpush1.msra.mxu0 0.0
  %2004 = vmatprep.subr.mxu0 0.0
  %2005 = vmatpush1.msra.mxu0 0.0
  %2006 = vmatprep.subr.mxu0 0.0
  %2007 = vmatpush1.msra.mxu0 0.0
  %2008 = vmatprep.subr.mxu0 0.0
  %2009 = vmatpush1.msra.mxu0 0.0
  %2010 = vmatprep.subr.mxu0 0.0
  %2011 = vmatpush1.msra.mxu0 0.0
  %2012 = vmatprep.subr.mxu0 0.0
  %2013 = vmatpush1.msra.mxu0 0.0
  %2014 = vmatprep.subr.mxu0 0.0
  %2015 = vmatpush1.msra.mxu0 0.0
  %2016 = vmatprep.subr.mxu0 0.0
  %2017 = vmatpush1.msra.mxu0 0.0
  %2018 = vmatprep.subr.mxu0 0.0
  %2019 = vmatpush1.msra.mxu0 0.0
  %2020 = vmatprep.subr.mxu0 0.0
  %2021 = vmatpush1.msra.mxu0 0.0
  %2022 = vmatprep.subr.mxu0 0.0
  %2023 = vmatpush1.msra.mxu0 0.0
  %2024 = vmatprep.subr.mxu0 0.0
  %2025 = vmatpush1.msra.mxu0 0.0
  %2026 = vmatprep.mubr.f32.mxu0 0.0
  %2027 = vmatmul.mubr.f32.gmra.mrb[0].mxu0 %v1960
  %v2028 = vpop.f32.mrb[0].mxu0
  %v2029 = vadd.f32 0.0, %v2028
  %v2030 = vpop.f32.mrb[0].mxu0
  %2031 = vdwg.mxu0
  %2032 = vrot.lane.b32.xlu0 %v259, 64
  %v2033 = vpop.permute.xlu0 %2032
  %v2036 = vsel %vm306, %v1716, 0
  %2038 = vmatprep.subr.mxu0 0.0
  %2039 = vmatpush1.msra.mxu0 %v2033
  %2040 = vmatprep.subr.mxu0 0.0
  %2041 = vmatpush1.msra.mxu0 0.0
  %2042 = vmatprep.subr.mxu0 0.0
  %2043 = vmatpush1.msra.mxu0 0.0
  %2044 = vmatprep.subr.mxu0 0.0
  %2045 = vmatpush1.msra.mxu0 0.0
  %2046 = vmatprep.subr.mxu0 0.0
  %2047 = vmatpush1.msra.mxu0 0.0
  %2048 = vmatprep.subr.mxu0 0.0
  %2049 = vmatpush1.msra.mxu0 0.0
  %2050 = vmatprep.subr.mxu0 0.0
  %2051 = vmatpush1.msra.mxu0 0.0
  %2052 = vmatprep.subr.mxu0 0.0
  %2053 = vmatpush1.msra.mxu0 0.0
  %2054 = vmatprep.subr.mxu0 0.0
  %2055 = vmatpush1.msra.mxu0 0.0
  %2056 = vmatprep.subr.mxu0 0.0
  %2057 = vmatpush1.msra.mxu0 0.0
  %2058 = vmatprep.subr.mxu0 0.0
  %2059 = vmatpush1.msra.mxu0 0.0
  %2060 = vmatprep.subr.mxu0 0.0
  %2061 = vmatpush1.msra.mxu0 0.0
  %2062 = vmatprep.subr.mxu0 0.0
  %2063 = vmatpush1.msra.mxu0 0.0
  %2064 = vmatprep.subr.mxu0 0.0
  %2065 = vmatpush1.msra.mxu0 0.0
  %2066 = vmatprep.subr.mxu0 0.0
  %2067 = vmatpush1.msra.mxu0 0.0
  %2068 = vmatprep.subr.mxu0 0.0
  %2069 = vmatpush1.msra.mxu0 0.0
  %2070 = vmatprep.subr.mxu0 0.0
  %2071 = vmatpush1.msra.mxu0 0.0
  %2072 = vmatprep.subr.mxu0 0.0
  %2073 = vmatpush1.msra.mxu0 0.0
  %2074 = vmatprep.subr.mxu0 0.0
  %2075 = vmatpush1.msra.mxu0 0.0
  %2076 = vmatprep.subr.mxu0 0.0
  %2077 = vmatpush1.msra.mxu0 0.0
  %2078 = vmatprep.subr.mxu0 0.0
  %2079 = vmatpush1.msra.mxu0 0.0
  %2080 = vmatprep.subr.mxu0 0.0
  %2081 = vmatpush1.msra.mxu0 0.0
  %2082 = vmatprep.subr.mxu0 0.0
  %2083 = vmatpush1.msra.mxu0 0.0
  %2084 = vmatprep.subr.mxu0 0.0
  %2085 = vmatpush1.msra.mxu0 0.0
  %2086 = vmatprep.subr.mxu0 0.0
  %2087 = vmatpush1.msra.mxu0 0.0
  %2088 = vmatprep.subr.mxu0 0.0
  %2089 = vmatpush1.msra.mxu0 0.0
  %2090 = vmatprep.subr.mxu0 0.0
  %2091 = vmatpush1.msra.mxu0 0.0
  %2092 = vmatprep.subr.mxu0 0.0
  %2093 = vmatpush1.msra.mxu0 0.0
  %2094 = vmatprep.subr.mxu0 0.0
  %2095 = vmatpush1.msra.mxu0 0.0
  %2096 = vmatprep.subr.mxu0 0.0
  %2097 = vmatpush1.msra.mxu0 0.0
  %2098 = vmatprep.subr.mxu0 0.0
  %2099 = vmatpush1.msra.mxu0 0.0
  %2100 = vmatprep.subr.mxu0 0.0
  %2101 = vmatpush1.msra.mxu0 0.0
  %2102 = vmatprep.mubr.f32.mxu0 0.0
  %2103 = vmatmul.mubr.f32.gmra.mrb[0].mxu0 %v2036
  %v2104 = vpop.f32.mrb[0].mxu0
  %v2105 = vadd.f32 0.0, %v2104
  %v2106 = vpop.f32.mrb[0].mxu0
  %2107 = vdwg.mxu0
  %2108 = vrot.lane.b32.xlu0 %v260, 64
  %v2109 = vpop.permute.xlu0 %2108
  %v2112 = vsel %vm306, %v1717, 0
  %2114 = vmatprep.subr.mxu0 0.0
  %2115 = vmatpush1.msra.mxu0 %v2109
  %2116 = vmatprep.subr.mxu0 0.0
  %2117 = vmatpush1.msra.mxu0 0.0
  %2118 = vmatprep.subr.mxu0 0.0
  %2119 = vmatpush1.msra.mxu0 0.0
  %2120 = vmatprep.subr.mxu0 0.0
  %2121 = vmatpush1.msra.mxu0 0.0
  %2122 = vmatprep.subr.mxu0 0.0
  %2123 = vmatpush1.msra.mxu0 0.0
  %2124 = vmatprep.subr.mxu0 0.0
  %2125 = vmatpush1.msra.mxu0 0.0
  %2126 = vmatprep.subr.mxu0 0.0
  %2127 = vmatpush1.msra.mxu0 0.0
  %2128 = vmatprep.subr.mxu0 0.0
  %2129 = vmatpush1.msra.mxu0 0.0
  %2130 = vmatprep.subr.mxu0 0.0
  %2131 = vmatpush1.msra.mxu0 0.0
  %2132 = vmatprep.subr.mxu0 0.0
  %2133 = vmatpush1.msra.mxu0 0.0
  %2134 = vmatprep.subr.mxu0 0.0
  %2135 = vmatpush1.msra.mxu0 0.0
  %2136 = vmatprep.subr.mxu0 0.0
  %2137 = vmatpush1.msra.mxu0 0.0
  %2138 = vmatprep.subr.mxu0 0.0
  %2139 = vmatpush1.msra.mxu0 0.0
  %2140 = vmatprep.subr.mxu0 0.0
  %2141 = vmatpush1.msra.mxu0 0.0
  %2142 = vmatprep.subr.mxu0 0.0
  %2143 = vmatpush1.msra.mxu0 0.0
  %2144 = vmatprep.subr.mxu0 0.0
  %2145 = vmatpush1.msra.mxu0 0.0
  %2146 = vmatprep.subr.mxu0 0.0
  %2147 = vmatpush1.msra.mxu0 0.0
  %2148 = vmatprep.subr.mxu0 0.0
  %2149 = vmatpush1.msra.mxu0 0.0
  %2150 = vmatprep.subr.mxu0 0.0
  %2151 = vmatpush1.msra.mxu0 0.0
  %2152 = vmatprep.subr.mxu0 0.0
  %2153 = vmatpush1.msra.mxu0 0.0
  %2154 = vmatprep.subr.mxu0 0.0
  %2155 = vmatpush1.msra.mxu0 0.0
  %2156 = vmatprep.subr.mxu0 0.0
  %2157 = vmatpush1.msra.mxu0 0.0
  %2158 = vmatprep.subr.mxu0 0.0
  %2159 = vmatpush1.msra.mxu0 0.0
  %2160 = vmatprep.subr.mxu0 0.0
  %2161 = vmatpush1.msra.mxu0 0.0
  %2162 = vmatprep.subr.mxu0 0.0
  %2163 = vmatpush1.msra.mxu0 0.0
  %2164 = vmatprep.subr.mxu0 0.0
  %2165 = vmatpush1.msra.mxu0 0.0
  %2166 = vmatprep.subr.mxu0 0.0
  %2167 = vmatpush1.msra.mxu0 0.0
  %2168 = vmatprep.subr.mxu0 0.0
  %2169 = vmatpush1.msra.mxu0 0.0
  %2170 = vmatprep.subr.mxu0 0.0
  %2171 = vmatpush1.msra.mxu0 0.0
  %2172 = vmatprep.subr.mxu0 0.0
  %2173 = vmatpush1.msra.mxu0 0.0
  %2174 = vmatprep.subr.mxu0 0.0
  %2175 = vmatpush1.msra.mxu0 0.0
  %2176 = vmatprep.subr.mxu0 0.0
  %2177 = vmatpush1.msra.mxu0 0.0
  %2178 = vmatprep.mubr.f32.mxu0 0.0
  %2179 = vmatmul.mubr.f32.gmra.mrb[0].mxu0 %v2112
  %v2180 = vpop.f32.mrb[0].mxu0
  %v2181 = vadd.f32 0.0, %v2180
  %v2182 = vpop.f32.mrb[0].mxu0
  %2183 = vdwg.mxu0
  %2184 = vrot.lane.b32.xlu0 %v261, 64
  %v2185 = vpop.permute.xlu0 %2184
  %v2188 = vsel %vm306, %v1718, 0
  %2190 = vmatprep.subr.mxu0 0.0
  %2191 = vmatpush1.msra.mxu0 %v2185
  %2192 = vmatprep.subr.mxu0 0.0
  %2193 = vmatpush1.msra.mxu0 0.0
  %2194 = vmatprep.subr.mxu0 0.0
  %2195 = vmatpush1.msra.mxu0 0.0
  %2196 = vmatprep.subr.mxu0 0.0
  %2197 = vmatpush1.msra.mxu0 0.0
  %2198 = vmatprep.subr.mxu0 0.0
  %2199 = vmatpush1.msra.mxu0 0.0
  %2200 = vmatprep.subr.mxu0 0.0
  %2201 = vmatpush1.msra.mxu0 0.0
  %2202 = vmatprep.subr.mxu0 0.0
  %2203 = vmatpush1.msra.mxu0 0.0
  %2204 = vmatprep.subr.mxu0 0.0
  %2205 = vmatpush1.msra.mxu0 0.0
  %2206 = vmatprep.subr.mxu0 0.0
  %2207 = vmatpush1.msra.mxu0 0.0
  %2208 = vmatprep.subr.mxu0 0.0
  %2209 = vmatpush1.msra.mxu0 0.0
  %2210 = vmatprep.subr.mxu0 0.0
  %2211 = vmatpush1.msra.mxu0 0.0
  %2212 = vmatprep.subr.mxu0 0.0
  %2213 = vmatpush1.msra.mxu0 0.0
  %2214 = vmatprep.subr.mxu0 0.0
  %2215 = vmatpush1.msra.mxu0 0.0
  %2216 = vmatprep.subr.mxu0 0.0
  %2217 = vmatpush1.msra.mxu0 0.0
  %2218 = vmatprep.subr.mxu0 0.0
  %2219 = vmatpush1.msra.mxu0 0.0
  %2220 = vmatprep.subr.mxu0 0.0
  %2221 = vmatpush1.msra.mxu0 0.0
  %2222 = vmatprep.subr.mxu0 0.0
  %2223 = vmatpush1.msra.mxu0 0.0
  %2224 = vmatprep.subr.mxu0 0.0
  %2225 = vmatpush1.msra.mxu0 0.0
  %2226 = vmatprep.subr.mxu0 0.0
  %2227 = vmatpush1.msra.mxu0 0.0
  %2228 = vmatprep.subr.mxu0 0.0
  %2229 = vmatpush1.msra.mxu0 0.0
  %2230 = vmatprep.subr.mxu0 0.0
  %2231 = vmatpush1.msra.mxu0 0.0
  %2232 = vmatprep.subr.mxu0 0.0
  %2233 = vmatpush1.msra.mxu0 0.0
  %2234 = vmatprep.subr.mxu0 0.0
  %2235 = vmatpush1.msra.mxu0 0.0
  %2236 = vmatprep.subr.mxu0 0.0
  %2237 = vmatpush1.msra.mxu0 0.0
  %2238 = vmatprep.subr.mxu0 0.0
  %2239 = vmatpush1.msra.mxu0 0.0
  %2240 = vmatprep.subr.mxu0 0.0
  %2241 = vmatpush1.msra.mxu0 0.0
  %2242 = vmatprep.subr.mxu0 0.0
  %2243 = vmatpush1.msra.mxu0 0.0
  %2244 = vmatprep.subr.mxu0 0.0
  %2245 = vmatpush1.msra.mxu0 0.0
  %2246 = vmatprep.subr.mxu0 0.0
  %2247 = vmatpush1.msra.mxu0 0.0
  %2248 = vmatprep.subr.mxu0 0.0
  %2249 = vmatpush1.msra.mxu0 0.0
  %2250 = vmatprep.subr.mxu0 0.0
  %2251 = vmatpush1.msra.mxu0 0.0
  %2252 = vmatprep.subr.mxu0 0.0
  %2253 = vmatpush1.msra.mxu0 0.0
  %2254 = vmatprep.mubr.f32.mxu0 0.0
  %2255 = vmatmul.mubr.f32.gmra.mrb[0].mxu0 %v2188
  %v2256 = vpop.f32.mrb[0].mxu0
  %v2257 = vadd.f32 0.0, %v2256
  %v2258 = vpop.f32.mrb[0].mxu0
  %2259 = vdwg.mxu0
  %2260 = vrot.lane.b32.xlu0 %v262, 64
  %v2261 = vpop.permute.xlu0 %2260
  %v2264 = vsel %vm306, %v1719, 0
  %2266 = vmatprep.subr.mxu0 0.0
  %2267 = vmatpush1.msra.mxu0 %v2261
  %2268 = vmatprep.subr.mxu0 0.0
  %2269 = vmatpush1.msra.mxu0 0.0
  %2270 = vmatprep.subr.mxu0 0.0
  %2271 = vmatpush1.msra.mxu0 0.0
  %2272 = vmatprep.subr.mxu0 0.0
  %2273 = vmatpush1.msra.mxu0 0.0
  %2274 = vmatprep.subr.mxu0 0.0
  %2275 = vmatpush1.msra.mxu0 0.0
  %2276 = vmatprep.subr.mxu0 0.0
  %2277 = vmatpush1.msra.mxu0 0.0
  %2278 = vmatprep.subr.mxu0 0.0
  %2279 = vmatpush1.msra.mxu0 0.0
  %2280 = vmatprep.subr.mxu0 0.0
  %2281 = vmatpush1.msra.mxu0 0.0
  %2282 = vmatprep.subr.mxu0 0.0
  %2283 = vmatpush1.msra.mxu0 0.0
  %2284 = vmatprep.subr.mxu0 0.0
  %2285 = vmatpush1.msra.mxu0 0.0
  %2286 = vmatprep.subr.mxu0 0.0
  %2287 = vmatpush1.msra.mxu0 0.0
  %2288 = vmatprep.subr.mxu0 0.0
  %2289 = vmatpush1.msra.mxu0 0.0
  %2290 = vmatprep.subr.mxu0 0.0
  %2291 = vmatpush1.msra.mxu0 0.0
  %2292 = vmatprep.subr.mxu0 0.0
  %2293 = vmatpush1.msra.mxu0 0.0
  %2294 = vmatprep.subr.mxu0 0.0
  %2295 = vmatpush1.msra.mxu0 0.0
  %2296 = vmatprep.subr.mxu0 0.0
  %2297 = vmatpush1.msra.mxu0 0.0
  %2298 = vmatprep.subr.mxu0 0.0
  %2299 = vmatpush1.msra.mxu0 0.0
  %2300 = vmatprep.subr.mxu0 0.0
  %2301 = vmatpush1.msra.mxu0 0.0
  %2302 = vmatprep.subr.mxu0 0.0
  %2303 = vmatpush1.msra.mxu0 0.0
  %2304 = vmatprep.subr.mxu0 0.0
  %2305 = vmatpush1.msra.mxu0 0.0
  %2306 = vmatprep.subr.mxu0 0.0
  %2307 = vmatpush1.msra.mxu0 0.0
  %2308 = vmatprep.subr.mxu0 0.0
  %2309 = vmatpush1.msra.mxu0 0.0
  %2310 = vmatprep.subr.mxu0 0.0
  %2311 = vmatpush1.msra.mxu0 0.0
  %2312 = vmatprep.subr.mxu0 0.0
  %2313 = vmatpush1.msra.mxu0 0.0
  %2314 = vmatprep.subr.mxu0 0.0
  %2315 = vmatpush1.msra.mxu0 0.0
  %2316 = vmatprep.subr.mxu0 0.0
  %2317 = vmatpush1.msra.mxu0 0.0
  %2318 = vmatprep.subr.mxu0 0.0
  %2319 = vmatpush1.msra.mxu0 0.0
  %2320 = vmatprep.subr.mxu0 0.0
  %2321 = vmatpush1.msra.mxu0 0.0
  %2322 = vmatprep.subr.mxu0 0.0
  %2323 = vmatpush1.msra.mxu0 0.0
  %2324 = vmatprep.subr.mxu0 0.0
  %2325 = vmatpush1.msra.mxu0 0.0
  %2326 = vmatprep.subr.mxu0 0.0
  %2327 = vmatpush1.msra.mxu0 0.0
  %2328 = vmatprep.subr.mxu0 0.0
  %2329 = vmatpush1.msra.mxu0 0.0
  %2330 = vmatprep.mubr.f32.mxu0 0.0
  %2331 = vmatmul.mubr.f32.gmra.mrb[0].mxu0 %v2264
  %v2332 = vpop.f32.mrb[0].mxu0
  %v2333 = vadd.f32 0.0, %v2332
  %v2334 = vpop.f32.mrb[0].mxu0
  %2335 = vdwg.mxu0
  %2336 = vrot.lane.b32.xlu0 %v263, 64
  %v2337 = vpop.permute.xlu0 %2336
  %v2340 = vsel %vm306, %v1720, 0
  %2342 = vmatprep.subr.mxu0 0.0
  %2343 = vmatpush1.msra.mxu0 %v2337
  %2344 = vmatprep.subr.mxu0 0.0
  %2345 = vmatpush1.msra.mxu0 0.0
  %2346 = vmatprep.subr.mxu0 0.0
  %2347 = vmatpush1.msra.mxu0 0.0
  %2348 = vmatprep.subr.mxu0 0.0
  %2349 = vmatpush1.msra.mxu0 0.0
  %2350 = vmatprep.subr.mxu0 0.0
  %2351 = vmatpush1.msra.mxu0 0.0
  %2352 = vmatprep.subr.mxu0 0.0
  %2353 = vmatpush1.msra.mxu0 0.0
  %2354 = vmatprep.subr.mxu0 0.0
  %2355 = vmatpush1.msra.mxu0 0.0
  %2356 = vmatprep.subr.mxu0 0.0
  %2357 = vmatpush1.msra.mxu0 0.0
  %2358 = vmatprep.subr.mxu0 0.0
  %2359 = vmatpush1.msra.mxu0 0.0
  %2360 = vmatprep.subr.mxu0 0.0
  %2361 = vmatpush1.msra.mxu0 0.0
  %2362 = vmatprep.subr.mxu0 0.0
  %2363 = vmatpush1.msra.mxu0 0.0
  %2364 = vmatprep.subr.mxu0 0.0
  %2365 = vmatpush1.msra.mxu0 0.0
  %2366 = vmatprep.subr.mxu0 0.0
  %2367 = vmatpush1.msra.mxu0 0.0
  %2368 = vmatprep.subr.mxu0 0.0
  %2369 = vmatpush1.msra.mxu0 0.0
  %2370 = vmatprep.subr.mxu0 0.0
  %2371 = vmatpush1.msra.mxu0 0.0
  %2372 = vmatprep.subr.mxu0 0.0
  %2373 = vmatpush1.msra.mxu0 0.0
  %2374 = vmatprep.subr.mxu0 0.0
  %2375 = vmatpush1.msra.mxu0 0.0
  %2376 = vmatprep.subr.mxu0 0.0
  %2377 = vmatpush1.msra.mxu0 0.0
  %2378 = vmatprep.subr.mxu0 0.0
  %2379 = vmatpush1.msra.mxu0 0.0
  %2380 = vmatprep.subr.mxu0 0.0
  %2381 = vmatpush1.msra.mxu0 0.0
  %2382 = vmatprep.subr.mxu0 0.0
  %2383 = vmatpush1.msra.mxu0 0.0
  %2384 = vmatprep.subr.mxu0 0.0
  %2385 = vmatpush1.msra.mxu0 0.0
  %2386 = vmatprep.subr.mxu0 0.0
  %2387 = vmatpush1.msra.mxu0 0.0
  %2388 = vmatprep.subr.mxu0 0.0
  %2389 = vmatpush1.msra.mxu0 0.0
  %2390 = vmatprep.subr.mxu0 0.0
  %2391 = vmatpush1.msra.mxu0 0.0
  %2392 = vmatprep.subr.mxu0 0.0
  %2393 = vmatpush1.msra.mxu0 0.0
  %2394 = vmatprep.subr.mxu0 0.0
  %2395 = vmatpush1.msra.mxu0 0.0
  %2396 = vmatprep.subr.mxu0 0.0
  %2397 = vmatpush1.msra.mxu0 0.0
  %2398 = vmatprep.subr.mxu0 0.0
  %2399 = vmatpush1.msra.mxu0 0.0
  %2400 = vmatprep.subr.mxu0 0.0
  %2401 = vmatpush1.msra.mxu0 0.0
  %2402 = vmatprep.subr.mxu0 0.0
  %2403 = vmatpush1.msra.mxu0 0.0
  %2404 = vmatprep.subr.mxu0 0.0
  %2405 = vmatpush1.msra.mxu0 0.0
  %2406 = vmatprep.mubr.f32.mxu0 0.0
  %2407 = vmatmul.mubr.f32.gmra.mrb[0].mxu0 %v2340
  %v2408 = vpop.f32.mrb[0].mxu0
  %v2409 = vadd.f32 0.0, %v2408
  %v2410 = vpop.f32.mrb[0].mxu0
  %2411 = vdwg.mxu0
  %2412 = vrot.lane.b32.xlu0 %v264, 64
  %v2413 = vpop.permute.xlu0 %2412
  %v2416 = vsel %vm306, %v1721, 0
  %2418 = vmatprep.subr.mxu0 0.0
  %2419 = vmatpush1.msra.mxu0 %v2413
  %2420 = vmatprep.subr.mxu0 0.0
  %2421 = vmatpush1.msra.mxu0 0.0
  %2422 = vmatprep.subr.mxu0 0.0
  %2423 = vmatpush1.msra.mxu0 0.0
  %2424 = vmatprep.subr.mxu0 0.0
  %2425 = vmatpush1.msra.mxu0 0.0
  %2426 = vmatprep.subr.mxu0 0.0
  %2427 = vmatpush1.msra.mxu0 0.0
  %2428 = vmatprep.subr.mxu0 0.0
  %2429 = vmatpush1.msra.mxu0 0.0
  %2430 = vmatprep.subr.mxu0 0.0
  %2431 = vmatpush1.msra.mxu0 0.0
  %2432 = vmatprep.subr.mxu0 0.0
  %2433 = vmatpush1.msra.mxu0 0.0
  %2434 = vmatprep.subr.mxu0 0.0
  %2435 = vmatpush1.msra.mxu0 0.0
  %2436 = vmatprep.subr.mxu0 0.0
  %2437 = vmatpush1.msra.mxu0 0.0
  %2438 = vmatprep.subr.mxu0 0.0
  %2439 = vmatpush1.msra.mxu0 0.0
  %2440 = vmatprep.subr.mxu0 0.0
  %2441 = vmatpush1.msra.mxu0 0.0
  %2442 = vmatprep.subr.mxu0 0.0
  %2443 = vmatpush1.msra.mxu0 0.0
  %2444 = vmatprep.subr.mxu0 0.0
  %2445 = vmatpush1.msra.mxu0 0.0
  %2446 = vmatprep.subr.mxu0 0.0
  %2447 = vmatpush1.msra.mxu0 0.0
  %2448 = vmatprep.subr.mxu0 0.0
  %2449 = vmatpush1.msra.mxu0 0.0
  %2450 = vmatprep.subr.mxu0 0.0
  %2451 = vmatpush1.msra.mxu0 0.0
  %2452 = vmatprep.subr.mxu0 0.0
  %2453 = vmatpush1.msra.mxu0 0.0
  %2454 = vmatprep.subr.mxu0 0.0
  %2455 = vmatpush1.msra.mxu0 0.0
  %2456 = vmatprep.subr.mxu0 0.0
  %2457 = vmatpush1.msra.mxu0 0.0
  %2458 = vmatprep.subr.mxu0 0.0
  %2459 = vmatpush1.msra.mxu0 0.0
  %2460 = vmatprep.subr.mxu0 0.0
  %2461 = vmatpush1.msra.mxu0 0.0
  %2462 = vmatprep.subr.mxu0 0.0
  %2463 = vmatpush1.msra.mxu0 0.0
  %2464 = vmatprep.subr.mxu0 0.0
  %2465 = vmatpush1.msra.mxu0 0.0
  %2466 = vmatprep.subr.mxu0 0.0
  %2467 = vmatpush1.msra.mxu0 0.0
  %2468 = vmatprep.subr.mxu0 0.0
  %2469 = vmatpush1.msra.mxu0 0.0
  %2470 = vmatprep.subr.mxu0 0.0
  %2471 = vmatpush1.msra.mxu0 0.0
  %2472 = vmatprep.subr.mxu0 0.0
  %2473 = vmatpush1.msra.mxu0 0.0
  %2474 = vmatprep.subr.mxu0 0.0
  %2475 = vmatpush1.msra.mxu0 0.0
  %2476 = vmatprep.subr.mxu0 0.0
  %2477 = vmatpush1.msra.mxu0 0.0
  %2478 = vmatprep.subr.mxu0 0.0
  %2479 = vmatpush1.msra.mxu0 0.0
  %2480 = vmatprep.subr.mxu0 0.0
  %2481 = vmatpush1.msra.mxu0 0.0
  %2482 = vmatprep.mubr.f32.mxu0 0.0
  %2483 = vmatmul.mubr.f32.gmra.mrb[0].mxu0 %v2416
  %v2484 = vpop.f32.mrb[0].mxu0
  %v2485 = vadd.f32 0.0, %v2484
  %v2486 = vpop.f32.mrb[0].mxu0
  %2487 = vdwg.mxu0
  %2488 = vrot.lane.b32.xlu0 %v265, 64
  %v2489 = vpop.permute.xlu0 %2488
  %v2492 = vsel %vm306, %v1722, 0
  %2494 = vmatprep.subr.mxu0 0.0
  %2495 = vmatpush1.msra.mxu0 %v2489
  %2496 = vmatprep.subr.mxu0 0.0
  %2497 = vmatpush1.msra.mxu0 0.0
  %2498 = vmatprep.subr.mxu0 0.0
  %2499 = vmatpush1.msra.mxu0 0.0
  %2500 = vmatprep.subr.mxu0 0.0
  %2501 = vmatpush1.msra.mxu0 0.0
  %2502 = vmatprep.subr.mxu0 0.0
  %2503 = vmatpush1.msra.mxu0 0.0
  %2504 = vmatprep.subr.mxu0 0.0
  %2505 = vmatpush1.msra.mxu0 0.0
  %2506 = vmatprep.subr.mxu0 0.0
  %2507 = vmatpush1.msra.mxu0 0.0
  %2508 = vmatprep.subr.mxu0 0.0
  %2509 = vmatpush1.msra.mxu0 0.0
  %2510 = vmatprep.subr.mxu0 0.0
  %2511 = vmatpush1.msra.mxu0 0.0
  %2512 = vmatprep.subr.mxu0 0.0
  %2513 = vmatpush1.msra.mxu0 0.0
  %2514 = vmatprep.subr.mxu0 0.0
  %2515 = vmatpush1.msra.mxu0 0.0
  %2516 = vmatprep.subr.mxu0 0.0
  %2517 = vmatpush1.msra.mxu0 0.0
  %2518 = vmatprep.subr.mxu0 0.0
  %2519 = vmatpush1.msra.mxu0 0.0
  %2520 = vmatprep.subr.mxu0 0.0
  %2521 = vmatpush1.msra.mxu0 0.0
  %2522 = vmatprep.subr.mxu0 0.0
  %2523 = vmatpush1.msra.mxu0 0.0
  %2524 = vmatprep.subr.mxu0 0.0
  %2525 = vmatpush1.msra.mxu0 0.0
  %2526 = vmatprep.subr.mxu0 0.0
  %2527 = vmatpush1.msra.mxu0 0.0
  %2528 = vmatprep.subr.mxu0 0.0
  %2529 = vmatpush1.msra.mxu0 0.0
  %2530 = vmatprep.subr.mxu0 0.0
  %2531 = vmatpush1.msra.mxu0 0.0
  %2532 = vmatprep.subr.mxu0 0.0
  %2533 = vmatpush1.msra.mxu0 0.0
  %2534 = vmatprep.subr.mxu0 0.0
  %2535 = vmatpush1.msra.mxu0 0.0
  %2536 = vmatprep.subr.mxu0 0.0
  %2537 = vmatpush1.msra.mxu0 0.0
  %2538 = vmatprep.subr.mxu0 0.0
  %2539 = vmatpush1.msra.mxu0 0.0
  %2540 = vmatprep.subr.mxu0 0.0
  %2541 = vmatpush1.msra.mxu0 0.0
  %2542 = vmatprep.subr.mxu0 0.0
  %2543 = vmatpush1.msra.mxu0 0.0
  %2544 = vmatprep.subr.mxu0 0.0
  %2545 = vmatpush1.msra.mxu0 0.0
  %2546 = vmatprep.subr.mxu0 0.0
  %2547 = vmatpush1.msra.mxu0 0.0
  %2548 = vmatprep.subr.mxu0 0.0
  %2549 = vmatpush1.msra.mxu0 0.0
  %2550 = vmatprep.subr.mxu0 0.0
  %2551 = vmatpush1.msra.mxu0 0.0
  %2552 = vmatprep.subr.mxu0 0.0
  %2553 = vmatpush1.msra.mxu0 0.0
  %2554 = vmatprep.subr.mxu0 0.0
  %2555 = vmatpush1.msra.mxu0 0.0
  %2556 = vmatprep.subr.mxu0 0.0
  %2557 = vmatpush1.msra.mxu0 0.0
  %2558 = vmatprep.mubr.f32.mxu0 0.0
  %2559 = vmatmul.mubr.f32.gmra.mrb[0].mxu0 %v2492
  %v2560 = vpop.f32.mrb[0].mxu0
  %v2561 = vadd.f32 0.0, %v2560
  %v2562 = vpop.f32.mrb[0].mxu0
  %2563 = vdwg.mxu0
  %2564 = vrot.lane.b32.xlu0 %v266, 64
  %v2565 = vpop.permute.xlu0 %2564
  %v2568 = vsel %vm306, %v1723, 0
  %2570 = vmatprep.subr.mxu0 0.0
  %2571 = vmatpush1.msra.mxu0 %v2565
  %2572 = vmatprep.subr.mxu0 0.0
  %2573 = vmatpush1.msra.mxu0 0.0
  %2574 = vmatprep.subr.mxu0 0.0
  %2575 = vmatpush1.msra.mxu0 0.0
  %2576 = vmatprep.subr.mxu0 0.0
  %2577 = vmatpush1.msra.mxu0 0.0
  %2578 = vmatprep.subr.mxu0 0.0
  %2579 = vmatpush1.msra.mxu0 0.0
  %2580 = vmatprep.subr.mxu0 0.0
  %2581 = vmatpush1.msra.mxu0 0.0
  %2582 = vmatprep.subr.mxu0 0.0
  %2583 = vmatpush1.msra.mxu0 0.0
  %2584 = vmatprep.subr.mxu0 0.0
  %2585 = vmatpush1.msra.mxu0 0.0
  %2586 = vmatprep.subr.mxu0 0.0
  %2587 = vmatpush1.msra.mxu0 0.0
  %2588 = vmatprep.subr.mxu0 0.0
  %2589 = vmatpush1.msra.mxu0 0.0
  %2590 = vmatprep.subr.mxu0 0.0
  %2591 = vmatpush1.msra.mxu0 0.0
  %2592 = vmatprep.subr.mxu0 0.0
  %2593 = vmatpush1.msra.mxu0 0.0
  %2594 = vmatprep.subr.mxu0 0.0
  %2595 = vmatpush1.msra.mxu0 0.0
  %2596 = vmatprep.subr.mxu0 0.0
  %2597 = vmatpush1.msra.mxu0 0.0
  %2598 = vmatprep.subr.mxu0 0.0
  %2599 = vmatpush1.msra.mxu0 0.0
  %2600 = vmatprep.subr.mxu0 0.0
  %2601 = vmatpush1.msra.mxu0 0.0
  %2602 = vmatprep.subr.mxu0 0.0
  %2603 = vmatpush1.msra.mxu0 0.0
  %2604 = vmatprep.subr.mxu0 0.0
  %2605 = vmatpush1.msra.mxu0 0.0
  %2606 = vmatprep.subr.mxu0 0.0
  %2607 = vmatpush1.msra.mxu0 0.0
  %2608 = vmatprep.subr.mxu0 0.0
  %2609 = vmatpush1.msra.mxu0 0.0
  %2610 = vmatprep.subr.mxu0 0.0
  %2611 = vmatpush1.msra.mxu0 0.0
  %2612 = vmatprep.subr.mxu0 0.0
  %2613 = vmatpush1.msra.mxu0 0.0
  %2614 = vmatprep.subr.mxu0 0.0
  %2615 = vmatpush1.msra.mxu0 0.0
  %2616 = vmatprep.subr.mxu0 0.0
  %2617 = vmatpush1.msra.mxu0 0.0
  %2618 = vmatprep.subr.mxu0 0.0
  %2619 = vmatpush1.msra.mxu0 0.0
  %2620 = vmatprep.subr.mxu0 0.0
  %2621 = vmatpush1.msra.mxu0 0.0
  %2622 = vmatprep.subr.mxu0 0.0
  %2623 = vmatpush1.msra.mxu0 0.0
  %2624 = vmatprep.subr.mxu0 0.0
  %2625 = vmatpush1.msra.mxu0 0.0
  %2626 = vmatprep.subr.mxu0 0.0
  %2627 = vmatpush1.msra.mxu0 0.0
  %2628 = vmatprep.subr.mxu0 0.0
  %2629 = vmatpush1.msra.mxu0 0.0
  %2630 = vmatprep.subr.mxu0 0.0
  %2631 = vmatpush1.msra.mxu0 0.0
  %2632 = vmatprep.subr.mxu0 0.0
  %2633 = vmatpush1.msra.mxu0 0.0
  %2634 = vmatprep.mubr.f32.mxu0 0.0
  %2635 = vmatmul.mubr.f32.gmra.mrb[0].mxu0 %v2568
  %v2636 = vpop.f32.mrb[0].mxu0
  %v2637 = vadd.f32 0.0, %v2636
  %v2638 = vpop.f32.mrb[0].mxu0
  %2639 = vdwg.mxu0
  %2640 = vrot.lane.b32.xlu0 %v267, 64
  %v2641 = vpop.permute.xlu0 %2640
  %v2644 = vsel %vm306, %v1724, 0
  %2646 = vmatprep.subr.mxu0 0.0
  %2647 = vmatpush1.msra.mxu0 %v2641
  %2648 = vmatprep.subr.mxu0 0.0
  %2649 = vmatpush1.msra.mxu0 0.0
  %2650 = vmatprep.subr.mxu0 0.0
  %2651 = vmatpush1.msra.mxu0 0.0
  %2652 = vmatprep.subr.mxu0 0.0
  %2653 = vmatpush1.msra.mxu0 0.0
  %2654 = vmatprep.subr.mxu0 0.0
  %2655 = vmatpush1.msra.mxu0 0.0
  %2656 = vmatprep.subr.mxu0 0.0
  %2657 = vmatpush1.msra.mxu0 0.0
  %2658 = vmatprep.subr.mxu0 0.0
  %2659 = vmatpush1.msra.mxu0 0.0
  %2660 = vmatprep.subr.mxu0 0.0
  %2661 = vmatpush1.msra.mxu0 0.0
  %2662 = vmatprep.subr.mxu0 0.0
  %2663 = vmatpush1.msra.mxu0 0.0
  %2664 = vmatprep.subr.mxu0 0.0
  %2665 = vmatpush1.msra.mxu0 0.0
  %2666 = vmatprep.subr.mxu0 0.0
  %2667 = vmatpush1.msra.mxu0 0.0
  %2668 = vmatprep.subr.mxu0 0.0
  %2669 = vmatpush1.msra.mxu0 0.0
  %2670 = vmatprep.subr.mxu0 0.0
  %2671 = vmatpush1.msra.mxu0 0.0
  %2672 = vmatprep.subr.mxu0 0.0
  %2673 = vmatpush1.msra.mxu0 0.0
  %2674 = vmatprep.subr.mxu0 0.0
  %2675 = vmatpush1.msra.mxu0 0.0
  %2676 = vmatprep.subr.mxu0 0.0
  %2677 = vmatpush1.msra.mxu0 0.0
  %2678 = vmatprep.subr.mxu0 0.0
  %2679 = vmatpush1.msra.mxu0 0.0
  %2680 = vmatprep.subr.mxu0 0.0
  %2681 = vmatpush1.msra.mxu0 0.0
  %2682 = vmatprep.subr.mxu0 0.0
  %2683 = vmatpush1.msra.mxu0 0.0
  %2684 = vmatprep.subr.mxu0 0.0
  %2685 = vmatpush1.msra.mxu0 0.0
  %2686 = vmatprep.subr.mxu0 0.0
  %2687 = vmatpush1.msra.mxu0 0.0
  %2688 = vmatprep.subr.mxu0 0.0
  %2689 = vmatpush1.msra.mxu0 0.0
  %2690 = vmatprep.subr.mxu0 0.0
  %2691 = vmatpush1.msra.mxu0 0.0
  %2692 = vmatprep.subr.mxu0 0.0
  %2693 = vmatpush1.msra.mxu0 0.0
  %2694 = vmatprep.subr.mxu0 0.0
  %2695 = vmatpush1.msra.mxu0 0.0
  %2696 = vmatprep.subr.mxu0 0.0
  %2697 = vmatpush1.msra.mxu0 0.0
  %2698 = vmatprep.subr.mxu0 0.0
  %2699 = vmatpush1.msra.mxu0 0.0
  %2700 = vmatprep.subr.mxu0 0.0
  %2701 = vmatpush1.msra.mxu0 0.0
  %2702 = vmatprep.subr.mxu0 0.0
  %2703 = vmatpush1.msra.mxu0 0.0
  %2704 = vmatprep.subr.mxu0 0.0
  %2705 = vmatpush1.msra.mxu0 0.0
  %2706 = vmatprep.subr.mxu0 0.0
  %2707 = vmatpush1.msra.mxu0 0.0
  %2708 = vmatprep.subr.mxu0 0.0
  %2709 = vmatpush1.msra.mxu0 0.0
  %2710 = vmatprep.mubr.f32.mxu0 0.0
  %2711 = vmatmul.mubr.f32.gmra.mrb[0].mxu0 %v2644
  %v2712 = vpop.f32.mrb[0].mxu0
  %v2713 = vadd.f32 0.0, %v2712
  %v2714 = vpop.f32.mrb[0].mxu0
  %2715 = vdwg.mxu0
  %2716 = vrot.lane.b32.xlu0 %v268, 64
  %v2717 = vpop.permute.xlu0 %2716
  %v2720 = vsel %vm306, %v1725, 0
  %2722 = vmatprep.subr.mxu0 0.0
  %2723 = vmatpush1.msra.mxu0 %v2717
  %2724 = vmatprep.subr.mxu0 0.0
  %2725 = vmatpush1.msra.mxu0 0.0
  %2726 = vmatprep.subr.mxu0 0.0
  %2727 = vmatpush1.msra.mxu0 0.0
  %2728 = vmatprep.subr.mxu0 0.0
  %2729 = vmatpush1.msra.mxu0 0.0
  %2730 = vmatprep.subr.mxu0 0.0
  %2731 = vmatpush1.msra.mxu0 0.0
  %2732 = vmatprep.subr.mxu0 0.0
  %2733 = vmatpush1.msra.mxu0 0.0
  %2734 = vmatprep.subr.mxu0 0.0
  %2735 = vmatpush1.msra.mxu0 0.0
  %2736 = vmatprep.subr.mxu0 0.0
  %2737 = vmatpush1.msra.mxu0 0.0
  %2738 = vmatprep.subr.mxu0 0.0
  %2739 = vmatpush1.msra.mxu0 0.0
  %2740 = vmatprep.subr.mxu0 0.0
  %2741 = vmatpush1.msra.mxu0 0.0
  %2742 = vmatprep.subr.mxu0 0.0
  %2743 = vmatpush1.msra.mxu0 0.0
  %2744 = vmatprep.subr.mxu0 0.0
  %2745 = vmatpush1.msra.mxu0 0.0
  %2746 = vmatprep.subr.mxu0 0.0
  %2747 = vmatpush1.msra.mxu0 0.0
  %2748 = vmatprep.subr.mxu0 0.0
  %2749 = vmatpush1.msra.mxu0 0.0
  %2750 = vmatprep.subr.mxu0 0.0
  %2751 = vmatpush1.msra.mxu0 0.0
  %2752 = vmatprep.subr.mxu0 0.0
  %2753 = vmatpush1.msra.mxu0 0.0
  %2754 = vmatprep.subr.mxu0 0.0
  %2755 = vmatpush1.msra.mxu0 0.0
  %2756 = vmatprep.subr.mxu0 0.0
  %2757 = vmatpush1.msra.mxu0 0.0
  %2758 = vmatprep.subr.mxu0 0.0
  %2759 = vmatpush1.msra.mxu0 0.0
  %2760 = vmatprep.subr.mxu0 0.0
  %2761 = vmatpush1.msra.mxu0 0.0
  %2762 = vmatprep.subr.mxu0 0.0
  %2763 = vmatpush1.msra.mxu0 0.0
  %2764 = vmatprep.subr.mxu0 0.0
  %2765 = vmatpush1.msra.mxu0 0.0
  %2766 = vmatprep.subr.mxu0 0.0
  %2767 = vmatpush1.msra.mxu0 0.0
  %2768 = vmatprep.subr.mxu0 0.0
  %2769 = vmatpush1.msra.mxu0 0.0
  %2770 = vmatprep.subr.mxu0 0.0
  %2771 = vmatpush1.msra.mxu0 0.0
  %2772 = vmatprep.subr.mxu0 0.0
  %2773 = vmatpush1.msra.mxu0 0.0
  %2774 = vmatprep.subr.mxu0 0.0
  %2775 = vmatpush1.msra.mxu0 0.0
  %2776 = vmatprep.subr.mxu0 0.0
  %2777 = vmatpush1.msra.mxu0 0.0
  %2778 = vmatprep.subr.mxu0 0.0
  %2779 = vmatpush1.msra.mxu0 0.0
  %2780 = vmatprep.subr.mxu0 0.0
  %2781 = vmatpush1.msra.mxu0 0.0
  %2782 = vmatprep.subr.mxu0 0.0
  %2783 = vmatpush1.msra.mxu0 0.0
  %2784 = vmatprep.subr.mxu0 0.0
  %2785 = vmatpush1.msra.mxu0 0.0
  %2786 = vmatprep.mubr.f32.mxu0 0.0
  %2787 = vmatmul.mubr.f32.gmra.mrb[0].mxu0 %v2720
  %v2788 = vpop.f32.mrb[0].mxu0
  %v2789 = vadd.f32 0.0, %v2788
  %v2790 = vpop.f32.mrb[0].mxu0
  %2791 = vdwg.mxu0
  %2792 = vrot.lane.b32.xlu0 %v269, 64
  %v2793 = vpop.permute.xlu0 %2792
  %v2796 = vsel %vm306, %v1726, 0
  %2798 = vmatprep.subr.mxu0 0.0
  %2799 = vmatpush1.msra.mxu0 %v2793
  %2800 = vmatprep.subr.mxu0 0.0
  %2801 = vmatpush1.msra.mxu0 0.0
  %2802 = vmatprep.subr.mxu0 0.0
  %2803 = vmatpush1.msra.mxu0 0.0
  %2804 = vmatprep.subr.mxu0 0.0
  %2805 = vmatpush1.msra.mxu0 0.0
  %2806 = vmatprep.subr.mxu0 0.0
  %2807 = vmatpush1.msra.mxu0 0.0
  %2808 = vmatprep.subr.mxu0 0.0
  %2809 = vmatpush1.msra.mxu0 0.0
  %2810 = vmatprep.subr.mxu0 0.0
  %2811 = vmatpush1.msra.mxu0 0.0
  %2812 = vmatprep.subr.mxu0 0.0
  %2813 = vmatpush1.msra.mxu0 0.0
  %2814 = vmatprep.subr.mxu0 0.0
  %2815 = vmatpush1.msra.mxu0 0.0
  %2816 = vmatprep.subr.mxu0 0.0
  %2817 = vmatpush1.msra.mxu0 0.0
  %2818 = vmatprep.subr.mxu0 0.0
  %2819 = vmatpush1.msra.mxu0 0.0
  %2820 = vmatprep.subr.mxu0 0.0
  %2821 = vmatpush1.msra.mxu0 0.0
  %2822 = vmatprep.subr.mxu0 0.0
  %2823 = vmatpush1.msra.mxu0 0.0
  %2824 = vmatprep.subr.mxu0 0.0
  %2825 = vmatpush1.msra.mxu0 0.0
  %2826 = vmatprep.subr.mxu0 0.0
  %2827 = vmatpush1.msra.mxu0 0.0
  %2828 = vmatprep.subr.mxu0 0.0
  %2829 = vmatpush1.msra.mxu0 0.0
  %2830 = vmatprep.subr.mxu0 0.0
  %2831 = vmatpush1.msra.mxu0 0.0
  %2832 = vmatprep.subr.mxu0 0.0
  %2833 = vmatpush1.msra.mxu0 0.0
  %2834 = vmatprep.subr.mxu0 0.0
  %2835 = vmatpush1.msra.mxu0 0.0
  %2836 = vmatprep.subr.mxu0 0.0
  %2837 = vmatpush1.msra.mxu0 0.0
  %2838 = vmatprep.subr.mxu0 0.0
  %2839 = vmatpush1.msra.mxu0 0.0
  %2840 = vmatprep.subr.mxu0 0.0
  %2841 = vmatpush1.msra.mxu0 0.0
  %2842 = vmatprep.subr.mxu0 0.0
  %2843 = vmatpush1.msra.mxu0 0.0
  %2844 = vmatprep.subr.mxu0 0.0
  %2845 = vmatpush1.msra.mxu0 0.0
  %2846 = vmatprep.subr.mxu0 0.0
  %2847 = vmatpush1.msra.mxu0 0.0
  %2848 = vmatprep.subr.mxu0 0.0
  %2849 = vmatpush1.msra.mxu0 0.0
  %2850 = vmatprep.subr.mxu0 0.0
  %2851 = vmatpush1.msra.mxu0 0.0
  %2852 = vmatprep.subr.mxu0 0.0
  %2853 = vmatpush1.msra.mxu0 0.0
  %2854 = vmatprep.subr.mxu0 0.0
  %2855 = vmatpush1.msra.mxu0 0.0
  %2856 = vmatprep.subr.mxu0 0.0
  %2857 = vmatpush1.msra.mxu0 0.0
  %2858 = vmatprep.subr.mxu0 0.0
  %2859 = vmatpush1.msra.mxu0 0.0
  %2860 = vmatprep.subr.mxu0 0.0
  %2861 = vmatpush1.msra.mxu0 0.0
  %2862 = vmatprep.mubr.f32.mxu0 0.0
  %2863 = vmatmul.mubr.f32.gmra.mrb[0].mxu0 %v2796
  %v2864 = vpop.f32.mrb[0].mxu0
  %v2865 = vadd.f32 0.0, %v2864
  %v2866 = vpop.f32.mrb[0].mxu0
  %2867 = vdwg.mxu0
  %2868 = vrot.lane.b32.xlu0 %v270, 64
  %v2869 = vpop.permute.xlu0 %2868
  %v2872 = vsel %vm306, %v1727, 0
  %2874 = vmatprep.subr.mxu0 0.0
  %2875 = vmatpush1.msra.mxu0 %v2869
  %2876 = vmatprep.subr.mxu0 0.0
  %2877 = vmatpush1.msra.mxu0 0.0
  %2878 = vmatprep.subr.mxu0 0.0
  %2879 = vmatpush1.msra.mxu0 0.0
  %2880 = vmatprep.subr.mxu0 0.0
  %2881 = vmatpush1.msra.mxu0 0.0
  %2882 = vmatprep.subr.mxu0 0.0
  %2883 = vmatpush1.msra.mxu0 0.0
  %2884 = vmatprep.subr.mxu0 0.0
  %2885 = vmatpush1.msra.mxu0 0.0
  %2886 = vmatprep.subr.mxu0 0.0
  %2887 = vmatpush1.msra.mxu0 0.0
  %2888 = vmatprep.subr.mxu0 0.0
  %2889 = vmatpush1.msra.mxu0 0.0
  %2890 = vmatprep.subr.mxu0 0.0
  %2891 = vmatpush1.msra.mxu0 0.0
  %2892 = vmatprep.subr.mxu0 0.0
  %2893 = vmatpush1.msra.mxu0 0.0
  %2894 = vmatprep.subr.mxu0 0.0
  %2895 = vmatpush1.msra.mxu0 0.0
  %2896 = vmatprep.subr.mxu0 0.0
  %2897 = vmatpush1.msra.mxu0 0.0
  %2898 = vmatprep.subr.mxu0 0.0
  %2899 = vmatpush1.msra.mxu0 0.0
  %2900 = vmatprep.subr.mxu0 0.0
  %2901 = vmatpush1.msra.mxu0 0.0
  %2902 = vmatprep.subr.mxu0 0.0
  %2903 = vmatpush1.msra.mxu0 0.0
  %2904 = vmatprep.subr.mxu0 0.0
  %2905 = vmatpush1.msra.mxu0 0.0
  %2906 = vmatprep.subr.mxu0 0.0
  %2907 = vmatpush1.msra.mxu0 0.0
  %2908 = vmatprep.subr.mxu0 0.0
  %2909 = vmatpush1.msra.mxu0 0.0
  %2910 = vmatprep.subr.mxu0 0.0
  %2911 = vmatpush1.msra.mxu0 0.0
  %2912 = vmatprep.subr.mxu0 0.0
  %2913 = vmatpush1.msra.mxu0 0.0
  %2914 = vmatprep.subr.mxu0 0.0
  %2915 = vmatpush1.msra.mxu0 0.0
  %2916 = vmatprep.subr.mxu0 0.0
  %2917 = vmatpush1.msra.mxu0 0.0
  %2918 = vmatprep.subr.mxu0 0.0
  %2919 = vmatpush1.msra.mxu0 0.0
  %2920 = vmatprep.subr.mxu0 0.0
  %2921 = vmatpush1.msra.mxu0 0.0
  %2922 = vmatprep.subr.mxu0 0.0
  %2923 = vmatpush1.msra.mxu0 0.0
  %2924 = vmatprep.subr.mxu0 0.0
  %2925 = vmatpush1.msra.mxu0 0.0
  %2926 = vmatprep.subr.mxu0 0.0
  %2927 = vmatpush1.msra.mxu0 0.0
  %2928 = vmatprep.subr.mxu0 0.0
  %2929 = vmatpush1.msra.mxu0 0.0
  %2930 = vmatprep.subr.mxu0 0.0
  %2931 = vmatpush1.msra.mxu0 0.0
  %2932 = vmatprep.subr.mxu0 0.0
  %2933 = vmatpush1.msra.mxu0 0.0
  %2934 = vmatprep.subr.mxu0 0.0
  %2935 = vmatpush1.msra.mxu0 0.0
  %2936 = vmatprep.subr.mxu0 0.0
  %2937 = vmatpush1.msra.mxu0 0.0
  %2938 = vmatprep.mubr.f32.mxu0 0.0
  %2939 = vmatmul.mubr.f32.gmra.mrb[0].mxu0 %v2872
  %v2940 = vpop.f32.mrb[0].mxu0
  %v2941 = vadd.f32 0.0, %v2940
  %v2942 = vpop.f32.mrb[0].mxu0
  %2943 = vdwg.mxu0
  %2944 = vst.msk [vmem:[%s4] sm:$0xff] %vm306, %v1801
  %2945 = vst.msk [vmem:[%s4 + $0x8] sm:$0xff] %vm306, %v1877
  %2946 = vst.msk [vmem:[%s4 + $0x10] sm:$0xff] %vm306, %v1953
  %2947 = vst.msk [vmem:[%s4 + $0x18] sm:$0xff] %vm306, %v2029
  %2948 = vst.msk [vmem:[%s4 + $0x20] sm:$0xff] %vm306, %v2105
  %2949 = vst.msk [vmem:[%s4 + $0x28] sm:$0xff] %vm306, %v2181
  %2950 = vst.msk [vmem:[%s4 + $0x30] sm:$0xff] %vm306, %v2257
  %2951 = vst.msk [vmem:[%s4 + $0x38] sm:$0xff] %vm306, %v2333
  %2952 = vst.msk [vmem:[%s4 + $0x40] sm:$0xff] %vm306, %v2409
  %2953 = vst.msk [vmem:[%s4 + $0x48] sm:$0xff] %vm306, %v2485
  %2954 = vst.msk [vmem:[%s4 + $0x50] sm:$0xff] %vm306, %v2561
  %2955 = vst.msk [vmem:[%s4 + $0x58] sm:$0xff] %vm306, %v2637
  %2956 = vst.msk [vmem:[%s4 + $0x60] sm:$0xff] %vm306, %v2713
  %2957 = vst.msk [vmem:[%s4 + $0x68] sm:$0xff] %vm306, %v2789
  %2958 = vst.msk [vmem:[%s4 + $0x70] sm:$0xff] %vm306, %v2865
  %2959 = vst.msk [vmem:[%s4 + $0x78] sm:$0xff] %vm306, %v2941
  %v2960 = vld [vmem:[#allocation2] sm:$0xff]
  %v2961 = vld [vmem:[#allocation2 + $0x8] sm:$0xff]
  %v2962 = vld [vmem:[#allocation2 + $0x10] sm:$0xff]
  %v2963 = vld [vmem:[#allocation2 + $0x18] sm:$0xff]
  %v2964 = vld [vmem:[#allocation2 + $0x20] sm:$0xff]
  %v2965 = vld [vmem:[#allocation2 + $0x28] sm:$0xff]
  %v2966 = vld [vmem:[#allocation2 + $0x30] sm:$0xff]
  %v2967 = vld [vmem:[#allocation2 + $0x38] sm:$0xff]
  %v2968 = vld [vmem:[#allocation2 + $0x40] sm:$0xff]
  %v2969 = vld [vmem:[#allocation2 + $0x48] sm:$0xff]
  %v2970 = vld [vmem:[#allocation2 + $0x50] sm:$0xff]
  %v2971 = vld [vmem:[#allocation2 + $0x58] sm:$0xff]
  %v2972 = vld [vmem:[#allocation2 + $0x60] sm:$0xff]
  %v2973 = vld [vmem:[#allocation2 + $0x68] sm:$0xff]
  %v2974 = vld [vmem:[#allocation2 + $0x70] sm:$0xff]
  %v2975 = vld [vmem:[#allocation2 + $0x78] sm:$0xff]
  %v2976 = vmul.f32 %v2960, 0.35355338
  %v2977 = vmul.f32 %v2961, 0.35355338
  %v2978 = vmul.f32 %v2962, 0.35355338
  %v2979 = vmul.f32 %v2963, 0.35355338
  %v2980 = vmul.f32 %v2964, 0.35355338
  %v2981 = vmul.f32 %v2965, 0.35355338
  %v2982 = vmul.f32 %v2966, 0.35355338
  %v2983 = vmul.f32 %v2967, 0.35355338
  %v2984 = vmul.f32 %v2968, 0.35355338
  %v2985 = vmul.f32 %v2969, 0.35355338
  %v2986 = vmul.f32 %v2970, 0.35355338
  %v2987 = vmul.f32 %v2971, 0.35355338
  %v2988 = vmul.f32 %v2972, 0.35355338
  %v2989 = vmul.f32 %v2973, 0.35355338
  %v2990 = vmul.f32 %v2974, 0.35355338
  %v2991 = vmul.f32 %v2975, 0.35355338
  %v2992 = vld [vmem:[%s1] sm:$0xff]
  %v2993 = vld [vmem:[%s1 + $0x8] sm:$0xff]
  %v2994 = vld [vmem:[%s1 + $0x10] sm:$0xff]
  %v2995 = vld [vmem:[%s1 + $0x18] sm:$0xff]
  %v2996 = vld [vmem:[%s1 + $0x20] sm:$0xff]
  %v2997 = vld [vmem:[%s1 + $0x28] sm:$0xff]
  %v2998 = vld [vmem:[%s1 + $0x30] sm:$0xff]
  %v2999 = vld [vmem:[%s1 + $0x38] sm:$0xff]
  %v3000 = vld [vmem:[%s1 + $0x40] sm:$0xff]
  %v3001 = vld [vmem:[%s1 + $0x48] sm:$0xff]
  %v3002 = vld [vmem:[%s1 + $0x50] sm:$0xff]
  %v3003 = vld [vmem:[%s1 + $0x58] sm:$0xff]
  %v3004 = vld [vmem:[%s1 + $0x60] sm:$0xff]
  %v3005 = vld [vmem:[%s1 + $0x68] sm:$0xff]
  %v3006 = vld [vmem:[%s1 + $0x70] sm:$0xff]
  %v3007 = vld [vmem:[%s1 + $0x78] sm:$0xff]
  %3009 = vrot.lane.b32.xlu0 %v2976, 120
  %v3010 = vpop.permute.xlu0 %3009
  %3012 = vrot.lane.b32.xlu0 %v2960, 88
  %v3013 = vpop.permute.xlu0 %3012
  %v3014 = vsel %vm306, %v3010, 0
  %v3016 = vsel %vm306, %v3013, 0
  %3018 = vmatprep.subr.mxu0 0.0
  %3019 = vmatpush1.xpose.msra.mxu0 %v3016
  %3020 = vmatprep.subr.mxu0 0.0
  %3021 = vmatpush1.xpose.msra.mxu0 0.0
  %3022 = vmatprep.subr.mxu0 0.0
  %3023 = vmatpush1.xpose.msra.mxu0 0.0
  %3024 = vmatprep.subr.mxu0 0.0
  %3025 = vmatpush1.xpose.msra.mxu0 0.0
  %3026 = vmatprep.subr.mxu0 0.0
  %3027 = vmatpush1.xpose.msra.mxu0 0.0
  %3028 = vmatprep.subr.mxu0 0.0
  %3029 = vmatpush1.xpose.msra.mxu0 0.0
  %3030 = vmatprep.subr.mxu0 0.0
  %3031 = vmatpush1.xpose.msra.mxu0 0.0
  %3032 = vmatprep.subr.mxu0 0.0
  %3033 = vmatpush1.xpose.msra.mxu0 0.0
  %3034 = vmatprep.subr.mxu0 0.0
  %3035 = vmatpush1.xpose.msra.mxu0 0.0
  %3036 = vmatprep.subr.mxu0 0.0
  %3037 = vmatpush1.xpose.msra.mxu0 0.0
  %3038 = vmatprep.subr.mxu0 0.0
  %3039 = vmatpush1.xpose.msra.mxu0 0.0
  %3040 = vmatprep.subr.mxu0 0.0
  %3041 = vmatpush1.xpose.msra.mxu0 0.0
  %3042 = vmatprep.subr.mxu0 0.0
  %3043 = vmatpush1.xpose.msra.mxu0 0.0
  %3044 = vmatprep.subr.mxu0 0.0
  %3045 = vmatpush1.xpose.msra.mxu0 0.0
  %3046 = vmatprep.subr.mxu0 0.0
  %3047 = vmatpush1.xpose.msra.mxu0 0.0
  %3048 = vmatprep.subr.mxu0 0.0
  %3049 = vmatpush1.xpose.msra.mxu0 0.0
  %3050 = vmatprep.subr.mxu0 0.0
  %3051 = vmatpush1.xpose.msra.mxu0 0.0
  %3052 = vmatprep.subr.mxu0 0.0
  %3053 = vmatpush1.xpose.msra.mxu0 0.0
  %3054 = vmatprep.subr.mxu0 0.0
  %3055 = vmatpush1.xpose.msra.mxu0 0.0
  %3056 = vmatprep.subr.mxu0 0.0
  %3057 = vmatpush1.xpose.msra.mxu0 0.0
  %3058 = vmatprep.subr.mxu0 0.0
  %3059 = vmatpush1.xpose.msra.mxu0 0.0
  %3060 = vmatprep.subr.mxu0 0.0
  %3061 = vmatpush1.xpose.msra.mxu0 0.0
  %3062 = vmatprep.subr.mxu0 0.0
  %3063 = vmatpush1.xpose.msra.mxu0 0.0
  %3064 = vmatprep.subr.mxu0 0.0
  %3065 = vmatpush1.xpose.msra.mxu0 0.0
  %3066 = vmatprep.subr.mxu0 0.0
  %3067 = vmatpush1.xpose.msra.mxu0 0.0
  %3068 = vmatprep.subr.mxu0 0.0
  %3069 = vmatpush1.xpose.msra.mxu0 0.0
  %3070 = vmatprep.subr.mxu0 0.0
  %3071 = vmatpush1.xpose.msra.mxu0 0.0
  %3072 = vmatprep.subr.mxu0 0.0
  %3073 = vmatpush1.xpose.msra.mxu0 0.0
  %3074 = vmatprep.subr.mxu0 0.0
  %3075 = vmatpush1.xpose.msra.mxu0 0.0
  %3076 = vmatprep.subr.mxu0 0.0
  %3077 = vmatpush1.xpose.msra.mxu0 0.0
  %3078 = vmatprep.subr.mxu0 0.0
  %3079 = vmatpush1.xpose.msra.mxu0 0.0
  %3080 = vmatprep.subr.mxu0 0.0
  %3081 = vmatpush1.xpose.msra.mxu0 0.0
  %3082 = vmatprep.mubr.f32.mxu0 0.0
  %3083 = vmatmul.mubr.f32.gmra.mrb[0].mxu0 %v3014
  %v3084 = vpop.f32.mrb[0].mxu0
  %v3085 = vadd.f32 %v2992, %v3084
  %v3086 = vpop.f32.mrb[0].mxu0
  %3087 = vdwg.mxu0
  %3089 = vrot.lane.b32.xlu0 %v2977, 120
  %v3090 = vpop.permute.xlu0 %3089
  %3092 = vrot.lane.b32.xlu0 %v2961, 88
  %v3093 = vpop.permute.xlu0 %3092
  %v3094 = vsel %vm306, %v3090, 0
  %v3096 = vsel %vm306, %v3093, 0
  %3098 = vmatprep.subr.mxu0 0.0
  %3099 = vmatpush1.xpose.msra.mxu0 %v3096
  %3100 = vmatprep.subr.mxu0 0.0
  %3101 = vmatpush1.xpose.msra.mxu0 0.0
  %3102 = vmatprep.subr.mxu0 0.0
  %3103 = vmatpush1.xpose.msra.mxu0 0.0
  %3104 = vmatprep.subr.mxu0 0.0
  %3105 = vmatpush1.xpose.msra.mxu0 0.0
  %3106 = vmatprep.subr.mxu0 0.0
  %3107 = vmatpush1.xpose.msra.mxu0 0.0
  %3108 = vmatprep.subr.mxu0 0.0
  %3109 = vmatpush1.xpose.msra.mxu0 0.0
  %3110 = vmatprep.subr.mxu0 0.0
  %3111 = vmatpush1.xpose.msra.mxu0 0.0
  %3112 = vmatprep.subr.mxu0 0.0
  %3113 = vmatpush1.xpose.msra.mxu0 0.0
  %3114 = vmatprep.subr.mxu0 0.0
  %3115 = vmatpush1.xpose.msra.mxu0 0.0
  %3116 = vmatprep.subr.mxu0 0.0
  %3117 = vmatpush1.xpose.msra.mxu0 0.0
  %3118 = vmatprep.subr.mxu0 0.0
  %3119 = vmatpush1.xpose.msra.mxu0 0.0
  %3120 = vmatprep.subr.mxu0 0.0
  %3121 = vmatpush1.xpose.msra.mxu0 0.0
  %3122 = vmatprep.subr.mxu0 0.0
  %3123 = vmatpush1.xpose.msra.mxu0 0.0
  %3124 = vmatprep.subr.mxu0 0.0
  %3125 = vmatpush1.xpose.msra.mxu0 0.0
  %3126 = vmatprep.subr.mxu0 0.0
  %3127 = vmatpush1.xpose.msra.mxu0 0.0
  %3128 = vmatprep.subr.mxu0 0.0
  %3129 = vmatpush1.xpose.msra.mxu0 0.0
  %3130 = vmatprep.subr.mxu0 0.0
  %3131 = vmatpush1.xpose.msra.mxu0 0.0
  %3132 = vmatprep.subr.mxu0 0.0
  %3133 = vmatpush1.xpose.msra.mxu0 0.0
  %3134 = vmatprep.subr.mxu0 0.0
  %3135 = vmatpush1.xpose.msra.mxu0 0.0
  %3136 = vmatprep.subr.mxu0 0.0
  %3137 = vmatpush1.xpose.msra.mxu0 0.0
  %3138 = vmatprep.subr.mxu0 0.0
  %3139 = vmatpush1.xpose.msra.mxu0 0.0
  %3140 = vmatprep.subr.mxu0 0.0
  %3141 = vmatpush1.xpose.msra.mxu0 0.0
  %3142 = vmatprep.subr.mxu0 0.0
  %3143 = vmatpush1.xpose.msra.mxu0 0.0
  %3144 = vmatprep.subr.mxu0 0.0
  %3145 = vmatpush1.xpose.msra.mxu0 0.0
  %3146 = vmatprep.subr.mxu0 0.0
  %3147 = vmatpush1.xpose.msra.mxu0 0.0
  %3148 = vmatprep.subr.mxu0 0.0
  %3149 = vmatpush1.xpose.msra.mxu0 0.0
  %3150 = vmatprep.subr.mxu0 0.0
  %3151 = vmatpush1.xpose.msra.mxu0 0.0
  %3152 = vmatprep.subr.mxu0 0.0
  %3153 = vmatpush1.xpose.msra.mxu0 0.0
  %3154 = vmatprep.subr.mxu0 0.0
  %3155 = vmatpush1.xpose.msra.mxu0 0.0
  %3156 = vmatprep.subr.mxu0 0.0
  %3157 = vmatpush1.xpose.msra.mxu0 0.0
  %3158 = vmatprep.subr.mxu0 0.0
  %3159 = vmatpush1.xpose.msra.mxu0 0.0
  %3160 = vmatprep.subr.mxu0 0.0
  %3161 = vmatpush1.xpose.msra.mxu0 0.0
  %3162 = vmatprep.mubr.f32.mxu0 0.0
  %3163 = vmatmul.mubr.f32.gmra.mrb[0].mxu0 %v3094
  %v3164 = vpop.f32.mrb[0].mxu0
  %v3165 = vadd.f32 %v2993, %v3164
  %v3166 = vpop.f32.mrb[0].mxu0
  %3167 = vdwg.mxu0
  %3169 = vrot.lane.b32.xlu0 %v2978, 120
  %v3170 = vpop.permute.xlu0 %3169
  %3172 = vrot.lane.b32.xlu0 %v2962, 88
  %v3173 = vpop.permute.xlu0 %3172
  %v3174 = vsel %vm306, %v3170, 0
  %v3176 = vsel %vm306, %v3173, 0
  %3178 = vmatprep.subr.mxu0 0.0
  %3179 = vmatpush1.xpose.msra.mxu0 %v3176
  %3180 = vmatprep.subr.mxu0 0.0
  %3181 = vmatpush1.xpose.msra.mxu0 0.0
  %3182 = vmatprep.subr.mxu0 0.0
  %3183 = vmatpush1.xpose.msra.mxu0 0.0
  %3184 = vmatprep.subr.mxu0 0.0
  %3185 = vmatpush1.xpose.msra.mxu0 0.0
  %3186 = vmatprep.subr.mxu0 0.0
  %3187 = vmatpush1.xpose.msra.mxu0 0.0
  %3188 = vmatprep.subr.mxu0 0.0
  %3189 = vmatpush1.xpose.msra.mxu0 0.0
  %3190 = vmatprep.subr.mxu0 0.0
  %3191 = vmatpush1.xpose.msra.mxu0 0.0
  %3192 = vmatprep.subr.mxu0 0.0
  %3193 = vmatpush1.xpose.msra.mxu0 0.0
  %3194 = vmatprep.subr.mxu0 0.0
  %3195 = vmatpush1.xpose.msra.mxu0 0.0
  %3196 = vmatprep.subr.mxu0 0.0
  %3197 = vmatpush1.xpose.msra.mxu0 0.0
  %3198 = vmatprep.subr.mxu0 0.0
  %3199 = vmatpush1.xpose.msra.mxu0 0.0
  %3200 = vmatprep.subr.mxu0 0.0
  %3201 = vmatpush1.xpose.msra.mxu0 0.0
  %3202 = vmatprep.subr.mxu0 0.0
  %3203 = vmatpush1.xpose.msra.mxu0 0.0
  %3204 = vmatprep.subr.mxu0 0.0
  %3205 = vmatpush1.xpose.msra.mxu0 0.0
  %3206 = vmatprep.subr.mxu0 0.0
  %3207 = vmatpush1.xpose.msra.mxu0 0.0
  %3208 = vmatprep.subr.mxu0 0.0
  %3209 = vmatpush1.xpose.msra.mxu0 0.0
  %3210 = vmatprep.subr.mxu0 0.0
  %3211 = vmatpush1.xpose.msra.mxu0 0.0
  %3212 = vmatprep.subr.mxu0 0.0
  %3213 = vmatpush1.xpose.msra.mxu0 0.0
  %3214 = vmatprep.subr.mxu0 0.0
  %3215 = vmatpush1.xpose.msra.mxu0 0.0
  %3216 = vmatprep.subr.mxu0 0.0
  %3217 = vmatpush1.xpose.msra.mxu0 0.0
  %3218 = vmatprep.subr.mxu0 0.0
  %3219 = vmatpush1.xpose.msra.mxu0 0.0
  %3220 = vmatprep.subr.mxu0 0.0
  %3221 = vmatpush1.xpose.msra.mxu0 0.0
  %3222 = vmatprep.subr.mxu0 0.0
  %3223 = vmatpush1.xpose.msra.mxu0 0.0
  %3224 = vmatprep.subr.mxu0 0.0
  %3225 = vmatpush1.xpose.msra.mxu0 0.0
  %3226 = vmatprep.subr.mxu0 0.0
  %3227 = vmatpush1.xpose.msra.mxu0 0.0
  %3228 = vmatprep.subr.mxu0 0.0
  %3229 = vmatpush1.xpose.msra.mxu0 0.0
  %3230 = vmatprep.subr.mxu0 0.0
  %3231 = vmatpush1.xpose.msra.mxu0 0.0
  %3232 = vmatprep.subr.mxu0 0.0
  %3233 = vmatpush1.xpose.msra.mxu0 0.0
  %3234 = vmatprep.subr.mxu0 0.0
  %3235 = vmatpush1.xpose.msra.mxu0 0.0
  %3236 = vmatprep.subr.mxu0 0.0
  %3237 = vmatpush1.xpose.msra.mxu0 0.0
  %3238 = vmatprep.subr.mxu0 0.0
  %3239 = vmatpush1.xpose.msra.mxu0 0.0
  %3240 = vmatprep.subr.mxu0 0.0
  %3241 = vmatpush1.xpose.msra.mxu0 0.0
  %3242 = vmatprep.mubr.f32.mxu0 0.0
  %3243 = vmatmul.mubr.f32.gmra.mrb[0].mxu0 %v3174
  %v3244 = vpop.f32.mrb[0].mxu0
  %v3245 = vadd.f32 %v2994, %v3244
  %v3246 = vpop.f32.mrb[0].mxu0
  %3247 = vdwg.mxu0
  %3249 = vrot.lane.b32.xlu0 %v2979, 120
  %v3250 = vpop.permute.xlu0 %3249
  %3252 = vrot.lane.b32.xlu0 %v2963, 88
  %v3253 = vpop.permute.xlu0 %3252
  %v3254 = vsel %vm306, %v3250, 0
  %v3256 = vsel %vm306, %v3253, 0
  %3258 = vmatprep.subr.mxu0 0.0
  %3259 = vmatpush1.xpose.msra.mxu0 %v3256
  %3260 = vmatprep.subr.mxu0 0.0
  %3261 = vmatpush1.xpose.msra.mxu0 0.0
  %3262 = vmatprep.subr.mxu0 0.0
  %3263 = vmatpush1.xpose.msra.mxu0 0.0
  %3264 = vmatprep.subr.mxu0 0.0
  %3265 = vmatpush1.xpose.msra.mxu0 0.0
  %3266 = vmatprep.subr.mxu0 0.0
  %3267 = vmatpush1.xpose.msra.mxu0 0.0
  %3268 = vmatprep.subr.mxu0 0.0
  %3269 = vmatpush1.xpose.msra.mxu0 0.0
  %3270 = vmatprep.subr.mxu0 0.0
  %3271 = vmatpush1.xpose.msra.mxu0 0.0
  %3272 = vmatprep.subr.mxu0 0.0
  %3273 = vmatpush1.xpose.msra.mxu0 0.0
  %3274 = vmatprep.subr.mxu0 0.0
  %3275 = vmatpush1.xpose.msra.mxu0 0.0
  %3276 = vmatprep.subr.mxu0 0.0
  %3277 = vmatpush1.xpose.msra.mxu0 0.0
  %3278 = vmatprep.subr.mxu0 0.0
  %3279 = vmatpush1.xpose.msra.mxu0 0.0
  %3280 = vmatprep.subr.mxu0 0.0
  %3281 = vmatpush1.xpose.msra.mxu0 0.0
  %3282 = vmatprep.subr.mxu0 0.0
  %3283 = vmatpush1.xpose.msra.mxu0 0.0
  %3284 = vmatprep.subr.mxu0 0.0
  %3285 = vmatpush1.xpose.msra.mxu0 0.0
  %3286 = vmatprep.subr.mxu0 0.0
  %3287 = vmatpush1.xpose.msra.mxu0 0.0
  %3288 = vmatprep.subr.mxu0 0.0
  %3289 = vmatpush1.xpose.msra.mxu0 0.0
  %3290 = vmatprep.subr.mxu0 0.0
  %3291 = vmatpush1.xpose.msra.mxu0 0.0
  %3292 = vmatprep.subr.mxu0 0.0
  %3293 = vmatpush1.xpose.msra.mxu0 0.0
  %3294 = vmatprep.subr.mxu0 0.0
  %3295 = vmatpush1.xpose.msra.mxu0 0.0
  %3296 = vmatprep.subr.mxu0 0.0
  %3297 = vmatpush1.xpose.msra.mxu0 0.0
  %3298 = vmatprep.subr.mxu0 0.0
  %3299 = vmatpush1.xpose.msra.mxu0 0.0
  %3300 = vmatprep.subr.mxu0 0.0
  %3301 = vmatpush1.xpose.msra.mxu0 0.0
  %3302 = vmatprep.subr.mxu0 0.0
  %3303 = vmatpush1.xpose.msra.mxu0 0.0
  %3304 = vmatprep.subr.mxu0 0.0
  %3305 = vmatpush1.xpose.msra.mxu0 0.0
  %3306 = vmatprep.subr.mxu0 0.0
  %3307 = vmatpush1.xpose.msra.mxu0 0.0
  %3308 = vmatprep.subr.mxu0 0.0
  %3309 = vmatpush1.xpose.msra.mxu0 0.0
  %3310 = vmatprep.subr.mxu0 0.0
  %3311 = vmatpush1.xpose.msra.mxu0 0.0
  %3312 = vmatprep.subr.mxu0 0.0
  %3313 = vmatpush1.xpose.msra.mxu0 0.0
  %3314 = vmatprep.subr.mxu0 0.0
  %3315 = vmatpush1.xpose.msra.mxu0 0.0
  %3316 = vmatprep.subr.mxu0 0.0
  %3317 = vmatpush1.xpose.msra.mxu0 0.0
  %3318 = vmatprep.subr.mxu0 0.0
  %3319 = vmatpush1.xpose.msra.mxu0 0.0
  %3320 = vmatprep.subr.mxu0 0.0
  %3321 = vmatpush1.xpose.msra.mxu0 0.0
  %3322 = vmatprep.mubr.f32.mxu0 0.0
  %3323 = vmatmul.mubr.f32.gmra.mrb[0].mxu0 %v3254
  %v3324 = vpop.f32.mrb[0].mxu0
  %v3325 = vadd.f32 %v2995, %v3324
  %v3326 = vpop.f32.mrb[0].mxu0
  %3327 = vdwg.mxu0
  %3329 = vrot.lane.b32.xlu0 %v2980, 120
  %v3330 = vpop.permute.xlu0 %3329
  %3332 = vrot.lane.b32.xlu0 %v2964, 88
  %v3333 = vpop.permute.xlu0 %3332
  %v3334 = vsel %vm306, %v3330, 0
  %v3336 = vsel %vm306, %v3333, 0
  %3338 = vmatprep.subr.mxu0 0.0
  %3339 = vmatpush1.xpose.msra.mxu0 %v3336
  %3340 = vmatprep.subr.mxu0 0.0
  %3341 = vmatpush1.xpose.msra.mxu0 0.0
  %3342 = vmatprep.subr.mxu0 0.0
  %3343 = vmatpush1.xpose.msra.mxu0 0.0
  %3344 = vmatprep.subr.mxu0 0.0
  %3345 = vmatpush1.xpose.msra.mxu0 0.0
  %3346 = vmatprep.subr.mxu0 0.0
  %3347 = vmatpush1.xpose.msra.mxu0 0.0
  %3348 = vmatprep.subr.mxu0 0.0
  %3349 = vmatpush1.xpose.msra.mxu0 0.0
  %3350 = vmatprep.subr.mxu0 0.0
  %3351 = vmatpush1.xpose.msra.mxu0 0.0
  %3352 = vmatprep.subr.mxu0 0.0
  %3353 = vmatpush1.xpose.msra.mxu0 0.0
  %3354 = vmatprep.subr.mxu0 0.0
  %3355 = vmatpush1.xpose.msra.mxu0 0.0
  %3356 = vmatprep.subr.mxu0 0.0
  %3357 = vmatpush1.xpose.msra.mxu0 0.0
  %3358 = vmatprep.subr.mxu0 0.0
  %3359 = vmatpush1.xpose.msra.mxu0 0.0
  %3360 = vmatprep.subr.mxu0 0.0
  %3361 = vmatpush1.xpose.msra.mxu0 0.0
  %3362 = vmatprep.subr.mxu0 0.0
  %3363 = vmatpush1.xpose.msra.mxu0 0.0
  %3364 = vmatprep.subr.mxu0 0.0
  %3365 = vmatpush1.xpose.msra.mxu0 0.0
  %3366 = vmatprep.subr.mxu0 0.0
  %3367 = vmatpush1.xpose.msra.mxu0 0.0
  %3368 = vmatprep.subr.mxu0 0.0
  %3369 = vmatpush1.xpose.msra.mxu0 0.0
  %3370 = vmatprep.subr.mxu0 0.0
  %3371 = vmatpush1.xpose.msra.mxu0 0.0
  %3372 = vmatprep.subr.mxu0 0.0
  %3373 = vmatpush1.xpose.msra.mxu0 0.0
  %3374 = vmatprep.subr.mxu0 0.0
  %3375 = vmatpush1.xpose.msra.mxu0 0.0
  %3376 = vmatprep.subr.mxu0 0.0
  %3377 = vmatpush1.xpose.msra.mxu0 0.0
  %3378 = vmatprep.subr.mxu0 0.0
  %3379 = vmatpush1.xpose.msra.mxu0 0.0
  %3380 = vmatprep.subr.mxu0 0.0
  %3381 = vmatpush1.xpose.msra.mxu0 0.0
  %3382 = vmatprep.subr.mxu0 0.0
  %3383 = vmatpush1.xpose.msra.mxu0 0.0
  %3384 = vmatprep.subr.mxu0 0.0
  %3385 = vmatpush1.xpose.msra.mxu0 0.0
  %3386 = vmatprep.subr.mxu0 0.0
  %3387 = vmatpush1.xpose.msra.mxu0 0.0
  %3388 = vmatprep.subr.mxu0 0.0
  %3389 = vmatpush1.xpose.msra.mxu0 0.0
  %3390 = vmatprep.subr.mxu0 0.0
  %3391 = vmatpush1.xpose.msra.mxu0 0.0
  %3392 = vmatprep.subr.mxu0 0.0
  %3393 = vmatpush1.xpose.msra.mxu0 0.0
  %3394 = vmatprep.subr.mxu0 0.0
  %3395 = vmatpush1.xpose.msra.mxu0 0.0
  %3396 = vmatprep.subr.mxu0 0.0
  %3397 = vmatpush1.xpose.msra.mxu0 0.0
  %3398 = vmatprep.subr.mxu0 0.0
  %3399 = vmatpush1.xpose.msra.mxu0 0.0
  %3400 = vmatprep.subr.mxu0 0.0
  %3401 = vmatpush1.xpose.msra.mxu0 0.0
  %3402 = vmatprep.mubr.f32.mxu0 0.0
  %3403 = vmatmul.mubr.f32.gmra.mrb[0].mxu0 %v3334
  %v3404 = vpop.f32.mrb[0].mxu0
  %v3405 = vadd.f32 %v2996, %v3404
  %v3406 = vpop.f32.mrb[0].mxu0
  %3407 = vdwg.mxu0
  %3409 = vrot.lane.b32.xlu0 %v2981, 120
  %v3410 = vpop.permute.xlu0 %3409
  %3412 = vrot.lane.b32.xlu0 %v2965, 88
  %v3413 = vpop.permute.xlu0 %3412
  %v3414 = vsel %vm306, %v3410, 0
  %v3416 = vsel %vm306, %v3413, 0
  %3418 = vmatprep.subr.mxu0 0.0
  %3419 = vmatpush1.xpose.msra.mxu0 %v3416
  %3420 = vmatprep.subr.mxu0 0.0
  %3421 = vmatpush1.xpose.msra.mxu0 0.0
  %3422 = vmatprep.subr.mxu0 0.0
  %3423 = vmatpush1.xpose.msra.mxu0 0.0
  %3424 = vmatprep.subr.mxu0 0.0
  %3425 = vmatpush1.xpose.msra.mxu0 0.0
  %3426 = vmatprep.subr.mxu0 0.0
  %3427 = vmatpush1.xpose.msra.mxu0 0.0
  %3428 = vmatprep.subr.mxu0 0.0
  %3429 = vmatpush1.xpose.msra.mxu0 0.0
  %3430 = vmatprep.subr.mxu0 0.0
  %3431 = vmatpush1.xpose.msra.mxu0 0.0
  %3432 = vmatprep.subr.mxu0 0.0
  %3433 = vmatpush1.xpose.msra.mxu0 0.0
  %3434 = vmatprep.subr.mxu0 0.0
  %3435 = vmatpush1.xpose.msra.mxu0 0.0
  %3436 = vmatprep.subr.mxu0 0.0
  %3437 = vmatpush1.xpose.msra.mxu0 0.0
  %3438 = vmatprep.subr.mxu0 0.0
  %3439 = vmatpush1.xpose.msra.mxu0 0.0
  %3440 = vmatprep.subr.mxu0 0.0
  %3441 = vmatpush1.xpose.msra.mxu0 0.0
  %3442 = vmatprep.subr.mxu0 0.0
  %3443 = vmatpush1.xpose.msra.mxu0 0.0
  %3444 = vmatprep.subr.mxu0 0.0
  %3445 = vmatpush1.xpose.msra.mxu0 0.0
  %3446 = vmatprep.subr.mxu0 0.0
  %3447 = vmatpush1.xpose.msra.mxu0 0.0
  %3448 = vmatprep.subr.mxu0 0.0
  %3449 = vmatpush1.xpose.msra.mxu0 0.0
  %3450 = vmatprep.subr.mxu0 0.0
  %3451 = vmatpush1.xpose.msra.mxu0 0.0
  %3452 = vmatprep.subr.mxu0 0.0
  %3453 = vmatpush1.xpose.msra.mxu0 0.0
  %3454 = vmatprep.subr.mxu0 0.0
  %3455 = vmatpush1.xpose.msra.mxu0 0.0
  %3456 = vmatprep.subr.mxu0 0.0
  %3457 = vmatpush1.xpose.msra.mxu0 0.0
  %3458 = vmatprep.subr.mxu0 0.0
  %3459 = vmatpush1.xpose.msra.mxu0 0.0
  %3460 = vmatprep.subr.mxu0 0.0
  %3461 = vmatpush1.xpose.msra.mxu0 0.0
  %3462 = vmatprep.subr.mxu0 0.0
  %3463 = vmatpush1.xpose.msra.mxu0 0.0
  %3464 = vmatprep.subr.mxu0 0.0
  %3465 = vmatpush1.xpose.msra.mxu0 0.0
  %3466 = vmatprep.subr.mxu0 0.0
  %3467 = vmatpush1.xpose.msra.mxu0 0.0
  %3468 = vmatprep.subr.mxu0 0.0
  %3469 = vmatpush1.xpose.msra.mxu0 0.0
  %3470 = vmatprep.subr.mxu0 0.0
  %3471 = vmatpush1.xpose.msra.mxu0 0.0
  %3472 = vmatprep.subr.mxu0 0.0
  %3473 = vmatpush1.xpose.msra.mxu0 0.0
  %3474 = vmatprep.subr.mxu0 0.0
  %3475 = vmatpush1.xpose.msra.mxu0 0.0
  %3476 = vmatprep.subr.mxu0 0.0
  %3477 = vmatpush1.xpose.msra.mxu0 0.0
  %3478 = vmatprep.subr.mxu0 0.0
  %3479 = vmatpush1.xpose.msra.mxu0 0.0
  %3480 = vmatprep.subr.mxu0 0.0
  %3481 = vmatpush1.xpose.msra.mxu0 0.0
  %3482 = vmatprep.mubr.f32.mxu0 0.0
  %3483 = vmatmul.mubr.f32.gmra.mrb[0].mxu0 %v3414
  %v3484 = vpop.f32.mrb[0].mxu0
  %v3485 = vadd.f32 %v2997, %v3484
  %v3486 = vpop.f32.mrb[0].mxu0
  %3487 = vdwg.mxu0
  %3489 = vrot.lane.b32.xlu0 %v2982, 120
  %v3490 = vpop.permute.xlu0 %3489
  %3492 = vrot.lane.b32.xlu0 %v2966, 88
  %v3493 = vpop.permute.xlu0 %3492
  %v3494 = vsel %vm306, %v3490, 0
  %v3496 = vsel %vm306, %v3493, 0
  %3498 = vmatprep.subr.mxu0 0.0
  %3499 = vmatpush1.xpose.msra.mxu0 %v3496
  %3500 = vmatprep.subr.mxu0 0.0
  %3501 = vmatpush1.xpose.msra.mxu0 0.0
  %3502 = vmatprep.subr.mxu0 0.0
  %3503 = vmatpush1.xpose.msra.mxu0 0.0
  %3504 = vmatprep.subr.mxu0 0.0
  %3505 = vmatpush1.xpose.msra.mxu0 0.0
  %3506 = vmatprep.subr.mxu0 0.0
  %3507 = vmatpush1.xpose.msra.mxu0 0.0
  %3508 = vmatprep.subr.mxu0 0.0
  %3509 = vmatpush1.xpose.msra.mxu0 0.0
  %3510 = vmatprep.subr.mxu0 0.0
  %3511 = vmatpush1.xpose.msra.mxu0 0.0
  %3512 = vmatprep.subr.mxu0 0.0
  %3513 = vmatpush1.xpose.msra.mxu0 0.0
  %3514 = vmatprep.subr.mxu0 0.0
  %3515 = vmatpush1.xpose.msra.mxu0 0.0
  %3516 = vmatprep.subr.mxu0 0.0
  %3517 = vmatpush1.xpose.msra.mxu0 0.0
  %3518 = vmatprep.subr.mxu0 0.0
  %3519 = vmatpush1.xpose.msra.mxu0 0.0
  %3520 = vmatprep.subr.mxu0 0.0
  %3521 = vmatpush1.xpose.msra.mxu0 0.0
  %3522 = vmatprep.subr.mxu0 0.0
  %3523 = vmatpush1.xpose.msra.mxu0 0.0
  %3524 = vmatprep.subr.mxu0 0.0
  %3525 = vmatpush1.xpose.msra.mxu0 0.0
  %3526 = vmatprep.subr.mxu0 0.0
  %3527 = vmatpush1.xpose.msra.mxu0 0.0
  %3528 = vmatprep.subr.mxu0 0.0
  %3529 = vmatpush1.xpose.msra.mxu0 0.0
  %3530 = vmatprep.subr.mxu0 0.0
  %3531 = vmatpush1.xpose.msra.mxu0 0.0
  %3532 = vmatprep.subr.mxu0 0.0
  %3533 = vmatpush1.xpose.msra.mxu0 0.0
  %3534 = vmatprep.subr.mxu0 0.0
  %3535 = vmatpush1.xpose.msra.mxu0 0.0
  %3536 = vmatprep.subr.mxu0 0.0
  %3537 = vmatpush1.xpose.msra.mxu0 0.0
  %3538 = vmatprep.subr.mxu0 0.0
  %3539 = vmatpush1.xpose.msra.mxu0 0.0
  %3540 = vmatprep.subr.mxu0 0.0
  %3541 = vmatpush1.xpose.msra.mxu0 0.0
  %3542 = vmatprep.subr.mxu0 0.0
  %3543 = vmatpush1.xpose.msra.mxu0 0.0
  %3544 = vmatprep.subr.mxu0 0.0
  %3545 = vmatpush1.xpose.msra.mxu0 0.0
  %3546 = vmatprep.subr.mxu0 0.0
  %3547 = vmatpush1.xpose.msra.mxu0 0.0
  %3548 = vmatprep.subr.mxu0 0.0
  %3549 = vmatpush1.xpose.msra.mxu0 0.0
  %3550 = vmatprep.subr.mxu0 0.0
  %3551 = vmatpush1.xpose.msra.mxu0 0.0
  %3552 = vmatprep.subr.mxu0 0.0
  %3553 = vmatpush1.xpose.msra.mxu0 0.0
  %3554 = vmatprep.subr.mxu0 0.0
  %3555 = vmatpush1.xpose.msra.mxu0 0.0
  %3556 = vmatprep.subr.mxu0 0.0
  %3557 = vmatpush1.xpose.msra.mxu0 0.0
  %3558 = vmatprep.subr.mxu0 0.0
  %3559 = vmatpush1.xpose.msra.mxu0 0.0
  %3560 = vmatprep.subr.mxu0 0.0
  %3561 = vmatpush1.xpose.msra.mxu0 0.0
  %3562 = vmatprep.mubr.f32.mxu0 0.0
  %3563 = vmatmul.mubr.f32.gmra.mrb[0].mxu0 %v3494
  %v3564 = vpop.f32.mrb[0].mxu0
  %v3565 = vadd.f32 %v2998, %v3564
  %v3566 = vpop.f32.mrb[0].mxu0
  %3567 = vdwg.mxu0
  %3569 = vrot.lane.b32.xlu0 %v2983, 120
  %v3570 = vpop.permute.xlu0 %3569
  %3572 = vrot.lane.b32.xlu0 %v2967, 88
  %v3573 = vpop.permute.xlu0 %3572
  %v3574 = vsel %vm306, %v3570, 0
  %v3576 = vsel %vm306, %v3573, 0
  %3578 = vmatprep.subr.mxu0 0.0
  %3579 = vmatpush1.xpose.msra.mxu0 %v3576
  %3580 = vmatprep.subr.mxu0 0.0
  %3581 = vmatpush1.xpose.msra.mxu0 0.0
  %3582 = vmatprep.subr.mxu0 0.0
  %3583 = vmatpush1.xpose.msra.mxu0 0.0
  %3584 = vmatprep.subr.mxu0 0.0
  %3585 = vmatpush1.xpose.msra.mxu0 0.0
  %3586 = vmatprep.subr.mxu0 0.0
  %3587 = vmatpush1.xpose.msra.mxu0 0.0
  %3588 = vmatprep.subr.mxu0 0.0
  %3589 = vmatpush1.xpose.msra.mxu0 0.0
  %3590 = vmatprep.subr.mxu0 0.0
  %3591 = vmatpush1.xpose.msra.mxu0 0.0
  %3592 = vmatprep.subr.mxu0 0.0
  %3593 = vmatpush1.xpose.msra.mxu0 0.0
  %3594 = vmatprep.subr.mxu0 0.0
  %3595 = vmatpush1.xpose.msra.mxu0 0.0
  %3596 = vmatprep.subr.mxu0 0.0
  %3597 = vmatpush1.xpose.msra.mxu0 0.0
  %3598 = vmatprep.subr.mxu0 0.0
  %3599 = vmatpush1.xpose.msra.mxu0 0.0
  %3600 = vmatprep.subr.mxu0 0.0
  %3601 = vmatpush1.xpose.msra.mxu0 0.0
  %3602 = vmatprep.subr.mxu0 0.0
  %3603 = vmatpush1.xpose.msra.mxu0 0.0
  %3604 = vmatprep.subr.mxu0 0.0
  %3605 = vmatpush1.xpose.msra.mxu0 0.0
  %3606 = vmatprep.subr.mxu0 0.0
  %3607 = vmatpush1.xpose.msra.mxu0 0.0
  %3608 = vmatprep.subr.mxu0 0.0
  %3609 = vmatpush1.xpose.msra.mxu0 0.0
  %3610 = vmatprep.subr.mxu0 0.0
  %3611 = vmatpush1.xpose.msra.mxu0 0.0
  %3612 = vmatprep.subr.mxu0 0.0
  %3613 = vmatpush1.xpose.msra.mxu0 0.0
  %3614 = vmatprep.subr.mxu0 0.0
  %3615 = vmatpush1.xpose.msra.mxu0 0.0
  %3616 = vmatprep.subr.mxu0 0.0
  %3617 = vmatpush1.xpose.msra.mxu0 0.0
  %3618 = vmatprep.subr.mxu0 0.0
  %3619 = vmatpush1.xpose.msra.mxu0 0.0
  %3620 = vmatprep.subr.mxu0 0.0
  %3621 = vmatpush1.xpose.msra.mxu0 0.0
  %3622 = vmatprep.subr.mxu0 0.0
  %3623 = vmatpush1.xpose.msra.mxu0 0.0
  %3624 = vmatprep.subr.mxu0 0.0
  %3625 = vmatpush1.xpose.msra.mxu0 0.0
  %3626 = vmatprep.subr.mxu0 0.0
  %3627 = vmatpush1.xpose.msra.mxu0 0.0
  %3628 = vmatprep.subr.mxu0 0.0
  %3629 = vmatpush1.xpose.msra.mxu0 0.0
  %3630 = vmatprep.subr.mxu0 0.0
  %3631 = vmatpush1.xpose.msra.mxu0 0.0
  %3632 = vmatprep.subr.mxu0 0.0
  %3633 = vmatpush1.xpose.msra.mxu0 0.0
  %3634 = vmatprep.subr.mxu0 0.0
  %3635 = vmatpush1.xpose.msra.mxu0 0.0
  %3636 = vmatprep.subr.mxu0 0.0
  %3637 = vmatpush1.xpose.msra.mxu0 0.0
  %3638 = vmatprep.subr.mxu0 0.0
  %3639 = vmatpush1.xpose.msra.mxu0 0.0
  %3640 = vmatprep.subr.mxu0 0.0
  %3641 = vmatpush1.xpose.msra.mxu0 0.0
  %3642 = vmatprep.mubr.f32.mxu0 0.0
  %3643 = vmatmul.mubr.f32.gmra.mrb[0].mxu0 %v3574
  %v3644 = vpop.f32.mrb[0].mxu0
  %v3645 = vadd.f32 %v2999, %v3644
  %v3646 = vpop.f32.mrb[0].mxu0
  %3647 = vdwg.mxu0
  %3649 = vrot.lane.b32.xlu0 %v2984, 120
  %v3650 = vpop.permute.xlu0 %3649
  %3652 = vrot.lane.b32.xlu0 %v2968, 88
  %v3653 = vpop.permute.xlu0 %3652
  %v3654 = vsel %vm306, %v3650, 0
  %v3656 = vsel %vm306, %v3653, 0
  %3658 = vmatprep.subr.mxu0 0.0
  %3659 = vmatpush1.xpose.msra.mxu0 %v3656
  %3660 = vmatprep.subr.mxu0 0.0
  %3661 = vmatpush1.xpose.msra.mxu0 0.0
  %3662 = vmatprep.subr.mxu0 0.0
  %3663 = vmatpush1.xpose.msra.mxu0 0.0
  %3664 = vmatprep.subr.mxu0 0.0
  %3665 = vmatpush1.xpose.msra.mxu0 0.0
  %3666 = vmatprep.subr.mxu0 0.0
  %3667 = vmatpush1.xpose.msra.mxu0 0.0
  %3668 = vmatprep.subr.mxu0 0.0
  %3669 = vmatpush1.xpose.msra.mxu0 0.0
  %3670 = vmatprep.subr.mxu0 0.0
  %3671 = vmatpush1.xpose.msra.mxu0 0.0
  %3672 = vmatprep.subr.mxu0 0.0
  %3673 = vmatpush1.xpose.msra.mxu0 0.0
  %3674 = vmatprep.subr.mxu0 0.0
  %3675 = vmatpush1.xpose.msra.mxu0 0.0
  %3676 = vmatprep.subr.mxu0 0.0
  %3677 = vmatpush1.xpose.msra.mxu0 0.0
  %3678 = vmatprep.subr.mxu0 0.0
  %3679 = vmatpush1.xpose.msra.mxu0 0.0
  %3680 = vmatprep.subr.mxu0 0.0
  %3681 = vmatpush1.xpose.msra.mxu0 0.0
  %3682 = vmatprep.subr.mxu0 0.0
  %3683 = vmatpush1.xpose.msra.mxu0 0.0
  %3684 = vmatprep.subr.mxu0 0.0
  %3685 = vmatpush1.xpose.msra.mxu0 0.0
  %3686 = vmatprep.subr.mxu0 0.0
  %3687 = vmatpush1.xpose.msra.mxu0 0.0
  %3688 = vmatprep.subr.mxu0 0.0
  %3689 = vmatpush1.xpose.msra.mxu0 0.0
  %3690 = vmatprep.subr.mxu0 0.0
  %3691 = vmatpush1.xpose.msra.mxu0 0.0
  %3692 = vmatprep.subr.mxu0 0.0
  %3693 = vmatpush1.xpose.msra.mxu0 0.0
  %3694 = vmatprep.subr.mxu0 0.0
  %3695 = vmatpush1.xpose.msra.mxu0 0.0
  %3696 = vmatprep.subr.mxu0 0.0
  %3697 = vmatpush1.xpose.msra.mxu0 0.0
  %3698 = vmatprep.subr.mxu0 0.0
  %3699 = vmatpush1.xpose.msra.mxu0 0.0
  %3700 = vmatprep.subr.mxu0 0.0
  %3701 = vmatpush1.xpose.msra.mxu0 0.0
  %3702 = vmatprep.subr.mxu0 0.0
  %3703 = vmatpush1.xpose.msra.mxu0 0.0
  %3704 = vmatprep.subr.mxu0 0.0
  %3705 = vmatpush1.xpose.msra.mxu0 0.0
  %3706 = vmatprep.subr.mxu0 0.0
  %3707 = vmatpush1.xpose.msra.mxu0 0.0
  %3708 = vmatprep.subr.mxu0 0.0
  %3709 = vmatpush1.xpose.msra.mxu0 0.0
  %3710 = vmatprep.subr.mxu0 0.0
  %3711 = vmatpush1.xpose.msra.mxu0 0.0
  %3712 = vmatprep.subr.mxu0 0.0
  %3713 = vmatpush1.xpose.msra.mxu0 0.0
  %3714 = vmatprep.subr.mxu0 0.0
  %3715 = vmatpush1.xpose.msra.mxu0 0.0
  %3716 = vmatprep.subr.mxu0 0.0
  %3717 = vmatpush1.xpose.msra.mxu0 0.0
  %3718 = vmatprep.subr.mxu0 0.0
  %3719 = vmatpush1.xpose.msra.mxu0 0.0
  %3720 = vmatprep.subr.mxu0 0.0
  %3721 = vmatpush1.xpose.msra.mxu0 0.0
  %3722 = vmatprep.mubr.f32.mxu0 0.0
  %3723 = vmatmul.mubr.f32.gmra.mrb[0].mxu0 %v3654
  %v3724 = vpop.f32.mrb[0].mxu0
  %v3725 = vadd.f32 %v3000, %v3724
  %v3726 = vpop.f32.mrb[0].mxu0
  %3727 = vdwg.mxu0
  %3729 = vrot.lane.b32.xlu0 %v2985, 120
  %v3730 = vpop.permute.xlu0 %3729
  %3732 = vrot.lane.b32.xlu0 %v2969, 88
  %v3733 = vpop.permute.xlu0 %3732
  %v3734 = vsel %vm306, %v3730, 0
  %v3736 = vsel %vm306, %v3733, 0
  %3738 = vmatprep.subr.mxu0 0.0
  %3739 = vmatpush1.xpose.msra.mxu0 %v3736
  %3740 = vmatprep.subr.mxu0 0.0
  %3741 = vmatpush1.xpose.msra.mxu0 0.0
  %3742 = vmatprep.subr.mxu0 0.0
  %3743 = vmatpush1.xpose.msra.mxu0 0.0
  %3744 = vmatprep.subr.mxu0 0.0
  %3745 = vmatpush1.xpose.msra.mxu0 0.0
  %3746 = vmatprep.subr.mxu0 0.0
  %3747 = vmatpush1.xpose.msra.mxu0 0.0
  %3748 = vmatprep.subr.mxu0 0.0
  %3749 = vmatpush1.xpose.msra.mxu0 0.0
  %3750 = vmatprep.subr.mxu0 0.0
  %3751 = vmatpush1.xpose.msra.mxu0 0.0
  %3752 = vmatprep.subr.mxu0 0.0
  %3753 = vmatpush1.xpose.msra.mxu0 0.0
  %3754 = vmatprep.subr.mxu0 0.0
  %3755 = vmatpush1.xpose.msra.mxu0 0.0
  %3756 = vmatprep.subr.mxu0 0.0
  %3757 = vmatpush1.xpose.msra.mxu0 0.0
  %3758 = vmatprep.subr.mxu0 0.0
  %3759 = vmatpush1.xpose.msra.mxu0 0.0
  %3760 = vmatprep.subr.mxu0 0.0
  %3761 = vmatpush1.xpose.msra.mxu0 0.0
  %3762 = vmatprep.subr.mxu0 0.0
  %3763 = vmatpush1.xpose.msra.mxu0 0.0
  %3764 = vmatprep.subr.mxu0 0.0
  %3765 = vmatpush1.xpose.msra.mxu0 0.0
  %3766 = vmatprep.subr.mxu0 0.0
  %3767 = vmatpush1.xpose.msra.mxu0 0.0
  %3768 = vmatprep.subr.mxu0 0.0
  %3769 = vmatpush1.xpose.msra.mxu0 0.0
  %3770 = vmatprep.subr.mxu0 0.0
  %3771 = vmatpush1.xpose.msra.mxu0 0.0
  %3772 = vmatprep.subr.mxu0 0.0
  %3773 = vmatpush1.xpose.msra.mxu0 0.0
  %3774 = vmatprep.subr.mxu0 0.0
  %3775 = vmatpush1.xpose.msra.mxu0 0.0
  %3776 = vmatprep.subr.mxu0 0.0
  %3777 = vmatpush1.xpose.msra.mxu0 0.0
  %3778 = vmatprep.subr.mxu0 0.0
  %3779 = vmatpush1.xpose.msra.mxu0 0.0
  %3780 = vmatprep.subr.mxu0 0.0
  %3781 = vmatpush1.xpose.msra.mxu0 0.0
  %3782 = vmatprep.subr.mxu0 0.0
  %3783 = vmatpush1.xpose.msra.mxu0 0.0
  %3784 = vmatprep.subr.mxu0 0.0
  %3785 = vmatpush1.xpose.msra.mxu0 0.0
  %3786 = vmatprep.subr.mxu0 0.0
  %3787 = vmatpush1.xpose.msra.mxu0 0.0
  %3788 = vmatprep.subr.mxu0 0.0
  %3789 = vmatpush1.xpose.msra.mxu0 0.0
  %3790 = vmatprep.subr.mxu0 0.0
  %3791 = vmatpush1.xpose.msra.mxu0 0.0
  %3792 = vmatprep.subr.mxu0 0.0
  %3793 = vmatpush1.xpose.msra.mxu0 0.0
  %3794 = vmatprep.subr.mxu0 0.0
  %3795 = vmatpush1.xpose.msra.mxu0 0.0
  %3796 = vmatprep.subr.mxu0 0.0
  %3797 = vmatpush1.xpose.msra.mxu0 0.0
  %3798 = vmatprep.subr.mxu0 0.0
  %3799 = vmatpush1.xpose.msra.mxu0 0.0
  %3800 = vmatprep.subr.mxu0 0.0
  %3801 = vmatpush1.xpose.msra.mxu0 0.0
  %3802 = vmatprep.mubr.f32.mxu0 0.0
  %3803 = vmatmul.mubr.f32.gmra.mrb[0].mxu0 %v3734
  %v3804 = vpop.f32.mrb[0].mxu0
  %v3805 = vadd.f32 %v3001, %v3804
  %v3806 = vpop.f32.mrb[0].mxu0
  %3807 = vdwg.mxu0
  %3809 = vrot.lane.b32.xlu0 %v2986, 120
  %v3810 = vpop.permute.xlu0 %3809
  %3812 = vrot.lane.b32.xlu0 %v2970, 88
  %v3813 = vpop.permute.xlu0 %3812
  %v3814 = vsel %vm306, %v3810, 0
  %v3816 = vsel %vm306, %v3813, 0
  %3818 = vmatprep.subr.mxu0 0.0
  %3819 = vmatpush1.xpose.msra.mxu0 %v3816
  %3820 = vmatprep.subr.mxu0 0.0
  %3821 = vmatpush1.xpose.msra.mxu0 0.0
  %3822 = vmatprep.subr.mxu0 0.0
  %3823 = vmatpush1.xpose.msra.mxu0 0.0
  %3824 = vmatprep.subr.mxu0 0.0
  %3825 = vmatpush1.xpose.msra.mxu0 0.0
  %3826 = vmatprep.subr.mxu0 0.0
  %3827 = vmatpush1.xpose.msra.mxu0 0.0
  %3828 = vmatprep.subr.mxu0 0.0
  %3829 = vmatpush1.xpose.msra.mxu0 0.0
  %3830 = vmatprep.subr.mxu0 0.0
  %3831 = vmatpush1.xpose.msra.mxu0 0.0
  %3832 = vmatprep.subr.mxu0 0.0
  %3833 = vmatpush1.xpose.msra.mxu0 0.0
  %3834 = vmatprep.subr.mxu0 0.0
  %3835 = vmatpush1.xpose.msra.mxu0 0.0
  %3836 = vmatprep.subr.mxu0 0.0
  %3837 = vmatpush1.xpose.msra.mxu0 0.0
  %3838 = vmatprep.subr.mxu0 0.0
  %3839 = vmatpush1.xpose.msra.mxu0 0.0
  %3840 = vmatprep.subr.mxu0 0.0
  %3841 = vmatpush1.xpose.msra.mxu0 0.0
  %3842 = vmatprep.subr.mxu0 0.0
  %3843 = vmatpush1.xpose.msra.mxu0 0.0
  %3844 = vmatprep.subr.mxu0 0.0
  %3845 = vmatpush1.xpose.msra.mxu0 0.0
  %3846 = vmatprep.subr.mxu0 0.0
  %3847 = vmatpush1.xpose.msra.mxu0 0.0
  %3848 = vmatprep.subr.mxu0 0.0
  %3849 = vmatpush1.xpose.msra.mxu0 0.0
  %3850 = vmatprep.subr.mxu0 0.0
  %3851 = vmatpush1.xpose.msra.mxu0 0.0
  %3852 = vmatprep.subr.mxu0 0.0
  %3853 = vmatpush1.xpose.msra.mxu0 0.0
  %3854 = vmatprep.subr.mxu0 0.0
  %3855 = vmatpush1.xpose.msra.mxu0 0.0
  %3856 = vmatprep.subr.mxu0 0.0
  %3857 = vmatpush1.xpose.msra.mxu0 0.0
  %3858 = vmatprep.subr.mxu0 0.0
  %3859 = vmatpush1.xpose.msra.mxu0 0.0
  %3860 = vmatprep.subr.mxu0 0.0
  %3861 = vmatpush1.xpose.msra.mxu0 0.0
  %3862 = vmatprep.subr.mxu0 0.0
  %3863 = vmatpush1.xpose.msra.mxu0 0.0
  %3864 = vmatprep.subr.mxu0 0.0
  %3865 = vmatpush1.xpose.msra.mxu0 0.0
  %3866 = vmatprep.subr.mxu0 0.0
  %3867 = vmatpush1.xpose.msra.mxu0 0.0
  %3868 = vmatprep.subr.mxu0 0.0
  %3869 = vmatpush1.xpose.msra.mxu0 0.0
  %3870 = vmatprep.subr.mxu0 0.0
  %3871 = vmatpush1.xpose.msra.mxu0 0.0
  %3872 = vmatprep.subr.mxu0 0.0
  %3873 = vmatpush1.xpose.msra.mxu0 0.0
  %3874 = vmatprep.subr.mxu0 0.0
  %3875 = vmatpush1.xpose.msra.mxu0 0.0
  %3876 = vmatprep.subr.mxu0 0.0
  %3877 = vmatpush1.xpose.msra.mxu0 0.0
  %3878 = vmatprep.subr.mxu0 0.0
  %3879 = vmatpush1.xpose.msra.mxu0 0.0
  %3880 = vmatprep.subr.mxu0 0.0
  %3881 = vmatpush1.xpose.msra.mxu0 0.0
  %3882 = vmatprep.mubr.f32.mxu0 0.0
  %3883 = vmatmul.mubr.f32.gmra.mrb[0].mxu0 %v3814
  %v3884 = vpop.f32.mrb[0].mxu0
  %v3885 = vadd.f32 %v3002, %v3884
  %v3886 = vpop.f32.mrb[0].mxu0
  %3887 = vdwg.mxu0
  %3889 = vrot.lane.b32.xlu0 %v2987, 120
  %v3890 = vpop.permute.xlu0 %3889
  %3892 = vrot.lane.b32.xlu0 %v2971, 88
  %v3893 = vpop.permute.xlu0 %3892
  %v3894 = vsel %vm306, %v3890, 0
  %v3896 = vsel %vm306, %v3893, 0
  %3898 = vmatprep.subr.mxu0 0.0
  %3899 = vmatpush1.xpose.msra.mxu0 %v3896
  %3900 = vmatprep.subr.mxu0 0.0
  %3901 = vmatpush1.xpose.msra.mxu0 0.0
  %3902 = vmatprep.subr.mxu0 0.0
  %3903 = vmatpush1.xpose.msra.mxu0 0.0
  %3904 = vmatprep.subr.mxu0 0.0
  %3905 = vmatpush1.xpose.msra.mxu0 0.0
  %3906 = vmatprep.subr.mxu0 0.0
  %3907 = vmatpush1.xpose.msra.mxu0 0.0
  %3908 = vmatprep.subr.mxu0 0.0
  %3909 = vmatpush1.xpose.msra.mxu0 0.0
  %3910 = vmatprep.subr.mxu0 0.0
  %3911 = vmatpush1.xpose.msra.mxu0 0.0
  %3912 = vmatprep.subr.mxu0 0.0
  %3913 = vmatpush1.xpose.msra.mxu0 0.0
  %3914 = vmatprep.subr.mxu0 0.0
  %3915 = vmatpush1.xpose.msra.mxu0 0.0
  %3916 = vmatprep.subr.mxu0 0.0
  %3917 = vmatpush1.xpose.msra.mxu0 0.0
  %3918 = vmatprep.subr.mxu0 0.0
  %3919 = vmatpush1.xpose.msra.mxu0 0.0
  %3920 = vmatprep.subr.mxu0 0.0
  %3921 = vmatpush1.xpose.msra.mxu0 0.0
  %3922 = vmatprep.subr.mxu0 0.0
  %3923 = vmatpush1.xpose.msra.mxu0 0.0
  %3924 = vmatprep.subr.mxu0 0.0
  %3925 = vmatpush1.xpose.msra.mxu0 0.0
  %3926 = vmatprep.subr.mxu0 0.0
  %3927 = vmatpush1.xpose.msra.mxu0 0.0
  %3928 = vmatprep.subr.mxu0 0.0
  %3929 = vmatpush1.xpose.msra.mxu0 0.0
  %3930 = vmatprep.subr.mxu0 0.0
  %3931 = vmatpush1.xpose.msra.mxu0 0.0
  %3932 = vmatprep.subr.mxu0 0.0
  %3933 = vmatpush1.xpose.msra.mxu0 0.0
  %3934 = vmatprep.subr.mxu0 0.0
  %3935 = vmatpush1.xpose.msra.mxu0 0.0
  %3936 = vmatprep.subr.mxu0 0.0
  %3937 = vmatpush1.xpose.msra.mxu0 0.0
  %3938 = vmatprep.subr.mxu0 0.0
  %3939 = vmatpush1.xpose.msra.mxu0 0.0
  %3940 = vmatprep.subr.mxu0 0.0
  %3941 = vmatpush1.xpose.msra.mxu0 0.0
  %3942 = vmatprep.subr.mxu0 0.0
  %3943 = vmatpush1.xpose.msra.mxu0 0.0
  %3944 = vmatprep.subr.mxu0 0.0
  %3945 = vmatpush1.xpose.msra.mxu0 0.0
  %3946 = vmatprep.subr.mxu0 0.0
  %3947 = vmatpush1.xpose.msra.mxu0 0.0
  %3948 = vmatprep.subr.mxu0 0.0
  %3949 = vmatpush1.xpose.msra.mxu0 0.0
  %3950 = vmatprep.subr.mxu0 0.0
  %3951 = vmatpush1.xpose.msra.mxu0 0.0
  %3952 = vmatprep.subr.mxu0 0.0
  %3953 = vmatpush1.xpose.msra.mxu0 0.0
  %3954 = vmatprep.subr.mxu0 0.0
  %3955 = vmatpush1.xpose.msra.mxu0 0.0
  %3956 = vmatprep.subr.mxu0 0.0
  %3957 = vmatpush1.xpose.msra.mxu0 0.0
  %3958 = vmatprep.subr.mxu0 0.0
  %3959 = vmatpush1.xpose.msra.mxu0 0.0
  %3960 = vmatprep.subr.mxu0 0.0
  %3961 = vmatpush1.xpose.msra.mxu0 0.0
  %3962 = vmatprep.mubr.f32.mxu0 0.0
  %3963 = vmatmul.mubr.f32.gmra.mrb[0].mxu0 %v3894
  %v3964 = vpop.f32.mrb[0].mxu0
  %v3965 = vadd.f32 %v3003, %v3964
  %v3966 = vpop.f32.mrb[0].mxu0
  %3967 = vdwg.mxu0
  %3969 = vrot.lane.b32.xlu0 %v2988, 120
  %v3970 = vpop.permute.xlu0 %3969
  %3972 = vrot.lane.b32.xlu0 %v2972, 88
  %v3973 = vpop.permute.xlu0 %3972
  %v3974 = vsel %vm306, %v3970, 0
  %v3976 = vsel %vm306, %v3973, 0
  %3978 = vmatprep.subr.mxu0 0.0
  %3979 = vmatpush1.xpose.msra.mxu0 %v3976
  %3980 = vmatprep.subr.mxu0 0.0
  %3981 = vmatpush1.xpose.msra.mxu0 0.0
  %3982 = vmatprep.subr.mxu0 0.0
  %3983 = vmatpush1.xpose.msra.mxu0 0.0
  %3984 = vmatprep.subr.mxu0 0.0
  %3985 = vmatpush1.xpose.msra.mxu0 0.0
  %3986 = vmatprep.subr.mxu0 0.0
  %3987 = vmatpush1.xpose.msra.mxu0 0.0
  %3988 = vmatprep.subr.mxu0 0.0
  %3989 = vmatpush1.xpose.msra.mxu0 0.0
  %3990 = vmatprep.subr.mxu0 0.0
  %3991 = vmatpush1.xpose.msra.mxu0 0.0
  %3992 = vmatprep.subr.mxu0 0.0
  %3993 = vmatpush1.xpose.msra.mxu0 0.0
  %3994 = vmatprep.subr.mxu0 0.0
  %3995 = vmatpush1.xpose.msra.mxu0 0.0
  %3996 = vmatprep.subr.mxu0 0.0
  %3997 = vmatpush1.xpose.msra.mxu0 0.0
  %3998 = vmatprep.subr.mxu0 0.0
  %3999 = vmatpush1.xpose.msra.mxu0 0.0
  %4000 = vmatprep.subr.mxu0 0.0
  %4001 = vmatpush1.xpose.msra.mxu0 0.0
  %4002 = vmatprep.subr.mxu0 0.0
  %4003 = vmatpush1.xpose.msra.mxu0 0.0
  %4004 = vmatprep.subr.mxu0 0.0
  %4005 = vmatpush1.xpose.msra.mxu0 0.0
  %4006 = vmatprep.subr.mxu0 0.0
  %4007 = vmatpush1.xpose.msra.mxu0 0.0
  %4008 = vmatprep.subr.mxu0 0.0
  %4009 = vmatpush1.xpose.msra.mxu0 0.0
  %4010 = vmatprep.subr.mxu0 0.0
  %4011 = vmatpush1.xpose.msra.mxu0 0.0
  %4012 = vmatprep.subr.mxu0 0.0
  %4013 = vmatpush1.xpose.msra.mxu0 0.0
  %4014 = vmatprep.subr.mxu0 0.0
  %4015 = vmatpush1.xpose.msra.mxu0 0.0
  %4016 = vmatprep.subr.mxu0 0.0
  %4017 = vmatpush1.xpose.msra.mxu0 0.0
  %4018 = vmatprep.subr.mxu0 0.0
  %4019 = vmatpush1.xpose.msra.mxu0 0.0
  %4020 = vmatprep.subr.mxu0 0.0
  %4021 = vmatpush1.xpose.msra.mxu0 0.0
  %4022 = vmatprep.subr.mxu0 0.0
  %4023 = vmatpush1.xpose.msra.mxu0 0.0
  %4024 = vmatprep.subr.mxu0 0.0
  %4025 = vmatpush1.xpose.msra.mxu0 0.0
  %4026 = vmatprep.subr.mxu0 0.0
  %4027 = vmatpush1.xpose.msra.mxu0 0.0
  %4028 = vmatprep.subr.mxu0 0.0
  %4029 = vmatpush1.xpose.msra.mxu0 0.0
  %4030 = vmatprep.subr.mxu0 0.0
  %4031 = vmatpush1.xpose.msra.mxu0 0.0
  %4032 = vmatprep.subr.mxu0 0.0
  %4033 = vmatpush1.xpose.msra.mxu0 0.0
  %4034 = vmatprep.subr.mxu0 0.0
  %4035 = vmatpush1.xpose.msra.mxu0 0.0
  %4036 = vmatprep.subr.mxu0 0.0
  %4037 = vmatpush1.xpose.msra.mxu0 0.0
  %4038 = vmatprep.subr.mxu0 0.0
  %4039 = vmatpush1.xpose.msra.mxu0 0.0
  %4040 = vmatprep.subr.mxu0 0.0
  %4041 = vmatpush1.xpose.msra.mxu0 0.0
  %4042 = vmatprep.mubr.f32.mxu0 0.0
  %4043 = vmatmul.mubr.f32.gmra.mrb[0].mxu0 %v3974
  %v4044 = vpop.f32.mrb[0].mxu0
  %v4045 = vadd.f32 %v3004, %v4044
  %v4046 = vpop.f32.mrb[0].mxu0
  %4047 = vdwg.mxu0
  %4049 = vrot.lane.b32.xlu0 %v2989, 120
  %v4050 = vpop.permute.xlu0 %4049
  %4052 = vrot.lane.b32.xlu0 %v2973, 88
  %v4053 = vpop.permute.xlu0 %4052
  %v4054 = vsel %vm306, %v4050, 0
  %v4056 = vsel %vm306, %v4053, 0
  %4058 = vmatprep.subr.mxu0 0.0
  %4059 = vmatpush1.xpose.msra.mxu0 %v4056
  %4060 = vmatprep.subr.mxu0 0.0
  %4061 = vmatpush1.xpose.msra.mxu0 0.0
  %4062 = vmatprep.subr.mxu0 0.0
  %4063 = vmatpush1.xpose.msra.mxu0 0.0
  %4064 = vmatprep.subr.mxu0 0.0
  %4065 = vmatpush1.xpose.msra.mxu0 0.0
  %4066 = vmatprep.subr.mxu0 0.0
  %4067 = vmatpush1.xpose.msra.mxu0 0.0
  %4068 = vmatprep.subr.mxu0 0.0
  %4069 = vmatpush1.xpose.msra.mxu0 0.0
  %4070 = vmatprep.subr.mxu0 0.0
  %4071 = vmatpush1.xpose.msra.mxu0 0.0
  %4072 = vmatprep.subr.mxu0 0.0
  %4073 = vmatpush1.xpose.msra.mxu0 0.0
  %4074 = vmatprep.subr.mxu0 0.0
  %4075 = vmatpush1.xpose.msra.mxu0 0.0
  %4076 = vmatprep.subr.mxu0 0.0
  %4077 = vmatpush1.xpose.msra.mxu0 0.0
  %4078 = vmatprep.subr.mxu0 0.0
  %4079 = vmatpush1.xpose.msra.mxu0 0.0
  %4080 = vmatprep.subr.mxu0 0.0
  %4081 = vmatpush1.xpose.msra.mxu0 0.0
  %4082 = vmatprep.subr.mxu0 0.0
  %4083 = vmatpush1.xpose.msra.mxu0 0.0
  %4084 = vmatprep.subr.mxu0 0.0
  %4085 = vmatpush1.xpose.msra.mxu0 0.0
  %4086 = vmatprep.subr.mxu0 0.0
  %4087 = vmatpush1.xpose.msra.mxu0 0.0
  %4088 = vmatprep.subr.mxu0 0.0
  %4089 = vmatpush1.xpose.msra.mxu0 0.0
  %4090 = vmatprep.subr.mxu0 0.0
  %4091 = vmatpush1.xpose.msra.mxu0 0.0
  %4092 = vmatprep.subr.mxu0 0.0
  %4093 = vmatpush1.xpose.msra.mxu0 0.0
  %4094 = vmatprep.subr.mxu0 0.0
  %4095 = vmatpush1.xpose.msra.mxu0 0.0
  %4096 = vmatprep.subr.mxu0 0.0
  %4097 = vmatpush1.xpose.msra.mxu0 0.0
  %4098 = vmatprep.subr.mxu0 0.0
  %4099 = vmatpush1.xpose.msra.mxu0 0.0
  %4100 = vmatprep.subr.mxu0 0.0
  %4101 = vmatpush1.xpose.msra.mxu0 0.0
  %4102 = vmatprep.subr.mxu0 0.0
  %4103 = vmatpush1.xpose.msra.mxu0 0.0
  %4104 = vmatprep.subr.mxu0 0.0
  %4105 = vmatpush1.xpose.msra.mxu0 0.0
  %4106 = vmatprep.subr.mxu0 0.0
  %4107 = vmatpush1.xpose.msra.mxu0 0.0
  %4108 = vmatprep.subr.mxu0 0.0
  %4109 = vmatpush1.xpose.msra.mxu0 0.0
  %4110 = vmatprep.subr.mxu0 0.0
  %4111 = vmatpush1.xpose.msra.mxu0 0.0
  %4112 = vmatprep.subr.mxu0 0.0
  %4113 = vmatpush1.xpose.msra.mxu0 0.0
  %4114 = vmatprep.subr.mxu0 0.0
  %4115 = vmatpush1.xpose.msra.mxu0 0.0
  %4116 = vmatprep.subr.mxu0 0.0
  %4117 = vmatpush1.xpose.msra.mxu0 0.0
  %4118 = vmatprep.subr.mxu0 0.0
  %4119 = vmatpush1.xpose.msra.mxu0 0.0
  %4120 = vmatprep.subr.mxu0 0.0
  %4121 = vmatpush1.xpose.msra.mxu0 0.0
  %4122 = vmatprep.mubr.f32.mxu0 0.0
  %4123 = vmatmul.mubr.f32.gmra.mrb[0].mxu0 %v4054
  %v4124 = vpop.f32.mrb[0].mxu0
  %v4125 = vadd.f32 %v3005, %v4124
  %v4126 = vpop.f32.mrb[0].mxu0
  %4127 = vdwg.mxu0
  %4129 = vrot.lane.b32.xlu0 %v2990, 120
  %v4130 = vpop.permute.xlu0 %4129
  %4132 = vrot.lane.b32.xlu0 %v2974, 88
  %v4133 = vpop.permute.xlu0 %4132
  %v4134 = vsel %vm306, %v4130, 0
  %v4136 = vsel %vm306, %v4133, 0
  %4138 = vmatprep.subr.mxu0 0.0
  %4139 = vmatpush1.xpose.msra.mxu0 %v4136
  %4140 = vmatprep.subr.mxu0 0.0
  %4141 = vmatpush1.xpose.msra.mxu0 0.0
  %4142 = vmatprep.subr.mxu0 0.0
  %4143 = vmatpush1.xpose.msra.mxu0 0.0
  %4144 = vmatprep.subr.mxu0 0.0
  %4145 = vmatpush1.xpose.msra.mxu0 0.0
  %4146 = vmatprep.subr.mxu0 0.0
  %4147 = vmatpush1.xpose.msra.mxu0 0.0
  %4148 = vmatprep.subr.mxu0 0.0
  %4149 = vmatpush1.xpose.msra.mxu0 0.0
  %4150 = vmatprep.subr.mxu0 0.0
  %4151 = vmatpush1.xpose.msra.mxu0 0.0
  %4152 = vmatprep.subr.mxu0 0.0
  %4153 = vmatpush1.xpose.msra.mxu0 0.0
  %4154 = vmatprep.subr.mxu0 0.0
  %4155 = vmatpush1.xpose.msra.mxu0 0.0
  %4156 = vmatprep.subr.mxu0 0.0
  %4157 = vmatpush1.xpose.msra.mxu0 0.0
  %4158 = vmatprep.subr.mxu0 0.0
  %4159 = vmatpush1.xpose.msra.mxu0 0.0
  %4160 = vmatprep.subr.mxu0 0.0
  %4161 = vmatpush1.xpose.msra.mxu0 0.0
  %4162 = vmatprep.subr.mxu0 0.0
  %4163 = vmatpush1.xpose.msra.mxu0 0.0
  %4164 = vmatprep.subr.mxu0 0.0
  %4165 = vmatpush1.xpose.msra.mxu0 0.0
  %4166 = vmatprep.subr.mxu0 0.0
  %4167 = vmatpush1.xpose.msra.mxu0 0.0
  %4168 = vmatprep.subr.mxu0 0.0
  %4169 = vmatpush1.xpose.msra.mxu0 0.0
  %4170 = vmatprep.subr.mxu0 0.0
  %4171 = vmatpush1.xpose.msra.mxu0 0.0
  %4172 = vmatprep.subr.mxu0 0.0
  %4173 = vmatpush1.xpose.msra.mxu0 0.0
  %4174 = vmatprep.subr.mxu0 0.0
  %4175 = vmatpush1.xpose.msra.mxu0 0.0
  %4176 = vmatprep.subr.mxu0 0.0
  %4177 = vmatpush1.xpose.msra.mxu0 0.0
  %4178 = vmatprep.subr.mxu0 0.0
  %4179 = vmatpush1.xpose.msra.mxu0 0.0
  %4180 = vmatprep.subr.mxu0 0.0
  %4181 = vmatpush1.xpose.msra.mxu0 0.0
  %4182 = vmatprep.subr.mxu0 0.0
  %4183 = vmatpush1.xpose.msra.mxu0 0.0
  %4184 = vmatprep.subr.mxu0 0.0
  %4185 = vmatpush1.xpose.msra.mxu0 0.0
  %4186 = vmatprep.subr.mxu0 0.0
  %4187 = vmatpush1.xpose.msra.mxu0 0.0
  %4188 = vmatprep.subr.mxu0 0.0
  %4189 = vmatpush1.xpose.msra.mxu0 0.0
  %4190 = vmatprep.subr.mxu0 0.0
  %4191 = vmatpush1.xpose.msra.mxu0 0.0
  %4192 = vmatprep.subr.mxu0 0.0
  %4193 = vmatpush1.xpose.msra.mxu0 0.0
  %4194 = vmatprep.subr.mxu0 0.0
  %4195 = vmatpush1.xpose.msra.mxu0 0.0
  %4196 = vmatprep.subr.mxu0 0.0
  %4197 = vmatpush1.xpose.msra.mxu0 0.0
  %4198 = vmatprep.subr.mxu0 0.0
  %4199 = vmatpush1.xpose.msra.mxu0 0.0
  %4200 = vmatprep.subr.mxu0 0.0
  %4201 = vmatpush1.xpose.msra.mxu0 0.0
  %4202 = vmatprep.mubr.f32.mxu0 0.0
  %4203 = vmatmul.mubr.f32.gmra.mrb[0].mxu0 %v4134
  %v4204 = vpop.f32.mrb[0].mxu0
  %v4205 = vadd.f32 %v3006, %v4204
  %v4206 = vpop.f32.mrb[0].mxu0
  %4207 = vdwg.mxu0
  %4209 = vrot.lane.b32.xlu0 %v2991, 120
  %v4210 = vpop.permute.xlu0 %4209
  %4212 = vrot.lane.b32.xlu0 %v2975, 88
  %v4213 = vpop.permute.xlu0 %4212
  %v4214 = vsel %vm306, %v4210, 0
  %v4216 = vsel %vm306, %v4213, 0
  %4218 = vmatprep.subr.mxu0 0.0
  %4219 = vmatpush1.xpose.msra.mxu0 %v4216
  %4220 = vmatprep.subr.mxu0 0.0
  %4221 = vmatpush1.xpose.msra.mxu0 0.0
  %4222 = vmatprep.subr.mxu0 0.0
  %4223 = vmatpush1.xpose.msra.mxu0 0.0
  %4224 = vmatprep.subr.mxu0 0.0
  %4225 = vmatpush1.xpose.msra.mxu0 0.0
  %4226 = vmatprep.subr.mxu0 0.0
  %4227 = vmatpush1.xpose.msra.mxu0 0.0
  %4228 = vmatprep.subr.mxu0 0.0
  %4229 = vmatpush1.xpose.msra.mxu0 0.0
  %4230 = vmatprep.subr.mxu0 0.0
  %4231 = vmatpush1.xpose.msra.mxu0 0.0
  %4232 = vmatprep.subr.mxu0 0.0
  %4233 = vmatpush1.xpose.msra.mxu0 0.0
  %4234 = vmatprep.subr.mxu0 0.0
  %4235 = vmatpush1.xpose.msra.mxu0 0.0
  %4236 = vmatprep.subr.mxu0 0.0
  %4237 = vmatpush1.xpose.msra.mxu0 0.0
  %4238 = vmatprep.subr.mxu0 0.0
  %4239 = vmatpush1.xpose.msra.mxu0 0.0
  %4240 = vmatprep.subr.mxu0 0.0
  %4241 = vmatpush1.xpose.msra.mxu0 0.0
  %4242 = vmatprep.subr.mxu0 0.0
  %4243 = vmatpush1.xpose.msra.mxu0 0.0
  %4244 = vmatprep.subr.mxu0 0.0
  %4245 = vmatpush1.xpose.msra.mxu0 0.0
  %4246 = vmatprep.subr.mxu0 0.0
  %4247 = vmatpush1.xpose.msra.mxu0 0.0
  %4248 = vmatprep.subr.mxu0 0.0
  %4249 = vmatpush1.xpose.msra.mxu0 0.0
  %4250 = vmatprep.subr.mxu0 0.0
  %4251 = vmatpush1.xpose.msra.mxu0 0.0
  %4252 = vmatprep.subr.mxu0 0.0
  %4253 = vmatpush1.xpose.msra.mxu0 0.0
  %4254 = vmatprep.subr.mxu0 0.0
  %4255 = vmatpush1.xpose.msra.mxu0 0.0
  %4256 = vmatprep.subr.mxu0 0.0
  %4257 = vmatpush1.xpose.msra.mxu0 0.0
  %4258 = vmatprep.subr.mxu0 0.0
  %4259 = vmatpush1.xpose.msra.mxu0 0.0
  %4260 = vmatprep.subr.mxu0 0.0
  %4261 = vmatpush1.xpose.msra.mxu0 0.0
  %4262 = vmatprep.subr.mxu0 0.0
  %4263 = vmatpush1.xpose.msra.mxu0 0.0
  %4264 = vmatprep.subr.mxu0 0.0
  %4265 = vmatpush1.xpose.msra.mxu0 0.0
  %4266 = vmatprep.subr.mxu0 0.0
  %4267 = vmatpush1.xpose.msra.mxu0 0.0
  %4268 = vmatprep.subr.mxu0 0.0
  %4269 = vmatpush1.xpose.msra.mxu0 0.0
  %4270 = vmatprep.subr.mxu0 0.0
  %4271 = vmatpush1.xpose.msra.mxu0 0.0
  %4272 = vmatprep.subr.mxu0 0.0
  %4273 = vmatpush1.xpose.msra.mxu0 0.0
  %4274 = vmatprep.subr.mxu0 0.0
  %4275 = vmatpush1.xpose.msra.mxu0 0.0
  %4276 = vmatprep.subr.mxu0 0.0
  %4277 = vmatpush1.xpose.msra.mxu0 0.0
  %4278 = vmatprep.subr.mxu0 0.0
  %4279 = vmatpush1.xpose.msra.mxu0 0.0
  %4280 = vmatprep.subr.mxu0 0.0
  %4281 = vmatpush1.xpose.msra.mxu0 0.0
  %4282 = vmatprep.mubr.f32.mxu0 0.0
  %4283 = vmatmul.mubr.f32.gmra.mrb[0].mxu0 %v4214
  %v4284 = vpop.f32.mrb[0].mxu0
  %v4285 = vadd.f32 %v3007, %v4284
  %v4286 = vpop.f32.mrb[0].mxu0
  %4287 = vdwg.mxu0
  %v4288 = vsel %vm306, %v3085, -inf
  %4289 = vmax.xlane.f32.xlu0 %v4288
  %v4290 = vpop.xlane.xlu0 %4289
  %v4291 = vsel %vm306, %v3165, -inf
  %4292 = vmax.xlane.f32.xlu0 %v4291
  %v4293 = vpop.xlane.xlu0 %4292
  %v4294 = vsel %vm306, %v3245, -inf
  %4295 = vmax.xlane.f32.xlu0 %v4294
  %v4296 = vpop.xlane.xlu0 %4295
  %v4297 = vsel %vm306, %v3325, -inf
  %4298 = vmax.xlane.f32.xlu0 %v4297
  %v4299 = vpop.xlane.xlu0 %4298
  %v4300 = vsel %vm306, %v3405, -inf
  %4301 = vmax.xlane.f32.xlu0 %v4300
  %v4302 = vpop.xlane.xlu0 %4301
  %v4303 = vsel %vm306, %v3485, -inf
  %4304 = vmax.xlane.f32.xlu0 %v4303
  %v4305 = vpop.xlane.xlu0 %4304
  %v4306 = vsel %vm306, %v3565, -inf
  %4307 = vmax.xlane.f32.xlu0 %v4306
  %v4308 = vpop.xlane.xlu0 %4307
  %v4309 = vsel %vm306, %v3645, -inf
  %4310 = vmax.xlane.f32.xlu0 %v4309
  %v4311 = vpop.xlane.xlu0 %4310
  %v4312 = vsel %vm306, %v3725, -inf
  %4313 = vmax.xlane.f32.xlu0 %v4312
  %v4314 = vpop.xlane.xlu0 %4313
  %v4315 = vsel %vm306, %v3805, -inf
  %4316 = vmax.xlane.f32.xlu0 %v4315
  %v4317 = vpop.xlane.xlu0 %4316
  %v4318 = vsel %vm306, %v3885, -inf
  %4319 = vmax.xlane.f32.xlu0 %v4318
  %v4320 = vpop.xlane.xlu0 %4319
  %v4321 = vsel %vm306, %v3965, -inf
  %4322 = vmax.xlane.f32.xlu0 %v4321
  %v4323 = vpop.xlane.xlu0 %4322
  %v4324 = vsel %vm306, %v4045, -inf
  %4325 = vmax.xlane.f32.xlu0 %v4324
  %v4326 = vpop.xlane.xlu0 %4325
  %v4327 = vsel %vm306, %v4125, -inf
  %4328 = vmax.xlane.f32.xlu0 %v4327
  %v4329 = vpop.xlane.xlu0 %4328
  %v4330 = vsel %vm306, %v4205, -inf
  %4331 = vmax.xlane.f32.xlu0 %v4330
  %v4332 = vpop.xlane.xlu0 %4331
  %v4333 = vsel %vm306, %v4285, -inf
  %4334 = vmax.xlane.f32.xlu0 %v4333
  %v4335 = vpop.xlane.xlu0 %4334
  %v4336 = vsub.f32 %v3085, %v4290
  %v4337 = vsub.f32 %v3165, %v4293
  %v4338 = vsub.f32 %v3245, %v4296
  %v4339 = vsub.f32 %v3325, %v4299
  %v4340 = vsub.f32 %v3405, %v4302
  %v4341 = vsub.f32 %v3485, %v4305
  %v4342 = vsub.f32 %v3565, %v4308
  %v4343 = vsub.f32 %v3645, %v4311
  %v4344 = vsub.f32 %v3725, %v4314
  %v4345 = vsub.f32 %v3805, %v4317
  %v4346 = vsub.f32 %v3885, %v4320
  %v4347 = vsub.f32 %v3965, %v4323
  %v4348 = vsub.f32 %v4045, %v4326
  %v4349 = vsub.f32 %v4125, %v4329
  %v4350 = vsub.f32 %v4205, %v4332
  %v4351 = vsub.f32 %v4285, %v4335
  %v4352 = vmul.f32 %v4336, 1.442695
  %v4353 = vpow.pop %v4352
  %v4354 = vmul.f32 %v4337, 1.442695
  %v4355 = vpow.pop %v4354
  %v4356 = vmul.f32 %v4338, 1.442695
  %v4357 = vpow.pop %v4356
  %v4358 = vmul.f32 %v4339, 1.442695
  %v4359 = vpow.pop %v4358
  %v4360 = vmul.f32 %v4340, 1.442695
  %v4361 = vpow.pop %v4360
  %v4362 = vmul.f32 %v4341, 1.442695
  %v4363 = vpow.pop %v4362
  %v4364 = vmul.f32 %v4342, 1.442695
  %v4365 = vpow.pop %v4364
  %v4366 = vmul.f32 %v4343, 1.442695
  %v4367 = vpow.pop %v4366
  %v4368 = vmul.f32 %v4344, 1.442695
  %v4369 = vpow.pop %v4368
  %v4370 = vmul.f32 %v4345, 1.442695
  %v4371 = vpow.pop %v4370
  %v4372 = vmul.f32 %v4346, 1.442695
  %v4373 = vpow.pop %v4372
  %v4374 = vmul.f32 %v4347, 1.442695
  %v4375 = vpow.pop %v4374
  %v4376 = vmul.f32 %v4348, 1.442695
  %v4377 = vpow.pop %v4376
  %v4378 = vmul.f32 %v4349, 1.442695
  %v4379 = vpow.pop %v4378
  %v4380 = vmul.f32 %v4350, 1.442695
  %v4381 = vpow.pop %v4380
  %v4382 = vmul.f32 %v4351, 1.442695
  %v4383 = vpow.pop %v4382
  %v4384 = vsel %vm306, %v4353, 0.0
  %4385 = vadd.xlane.f32.xlu0 %v4384
  %v4386 = vpop.xlane.xlu0 %4385
  %v4387 = vsel %vm306, %v4355, 0.0
  %4388 = vadd.xlane.f32.xlu0 %v4387
  %v4389 = vpop.xlane.xlu0 %4388
  %v4390 = vsel %vm306, %v4357, 0.0
  %4391 = vadd.xlane.f32.xlu0 %v4390
  %v4392 = vpop.xlane.xlu0 %4391
  %v4393 = vsel %vm306, %v4359, 0.0
  %4394 = vadd.xlane.f32.xlu0 %v4393
  %v4395 = vpop.xlane.xlu0 %4394
  %v4396 = vsel %vm306, %v4361, 0.0
  %4397 = vadd.xlane.f32.xlu0 %v4396
  %v4398 = vpop.xlane.xlu0 %4397
  %v4399 = vsel %vm306, %v4363, 0.0
  %4400 = vadd.xlane.f32.xlu0 %v4399
  %v4401 = vpop.xlane.xlu0 %4400
  %v4402 = vsel %vm306, %v4365, 0.0
  %4403 = vadd.xlane.f32.xlu0 %v4402
  %v4404 = vpop.xlane.xlu0 %4403
  %v4405 = vsel %vm306, %v4367, 0.0
  %4406 = vadd.xlane.f32.xlu0 %v4405
  %v4407 = vpop.xlane.xlu0 %4406
  %v4408 = vsel %vm306, %v4369, 0.0
  %4409 = vadd.xlane.f32.xlu0 %v4408
  %v4410 = vpop.xlane.xlu0 %4409
  %v4411 = vsel %vm306, %v4371, 0.0
  %4412 = vadd.xlane.f32.xlu0 %v4411
  %v4413 = vpop.xlane.xlu0 %4412
  %v4414 = vsel %vm306, %v4373, 0.0
  %4415 = vadd.xlane.f32.xlu0 %v4414
  %v4416 = vpop.xlane.xlu0 %4415
  %v4417 = vsel %vm306, %v4375, 0.0
  %4418 = vadd.xlane.f32.xlu0 %v4417
  %v4419 = vpop.xlane.xlu0 %4418
  %v4420 = vsel %vm306, %v4377, 0.0
  %4421 = vadd.xlane.f32.xlu0 %v4420
  %v4422 = vpop.xlane.xlu0 %4421
  %v4423 = vsel %vm306, %v4379, 0.0
  %4424 = vadd.xlane.f32.xlu0 %v4423
  %v4425 = vpop.xlane.xlu0 %4424
  %v4426 = vsel %vm306, %v4381, 0.0
  %4427 = vadd.xlane.f32.xlu0 %v4426
  %v4428 = vpop.xlane.xlu0 %4427
  %v4429 = vsel %vm306, %v4383, 0.0
  %4430 = vadd.xlane.f32.xlu0 %v4429
  %v4431 = vpop.xlane.xlu0 %4430
  %v4432 = vrcp.pop %v4386
  %v4433 = vrcp.pop %v4389
  %v4434 = vrcp.pop %v4392
  %v4435 = vrcp.pop %v4395
  %v4436 = vrcp.pop %v4398
  %v4437 = vrcp.pop %v4401
  %v4438 = vrcp.pop %v4404
  %v4439 = vrcp.pop %v4407
  %v4440 = vrcp.pop %v4410
  %v4441 = vrcp.pop %v4413
  %v4442 = vrcp.pop %v4416
  %v4443 = vrcp.pop %v4419
  %v4444 = vrcp.pop %v4422
  %v4445 = vrcp.pop %v4425
  %v4446 = vrcp.pop %v4428
  %v4447 = vrcp.pop %v4431
  %v4448 = vmul.f32 %v4353, %v4432
  %v4449 = vmul.f32 %v4355, %v4433
  %v4450 = vmul.f32 %v4357, %v4434
  %v4451 = vmul.f32 %v4359, %v4435
  %v4452 = vmul.f32 %v4361, %v4436
  %v4453 = vmul.f32 %v4363, %v4437
  %v4454 = vmul.f32 %v4365, %v4438
  %v4455 = vmul.f32 %v4367, %v4439
  %v4456 = vmul.f32 %v4369, %v4440
  %v4457 = vmul.f32 %v4371, %v4441
  %v4458 = vmul.f32 %v4373, %v4442
  %v4459 = vmul.f32 %v4375, %v4443
  %v4460 = vmul.f32 %v4377, %v4444
  %v4461 = vmul.f32 %v4379, %v4445
  %v4462 = vmul.f32 %v4381, %v4446
  %v4463 = vmul.f32 %v4383, %v4447
  %4464 = vrot.lane.b32.xlu0 %v2960, 56
  %v4465 = vpop.permute.xlu0 %4464
  %v4468 = vsel %vm306, %v4448, 0
  %4470 = vmatprep.subr.mxu0 0.0
  %4471 = vmatpush1.msra.mxu0 %v4465
  %4472 = vmatprep.subr.mxu0 0.0
  %4473 = vmatpush1.msra.mxu0 0.0
  %4474 = vmatprep.subr.mxu0 0.0
  %4475 = vmatpush1.msra.mxu0 0.0
  %4476 = vmatprep.subr.mxu0 0.0
  %4477 = vmatpush1.msra.mxu0 0.0
  %4478 = vmatprep.subr.mxu0 0.0
  %4479 = vmatpush1.msra.mxu0 0.0
  %4480 = vmatprep.subr.mxu0 0.0
  %4481 = vmatpush1.msra.mxu0 0.0
  %4482 = vmatprep.subr.mxu0 0.0
  %4483 = vmatpush1.msra.mxu0 0.0
  %4484 = vmatprep.subr.mxu0 0.0
  %4485 = vmatpush1.msra.mxu0 0.0
  %4486 = vmatprep.subr.mxu0 0.0
  %4487 = vmatpush1.msra.mxu0 0.0
  %4488 = vmatprep.subr.mxu0 0.0
  %4489 = vmatpush1.msra.mxu0 0.0
  %4490 = vmatprep.subr.mxu0 0.0
  %4491 = vmatpush1.msra.mxu0 0.0
  %4492 = vmatprep.subr.mxu0 0.0
  %4493 = vmatpush1.msra.mxu0 0.0
  %4494 = vmatprep.subr.mxu0 0.0
  %4495 = vmatpush1.msra.mxu0 0.0
  %4496 = vmatprep.subr.mxu0 0.0
  %4497 = vmatpush1.msra.mxu0 0.0
  %4498 = vmatprep.subr.mxu0 0.0
  %4499 = vmatpush1.msra.mxu0 0.0
  %4500 = vmatprep.subr.mxu0 0.0
  %4501 = vmatpush1.msra.mxu0 0.0
  %4502 = vmatprep.subr.mxu0 0.0
  %4503 = vmatpush1.msra.mxu0 0.0
  %4504 = vmatprep.subr.mxu0 0.0
  %4505 = vmatpush1.msra.mxu0 0.0
  %4506 = vmatprep.subr.mxu0 0.0
  %4507 = vmatpush1.msra.mxu0 0.0
  %4508 = vmatprep.subr.mxu0 0.0
  %4509 = vmatpush1.msra.mxu0 0.0
  %4510 = vmatprep.subr.mxu0 0.0
  %4511 = vmatpush1.msra.mxu0 0.0
  %4512 = vmatprep.subr.mxu0 0.0
  %4513 = vmatpush1.msra.mxu0 0.0
  %4514 = vmatprep.subr.mxu0 0.0
  %4515 = vmatpush1.msra.mxu0 0.0
  %4516 = vmatprep.subr.mxu0 0.0
  %4517 = vmatpush1.msra.mxu0 0.0
  %4518 = vmatprep.subr.mxu0 0.0
  %4519 = vmatpush1.msra.mxu0 0.0
  %4520 = vmatprep.subr.mxu0 0.0
  %4521 = vmatpush1.msra.mxu0 0.0
  %4522 = vmatprep.subr.mxu0 0.0
  %4523 = vmatpush1.msra.mxu0 0.0
  %4524 = vmatprep.subr.mxu0 0.0
  %4525 = vmatpush1.msra.mxu0 0.0
  %4526 = vmatprep.subr.mxu0 0.0
  %4527 = vmatpush1.msra.mxu0 0.0
  %4528 = vmatprep.subr.mxu0 0.0
  %4529 = vmatpush1.msra.mxu0 0.0
  %4530 = vmatprep.subr.mxu0 0.0
  %4531 = vmatpush1.msra.mxu0 0.0
  %4532 = vmatprep.subr.mxu0 0.0
  %4533 = vmatpush1.msra.mxu0 0.0
  %4534 = vmatprep.mubr.f32.mxu0 0.0
  %4535 = vmatmul.mubr.f32.gmra.mrb[0].mxu0 %v4468
  %v4536 = vpop.f32.mrb[0].mxu0
  %v4537 = vadd.f32 0.0, %v4536
  %v4538 = vpop.f32.mrb[0].mxu0
  %4539 = vdwg.mxu0
  %4540 = vrot.lane.b32.xlu0 %v2961, 56
  %v4541 = vpop.permute.xlu0 %4540
  %v4544 = vsel %vm306, %v4449, 0
  %4546 = vmatprep.subr.mxu0 0.0
  %4547 = vmatpush1.msra.mxu0 %v4541
  %4548 = vmatprep.subr.mxu0 0.0
  %4549 = vmatpush1.msra.mxu0 0.0
  %4550 = vmatprep.subr.mxu0 0.0
  %4551 = vmatpush1.msra.mxu0 0.0
  %4552 = vmatprep.subr.mxu0 0.0
  %4553 = vmatpush1.msra.mxu0 0.0
  %4554 = vmatprep.subr.mxu0 0.0
  %4555 = vmatpush1.msra.mxu0 0.0
  %4556 = vmatprep.subr.mxu0 0.0
  %4557 = vmatpush1.msra.mxu0 0.0
  %4558 = vmatprep.subr.mxu0 0.0
  %4559 = vmatpush1.msra.mxu0 0.0
  %4560 = vmatprep.subr.mxu0 0.0
  %4561 = vmatpush1.msra.mxu0 0.0
  %4562 = vmatprep.subr.mxu0 0.0
  %4563 = vmatpush1.msra.mxu0 0.0
  %4564 = vmatprep.subr.mxu0 0.0
  %4565 = vmatpush1.msra.mxu0 0.0
  %4566 = vmatprep.subr.mxu0 0.0
  %4567 = vmatpush1.msra.mxu0 0.0
  %4568 = vmatprep.subr.mxu0 0.0
  %4569 = vmatpush1.msra.mxu0 0.0
  %4570 = vmatprep.subr.mxu0 0.0
  %4571 = vmatpush1.msra.mxu0 0.0
  %4572 = vmatprep.subr.mxu0 0.0
  %4573 = vmatpush1.msra.mxu0 0.0
  %4574 = vmatprep.subr.mxu0 0.0
  %4575 = vmatpush1.msra.mxu0 0.0
  %4576 = vmatprep.subr.mxu0 0.0
  %4577 = vmatpush1.msra.mxu0 0.0
  %4578 = vmatprep.subr.mxu0 0.0
  %4579 = vmatpush1.msra.mxu0 0.0
  %4580 = vmatprep.subr.mxu0 0.0
  %4581 = vmatpush1.msra.mxu0 0.0
  %4582 = vmatprep.subr.mxu0 0.0
  %4583 = vmatpush1.msra.mxu0 0.0
  %4584 = vmatprep.subr.mxu0 0.0
  %4585 = vmatpush1.msra.mxu0 0.0
  %4586 = vmatprep.subr.mxu0 0.0
  %4587 = vmatpush1.msra.mxu0 0.0
  %4588 = vmatprep.subr.mxu0 0.0
  %4589 = vmatpush1.msra.mxu0 0.0
  %4590 = vmatprep.subr.mxu0 0.0
  %4591 = vmatpush1.msra.mxu0 0.0
  %4592 = vmatprep.subr.mxu0 0.0
  %4593 = vmatpush1.msra.mxu0 0.0
  %4594 = vmatprep.subr.mxu0 0.0
  %4595 = vmatpush1.msra.mxu0 0.0
  %4596 = vmatprep.subr.mxu0 0.0
  %4597 = vmatpush1.msra.mxu0 0.0
  %4598 = vmatprep.subr.mxu0 0.0
  %4599 = vmatpush1.msra.mxu0 0.0
  %4600 = vmatprep.subr.mxu0 0.0
  %4601 = vmatpush1.msra.mxu0 0.0
  %4602 = vmatprep.subr.mxu0 0.0
  %4603 = vmatpush1.msra.mxu0 0.0
  %4604 = vmatprep.subr.mxu0 0.0
  %4605 = vmatpush1.msra.mxu0 0.0
  %4606 = vmatprep.subr.mxu0 0.0
  %4607 = vmatpush1.msra.mxu0 0.0
  %4608 = vmatprep.subr.mxu0 0.0
  %4609 = vmatpush1.msra.mxu0 0.0
  %4610 = vmatprep.mubr.f32.mxu0 0.0
  %4611 = vmatmul.mubr.f32.gmra.mrb[0].mxu0 %v4544
  %v4612 = vpop.f32.mrb[0].mxu0
  %v4613 = vadd.f32 0.0, %v4612
  %v4614 = vpop.f32.mrb[0].mxu0
  %4615 = vdwg.mxu0
  %4616 = vrot.lane.b32.xlu0 %v2962, 56
  %v4617 = vpop.permute.xlu0 %4616
  %v4620 = vsel %vm306, %v4450, 0
  %4622 = vmatprep.subr.mxu0 0.0
  %4623 = vmatpush1.msra.mxu0 %v4617
  %4624 = vmatprep.subr.mxu0 0.0
  %4625 = vmatpush1.msra.mxu0 0.0
  %4626 = vmatprep.subr.mxu0 0.0
  %4627 = vmatpush1.msra.mxu0 0.0
  %4628 = vmatprep.subr.mxu0 0.0
  %4629 = vmatpush1.msra.mxu0 0.0
  %4630 = vmatprep.subr.mxu0 0.0
  %4631 = vmatpush1.msra.mxu0 0.0
  %4632 = vmatprep.subr.mxu0 0.0
  %4633 = vmatpush1.msra.mxu0 0.0
  %4634 = vmatprep.subr.mxu0 0.0
  %4635 = vmatpush1.msra.mxu0 0.0
  %4636 = vmatprep.subr.mxu0 0.0
  %4637 = vmatpush1.msra.mxu0 0.0
  %4638 = vmatprep.subr.mxu0 0.0
  %4639 = vmatpush1.msra.mxu0 0.0
  %4640 = vmatprep.subr.mxu0 0.0
  %4641 = vmatpush1.msra.mxu0 0.0
  %4642 = vmatprep.subr.mxu0 0.0
  %4643 = vmatpush1.msra.mxu0 0.0
  %4644 = vmatprep.subr.mxu0 0.0
  %4645 = vmatpush1.msra.mxu0 0.0
  %4646 = vmatprep.subr.mxu0 0.0
  %4647 = vmatpush1.msra.mxu0 0.0
  %4648 = vmatprep.subr.mxu0 0.0
  %4649 = vmatpush1.msra.mxu0 0.0
  %4650 = vmatprep.subr.mxu0 0.0
  %4651 = vmatpush1.msra.mxu0 0.0
  %4652 = vmatprep.subr.mxu0 0.0
  %4653 = vmatpush1.msra.mxu0 0.0
  %4654 = vmatprep.subr.mxu0 0.0
  %4655 = vmatpush1.msra.mxu0 0.0
  %4656 = vmatprep.subr.mxu0 0.0
  %4657 = vmatpush1.msra.mxu0 0.0
  %4658 = vmatprep.subr.mxu0 0.0
  %4659 = vmatpush1.msra.mxu0 0.0
  %4660 = vmatprep.subr.mxu0 0.0
  %4661 = vmatpush1.msra.mxu0 0.0
  %4662 = vmatprep.subr.mxu0 0.0
  %4663 = vmatpush1.msra.mxu0 0.0
  %4664 = vmatprep.subr.mxu0 0.0
  %4665 = vmatpush1.msra.mxu0 0.0
  %4666 = vmatprep.subr.mxu0 0.0
  %4667 = vmatpush1.msra.mxu0 0.0
  %4668 = vmatprep.subr.mxu0 0.0
  %4669 = vmatpush1.msra.mxu0 0.0
  %4670 = vmatprep.subr.mxu0 0.0
  %4671 = vmatpush1.msra.mxu0 0.0
  %4672 = vmatprep.subr.mxu0 0.0
  %4673 = vmatpush1.msra.mxu0 0.0
  %4674 = vmatprep.subr.mxu0 0.0
  %4675 = vmatpush1.msra.mxu0 0.0
  %4676 = vmatprep.subr.mxu0 0.0
  %4677 = vmatpush1.msra.mxu0 0.0
  %4678 = vmatprep.subr.mxu0 0.0
  %4679 = vmatpush1.msra.mxu0 0.0
  %4680 = vmatprep.subr.mxu0 0.0
  %4681 = vmatpush1.msra.mxu0 0.0
  %4682 = vmatprep.subr.mxu0 0.0
  %4683 = vmatpush1.msra.mxu0 0.0
  %4684 = vmatprep.subr.mxu0 0.0
  %4685 = vmatpush1.msra.mxu0 0.0
  %4686 = vmatprep.mubr.f32.mxu0 0.0
  %4687 = vmatmul.mubr.f32.gmra.mrb[0].mxu0 %v4620
  %v4688 = vpop.f32.mrb[0].mxu0
  %v4689 = vadd.f32 0.0, %v4688
  %v4690 = vpop.f32.mrb[0].mxu0
  %4691 = vdwg.mxu0
  %4692 = vrot.lane.b32.xlu0 %v2963, 56
  %v4693 = vpop.permute.xlu0 %4692
  %v4696 = vsel %vm306, %v4451, 0
  %4698 = vmatprep.subr.mxu0 0.0
  %4699 = vmatpush1.msra.mxu0 %v4693
  %4700 = vmatprep.subr.mxu0 0.0
  %4701 = vmatpush1.msra.mxu0 0.0
  %4702 = vmatprep.subr.mxu0 0.0
  %4703 = vmatpush1.msra.mxu0 0.0
  %4704 = vmatprep.subr.mxu0 0.0
  %4705 = vmatpush1.msra.mxu0 0.0
  %4706 = vmatprep.subr.mxu0 0.0
  %4707 = vmatpush1.msra.mxu0 0.0
  %4708 = vmatprep.subr.mxu0 0.0
  %4709 = vmatpush1.msra.mxu0 0.0
  %4710 = vmatprep.subr.mxu0 0.0
  %4711 = vmatpush1.msra.mxu0 0.0
  %4712 = vmatprep.subr.mxu0 0.0
  %4713 = vmatpush1.msra.mxu0 0.0
  %4714 = vmatprep.subr.mxu0 0.0
  %4715 = vmatpush1.msra.mxu0 0.0
  %4716 = vmatprep.subr.mxu0 0.0
  %4717 = vmatpush1.msra.mxu0 0.0
  %4718 = vmatprep.subr.mxu0 0.0
  %4719 = vmatpush1.msra.mxu0 0.0
  %4720 = vmatprep.subr.mxu0 0.0
  %4721 = vmatpush1.msra.mxu0 0.0
  %4722 = vmatprep.subr.mxu0 0.0
  %4723 = vmatpush1.msra.mxu0 0.0
  %4724 = vmatprep.subr.mxu0 0.0
  %4725 = vmatpush1.msra.mxu0 0.0
  %4726 = vmatprep.subr.mxu0 0.0
  %4727 = vmatpush1.msra.mxu0 0.0
  %4728 = vmatprep.subr.mxu0 0.0
  %4729 = vmatpush1.msra.mxu0 0.0
  %4730 = vmatprep.subr.mxu0 0.0
  %4731 = vmatpush1.msra.mxu0 0.0
  %4732 = vmatprep.subr.mxu0 0.0
  %4733 = vmatpush1.msra.mxu0 0.0
  %4734 = vmatprep.subr.mxu0 0.0
  %4735 = vmatpush1.msra.mxu0 0.0
  %4736 = vmatprep.subr.mxu0 0.0
  %4737 = vmatpush1.msra.mxu0 0.0
  %4738 = vmatprep.subr.mxu0 0.0
  %4739 = vmatpush1.msra.mxu0 0.0
  %4740 = vmatprep.subr.mxu0 0.0
  %4741 = vmatpush1.msra.mxu0 0.0
  %4742 = vmatprep.subr.mxu0 0.0
  %4743 = vmatpush1.msra.mxu0 0.0
  %4744 = vmatprep.subr.mxu0 0.0
  %4745 = vmatpush1.msra.mxu0 0.0
  %4746 = vmatprep.subr.mxu0 0.0
  %4747 = vmatpush1.msra.mxu0 0.0
  %4748 = vmatprep.subr.mxu0 0.0
  %4749 = vmatpush1.msra.mxu0 0.0
  %4750 = vmatprep.subr.mxu0 0.0
  %4751 = vmatpush1.msra.mxu0 0.0
  %4752 = vmatprep.subr.mxu0 0.0
  %4753 = vmatpush1.msra.mxu0 0.0
  %4754 = vmatprep.subr.mxu0 0.0
  %4755 = vmatpush1.msra.mxu0 0.0
  %4756 = vmatprep.subr.mxu0 0.0
  %4757 = vmatpush1.msra.mxu0 0.0
  %4758 = vmatprep.subr.mxu0 0.0
  %4759 = vmatpush1.msra.mxu0 0.0
  %4760 = vmatprep.subr.mxu0 0.0
  %4761 = vmatpush1.msra.mxu0 0.0
  %4762 = vmatprep.mubr.f32.mxu0 0.0
  %4763 = vmatmul.mubr.f32.gmra.mrb[0].mxu0 %v4696
  %v4764 = vpop.f32.mrb[0].mxu0
  %v4765 = vadd.f32 0.0, %v4764
  %v4766 = vpop.f32.mrb[0].mxu0
  %4767 = vdwg.mxu0
  %4768 = vrot.lane.b32.xlu0 %v2964, 56
  %v4769 = vpop.permute.xlu0 %4768
  %v4772 = vsel %vm306, %v4452, 0
  %4774 = vmatprep.subr.mxu0 0.0
  %4775 = vmatpush1.msra.mxu0 %v4769
  %4776 = vmatprep.subr.mxu0 0.0
  %4777 = vmatpush1.msra.mxu0 0.0
  %4778 = vmatprep.subr.mxu0 0.0
  %4779 = vmatpush1.msra.mxu0 0.0
  %4780 = vmatprep.subr.mxu0 0.0
  %4781 = vmatpush1.msra.mxu0 0.0
  %4782 = vmatprep.subr.mxu0 0.0
  %4783 = vmatpush1.msra.mxu0 0.0
  %4784 = vmatprep.subr.mxu0 0.0
  %4785 = vmatpush1.msra.mxu0 0.0
  %4786 = vmatprep.subr.mxu0 0.0
  %4787 = vmatpush1.msra.mxu0 0.0
  %4788 = vmatprep.subr.mxu0 0.0
  %4789 = vmatpush1.msra.mxu0 0.0
  %4790 = vmatprep.subr.mxu0 0.0
  %4791 = vmatpush1.msra.mxu0 0.0
  %4792 = vmatprep.subr.mxu0 0.0
  %4793 = vmatpush1.msra.mxu0 0.0
  %4794 = vmatprep.subr.mxu0 0.0
  %4795 = vmatpush1.msra.mxu0 0.0
  %4796 = vmatprep.subr.mxu0 0.0
  %4797 = vmatpush1.msra.mxu0 0.0
  %4798 = vmatprep.subr.mxu0 0.0
  %4799 = vmatpush1.msra.mxu0 0.0
  %4800 = vmatprep.subr.mxu0 0.0
  %4801 = vmatpush1.msra.mxu0 0.0
  %4802 = vmatprep.subr.mxu0 0.0
  %4803 = vmatpush1.msra.mxu0 0.0
  %4804 = vmatprep.subr.mxu0 0.0
  %4805 = vmatpush1.msra.mxu0 0.0
  %4806 = vmatprep.subr.mxu0 0.0
  %4807 = vmatpush1.msra.mxu0 0.0
  %4808 = vmatprep.subr.mxu0 0.0
  %4809 = vmatpush1.msra.mxu0 0.0
  %4810 = vmatprep.subr.mxu0 0.0
  %4811 = vmatpush1.msra.mxu0 0.0
  %4812 = vmatprep.subr.mxu0 0.0
  %4813 = vmatpush1.msra.mxu0 0.0
  %4814 = vmatprep.subr.mxu0 0.0
  %4815 = vmatpush1.msra.mxu0 0.0
  %4816 = vmatprep.subr.mxu0 0.0
  %4817 = vmatpush1.msra.mxu0 0.0
  %4818 = vmatprep.subr.mxu0 0.0
  %4819 = vmatpush1.msra.mxu0 0.0
  %4820 = vmatprep.subr.mxu0 0.0
  %4821 = vmatpush1.msra.mxu0 0.0
  %4822 = vmatprep.subr.mxu0 0.0
  %4823 = vmatpush1.msra.mxu0 0.0
  %4824 = vmatprep.subr.mxu0 0.0
  %4825 = vmatpush1.msra.mxu0 0.0
  %4826 = vmatprep.subr.mxu0 0.0
  %4827 = vmatpush1.msra.mxu0 0.0
  %4828 = vmatprep.subr.mxu0 0.0
  %4829 = vmatpush1.msra.mxu0 0.0
  %4830 = vmatprep.subr.mxu0 0.0
  %4831 = vmatpush1.msra.mxu0 0.0
  %4832 = vmatprep.subr.mxu0 0.0
  %4833 = vmatpush1.msra.mxu0 0.0
  %4834 = vmatprep.subr.mxu0 0.0
  %4835 = vmatpush1.msra.mxu0 0.0
  %4836 = vmatprep.subr.mxu0 0.0
  %4837 = vmatpush1.msra.mxu0 0.0
  %4838 = vmatprep.mubr.f32.mxu0 0.0
  %4839 = vmatmul.mubr.f32.gmra.mrb[0].mxu0 %v4772
  %v4840 = vpop.f32.mrb[0].mxu0
  %v4841 = vadd.f32 0.0, %v4840
  %v4842 = vpop.f32.mrb[0].mxu0
  %4843 = vdwg.mxu0
  %4844 = vrot.lane.b32.xlu0 %v2965, 56
  %v4845 = vpop.permute.xlu0 %4844
  %v4848 = vsel %vm306, %v4453, 0
  %4850 = vmatprep.subr.mxu0 0.0
  %4851 = vmatpush1.msra.mxu0 %v4845
  %4852 = vmatprep.subr.mxu0 0.0
  %4853 = vmatpush1.msra.mxu0 0.0
  %4854 = vmatprep.subr.mxu0 0.0
  %4855 = vmatpush1.msra.mxu0 0.0
  %4856 = vmatprep.subr.mxu0 0.0
  %4857 = vmatpush1.msra.mxu0 0.0
  %4858 = vmatprep.subr.mxu0 0.0
  %4859 = vmatpush1.msra.mxu0 0.0
  %4860 = vmatprep.subr.mxu0 0.0
  %4861 = vmatpush1.msra.mxu0 0.0
  %4862 = vmatprep.subr.mxu0 0.0
  %4863 = vmatpush1.msra.mxu0 0.0
  %4864 = vmatprep.subr.mxu0 0.0
  %4865 = vmatpush1.msra.mxu0 0.0
  %4866 = vmatprep.subr.mxu0 0.0
  %4867 = vmatpush1.msra.mxu0 0.0
  %4868 = vmatprep.subr.mxu0 0.0
  %4869 = vmatpush1.msra.mxu0 0.0
  %4870 = vmatprep.subr.mxu0 0.0
  %4871 = vmatpush1.msra.mxu0 0.0
  %4872 = vmatprep.subr.mxu0 0.0
  %4873 = vmatpush1.msra.mxu0 0.0
  %4874 = vmatprep.subr.mxu0 0.0
  %4875 = vmatpush1.msra.mxu0 0.0
  %4876 = vmatprep.subr.mxu0 0.0
  %4877 = vmatpush1.msra.mxu0 0.0
  %4878 = vmatprep.subr.mxu0 0.0
  %4879 = vmatpush1.msra.mxu0 0.0
  %4880 = vmatprep.subr.mxu0 0.0
  %4881 = vmatpush1.msra.mxu0 0.0
  %4882 = vmatprep.subr.mxu0 0.0
  %4883 = vmatpush1.msra.mxu0 0.0
  %4884 = vmatprep.subr.mxu0 0.0
  %4885 = vmatpush1.msra.mxu0 0.0
  %4886 = vmatprep.subr.mxu0 0.0
  %4887 = vmatpush1.msra.mxu0 0.0
  %4888 = vmatprep.subr.mxu0 0.0
  %4889 = vmatpush1.msra.mxu0 0.0
  %4890 = vmatprep.subr.mxu0 0.0
  %4891 = vmatpush1.msra.mxu0 0.0
  %4892 = vmatprep.subr.mxu0 0.0
  %4893 = vmatpush1.msra.mxu0 0.0
  %4894 = vmatprep.subr.mxu0 0.0
  %4895 = vmatpush1.msra.mxu0 0.0
  %4896 = vmatprep.subr.mxu0 0.0
  %4897 = vmatpush1.msra.mxu0 0.0
  %4898 = vmatprep.subr.mxu0 0.0
  %4899 = vmatpush1.msra.mxu0 0.0
  %4900 = vmatprep.subr.mxu0 0.0
  %4901 = vmatpush1.msra.mxu0 0.0
  %4902 = vmatprep.subr.mxu0 0.0
  %4903 = vmatpush1.msra.mxu0 0.0
  %4904 = vmatprep.subr.mxu0 0.0
  %4905 = vmatpush1.msra.mxu0 0.0
  %4906 = vmatprep.subr.mxu0 0.0
  %4907 = vmatpush1.msra.mxu0 0.0
  %4908 = vmatprep.subr.mxu0 0.0
  %4909 = vmatpush1.msra.mxu0 0.0
  %4910 = vmatprep.subr.mxu0 0.0
  %4911 = vmatpush1.msra.mxu0 0.0
  %4912 = vmatprep.subr.mxu0 0.0
  %4913 = vmatpush1.msra.mxu0 0.0
  %4914 = vmatprep.mubr.f32.mxu0 0.0
  %4915 = vmatmul.mubr.f32.gmra.mrb[0].mxu0 %v4848
  %v4916 = vpop.f32.mrb[0].mxu0
  %v4917 = vadd.f32 0.0, %v4916
  %v4918 = vpop.f32.mrb[0].mxu0
  %4919 = vdwg.mxu0
  %4920 = vrot.lane.b32.xlu0 %v2966, 56
  %v4921 = vpop.permute.xlu0 %4920
  %v4924 = vsel %vm306, %v4454, 0
  %4926 = vmatprep.subr.mxu0 0.0
  %4927 = vmatpush1.msra.mxu0 %v4921
  %4928 = vmatprep.subr.mxu0 0.0
  %4929 = vmatpush1.msra.mxu0 0.0
  %4930 = vmatprep.subr.mxu0 0.0
  %4931 = vmatpush1.msra.mxu0 0.0
  %4932 = vmatprep.subr.mxu0 0.0
  %4933 = vmatpush1.msra.mxu0 0.0
  %4934 = vmatprep.subr.mxu0 0.0
  %4935 = vmatpush1.msra.mxu0 0.0
  %4936 = vmatprep.subr.mxu0 0.0
  %4937 = vmatpush1.msra.mxu0 0.0
  %4938 = vmatprep.subr.mxu0 0.0
  %4939 = vmatpush1.msra.mxu0 0.0
  %4940 = vmatprep.subr.mxu0 0.0
  %4941 = vmatpush1.msra.mxu0 0.0
  %4942 = vmatprep.subr.mxu0 0.0
  %4943 = vmatpush1.msra.mxu0 0.0
  %4944 = vmatprep.subr.mxu0 0.0
  %4945 = vmatpush1.msra.mxu0 0.0
  %4946 = vmatprep.subr.mxu0 0.0
  %4947 = vmatpush1.msra.mxu0 0.0
  %4948 = vmatprep.subr.mxu0 0.0
  %4949 = vmatpush1.msra.mxu0 0.0
  %4950 = vmatprep.subr.mxu0 0.0
  %4951 = vmatpush1.msra.mxu0 0.0
  %4952 = vmatprep.subr.mxu0 0.0
  %4953 = vmatpush1.msra.mxu0 0.0
  %4954 = vmatprep.subr.mxu0 0.0
  %4955 = vmatpush1.msra.mxu0 0.0
  %4956 = vmatprep.subr.mxu0 0.0
  %4957 = vmatpush1.msra.mxu0 0.0
  %4958 = vmatprep.subr.mxu0 0.0
  %4959 = vmatpush1.msra.mxu0 0.0
  %4960 = vmatprep.subr.mxu0 0.0
  %4961 = vmatpush1.msra.mxu0 0.0
  %4962 = vmatprep.subr.mxu0 0.0
  %4963 = vmatpush1.msra.mxu0 0.0
  %4964 = vmatprep.subr.mxu0 0.0
  %4965 = vmatpush1.msra.mxu0 0.0
  %4966 = vmatprep.subr.mxu0 0.0
  %4967 = vmatpush1.msra.mxu0 0.0
  %4968 = vmatprep.subr.mxu0 0.0
  %4969 = vmatpush1.msra.mxu0 0.0
  %4970 = vmatprep.subr.mxu0 0.0
  %4971 = vmatpush1.msra.mxu0 0.0
  %4972 = vmatprep.subr.mxu0 0.0
  %4973 = vmatpush1.msra.mxu0 0.0
  %4974 = vmatprep.subr.mxu0 0.0
  %4975 = vmatpush1.msra.mxu0 0.0
  %4976 = vmatprep.subr.mxu0 0.0
  %4977 = vmatpush1.msra.mxu0 0.0
  %4978 = vmatprep.subr.mxu0 0.0
  %4979 = vmatpush1.msra.mxu0 0.0
  %4980 = vmatprep.subr.mxu0 0.0
  %4981 = vmatpush1.msra.mxu0 0.0
  %4982 = vmatprep.subr.mxu0 0.0
  %4983 = vmatpush1.msra.mxu0 0.0
  %4984 = vmatprep.subr.mxu0 0.0
  %4985 = vmatpush1.msra.mxu0 0.0
  %4986 = vmatprep.subr.mxu0 0.0
  %4987 = vmatpush1.msra.mxu0 0.0
  %4988 = vmatprep.subr.mxu0 0.0
  %4989 = vmatpush1.msra.mxu0 0.0
  %4990 = vmatprep.mubr.f32.mxu0 0.0
  %4991 = vmatmul.mubr.f32.gmra.mrb[0].mxu0 %v4924
  %v4992 = vpop.f32.mrb[0].mxu0
  %v4993 = vadd.f32 0.0, %v4992
  %v4994 = vpop.f32.mrb[0].mxu0
  %4995 = vdwg.mxu0
  %4996 = vrot.lane.b32.xlu0 %v2967, 56
  %v4997 = vpop.permute.xlu0 %4996
  %v5000 = vsel %vm306, %v4455, 0
  %5002 = vmatprep.subr.mxu0 0.0
  %5003 = vmatpush1.msra.mxu0 %v4997
  %5004 = vmatprep.subr.mxu0 0.0
  %5005 = vmatpush1.msra.mxu0 0.0
  %5006 = vmatprep.subr.mxu0 0.0
  %5007 = vmatpush1.msra.mxu0 0.0
  %5008 = vmatprep.subr.mxu0 0.0
  %5009 = vmatpush1.msra.mxu0 0.0
  %5010 = vmatprep.subr.mxu0 0.0
  %5011 = vmatpush1.msra.mxu0 0.0
  %5012 = vmatprep.subr.mxu0 0.0
  %5013 = vmatpush1.msra.mxu0 0.0
  %5014 = vmatprep.subr.mxu0 0.0
  %5015 = vmatpush1.msra.mxu0 0.0
  %5016 = vmatprep.subr.mxu0 0.0
  %5017 = vmatpush1.msra.mxu0 0.0
  %5018 = vmatprep.subr.mxu0 0.0
  %5019 = vmatpush1.msra.mxu0 0.0
  %5020 = vmatprep.subr.mxu0 0.0
  %5021 = vmatpush1.msra.mxu0 0.0
  %5022 = vmatprep.subr.mxu0 0.0
  %5023 = vmatpush1.msra.mxu0 0.0
  %5024 = vmatprep.subr.mxu0 0.0
  %5025 = vmatpush1.msra.mxu0 0.0
  %5026 = vmatprep.subr.mxu0 0.0
  %5027 = vmatpush1.msra.mxu0 0.0
  %5028 = vmatprep.subr.mxu0 0.0
  %5029 = vmatpush1.msra.mxu0 0.0
  %5030 = vmatprep.subr.mxu0 0.0
  %5031 = vmatpush1.msra.mxu0 0.0
  %5032 = vmatprep.subr.mxu0 0.0
  %5033 = vmatpush1.msra.mxu0 0.0
  %5034 = vmatprep.subr.mxu0 0.0
  %5035 = vmatpush1.msra.mxu0 0.0
  %5036 = vmatprep.subr.mxu0 0.0
  %5037 = vmatpush1.msra.mxu0 0.0
  %5038 = vmatprep.subr.mxu0 0.0
  %5039 = vmatpush1.msra.mxu0 0.0
  %5040 = vmatprep.subr.mxu0 0.0
  %5041 = vmatpush1.msra.mxu0 0.0
  %5042 = vmatprep.subr.mxu0 0.0
  %5043 = vmatpush1.msra.mxu0 0.0
  %5044 = vmatprep.subr.mxu0 0.0
  %5045 = vmatpush1.msra.mxu0 0.0
  %5046 = vmatprep.subr.mxu0 0.0
  %5047 = vmatpush1.msra.mxu0 0.0
  %5048 = vmatprep.subr.mxu0 0.0
  %5049 = vmatpush1.msra.mxu0 0.0
  %5050 = vmatprep.subr.mxu0 0.0
  %5051 = vmatpush1.msra.mxu0 0.0
  %5052 = vmatprep.subr.mxu0 0.0
  %5053 = vmatpush1.msra.mxu0 0.0
  %5054 = vmatprep.subr.mxu0 0.0
  %5055 = vmatpush1.msra.mxu0 0.0
  %5056 = vmatprep.subr.mxu0 0.0
  %5057 = vmatpush1.msra.mxu0 0.0
  %5058 = vmatprep.subr.mxu0 0.0
  %5059 = vmatpush1.msra.mxu0 0.0
  %5060 = vmatprep.subr.mxu0 0.0
  %5061 = vmatpush1.msra.mxu0 0.0
  %5062 = vmatprep.subr.mxu0 0.0
  %5063 = vmatpush1.msra.mxu0 0.0
  %5064 = vmatprep.subr.mxu0 0.0
  %5065 = vmatpush1.msra.mxu0 0.0
  %5066 = vmatprep.mubr.f32.mxu0 0.0
  %5067 = vmatmul.mubr.f32.gmra.mrb[0].mxu0 %v5000
  %v5068 = vpop.f32.mrb[0].mxu0
  %v5069 = vadd.f32 0.0, %v5068
  %v5070 = vpop.f32.mrb[0].mxu0
  %5071 = vdwg.mxu0
  %5072 = vrot.lane.b32.xlu0 %v2968, 56
  %v5073 = vpop.permute.xlu0 %5072
  %v5076 = vsel %vm306, %v4456, 0
  %5078 = vmatprep.subr.mxu0 0.0
  %5079 = vmatpush1.msra.mxu0 %v5073
  %5080 = vmatprep.subr.mxu0 0.0
  %5081 = vmatpush1.msra.mxu0 0.0
  %5082 = vmatprep.subr.mxu0 0.0
  %5083 = vmatpush1.msra.mxu0 0.0
  %5084 = vmatprep.subr.mxu0 0.0
  %5085 = vmatpush1.msra.mxu0 0.0
  %5086 = vmatprep.subr.mxu0 0.0
  %5087 = vmatpush1.msra.mxu0 0.0
  %5088 = vmatprep.subr.mxu0 0.0
  %5089 = vmatpush1.msra.mxu0 0.0
  %5090 = vmatprep.subr.mxu0 0.0
  %5091 = vmatpush1.msra.mxu0 0.0
  %5092 = vmatprep.subr.mxu0 0.0
  %5093 = vmatpush1.msra.mxu0 0.0
  %5094 = vmatprep.subr.mxu0 0.0
  %5095 = vmatpush1.msra.mxu0 0.0
  %5096 = vmatprep.subr.mxu0 0.0
  %5097 = vmatpush1.msra.mxu0 0.0
  %5098 = vmatprep.subr.mxu0 0.0
  %5099 = vmatpush1.msra.mxu0 0.0
  %5100 = vmatprep.subr.mxu0 0.0
  %5101 = vmatpush1.msra.mxu0 0.0
  %5102 = vmatprep.subr.mxu0 0.0
  %5103 = vmatpush1.msra.mxu0 0.0
  %5104 = vmatprep.subr.mxu0 0.0
  %5105 = vmatpush1.msra.mxu0 0.0
  %5106 = vmatprep.subr.mxu0 0.0
  %5107 = vmatpush1.msra.mxu0 0.0
  %5108 = vmatprep.subr.mxu0 0.0
  %5109 = vmatpush1.msra.mxu0 0.0
  %5110 = vmatprep.subr.mxu0 0.0
  %5111 = vmatpush1.msra.mxu0 0.0
  %5112 = vmatprep.subr.mxu0 0.0
  %5113 = vmatpush1.msra.mxu0 0.0
  %5114 = vmatprep.subr.mxu0 0.0
  %5115 = vmatpush1.msra.mxu0 0.0
  %5116 = vmatprep.subr.mxu0 0.0
  %5117 = vmatpush1.msra.mxu0 0.0
  %5118 = vmatprep.subr.mxu0 0.0
  %5119 = vmatpush1.msra.mxu0 0.0
  %5120 = vmatprep.subr.mxu0 0.0
  %5121 = vmatpush1.msra.mxu0 0.0
  %5122 = vmatprep.subr.mxu0 0.0
  %5123 = vmatpush1.msra.mxu0 0.0
  %5124 = vmatprep.subr.mxu0 0.0
  %5125 = vmatpush1.msra.mxu0 0.0
  %5126 = vmatprep.subr.mxu0 0.0
  %5127 = vmatpush1.msra.mxu0 0.0
  %5128 = vmatprep.subr.mxu0 0.0
  %5129 = vmatpush1.msra.mxu0 0.0
  %5130 = vmatprep.subr.mxu0 0.0
  %5131 = vmatpush1.msra.mxu0 0.0
  %5132 = vmatprep.subr.mxu0 0.0
  %5133 = vmatpush1.msra.mxu0 0.0
  %5134 = vmatprep.subr.mxu0 0.0
  %5135 = vmatpush1.msra.mxu0 0.0
  %5136 = vmatprep.subr.mxu0 0.0
  %5137 = vmatpush1.msra.mxu0 0.0
  %5138 = vmatprep.subr.mxu0 0.0
  %5139 = vmatpush1.msra.mxu0 0.0
  %5140 = vmatprep.subr.mxu0 0.0
  %5141 = vmatpush1.msra.mxu0 0.0
  %5142 = vmatprep.mubr.f32.mxu0 0.0
  %5143 = vmatmul.mubr.f32.gmra.mrb[0].mxu0 %v5076
  %v5144 = vpop.f32.mrb[0].mxu0
  %v5145 = vadd.f32 0.0, %v5144
  %v5146 = vpop.f32.mrb[0].mxu0
  %5147 = vdwg.mxu0
  %5148 = vrot.lane.b32.xlu0 %v2969, 56
  %v5149 = vpop.permute.xlu0 %5148
  %v5152 = vsel %vm306, %v4457, 0
  %5154 = vmatprep.subr.mxu0 0.0
  %5155 = vmatpush1.msra.mxu0 %v5149
  %5156 = vmatprep.subr.mxu0 0.0
  %5157 = vmatpush1.msra.mxu0 0.0
  %5158 = vmatprep.subr.mxu0 0.0
  %5159 = vmatpush1.msra.mxu0 0.0
  %5160 = vmatprep.subr.mxu0 0.0
  %5161 = vmatpush1.msra.mxu0 0.0
  %5162 = vmatprep.subr.mxu0 0.0
  %5163 = vmatpush1.msra.mxu0 0.0
  %5164 = vmatprep.subr.mxu0 0.0
  %5165 = vmatpush1.msra.mxu0 0.0
  %5166 = vmatprep.subr.mxu0 0.0
  %5167 = vmatpush1.msra.mxu0 0.0
  %5168 = vmatprep.subr.mxu0 0.0
  %5169 = vmatpush1.msra.mxu0 0.0
  %5170 = vmatprep.subr.mxu0 0.0
  %5171 = vmatpush1.msra.mxu0 0.0
  %5172 = vmatprep.subr.mxu0 0.0
  %5173 = vmatpush1.msra.mxu0 0.0
  %5174 = vmatprep.subr.mxu0 0.0
  %5175 = vmatpush1.msra.mxu0 0.0
  %5176 = vmatprep.subr.mxu0 0.0
  %5177 = vmatpush1.msra.mxu0 0.0
  %5178 = vmatprep.subr.mxu0 0.0
  %5179 = vmatpush1.msra.mxu0 0.0
  %5180 = vmatprep.subr.mxu0 0.0
  %5181 = vmatpush1.msra.mxu0 0.0
  %5182 = vmatprep.subr.mxu0 0.0
  %5183 = vmatpush1.msra.mxu0 0.0
  %5184 = vmatprep.subr.mxu0 0.0
  %5185 = vmatpush1.msra.mxu0 0.0
  %5186 = vmatprep.subr.mxu0 0.0
  %5187 = vmatpush1.msra.mxu0 0.0
  %5188 = vmatprep.subr.mxu0 0.0
  %5189 = vmatpush1.msra.mxu0 0.0
  %5190 = vmatprep.subr.mxu0 0.0
  %5191 = vmatpush1.msra.mxu0 0.0
  %5192 = vmatprep.subr.mxu0 0.0
  %5193 = vmatpush1.msra.mxu0 0.0
  %5194 = vmatprep.subr.mxu0 0.0
  %5195 = vmatpush1.msra.mxu0 0.0
  %5196 = vmatprep.subr.mxu0 0.0
  %5197 = vmatpush1.msra.mxu0 0.0
  %5198 = vmatprep.subr.mxu0 0.0
  %5199 = vmatpush1.msra.mxu0 0.0
  %5200 = vmatprep.subr.mxu0 0.0
  %5201 = vmatpush1.msra.mxu0 0.0
  %5202 = vmatprep.subr.mxu0 0.0
  %5203 = vmatpush1.msra.mxu0 0.0
  %5204 = vmatprep.subr.mxu0 0.0
  %5205 = vmatpush1.msra.mxu0 0.0
  %5206 = vmatprep.subr.mxu0 0.0
  %5207 = vmatpush1.msra.mxu0 0.0
  %5208 = vmatprep.subr.mxu0 0.0
  %5209 = vmatpush1.msra.mxu0 0.0
  %5210 = vmatprep.subr.mxu0 0.0
  %5211 = vmatpush1.msra.mxu0 0.0
  %5212 = vmatprep.subr.mxu0 0.0
  %5213 = vmatpush1.msra.mxu0 0.0
  %5214 = vmatprep.subr.mxu0 0.0
  %5215 = vmatpush1.msra.mxu0 0.0
  %5216 = vmatprep.subr.mxu0 0.0
  %5217 = vmatpush1.msra.mxu0 0.0
  %5218 = vmatprep.mubr.f32.mxu0 0.0
  %5219 = vmatmul.mubr.f32.gmra.mrb[0].mxu0 %v5152
  %v5220 = vpop.f32.mrb[0].mxu0
  %v5221 = vadd.f32 0.0, %v5220
  %v5222 = vpop.f32.mrb[0].mxu0
  %5223 = vdwg.mxu0
  %5224 = vrot.lane.b32.xlu0 %v2970, 56
  %v5225 = vpop.permute.xlu0 %5224
  %v5228 = vsel %vm306, %v4458, 0
  %5230 = vmatprep.subr.mxu0 0.0
  %5231 = vmatpush1.msra.mxu0 %v5225
  %5232 = vmatprep.subr.mxu0 0.0
  %5233 = vmatpush1.msra.mxu0 0.0
  %5234 = vmatprep.subr.mxu0 0.0
  %5235 = vmatpush1.msra.mxu0 0.0
  %5236 = vmatprep.subr.mxu0 0.0
  %5237 = vmatpush1.msra.mxu0 0.0
  %5238 = vmatprep.subr.mxu0 0.0
  %5239 = vmatpush1.msra.mxu0 0.0
  %5240 = vmatprep.subr.mxu0 0.0
  %5241 = vmatpush1.msra.mxu0 0.0
  %5242 = vmatprep.subr.mxu0 0.0
  %5243 = vmatpush1.msra.mxu0 0.0
  %5244 = vmatprep.subr.mxu0 0.0
  %5245 = vmatpush1.msra.mxu0 0.0
  %5246 = vmatprep.subr.mxu0 0.0
  %5247 = vmatpush1.msra.mxu0 0.0
  %5248 = vmatprep.subr.mxu0 0.0
  %5249 = vmatpush1.msra.mxu0 0.0
  %5250 = vmatprep.subr.mxu0 0.0
  %5251 = vmatpush1.msra.mxu0 0.0
  %5252 = vmatprep.subr.mxu0 0.0
  %5253 = vmatpush1.msra.mxu0 0.0
  %5254 = vmatprep.subr.mxu0 0.0
  %5255 = vmatpush1.msra.mxu0 0.0
  %5256 = vmatprep.subr.mxu0 0.0
  %5257 = vmatpush1.msra.mxu0 0.0
  %5258 = vmatprep.subr.mxu0 0.0
  %5259 = vmatpush1.msra.mxu0 0.0
  %5260 = vmatprep.subr.mxu0 0.0
  %5261 = vmatpush1.msra.mxu0 0.0
  %5262 = vmatprep.subr.mxu0 0.0
  %5263 = vmatpush1.msra.mxu0 0.0
  %5264 = vmatprep.subr.mxu0 0.0
  %5265 = vmatpush1.msra.mxu0 0.0
  %5266 = vmatprep.subr.mxu0 0.0
  %5267 = vmatpush1.msra.mxu0 0.0
  %5268 = vmatprep.subr.mxu0 0.0
  %5269 = vmatpush1.msra.mxu0 0.0
  %5270 = vmatprep.subr.mxu0 0.0
  %5271 = vmatpush1.msra.mxu0 0.0
  %5272 = vmatprep.subr.mxu0 0.0
  %5273 = vmatpush1.msra.mxu0 0.0
  %5274 = vmatprep.subr.mxu0 0.0
  %5275 = vmatpush1.msra.mxu0 0.0
  %5276 = vmatprep.subr.mxu0 0.0
  %5277 = vmatpush1.msra.mxu0 0.0
  %5278 = vmatprep.subr.mxu0 0.0
  %5279 = vmatpush1.msra.mxu0 0.0
  %5280 = vmatprep.subr.mxu0 0.0
  %5281 = vmatpush1.msra.mxu0 0.0
  %5282 = vmatprep.subr.mxu0 0.0
  %5283 = vmatpush1.msra.mxu0 0.0
  %5284 = vmatprep.subr.mxu0 0.0
  %5285 = vmatpush1.msra.mxu0 0.0
  %5286 = vmatprep.subr.mxu0 0.0
  %5287 = vmatpush1.msra.mxu0 0.0
  %5288 = vmatprep.subr.mxu0 0.0
  %5289 = vmatpush1.msra.mxu0 0.0
  %5290 = vmatprep.subr.mxu0 0.0
  %5291 = vmatpush1.msra.mxu0 0.0
  %5292 = vmatprep.subr.mxu0 0.0
  %5293 = vmatpush1.msra.mxu0 0.0
  %5294 = vmatprep.mubr.f32.mxu0 0.0
  %5295 = vmatmul.mubr.f32.gmra.mrb[0].mxu0 %v5228
  %v5296 = vpop.f32.mrb[0].mxu0
  %v5297 = vadd.f32 0.0, %v5296
  %v5298 = vpop.f32.mrb[0].mxu0
  %5299 = vdwg.mxu0
  %5300 = vrot.lane.b32.xlu0 %v2971, 56
  %v5301 = vpop.permute.xlu0 %5300
  %v5304 = vsel %vm306, %v4459, 0
  %5306 = vmatprep.subr.mxu0 0.0
  %5307 = vmatpush1.msra.mxu0 %v5301
  %5308 = vmatprep.subr.mxu0 0.0
  %5309 = vmatpush1.msra.mxu0 0.0
  %5310 = vmatprep.subr.mxu0 0.0
  %5311 = vmatpush1.msra.mxu0 0.0
  %5312 = vmatprep.subr.mxu0 0.0
  %5313 = vmatpush1.msra.mxu0 0.0
  %5314 = vmatprep.subr.mxu0 0.0
  %5315 = vmatpush1.msra.mxu0 0.0
  %5316 = vmatprep.subr.mxu0 0.0
  %5317 = vmatpush1.msra.mxu0 0.0
  %5318 = vmatprep.subr.mxu0 0.0
  %5319 = vmatpush1.msra.mxu0 0.0
  %5320 = vmatprep.subr.mxu0 0.0
  %5321 = vmatpush1.msra.mxu0 0.0
  %5322 = vmatprep.subr.mxu0 0.0
  %5323 = vmatpush1.msra.mxu0 0.0
  %5324 = vmatprep.subr.mxu0 0.0
  %5325 = vmatpush1.msra.mxu0 0.0
  %5326 = vmatprep.subr.mxu0 0.0
  %5327 = vmatpush1.msra.mxu0 0.0
  %5328 = vmatprep.subr.mxu0 0.0
  %5329 = vmatpush1.msra.mxu0 0.0
  %5330 = vmatprep.subr.mxu0 0.0
  %5331 = vmatpush1.msra.mxu0 0.0
  %5332 = vmatprep.subr.mxu0 0.0
  %5333 = vmatpush1.msra.mxu0 0.0
  %5334 = vmatprep.subr.mxu0 0.0
  %5335 = vmatpush1.msra.mxu0 0.0
  %5336 = vmatprep.subr.mxu0 0.0
  %5337 = vmatpush1.msra.mxu0 0.0
  %5338 = vmatprep.subr.mxu0 0.0
  %5339 = vmatpush1.msra.mxu0 0.0
  %5340 = vmatprep.subr.mxu0 0.0
  %5341 = vmatpush1.msra.mxu0 0.0
  %5342 = vmatprep.subr.mxu0 0.0
  %5343 = vmatpush1.msra.mxu0 0.0
  %5344 = vmatprep.subr.mxu0 0.0
  %5345 = vmatpush1.msra.mxu0 0.0
  %5346 = vmatprep.subr.mxu0 0.0
  %5347 = vmatpush1.msra.mxu0 0.0
  %5348 = vmatprep.subr.mxu0 0.0
  %5349 = vmatpush1.msra.mxu0 0.0
  %5350 = vmatprep.subr.mxu0 0.0
  %5351 = vmatpush1.msra.mxu0 0.0
  %5352 = vmatprep.subr.mxu0 0.0
  %5353 = vmatpush1.msra.mxu0 0.0
  %5354 = vmatprep.subr.mxu0 0.0
  %5355 = vmatpush1.msra.mxu0 0.0
  %5356 = vmatprep.subr.mxu0 0.0
  %5357 = vmatpush1.msra.mxu0 0.0
  %5358 = vmatprep.subr.mxu0 0.0
  %5359 = vmatpush1.msra.mxu0 0.0
  %5360 = vmatprep.subr.mxu0 0.0
  %5361 = vmatpush1.msra.mxu0 0.0
  %5362 = vmatprep.subr.mxu0 0.0
  %5363 = vmatpush1.msra.mxu0 0.0
  %5364 = vmatprep.subr.mxu0 0.0
  %5365 = vmatpush1.msra.mxu0 0.0
  %5366 = vmatprep.subr.mxu0 0.0
  %5367 = vmatpush1.msra.mxu0 0.0
  %5368 = vmatprep.subr.mxu0 0.0
  %5369 = vmatpush1.msra.mxu0 0.0
  %5370 = vmatprep.mubr.f32.mxu0 0.0
  %5371 = vmatmul.mubr.f32.gmra.mrb[0].mxu0 %v5304
  %v5372 = vpop.f32.mrb[0].mxu0
  %v5373 = vadd.f32 0.0, %v5372
  %v5374 = vpop.f32.mrb[0].mxu0
  %5375 = vdwg.mxu0
  %5376 = vrot.lane.b32.xlu0 %v2972, 56
  %v5377 = vpop.permute.xlu0 %5376
  %v5380 = vsel %vm306, %v4460, 0
  %5382 = vmatprep.subr.mxu0 0.0
  %5383 = vmatpush1.msra.mxu0 %v5377
  %5384 = vmatprep.subr.mxu0 0.0
  %5385 = vmatpush1.msra.mxu0 0.0
  %5386 = vmatprep.subr.mxu0 0.0
  %5387 = vmatpush1.msra.mxu0 0.0
  %5388 = vmatprep.subr.mxu0 0.0
  %5389 = vmatpush1.msra.mxu0 0.0
  %5390 = vmatprep.subr.mxu0 0.0
  %5391 = vmatpush1.msra.mxu0 0.0
  %5392 = vmatprep.subr.mxu0 0.0
  %5393 = vmatpush1.msra.mxu0 0.0
  %5394 = vmatprep.subr.mxu0 0.0
  %5395 = vmatpush1.msra.mxu0 0.0
  %5396 = vmatprep.subr.mxu0 0.0
  %5397 = vmatpush1.msra.mxu0 0.0
  %5398 = vmatprep.subr.mxu0 0.0
  %5399 = vmatpush1.msra.mxu0 0.0
  %5400 = vmatprep.subr.mxu0 0.0
  %5401 = vmatpush1.msra.mxu0 0.0
  %5402 = vmatprep.subr.mxu0 0.0
  %5403 = vmatpush1.msra.mxu0 0.0
  %5404 = vmatprep.subr.mxu0 0.0
  %5405 = vmatpush1.msra.mxu0 0.0
  %5406 = vmatprep.subr.mxu0 0.0
  %5407 = vmatpush1.msra.mxu0 0.0
  %5408 = vmatprep.subr.mxu0 0.0
  %5409 = vmatpush1.msra.mxu0 0.0
  %5410 = vmatprep.subr.mxu0 0.0
  %5411 = vmatpush1.msra.mxu0 0.0
  %5412 = vmatprep.subr.mxu0 0.0
  %5413 = vmatpush1.msra.mxu0 0.0
  %5414 = vmatprep.subr.mxu0 0.0
  %5415 = vmatpush1.msra.mxu0 0.0
  %5416 = vmatprep.subr.mxu0 0.0
  %5417 = vmatpush1.msra.mxu0 0.0
  %5418 = vmatprep.subr.mxu0 0.0
  %5419 = vmatpush1.msra.mxu0 0.0
  %5420 = vmatprep.subr.mxu0 0.0
  %5421 = vmatpush1.msra.mxu0 0.0
  %5422 = vmatprep.subr.mxu0 0.0
  %5423 = vmatpush1.msra.mxu0 0.0
  %5424 = vmatprep.subr.mxu0 0.0
  %5425 = vmatpush1.msra.mxu0 0.0
  %5426 = vmatprep.subr.mxu0 0.0
  %5427 = vmatpush1.msra.mxu0 0.0
  %5428 = vmatprep.subr.mxu0 0.0
  %5429 = vmatpush1.msra.mxu0 0.0
  %5430 = vmatprep.subr.mxu0 0.0
  %5431 = vmatpush1.msra.mxu0 0.0
  %5432 = vmatprep.subr.mxu0 0.0
  %5433 = vmatpush1.msra.mxu0 0.0
  %5434 = vmatprep.subr.mxu0 0.0
  %5435 = vmatpush1.msra.mxu0 0.0
  %5436 = vmatprep.subr.mxu0 0.0
  %5437 = vmatpush1.msra.mxu0 0.0
  %5438 = vmatprep.subr.mxu0 0.0
  %5439 = vmatpush1.msra.mxu0 0.0
  %5440 = vmatprep.subr.mxu0 0.0
  %5441 = vmatpush1.msra.mxu0 0.0
  %5442 = vmatprep.subr.mxu0 0.0
  %5443 = vmatpush1.msra.mxu0 0.0
  %5444 = vmatprep.subr.mxu0 0.0
  %5445 = vmatpush1.msra.mxu0 0.0
  %5446 = vmatprep.mubr.f32.mxu0 0.0
  %5447 = vmatmul.mubr.f32.gmra.mrb[0].mxu0 %v5380
  %v5448 = vpop.f32.mrb[0].mxu0
  %v5449 = vadd.f32 0.0, %v5448
  %v5450 = vpop.f32.mrb[0].mxu0
  %5451 = vdwg.mxu0
  %5452 = vrot.lane.b32.xlu0 %v2973, 56
  %v5453 = vpop.permute.xlu0 %5452
  %v5456 = vsel %vm306, %v4461, 0
  %5458 = vmatprep.subr.mxu0 0.0
  %5459 = vmatpush1.msra.mxu0 %v5453
  %5460 = vmatprep.subr.mxu0 0.0
  %5461 = vmatpush1.msra.mxu0 0.0
  %5462 = vmatprep.subr.mxu0 0.0
  %5463 = vmatpush1.msra.mxu0 0.0
  %5464 = vmatprep.subr.mxu0 0.0
  %5465 = vmatpush1.msra.mxu0 0.0
  %5466 = vmatprep.subr.mxu0 0.0
  %5467 = vmatpush1.msra.mxu0 0.0
  %5468 = vmatprep.subr.mxu0 0.0
  %5469 = vmatpush1.msra.mxu0 0.0
  %5470 = vmatprep.subr.mxu0 0.0
  %5471 = vmatpush1.msra.mxu0 0.0
  %5472 = vmatprep.subr.mxu0 0.0
  %5473 = vmatpush1.msra.mxu0 0.0
  %5474 = vmatprep.subr.mxu0 0.0
  %5475 = vmatpush1.msra.mxu0 0.0
  %5476 = vmatprep.subr.mxu0 0.0
  %5477 = vmatpush1.msra.mxu0 0.0
  %5478 = vmatprep.subr.mxu0 0.0
  %5479 = vmatpush1.msra.mxu0 0.0
  %5480 = vmatprep.subr.mxu0 0.0
  %5481 = vmatpush1.msra.mxu0 0.0
  %5482 = vmatprep.subr.mxu0 0.0
  %5483 = vmatpush1.msra.mxu0 0.0
  %5484 = vmatprep.subr.mxu0 0.0
  %5485 = vmatpush1.msra.mxu0 0.0
  %5486 = vmatprep.subr.mxu0 0.0
  %5487 = vmatpush1.msra.mxu0 0.0
  %5488 = vmatprep.subr.mxu0 0.0
  %5489 = vmatpush1.msra.mxu0 0.0
  %5490 = vmatprep.subr.mxu0 0.0
  %5491 = vmatpush1.msra.mxu0 0.0
  %5492 = vmatprep.subr.mxu0 0.0
  %5493 = vmatpush1.msra.mxu0 0.0
  %5494 = vmatprep.subr.mxu0 0.0
  %5495 = vmatpush1.msra.mxu0 0.0
  %5496 = vmatprep.subr.mxu0 0.0
  %5497 = vmatpush1.msra.mxu0 0.0
  %5498 = vmatprep.subr.mxu0 0.0
  %5499 = vmatpush1.msra.mxu0 0.0
  %5500 = vmatprep.subr.mxu0 0.0
  %5501 = vmatpush1.msra.mxu0 0.0
  %5502 = vmatprep.subr.mxu0 0.0
  %5503 = vmatpush1.msra.mxu0 0.0
  %5504 = vmatprep.subr.mxu0 0.0
  %5505 = vmatpush1.msra.mxu0 0.0
  %5506 = vmatprep.subr.mxu0 0.0
  %5507 = vmatpush1.msra.mxu0 0.0
  %5508 = vmatprep.subr.mxu0 0.0
  %5509 = vmatpush1.msra.mxu0 0.0
  %5510 = vmatprep.subr.mxu0 0.0
  %5511 = vmatpush1.msra.mxu0 0.0
  %5512 = vmatprep.subr.mxu0 0.0
  %5513 = vmatpush1.msra.mxu0 0.0
  %5514 = vmatprep.subr.mxu0 0.0
  %5515 = vmatpush1.msra.mxu0 0.0
  %5516 = vmatprep.subr.mxu0 0.0
  %5517 = vmatpush1.msra.mxu0 0.0
  %5518 = vmatprep.subr.mxu0 0.0
  %5519 = vmatpush1.msra.mxu0 0.0
  %5520 = vmatprep.subr.mxu0 0.0
  %5521 = vmatpush1.msra.mxu0 0.0
  %5522 = vmatprep.mubr.f32.mxu0 0.0
  %5523 = vmatmul.mubr.f32.gmra.mrb[0].mxu0 %v5456
  %v5524 = vpop.f32.mrb[0].mxu0
  %v5525 = vadd.f32 0.0, %v5524
  %v5526 = vpop.f32.mrb[0].mxu0
  %5527 = vdwg.mxu0
  %5528 = vrot.lane.b32.xlu0 %v2974, 56
  %v5529 = vpop.permute.xlu0 %5528
  %v5532 = vsel %vm306, %v4462, 0
  %5534 = vmatprep.subr.mxu0 0.0
  %5535 = vmatpush1.msra.mxu0 %v5529
  %5536 = vmatprep.subr.mxu0 0.0
  %5537 = vmatpush1.msra.mxu0 0.0
  %5538 = vmatprep.subr.mxu0 0.0
  %5539 = vmatpush1.msra.mxu0 0.0
  %5540 = vmatprep.subr.mxu0 0.0
  %5541 = vmatpush1.msra.mxu0 0.0
  %5542 = vmatprep.subr.mxu0 0.0
  %5543 = vmatpush1.msra.mxu0 0.0
  %5544 = vmatprep.subr.mxu0 0.0
  %5545 = vmatpush1.msra.mxu0 0.0
  %5546 = vmatprep.subr.mxu0 0.0
  %5547 = vmatpush1.msra.mxu0 0.0
  %5548 = vmatprep.subr.mxu0 0.0
  %5549 = vmatpush1.msra.mxu0 0.0
  %5550 = vmatprep.subr.mxu0 0.0
  %5551 = vmatpush1.msra.mxu0 0.0
  %5552 = vmatprep.subr.mxu0 0.0
  %5553 = vmatpush1.msra.mxu0 0.0
  %5554 = vmatprep.subr.mxu0 0.0
  %5555 = vmatpush1.msra.mxu0 0.0
  %5556 = vmatprep.subr.mxu0 0.0
  %5557 = vmatpush1.msra.mxu0 0.0
  %5558 = vmatprep.subr.mxu0 0.0
  %5559 = vmatpush1.msra.mxu0 0.0
  %5560 = vmatprep.subr.mxu0 0.0
  %5561 = vmatpush1.msra.mxu0 0.0
  %5562 = vmatprep.subr.mxu0 0.0
  %5563 = vmatpush1.msra.mxu0 0.0
  %5564 = vmatprep.subr.mxu0 0.0
  %5565 = vmatpush1.msra.mxu0 0.0
  %5566 = vmatprep.subr.mxu0 0.0
  %5567 = vmatpush1.msra.mxu0 0.0
  %5568 = vmatprep.subr.mxu0 0.0
  %5569 = vmatpush1.msra.mxu0 0.0
  %5570 = vmatprep.subr.mxu0 0.0
  %5571 = vmatpush1.msra.mxu0 0.0
  %5572 = vmatprep.subr.mxu0 0.0
  %5573 = vmatpush1.msra.mxu0 0.0
  %5574 = vmatprep.subr.mxu0 0.0
  %5575 = vmatpush1.msra.mxu0 0.0
  %5576 = vmatprep.subr.mxu0 0.0
  %5577 = vmatpush1.msra.mxu0 0.0
  %5578 = vmatprep.subr.mxu0 0.0
  %5579 = vmatpush1.msra.mxu0 0.0
  %5580 = vmatprep.subr.mxu0 0.0
  %5581 = vmatpush1.msra.mxu0 0.0
  %5582 = vmatprep.subr.mxu0 0.0
  %5583 = vmatpush1.msra.mxu0 0.0
  %5584 = vmatprep.subr.mxu0 0.0
  %5585 = vmatpush1.msra.mxu0 0.0
  %5586 = vmatprep.subr.mxu0 0.0
  %5587 = vmatpush1.msra.mxu0 0.0
  %5588 = vmatprep.subr.mxu0 0.0
  %5589 = vmatpush1.msra.mxu0 0.0
  %5590 = vmatprep.subr.mxu0 0.0
  %5591 = vmatpush1.msra.mxu0 0.0
  %5592 = vmatprep.subr.mxu0 0.0
  %5593 = vmatpush1.msra.mxu0 0.0
  %5594 = vmatprep.subr.mxu0 0.0
  %5595 = vmatpush1.msra.mxu0 0.0
  %5596 = vmatprep.subr.mxu0 0.0
  %5597 = vmatpush1.msra.mxu0 0.0
  %5598 = vmatprep.mubr.f32.mxu0 0.0
  %5599 = vmatmul.mubr.f32.gmra.mrb[0].mxu0 %v5532
  %v5600 = vpop.f32.mrb[0].mxu0
  %v5601 = vadd.f32 0.0, %v5600
  %v5602 = vpop.f32.mrb[0].mxu0
  %5603 = vdwg.mxu0
  %5604 = vrot.lane.b32.xlu0 %v2975, 56
  %v5605 = vpop.permute.xlu0 %5604
  %v5608 = vsel %vm306, %v4463, 0
  %5610 = vmatprep.subr.mxu0 0.0
  %5611 = vmatpush1.msra.mxu0 %v5605
  %5612 = vmatprep.subr.mxu0 0.0
  %5613 = vmatpush1.msra.mxu0 0.0
  %5614 = vmatprep.subr.mxu0 0.0
  %5615 = vmatpush1.msra.mxu0 0.0
  %5616 = vmatprep.subr.mxu0 0.0
  %5617 = vmatpush1.msra.mxu0 0.0
  %5618 = vmatprep.subr.mxu0 0.0
  %5619 = vmatpush1.msra.mxu0 0.0
  %5620 = vmatprep.subr.mxu0 0.0
  %5621 = vmatpush1.msra.mxu0 0.0
  %5622 = vmatprep.subr.mxu0 0.0
  %5623 = vmatpush1.msra.mxu0 0.0
  %5624 = vmatprep.subr.mxu0 0.0
  %5625 = vmatpush1.msra.mxu0 0.0
  %5626 = vmatprep.subr.mxu0 0.0
  %5627 = vmatpush1.msra.mxu0 0.0
  %5628 = vmatprep.subr.mxu0 0.0
  %5629 = vmatpush1.msra.mxu0 0.0
  %5630 = vmatprep.subr.mxu0 0.0
  %5631 = vmatpush1.msra.mxu0 0.0
  %5632 = vmatprep.subr.mxu0 0.0
  %5633 = vmatpush1.msra.mxu0 0.0
  %5634 = vmatprep.subr.mxu0 0.0
  %5635 = vmatpush1.msra.mxu0 0.0
  %5636 = vmatprep.subr.mxu0 0.0
  %5637 = vmatpush1.msra.mxu0 0.0
  %5638 = vmatprep.subr.mxu0 0.0
  %5639 = vmatpush1.msra.mxu0 0.0
  %5640 = vmatprep.subr.mxu0 0.0
  %5641 = vmatpush1.msra.mxu0 0.0
  %5642 = vmatprep.subr.mxu0 0.0
  %5643 = vmatpush1.msra.mxu0 0.0
  %5644 = vmatprep.subr.mxu0 0.0
  %5645 = vmatpush1.msra.mxu0 0.0
  %5646 = vmatprep.subr.mxu0 0.0
  %5647 = vmatpush1.msra.mxu0 0.0
  %5648 = vmatprep.subr.mxu0 0.0
  %5649 = vmatpush1.msra.mxu0 0.0
  %5650 = vmatprep.subr.mxu0 0.0
  %5651 = vmatpush1.msra.mxu0 0.0
  %5652 = vmatprep.subr.mxu0 0.0
  %5653 = vmatpush1.msra.mxu0 0.0
  %5654 = vmatprep.subr.mxu0 0.0
  %5655 = vmatpush1.msra.mxu0 0.0
  %5656 = vmatprep.subr.mxu0 0.0
  %5657 = vmatpush1.msra.mxu0 0.0
  %5658 = vmatprep.subr.mxu0 0.0
  %5659 = vmatpush1.msra.mxu0 0.0
  %5660 = vmatprep.subr.mxu0 0.0
  %5661 = vmatpush1.msra.mxu0 0.0
  %5662 = vmatprep.subr.mxu0 0.0
  %5663 = vmatpush1.msra.mxu0 0.0
  %5664 = vmatprep.subr.mxu0 0.0
  %5665 = vmatpush1.msra.mxu0 0.0
  %5666 = vmatprep.subr.mxu0 0.0
  %5667 = vmatpush1.msra.mxu0 0.0
  %5668 = vmatprep.subr.mxu0 0.0
  %5669 = vmatpush1.msra.mxu0 0.0
  %5670 = vmatprep.subr.mxu0 0.0
  %5671 = vmatpush1.msra.mxu0 0.0
  %5672 = vmatprep.subr.mxu0 0.0
  %5673 = vmatpush1.msra.mxu0 0.0
  %5674 = vmatprep.mubr.f32.mxu0 0.0
  %5675 = vmatmul.mubr.f32.gmra.mrb[0].mxu0 %v5608
  %v5676 = vpop.f32.mrb[0].mxu0
  %v5677 = vadd.f32 0.0, %v5676
  %v5678 = vpop.f32.mrb[0].mxu0
  %5679 = vdwg.mxu0
  %5696 = vrot.lane.b32.xlu0 %v4537, 8
  %v5697 = vpop.permute.xlu0 %5696
  %5698 = vrot.lane.b32.xlu0 %v4613, 8
  %v5699 = vpop.permute.xlu0 %5698
  %5700 = vrot.lane.b32.xlu0 %v4689, 8
  %v5701 = vpop.permute.xlu0 %5700
  %5702 = vrot.lane.b32.xlu0 %v4765, 8
  %v5703 = vpop.permute.xlu0 %5702
  %5704 = vrot.lane.b32.xlu0 %v4841, 8
  %v5705 = vpop.permute.xlu0 %5704
  %5706 = vrot.lane.b32.xlu0 %v4917, 8
  %v5707 = vpop.permute.xlu0 %5706
  %5708 = vrot.lane.b32.xlu0 %v4993, 8
  %v5709 = vpop.permute.xlu0 %5708
  %5710 = vrot.lane.b32.xlu0 %v5069, 8
  %v5711 = vpop.permute.xlu0 %5710
  %5712 = vrot.lane.b32.xlu0 %v5145, 8
  %v5713 = vpop.permute.xlu0 %5712
  %5714 = vrot.lane.b32.xlu0 %v5221, 8
  %v5715 = vpop.permute.xlu0 %5714
  %5716 = vrot.lane.b32.xlu0 %v5297, 8
  %v5717 = vpop.permute.xlu0 %5716
  %5718 = vrot.lane.b32.xlu0 %v5373, 8
  %v5719 = vpop.permute.xlu0 %5718
  %5720 = vrot.lane.b32.xlu0 %v5449, 8
  %v5721 = vpop.permute.xlu0 %5720
  %5722 = vrot.lane.b32.xlu0 %v5525, 8
  %v5723 = vpop.permute.xlu0 %5722
  %5724 = vrot.lane.b32.xlu0 %v5601, 8
  %v5725 = vpop.permute.xlu0 %5724
  %5726 = vrot.lane.b32.xlu0 %v5677, 8
  %v5727 = vpop.permute.xlu0 %5726
  %vm5744 = vcmask 130112
  %5745 = vst.msk [vmem:[%s4] sm:$0xff] %vm5744, %v5697
  %5746 = vst.msk [vmem:[%s4 + $0x8] sm:$0xff] %vm5744, %v5699
  %5747 = vst.msk [vmem:[%s4 + $0x10] sm:$0xff] %vm5744, %v5701
  %5748 = vst.msk [vmem:[%s4 + $0x18] sm:$0xff] %vm5744, %v5703
  %5749 = vst.msk [vmem:[%s4 + $0x20] sm:$0xff] %vm5744, %v5705
  %5750 = vst.msk [vmem:[%s4 + $0x28] sm:$0xff] %vm5744, %v5707
  %5751 = vst.msk [vmem:[%s4 + $0x30] sm:$0xff] %vm5744, %v5709
  %5752 = vst.msk [vmem:[%s4 + $0x38] sm:$0xff] %vm5744, %v5711
  %5753 = vst.msk [vmem:[%s4 + $0x40] sm:$0xff] %vm5744, %v5713
  %5754 = vst.msk [vmem:[%s4 + $0x48] sm:$0xff] %vm5744, %v5715
  %5755 = vst.msk [vmem:[%s4 + $0x50] sm:$0xff] %vm5744, %v5717
  %5756 = vst.msk [vmem:[%s4 + $0x58] sm:$0xff] %vm5744, %v5719
  %5757 = vst.msk [vmem:[%s4 + $0x60] sm:$0xff] %vm5744, %v5721
  %5758 = vst.msk [vmem:[%s4 + $0x68] sm:$0xff] %vm5744, %v5723
  %5759 = vst.msk [vmem:[%s4 + $0x70] sm:$0xff] %vm5744, %v5725
  %5760 = vst.msk [vmem:[%s4 + $0x78] sm:$0xff] %vm5744, %v5727
  %v5761 = vld [vmem:[#allocation2] sm:$0xff]
  %v5762 = vld [vmem:[#allocation2 + $0x8] sm:$0xff]
  %v5763 = vld [vmem:[#allocation2 + $0x10] sm:$0xff]
  %v5764 = vld [vmem:[#allocation2 + $0x18] sm:$0xff]
  %v5765 = vld [vmem:[#allocation2 + $0x20] sm:$0xff]
  %v5766 = vld [vmem:[#allocation2 + $0x28] sm:$0xff]
  %v5767 = vld [vmem:[#allocation2 + $0x30] sm:$0xff]
  %v5768 = vld [vmem:[#allocation2 + $0x38] sm:$0xff]
  %v5769 = vld [vmem:[#allocation2 + $0x40] sm:$0xff]
  %v5770 = vld [vmem:[#allocation2 + $0x48] sm:$0xff]
  %v5771 = vld [vmem:[#allocation2 + $0x50] sm:$0xff]
  %v5772 = vld [vmem:[#allocation2 + $0x58] sm:$0xff]
  %v5773 = vld [vmem:[#allocation2 + $0x60] sm:$0xff]
  %v5774 = vld [vmem:[#allocation2 + $0x68] sm:$0xff]
  %v5775 = vld [vmem:[#allocation2 + $0x70] sm:$0xff]
  %v5776 = vld [vmem:[#allocation2 + $0x78] sm:$0xff]
  %v5777 = vmul.f32 %v5761, 0.35355338
  %v5778 = vmul.f32 %v5762, 0.35355338
  %v5779 = vmul.f32 %v5763, 0.35355338
  %v5780 = vmul.f32 %v5764, 0.35355338
  %v5781 = vmul.f32 %v5765, 0.35355338
  %v5782 = vmul.f32 %v5766, 0.35355338
  %v5783 = vmul.f32 %v5767, 0.35355338
  %v5784 = vmul.f32 %v5768, 0.35355338
  %v5785 = vmul.f32 %v5769, 0.35355338
  %v5786 = vmul.f32 %v5770, 0.35355338
  %v5787 = vmul.f32 %v5771, 0.35355338
  %v5788 = vmul.f32 %v5772, 0.35355338
  %v5789 = vmul.f32 %v5773, 0.35355338
  %v5790 = vmul.f32 %v5774, 0.35355338
  %v5791 = vmul.f32 %v5775, 0.35355338
  %v5792 = vmul.f32 %v5776, 0.35355338
  %v5793 = vld [vmem:[%s1] sm:$0xff]
  %v5794 = vld [vmem:[%s1 + $0x8] sm:$0xff]
  %v5795 = vld [vmem:[%s1 + $0x10] sm:$0xff]
  %v5796 = vld [vmem:[%s1 + $0x18] sm:$0xff]
  %v5797 = vld [vmem:[%s1 + $0x20] sm:$0xff]
  %v5798 = vld [vmem:[%s1 + $0x28] sm:$0xff]
  %v5799 = vld [vmem:[%s1 + $0x30] sm:$0xff]
  %v5800 = vld [vmem:[%s1 + $0x38] sm:$0xff]
  %v5801 = vld [vmem:[%s1 + $0x40] sm:$0xff]
  %v5802 = vld [vmem:[%s1 + $0x48] sm:$0xff]
  %v5803 = vld [vmem:[%s1 + $0x50] sm:$0xff]
  %v5804 = vld [vmem:[%s1 + $0x58] sm:$0xff]
  %v5805 = vld [vmem:[%s1 + $0x60] sm:$0xff]
  %v5806 = vld [vmem:[%s1 + $0x68] sm:$0xff]
  %v5807 = vld [vmem:[%s1 + $0x70] sm:$0xff]
  %v5808 = vld [vmem:[%s1 + $0x78] sm:$0xff]
  %5810 = vrot.lane.b32.xlu0 %v5777, 112
  %v5811 = vpop.permute.xlu0 %5810
  %5813 = vrot.lane.b32.xlu0 %v5761, 80
  %v5814 = vpop.permute.xlu0 %5813
  %v5815 = vsel %vm306, %v5811, 0
  %v5817 = vsel %vm306, %v5814, 0
  %5819 = vmatprep.subr.mxu0 0.0
  %5820 = vmatpush1.xpose.msra.mxu0 %v5817
  %5821 = vmatprep.subr.mxu0 0.0
  %5822 = vmatpush1.xpose.msra.mxu0 0.0
  %5823 = vmatprep.subr.mxu0 0.0
  %5824 = vmatpush1.xpose.msra.mxu0 0.0
  %5825 = vmatprep.subr.mxu0 0.0
  %5826 = vmatpush1.xpose.msra.mxu0 0.0
  %5827 = vmatprep.subr.mxu0 0.0
  %5828 = vmatpush1.xpose.msra.mxu0 0.0
  %5829 = vmatprep.subr.mxu0 0.0
  %5830 = vmatpush1.xpose.msra.mxu0 0.0
  %5831 = vmatprep.subr.mxu0 0.0
  %5832 = vmatpush1.xpose.msra.mxu0 0.0
  %5833 = vmatprep.subr.mxu0 0.0
  %5834 = vmatpush1.xpose.msra.mxu0 0.0
  %5835 = vmatprep.subr.mxu0 0.0
  %5836 = vmatpush1.xpose.msra.mxu0 0.0
  %5837 = vmatprep.subr.mxu0 0.0
  %5838 = vmatpush1.xpose.msra.mxu0 0.0
  %5839 = vmatprep.subr.mxu0 0.0
  %5840 = vmatpush1.xpose.msra.mxu0 0.0
  %5841 = vmatprep.subr.mxu0 0.0
  %5842 = vmatpush1.xpose.msra.mxu0 0.0
  %5843 = vmatprep.subr.mxu0 0.0
  %5844 = vmatpush1.xpose.msra.mxu0 0.0
  %5845 = vmatprep.subr.mxu0 0.0
  %5846 = vmatpush1.xpose.msra.mxu0 0.0
  %5847 = vmatprep.subr.mxu0 0.0
  %5848 = vmatpush1.xpose.msra.mxu0 0.0
  %5849 = vmatprep.subr.mxu0 0.0
  %5850 = vmatpush1.xpose.msra.mxu0 0.0
  %5851 = vmatprep.subr.mxu0 0.0
  %5852 = vmatpush1.xpose.msra.mxu0 0.0
  %5853 = vmatprep.subr.mxu0 0.0
  %5854 = vmatpush1.xpose.msra.mxu0 0.0
  %5855 = vmatprep.subr.mxu0 0.0
  %5856 = vmatpush1.xpose.msra.mxu0 0.0
  %5857 = vmatprep.subr.mxu0 0.0
  %5858 = vmatpush1.xpose.msra.mxu0 0.0
  %5859 = vmatprep.subr.mxu0 0.0
  %5860 = vmatpush1.xpose.msra.mxu0 0.0
  %5861 = vmatprep.subr.mxu0 0.0
  %5862 = vmatpush1.xpose.msra.mxu0 0.0
  %5863 = vmatprep.subr.mxu0 0.0
  %5864 = vmatpush1.xpose.msra.mxu0 0.0
  %5865 = vmatprep.subr.mxu0 0.0
  %5866 = vmatpush1.xpose.msra.mxu0 0.0
  %5867 = vmatprep.subr.mxu0 0.0
  %5868 = vmatpush1.xpose.msra.mxu0 0.0
  %5869 = vmatprep.subr.mxu0 0.0
  %5870 = vmatpush1.xpose.msra.mxu0 0.0
  %5871 = vmatprep.subr.mxu0 0.0
  %5872 = vmatpush1.xpose.msra.mxu0 0.0
  %5873 = vmatprep.subr.mxu0 0.0
  %5874 = vmatpush1.xpose.msra.mxu0 0.0
  %5875 = vmatprep.subr.mxu0 0.0
  %5876 = vmatpush1.xpose.msra.mxu0 0.0
  %5877 = vmatprep.subr.mxu0 0.0
  %5878 = vmatpush1.xpose.msra.mxu0 0.0
  %5879 = vmatprep.subr.mxu0 0.0
  %5880 = vmatpush1.xpose.msra.mxu0 0.0
  %5881 = vmatprep.subr.mxu0 0.0
  %5882 = vmatpush1.xpose.msra.mxu0 0.0
  %5883 = vmatprep.mubr.f32.mxu0 0.0
  %5884 = vmatmul.mubr.f32.gmra.mrb[0].mxu0 %v5815
  %v5885 = vpop.f32.mrb[0].mxu0
  %v5886 = vadd.f32 %v5793, %v5885
  %v5887 = vpop.f32.mrb[0].mxu0
  %5888 = vdwg.mxu0
  %5890 = vrot.lane.b32.xlu0 %v5778, 112
  %v5891 = vpop.permute.xlu0 %5890
  %5893 = vrot.lane.b32.xlu0 %v5762, 80
  %v5894 = vpop.permute.xlu0 %5893
  %v5895 = vsel %vm306, %v5891, 0
  %v5897 = vsel %vm306, %v5894, 0
  %5899 = vmatprep.subr.mxu0 0.0
  %5900 = vmatpush1.xpose.msra.mxu0 %v5897
  %5901 = vmatprep.subr.mxu0 0.0
  %5902 = vmatpush1.xpose.msra.mxu0 0.0
  %5903 = vmatprep.subr.mxu0 0.0
  %5904 = vmatpush1.xpose.msra.mxu0 0.0
  %5905 = vmatprep.subr.mxu0 0.0
  %5906 = vmatpush1.xpose.msra.mxu0 0.0
  %5907 = vmatprep.subr.mxu0 0.0
  %5908 = vmatpush1.xpose.msra.mxu0 0.0
  %5909 = vmatprep.subr.mxu0 0.0
  %5910 = vmatpush1.xpose.msra.mxu0 0.0
  %5911 = vmatprep.subr.mxu0 0.0
  %5912 = vmatpush1.xpose.msra.mxu0 0.0
  %5913 = vmatprep.subr.mxu0 0.0
  %5914 = vmatpush1.xpose.msra.mxu0 0.0
  %5915 = vmatprep.subr.mxu0 0.0
  %5916 = vmatpush1.xpose.msra.mxu0 0.0
  %5917 = vmatprep.subr.mxu0 0.0
  %5918 = vmatpush1.xpose.msra.mxu0 0.0
  %5919 = vmatprep.subr.mxu0 0.0
  %5920 = vmatpush1.xpose.msra.mxu0 0.0
  %5921 = vmatprep.subr.mxu0 0.0
  %5922 = vmatpush1.xpose.msra.mxu0 0.0
  %5923 = vmatprep.subr.mxu0 0.0
  %5924 = vmatpush1.xpose.msra.mxu0 0.0
  %5925 = vmatprep.subr.mxu0 0.0
  %5926 = vmatpush1.xpose.msra.mxu0 0.0
  %5927 = vmatprep.subr.mxu0 0.0
  %5928 = vmatpush1.xpose.msra.mxu0 0.0
  %5929 = vmatprep.subr.mxu0 0.0
  %5930 = vmatpush1.xpose.msra.mxu0 0.0
  %5931 = vmatprep.subr.mxu0 0.0
  %5932 = vmatpush1.xpose.msra.mxu0 0.0
  %5933 = vmatprep.subr.mxu0 0.0
  %5934 = vmatpush1.xpose.msra.mxu0 0.0
  %5935 = vmatprep.subr.mxu0 0.0
  %5936 = vmatpush1.xpose.msra.mxu0 0.0
  %5937 = vmatprep.subr.mxu0 0.0
  %5938 = vmatpush1.xpose.msra.mxu0 0.0
  %5939 = vmatprep.subr.mxu0 0.0
  %5940 = vmatpush1.xpose.msra.mxu0 0.0
  %5941 = vmatprep.subr.mxu0 0.0
  %5942 = vmatpush1.xpose.msra.mxu0 0.0
  %5943 = vmatprep.subr.mxu0 0.0
  %5944 = vmatpush1.xpose.msra.mxu0 0.0
  %5945 = vmatprep.subr.mxu0 0.0
  %5946 = vmatpush1.xpose.msra.mxu0 0.0
  %5947 = vmatprep.subr.mxu0 0.0
  %5948 = vmatpush1.xpose.msra.mxu0 0.0
  %5949 = vmatprep.subr.mxu0 0.0
  %5950 = vmatpush1.xpose.msra.mxu0 0.0
  %5951 = vmatprep.subr.mxu0 0.0
  %5952 = vmatpush1.xpose.msra.mxu0 0.0
  %5953 = vmatprep.subr.mxu0 0.0
  %5954 = vmatpush1.xpose.msra.mxu0 0.0
  %5955 = vmatprep.subr.mxu0 0.0
  %5956 = vmatpush1.xpose.msra.mxu0 0.0
  %5957 = vmatprep.subr.mxu0 0.0
  %5958 = vmatpush1.xpose.msra.mxu0 0.0
  %5959 = vmatprep.subr.mxu0 0.0
  %5960 = vmatpush1.xpose.msra.mxu0 0.0
  %5961 = vmatprep.subr.mxu0 0.0
  %5962 = vmatpush1.xpose.msra.mxu0 0.0
  %5963 = vmatprep.mubr.f32.mxu0 0.0
  %5964 = vmatmul.mubr.f32.gmra.mrb[0].mxu0 %v5895
  %v5965 = vpop.f32.mrb[0].mxu0
  %v5966 = vadd.f32 %v5794, %v5965
  %v5967 = vpop.f32.mrb[0].mxu0
  %5968 = vdwg.mxu0
  %5970 = vrot.lane.b32.xlu0 %v5779, 112
  %v5971 = vpop.permute.xlu0 %5970
  %5973 = vrot.lane.b32.xlu0 %v5763, 80
  %v5974 = vpop.permute.xlu0 %5973
  %v5975 = vsel %vm306, %v5971, 0
  %v5977 = vsel %vm306, %v5974, 0
  %5979 = vmatprep.subr.mxu0 0.0
  %5980 = vmatpush1.xpose.msra.mxu0 %v5977
  %5981 = vmatprep.subr.mxu0 0.0
  %5982 = vmatpush1.xpose.msra.mxu0 0.0
  %5983 = vmatprep.subr.mxu0 0.0
  %5984 = vmatpush1.xpose.msra.mxu0 0.0
  %5985 = vmatprep.subr.mxu0 0.0
  %5986 = vmatpush1.xpose.msra.mxu0 0.0
  %5987 = vmatprep.subr.mxu0 0.0
  %5988 = vmatpush1.xpose.msra.mxu0 0.0
  %5989 = vmatprep.subr.mxu0 0.0
  %5990 = vmatpush1.xpose.msra.mxu0 0.0
  %5991 = vmatprep.subr.mxu0 0.0
  %5992 = vmatpush1.xpose.msra.mxu0 0.0
  %5993 = vmatprep.subr.mxu0 0.0
  %5994 = vmatpush1.xpose.msra.mxu0 0.0
  %5995 = vmatprep.subr.mxu0 0.0
  %5996 = vmatpush1.xpose.msra.mxu0 0.0
  %5997 = vmatprep.subr.mxu0 0.0
  %5998 = vmatpush1.xpose.msra.mxu0 0.0
  %5999 = vmatprep.subr.mxu0 0.0
  %6000 = vmatpush1.xpose.msra.mxu0 0.0
  %6001 = vmatprep.subr.mxu0 0.0
  %6002 = vmatpush1.xpose.msra.mxu0 0.0
  %6003 = vmatprep.subr.mxu0 0.0
  %6004 = vmatpush1.xpose.msra.mxu0 0.0
  %6005 = vmatprep.subr.mxu0 0.0
  %6006 = vmatpush1.xpose.msra.mxu0 0.0
  %6007 = vmatprep.subr.mxu0 0.0
  %6008 = vmatpush1.xpose.msra.mxu0 0.0
  %6009 = vmatprep.subr.mxu0 0.0
  %6010 = vmatpush1.xpose.msra.mxu0 0.0
  %6011 = vmatprep.subr.mxu0 0.0
  %6012 = vmatpush1.xpose.msra.mxu0 0.0
  %6013 = vmatprep.subr.mxu0 0.0
  %6014 = vmatpush1.xpose.msra.mxu0 0.0
  %6015 = vmatprep.subr.mxu0 0.0
  %6016 = vmatpush1.xpose.msra.mxu0 0.0
  %6017 = vmatprep.subr.mxu0 0.0
  %6018 = vmatpush1.xpose.msra.mxu0 0.0
  %6019 = vmatprep.subr.mxu0 0.0
  %6020 = vmatpush1.xpose.msra.mxu0 0.0
  %6021 = vmatprep.subr.mxu0 0.0
  %6022 = vmatpush1.xpose.msra.mxu0 0.0
  %6023 = vmatprep.subr.mxu0 0.0
  %6024 = vmatpush1.xpose.msra.mxu0 0.0
  %6025 = vmatprep.subr.mxu0 0.0
  %6026 = vmatpush1.xpose.msra.mxu0 0.0
  %6027 = vmatprep.subr.mxu0 0.0
  %6028 = vmatpush1.xpose.msra.mxu0 0.0
  %6029 = vmatprep.subr.mxu0 0.0
  %6030 = vmatpush1.xpose.msra.mxu0 0.0
  %6031 = vmatprep.subr.mxu0 0.0
  %6032 = vmatpush1.xpose.msra.mxu0 0.0
  %6033 = vmatprep.subr.mxu0 0.0
  %6034 = vmatpush1.xpose.msra.mxu0 0.0
  %6035 = vmatprep.subr.mxu0 0.0
  %6036 = vmatpush1.xpose.msra.mxu0 0.0
  %6037 = vmatprep.subr.mxu0 0.0
  %6038 = vmatpush1.xpose.msra.mxu0 0.0
  %6039 = vmatprep.subr.mxu0 0.0
  %6040 = vmatpush1.xpose.msra.mxu0 0.0
  %6041 = vmatprep.subr.mxu0 0.0
  %6042 = vmatpush1.xpose.msra.mxu0 0.0
  %6043 = vmatprep.mubr.f32.mxu0 0.0
  %6044 = vmatmul.mubr.f32.gmra.mrb[0].mxu0 %v5975
  %v6045 = vpop.f32.mrb[0].mxu0
  %v6046 = vadd.f32 %v5795, %v6045
  %v6047 = vpop.f32.mrb[0].mxu0
  %6048 = vdwg.mxu0
  %6050 = vrot.lane.b32.xlu0 %v5780, 112
  %v6051 = vpop.permute.xlu0 %6050
  %6053 = vrot.lane.b32.xlu0 %v5764, 80
  %v6054 = vpop.permute.xlu0 %6053
  %v6055 = vsel %vm306, %v6051, 0
  %v6057 = vsel %vm306, %v6054, 0
  %6059 = vmatprep.subr.mxu0 0.0
  %6060 = vmatpush1.xpose.msra.mxu0 %v6057
  %6061 = vmatprep.subr.mxu0 0.0
  %6062 = vmatpush1.xpose.msra.mxu0 0.0
  %6063 = vmatprep.subr.mxu0 0.0
  %6064 = vmatpush1.xpose.msra.mxu0 0.0
  %6065 = vmatprep.subr.mxu0 0.0
  %6066 = vmatpush1.xpose.msra.mxu0 0.0
  %6067 = vmatprep.subr.mxu0 0.0
  %6068 = vmatpush1.xpose.msra.mxu0 0.0
  %6069 = vmatprep.subr.mxu0 0.0
  %6070 = vmatpush1.xpose.msra.mxu0 0.0
  %6071 = vmatprep.subr.mxu0 0.0
  %6072 = vmatpush1.xpose.msra.mxu0 0.0
  %6073 = vmatprep.subr.mxu0 0.0
  %6074 = vmatpush1.xpose.msra.mxu0 0.0
  %6075 = vmatprep.subr.mxu0 0.0
  %6076 = vmatpush1.xpose.msra.mxu0 0.0
  %6077 = vmatprep.subr.mxu0 0.0
  %6078 = vmatpush1.xpose.msra.mxu0 0.0
  %6079 = vmatprep.subr.mxu0 0.0
  %6080 = vmatpush1.xpose.msra.mxu0 0.0
  %6081 = vmatprep.subr.mxu0 0.0
  %6082 = vmatpush1.xpose.msra.mxu0 0.0
  %6083 = vmatprep.subr.mxu0 0.0
  %6084 = vmatpush1.xpose.msra.mxu0 0.0
  %6085 = vmatprep.subr.mxu0 0.0
  %6086 = vmatpush1.xpose.msra.mxu0 0.0
  %6087 = vmatprep.subr.mxu0 0.0
  %6088 = vmatpush1.xpose.msra.mxu0 0.0
  %6089 = vmatprep.subr.mxu0 0.0
  %6090 = vmatpush1.xpose.msra.mxu0 0.0
  %6091 = vmatprep.subr.mxu0 0.0
  %6092 = vmatpush1.xpose.msra.mxu0 0.0
  %6093 = vmatprep.subr.mxu0 0.0
  %6094 = vmatpush1.xpose.msra.mxu0 0.0
  %6095 = vmatprep.subr.mxu0 0.0
  %6096 = vmatpush1.xpose.msra.mxu0 0.0
  %6097 = vmatprep.subr.mxu0 0.0
  %6098 = vmatpush1.xpose.msra.mxu0 0.0
  %6099 = vmatprep.subr.mxu0 0.0
  %6100 = vmatpush1.xpose.msra.mxu0 0.0
  %6101 = vmatprep.subr.mxu0 0.0
  %6102 = vmatpush1.xpose.msra.mxu0 0.0
  %6103 = vmatprep.subr.mxu0 0.0
  %6104 = vmatpush1.xpose.msra.mxu0 0.0
  %6105 = vmatprep.subr.mxu0 0.0
  %6106 = vmatpush1.xpose.msra.mxu0 0.0
  %6107 = vmatprep.subr.mxu0 0.0
  %6108 = vmatpush1.xpose.msra.mxu0 0.0
  %6109 = vmatprep.subr.mxu0 0.0
  %6110 = vmatpush1.xpose.msra.mxu0 0.0
  %6111 = vmatprep.subr.mxu0 0.0
  %6112 = vmatpush1.xpose.msra.mxu0 0.0
  %6113 = vmatprep.subr.mxu0 0.0
  %6114 = vmatpush1.xpose.msra.mxu0 0.0
  %6115 = vmatprep.subr.mxu0 0.0
  %6116 = vmatpush1.xpose.msra.mxu0 0.0
  %6117 = vmatprep.subr.mxu0 0.0
  %6118 = vmatpush1.xpose.msra.mxu0 0.0
  %6119 = vmatprep.subr.mxu0 0.0
  %6120 = vmatpush1.xpose.msra.mxu0 0.0
  %6121 = vmatprep.subr.mxu0 0.0
  %6122 = vmatpush1.xpose.msra.mxu0 0.0
  %6123 = vmatprep.mubr.f32.mxu0 0.0
  %6124 = vmatmul.mubr.f32.gmra.mrb[0].mxu0 %v6055
  %v6125 = vpop.f32.mrb[0].mxu0
  %v6126 = vadd.f32 %v5796, %v6125
  %v6127 = vpop.f32.mrb[0].mxu0
  %6128 = vdwg.mxu0
  %6130 = vrot.lane.b32.xlu0 %v5781, 112
  %v6131 = vpop.permute.xlu0 %6130
  %6133 = vrot.lane.b32.xlu0 %v5765, 80
  %v6134 = vpop.permute.xlu0 %6133
  %v6135 = vsel %vm306, %v6131, 0
  %v6137 = vsel %vm306, %v6134, 0
  %6139 = vmatprep.subr.mxu0 0.0
  %6140 = vmatpush1.xpose.msra.mxu0 %v6137
  %6141 = vmatprep.subr.mxu0 0.0
  %6142 = vmatpush1.xpose.msra.mxu0 0.0
  %6143 = vmatprep.subr.mxu0 0.0
  %6144 = vmatpush1.xpose.msra.mxu0 0.0
  %6145 = vmatprep.subr.mxu0 0.0
  %6146 = vmatpush1.xpose.msra.mxu0 0.0
  %6147 = vmatprep.subr.mxu0 0.0
  %6148 = vmatpush1.xpose.msra.mxu0 0.0
  %6149 = vmatprep.subr.mxu0 0.0
  %6150 = vmatpush1.xpose.msra.mxu0 0.0
  %6151 = vmatprep.subr.mxu0 0.0
  %6152 = vmatpush1.xpose.msra.mxu0 0.0
  %6153 = vmatprep.subr.mxu0 0.0
  %6154 = vmatpush1.xpose.msra.mxu0 0.0
  %6155 = vmatprep.subr.mxu0 0.0
  %6156 = vmatpush1.xpose.msra.mxu0 0.0
  %6157 = vmatprep.subr.mxu0 0.0
  %6158 = vmatpush1.xpose.msra.mxu0 0.0
  %6159 = vmatprep.subr.mxu0 0.0
  %6160 = vmatpush1.xpose.msra.mxu0 0.0
  %6161 = vmatprep.subr.mxu0 0.0
  %6162 = vmatpush1.xpose.msra.mxu0 0.0
  %6163 = vmatprep.subr.mxu0 0.0
  %6164 = vmatpush1.xpose.msra.mxu0 0.0
  %6165 = vmatprep.subr.mxu0 0.0
  %6166 = vmatpush1.xpose.msra.mxu0 0.0
  %6167 = vmatprep.subr.mxu0 0.0
  %6168 = vmatpush1.xpose.msra.mxu0 0.0
  %6169 = vmatprep.subr.mxu0 0.0
  %6170 = vmatpush1.xpose.msra.mxu0 0.0
  %6171 = vmatprep.subr.mxu0 0.0
  %6172 = vmatpush1.xpose.msra.mxu0 0.0
  %6173 = vmatprep.subr.mxu0 0.0
  %6174 = vmatpush1.xpose.msra.mxu0 0.0
  %6175 = vmatprep.subr.mxu0 0.0
  %6176 = vmatpush1.xpose.msra.mxu0 0.0
  %6177 = vmatprep.subr.mxu0 0.0
  %6178 = vmatpush1.xpose.msra.mxu0 0.0
  %6179 = vmatprep.subr.mxu0 0.0
  %6180 = vmatpush1.xpose.msra.mxu0 0.0
  %6181 = vmatprep.subr.mxu0 0.0
  %6182 = vmatpush1.xpose.msra.mxu0 0.0
  %6183 = vmatprep.subr.mxu0 0.0
  %6184 = vmatpush1.xpose.msra.mxu0 0.0
  %6185 = vmatprep.subr.mxu0 0.0
  %6186 = vmatpush1.xpose.msra.mxu0 0.0
  %6187 = vmatprep.subr.mxu0 0.0
  %6188 = vmatpush1.xpose.msra.mxu0 0.0
  %6189 = vmatprep.subr.mxu0 0.0
  %6190 = vmatpush1.xpose.msra.mxu0 0.0
  %6191 = vmatprep.subr.mxu0 0.0
  %6192 = vmatpush1.xpose.msra.mxu0 0.0
  %6193 = vmatprep.subr.mxu0 0.0
  %6194 = vmatpush1.xpose.msra.mxu0 0.0
  %6195 = vmatprep.subr.mxu0 0.0
  %6196 = vmatpush1.xpose.msra.mxu0 0.0
  %6197 = vmatprep.subr.mxu0 0.0
  %6198 = vmatpush1.xpose.msra.mxu0 0.0
  %6199 = vmatprep.subr.mxu0 0.0
  %6200 = vmatpush1.xpose.msra.mxu0 0.0
  %6201 = vmatprep.subr.mxu0 0.0
  %6202 = vmatpush1.xpose.msra.mxu0 0.0
  %6203 = vmatprep.mubr.f32.mxu0 0.0
  %6204 = vmatmul.mubr.f32.gmra.mrb[0].mxu0 %v6135
  %v6205 = vpop.f32.mrb[0].mxu0
  %v6206 = vadd.f32 %v5797, %v6205
  %v6207 = vpop.f32.mrb[0].mxu0
  %6208 = vdwg.mxu0
  %6210 = vrot.lane.b32.xlu0 %v5782, 112
  %v6211 = vpop.permute.xlu0 %6210
  %6213 = vrot.lane.b32.xlu0 %v5766, 80
  %v6214 = vpop.permute.xlu0 %6213
  %v6215 = vsel %vm306, %v6211, 0
  %v6217 = vsel %vm306, %v6214, 0
  %6219 = vmatprep.subr.mxu0 0.0
  %6220 = vmatpush1.xpose.msra.mxu0 %v6217
  %6221 = vmatprep.subr.mxu0 0.0
  %6222 = vmatpush1.xpose.msra.mxu0 0.0
  %6223 = vmatprep.subr.mxu0 0.0
  %6224 = vmatpush1.xpose.msra.mxu0 0.0
  %6225 = vmatprep.subr.mxu0 0.0
  %6226 = vmatpush1.xpose.msra.mxu0 0.0
  %6227 = vmatprep.subr.mxu0 0.0
  %6228 = vmatpush1.xpose.msra.mxu0 0.0
  %6229 = vmatprep.subr.mxu0 0.0
  %6230 = vmatpush1.xpose.msra.mxu0 0.0
  %6231 = vmatprep.subr.mxu0 0.0
  %6232 = vmatpush1.xpose.msra.mxu0 0.0
  %6233 = vmatprep.subr.mxu0 0.0
  %6234 = vmatpush1.xpose.msra.mxu0 0.0
  %6235 = vmatprep.subr.mxu0 0.0
  %6236 = vmatpush1.xpose.msra.mxu0 0.0
  %6237 = vmatprep.subr.mxu0 0.0
  %6238 = vmatpush1.xpose.msra.mxu0 0.0
  %6239 = vmatprep.subr.mxu0 0.0
  %6240 = vmatpush1.xpose.msra.mxu0 0.0
  %6241 = vmatprep.subr.mxu0 0.0
  %6242 = vmatpush1.xpose.msra.mxu0 0.0
  %6243 = vmatprep.subr.mxu0 0.0
  %6244 = vmatpush1.xpose.msra.mxu0 0.0
  %6245 = vmatprep.subr.mxu0 0.0
  %6246 = vmatpush1.xpose.msra.mxu0 0.0
  %6247 = vmatprep.subr.mxu0 0.0
  %6248 = vmatpush1.xpose.msra.mxu0 0.0
  %6249 = vmatprep.subr.mxu0 0.0
  %6250 = vmatpush1.xpose.msra.mxu0 0.0
  %6251 = vmatprep.subr.mxu0 0.0
  %6252 = vmatpush1.xpose.msra.mxu0 0.0
  %6253 = vmatprep.subr.mxu0 0.0
  %6254 = vmatpush1.xpose.msra.mxu0 0.0
  %6255 = vmatprep.subr.mxu0 0.0
  %6256 = vmatpush1.xpose.msra.mxu0 0.0
  %6257 = vmatprep.subr.mxu0 0.0
  %6258 = vmatpush1.xpose.msra.mxu0 0.0
  %6259 = vmatprep.subr.mxu0 0.0
  %6260 = vmatpush1.xpose.msra.mxu0 0.0
  %6261 = vmatprep.subr.mxu0 0.0
  %6262 = vmatpush1.xpose.msra.mxu0 0.0
  %6263 = vmatprep.subr.mxu0 0.0
  %6264 = vmatpush1.xpose.msra.mxu0 0.0
  %6265 = vmatprep.subr.mxu0 0.0
  %6266 = vmatpush1.xpose.msra.mxu0 0.0
  %6267 = vmatprep.subr.mxu0 0.0
  %6268 = vmatpush1.xpose.msra.mxu0 0.0
  %6269 = vmatprep.subr.mxu0 0.0
  %6270 = vmatpush1.xpose.msra.mxu0 0.0
  %6271 = vmatprep.subr.mxu0 0.0
  %6272 = vmatpush1.xpose.msra.mxu0 0.0
  %6273 = vmatprep.subr.mxu0 0.0
  %6274 = vmatpush1.xpose.msra.mxu0 0.0
  %6275 = vmatprep.subr.mxu0 0.0
  %6276 = vmatpush1.xpose.msra.mxu0 0.0
  %6277 = vmatprep.subr.mxu0 0.0
  %6278 = vmatpush1.xpose.msra.mxu0 0.0
  %6279 = vmatprep.subr.mxu0 0.0
  %6280 = vmatpush1.xpose.msra.mxu0 0.0
  %6281 = vmatprep.subr.mxu0 0.0
  %6282 = vmatpush1.xpose.msra.mxu0 0.0
  %6283 = vmatprep.mubr.f32.mxu0 0.0
  %6284 = vmatmul.mubr.f32.gmra.mrb[0].mxu0 %v6215
  %v6285 = vpop.f32.mrb[0].mxu0
  %v6286 = vadd.f32 %v5798, %v6285
  %v6287 = vpop.f32.mrb[0].mxu0
  %6288 = vdwg.mxu0
  %6290 = vrot.lane.b32.xlu0 %v5783, 112
  %v6291 = vpop.permute.xlu0 %6290
  %6293 = vrot.lane.b32.xlu0 %v5767, 80
  %v6294 = vpop.permute.xlu0 %6293
  %v6295 = vsel %vm306, %v6291, 0
  %v6297 = vsel %vm306, %v6294, 0
  %6299 = vmatprep.subr.mxu0 0.0
  %6300 = vmatpush1.xpose.msra.mxu0 %v6297
  %6301 = vmatprep.subr.mxu0 0.0
  %6302 = vmatpush1.xpose.msra.mxu0 0.0
  %6303 = vmatprep.subr.mxu0 0.0
  %6304 = vmatpush1.xpose.msra.mxu0 0.0
  %6305 = vmatprep.subr.mxu0 0.0
  %6306 = vmatpush1.xpose.msra.mxu0 0.0
  %6307 = vmatprep.subr.mxu0 0.0
  %6308 = vmatpush1.xpose.msra.mxu0 0.0
  %6309 = vmatprep.subr.mxu0 0.0
  %6310 = vmatpush1.xpose.msra.mxu0 0.0
  %6311 = vmatprep.subr.mxu0 0.0
  %6312 = vmatpush1.xpose.msra.mxu0 0.0
  %6313 = vmatprep.subr.mxu0 0.0
  %6314 = vmatpush1.xpose.msra.mxu0 0.0
  %6315 = vmatprep.subr.mxu0 0.0
  %6316 = vmatpush1.xpose.msra.mxu0 0.0
  %6317 = vmatprep.subr.mxu0 0.0
  %6318 = vmatpush1.xpose.msra.mxu0 0.0
  %6319 = vmatprep.subr.mxu0 0.0
  %6320 = vmatpush1.xpose.msra.mxu0 0.0
  %6321 = vmatprep.subr.mxu0 0.0
  %6322 = vmatpush1.xpose.msra.mxu0 0.0
  %6323 = vmatprep.subr.mxu0 0.0
  %6324 = vmatpush1.xpose.msra.mxu0 0.0
  %6325 = vmatprep.subr.mxu0 0.0
  %6326 = vmatpush1.xpose.msra.mxu0 0.0
  %6327 = vmatprep.subr.mxu0 0.0
  %6328 = vmatpush1.xpose.msra.mxu0 0.0
  %6329 = vmatprep.subr.mxu0 0.0
  %6330 = vmatpush1.xpose.msra.mxu0 0.0
  %6331 = vmatprep.subr.mxu0 0.0
  %6332 = vmatpush1.xpose.msra.mxu0 0.0
  %6333 = vmatprep.subr.mxu0 0.0
  %6334 = vmatpush1.xpose.msra.mxu0 0.0
  %6335 = vmatprep.subr.mxu0 0.0
  %6336 = vmatpush1.xpose.msra.mxu0 0.0
  %6337 = vmatprep.subr.mxu0 0.0
  %6338 = vmatpush1.xpose.msra.mxu0 0.0
  %6339 = vmatprep.subr.mxu0 0.0
  %6340 = vmatpush1.xpose.msra.mxu0 0.0
  %6341 = vmatprep.subr.mxu0 0.0
  %6342 = vmatpush1.xpose.msra.mxu0 0.0
  %6343 = vmatprep.subr.mxu0 0.0
  %6344 = vmatpush1.xpose.msra.mxu0 0.0
  %6345 = vmatprep.subr.mxu0 0.0
  %6346 = vmatpush1.xpose.msra.mxu0 0.0
  %6347 = vmatprep.subr.mxu0 0.0
  %6348 = vmatpush1.xpose.msra.mxu0 0.0
  %6349 = vmatprep.subr.mxu0 0.0
  %6350 = vmatpush1.xpose.msra.mxu0 0.0
  %6351 = vmatprep.subr.mxu0 0.0
  %6352 = vmatpush1.xpose.msra.mxu0 0.0
  %6353 = vmatprep.subr.mxu0 0.0
  %6354 = vmatpush1.xpose.msra.mxu0 0.0
  %6355 = vmatprep.subr.mxu0 0.0
  %6356 = vmatpush1.xpose.msra.mxu0 0.0
  %6357 = vmatprep.subr.mxu0 0.0
  %6358 = vmatpush1.xpose.msra.mxu0 0.0
  %6359 = vmatprep.subr.mxu0 0.0
  %6360 = vmatpush1.xpose.msra.mxu0 0.0
  %6361 = vmatprep.subr.mxu0 0.0
  %6362 = vmatpush1.xpose.msra.mxu0 0.0
  %6363 = vmatprep.mubr.f32.mxu0 0.0
  %6364 = vmatmul.mubr.f32.gmra.mrb[0].mxu0 %v6295
  %v6365 = vpop.f32.mrb[0].mxu0
  %v6366 = vadd.f32 %v5799, %v6365
  %v6367 = vpop.f32.mrb[0].mxu0
  %6368 = vdwg.mxu0
  %6370 = vrot.lane.b32.xlu0 %v5784, 112
  %v6371 = vpop.permute.xlu0 %6370
  %6373 = vrot.lane.b32.xlu0 %v5768, 80
  %v6374 = vpop.permute.xlu0 %6373
  %v6375 = vsel %vm306, %v6371, 0
  %v6377 = vsel %vm306, %v6374, 0
  %6379 = vmatprep.subr.mxu0 0.0
  %6380 = vmatpush1.xpose.msra.mxu0 %v6377
  %6381 = vmatprep.subr.mxu0 0.0
  %6382 = vmatpush1.xpose.msra.mxu0 0.0
  %6383 = vmatprep.subr.mxu0 0.0
  %6384 = vmatpush1.xpose.msra.mxu0 0.0
  %6385 = vmatprep.subr.mxu0 0.0
  %6386 = vmatpush1.xpose.msra.mxu0 0.0
  %6387 = vmatprep.subr.mxu0 0.0
  %6388 = vmatpush1.xpose.msra.mxu0 0.0
  %6389 = vmatprep.subr.mxu0 0.0
  %6390 = vmatpush1.xpose.msra.mxu0 0.0
  %6391 = vmatprep.subr.mxu0 0.0
  %6392 = vmatpush1.xpose.msra.mxu0 0.0
  %6393 = vmatprep.subr.mxu0 0.0
  %6394 = vmatpush1.xpose.msra.mxu0 0.0
  %6395 = vmatprep.subr.mxu0 0.0
  %6396 = vmatpush1.xpose.msra.mxu0 0.0
  %6397 = vmatprep.subr.mxu0 0.0
  %6398 = vmatpush1.xpose.msra.mxu0 0.0
  %6399 = vmatprep.subr.mxu0 0.0
  %6400 = vmatpush1.xpose.msra.mxu0 0.0
  %6401 = vmatprep.subr.mxu0 0.0
  %6402 = vmatpush1.xpose.msra.mxu0 0.0
  %6403 = vmatprep.subr.mxu0 0.0
  %6404 = vmatpush1.xpose.msra.mxu0 0.0
  %6405 = vmatprep.subr.mxu0 0.0
  %6406 = vmatpush1.xpose.msra.mxu0 0.0
  %6407 = vmatprep.subr.mxu0 0.0
  %6408 = vmatpush1.xpose.msra.mxu0 0.0
  %6409 = vmatprep.subr.mxu0 0.0
  %6410 = vmatpush1.xpose.msra.mxu0 0.0
  %6411 = vmatprep.subr.mxu0 0.0
  %6412 = vmatpush1.xpose.msra.mxu0 0.0
  %6413 = vmatprep.subr.mxu0 0.0
  %6414 = vmatpush1.xpose.msra.mxu0 0.0
  %6415 = vmatprep.subr.mxu0 0.0
  %6416 = vmatpush1.xpose.msra.mxu0 0.0
  %6417 = vmatprep.subr.mxu0 0.0
  %6418 = vmatpush1.xpose.msra.mxu0 0.0
  %6419 = vmatprep.subr.mxu0 0.0
  %6420 = vmatpush1.xpose.msra.mxu0 0.0
  %6421 = vmatprep.subr.mxu0 0.0
  %6422 = vmatpush1.xpose.msra.mxu0 0.0
  %6423 = vmatprep.subr.mxu0 0.0
  %6424 = vmatpush1.xpose.msra.mxu0 0.0
  %6425 = vmatprep.subr.mxu0 0.0
  %6426 = vmatpush1.xpose.msra.mxu0 0.0
  %6427 = vmatprep.subr.mxu0 0.0
  %6428 = vmatpush1.xpose.msra.mxu0 0.0
  %6429 = vmatprep.subr.mxu0 0.0
  %6430 = vmatpush1.xpose.msra.mxu0 0.0
  %6431 = vmatprep.subr.mxu0 0.0
  %6432 = vmatpush1.xpose.msra.mxu0 0.0
  %6433 = vmatprep.subr.mxu0 0.0
  %6434 = vmatpush1.xpose.msra.mxu0 0.0
  %6435 = vmatprep.subr.mxu0 0.0
  %6436 = vmatpush1.xpose.msra.mxu0 0.0
  %6437 = vmatprep.subr.mxu0 0.0
  %6438 = vmatpush1.xpose.msra.mxu0 0.0
  %6439 = vmatprep.subr.mxu0 0.0
  %6440 = vmatpush1.xpose.msra.mxu0 0.0
  %6441 = vmatprep.subr.mxu0 0.0
  %6442 = vmatpush1.xpose.msra.mxu0 0.0
  %6443 = vmatprep.mubr.f32.mxu0 0.0
  %6444 = vmatmul.mubr.f32.gmra.mrb[0].mxu0 %v6375
  %v6445 = vpop.f32.mrb[0].mxu0
  %v6446 = vadd.f32 %v5800, %v6445
  %v6447 = vpop.f32.mrb[0].mxu0
  %6448 = vdwg.mxu0
  %6450 = vrot.lane.b32.xlu0 %v5785, 112
  %v6451 = vpop.permute.xlu0 %6450
  %6453 = vrot.lane.b32.xlu0 %v5769, 80
  %v6454 = vpop.permute.xlu0 %6453
  %v6455 = vsel %vm306, %v6451, 0
  %v6457 = vsel %vm306, %v6454, 0
  %6459 = vmatprep.subr.mxu0 0.0
  %6460 = vmatpush1.xpose.msra.mxu0 %v6457
  %6461 = vmatprep.subr.mxu0 0.0
  %6462 = vmatpush1.xpose.msra.mxu0 0.0
  %6463 = vmatprep.subr.mxu0 0.0
  %6464 = vmatpush1.xpose.msra.mxu0 0.0
  %6465 = vmatprep.subr.mxu0 0.0
  %6466 = vmatpush1.xpose.msra.mxu0 0.0
  %6467 = vmatprep.subr.mxu0 0.0
  %6468 = vmatpush1.xpose.msra.mxu0 0.0
  %6469 = vmatprep.subr.mxu0 0.0
  %6470 = vmatpush1.xpose.msra.mxu0 0.0
  %6471 = vmatprep.subr.mxu0 0.0
  %6472 = vmatpush1.xpose.msra.mxu0 0.0
  %6473 = vmatprep.subr.mxu0 0.0
  %6474 = vmatpush1.xpose.msra.mxu0 0.0
  %6475 = vmatprep.subr.mxu0 0.0
  %6476 = vmatpush1.xpose.msra.mxu0 0.0
  %6477 = vmatprep.subr.mxu0 0.0
  %6478 = vmatpush1.xpose.msra.mxu0 0.0
  %6479 = vmatprep.subr.mxu0 0.0
  %6480 = vmatpush1.xpose.msra.mxu0 0.0
  %6481 = vmatprep.subr.mxu0 0.0
  %6482 = vmatpush1.xpose.msra.mxu0 0.0
  %6483 = vmatprep.subr.mxu0 0.0
  %6484 = vmatpush1.xpose.msra.mxu0 0.0
  %6485 = vmatprep.subr.mxu0 0.0
  %6486 = vmatpush1.xpose.msra.mxu0 0.0
  %6487 = vmatprep.subr.mxu0 0.0
  %6488 = vmatpush1.xpose.msra.mxu0 0.0
  %6489 = vmatprep.subr.mxu0 0.0
  %6490 = vmatpush1.xpose.msra.mxu0 0.0
  %6491 = vmatprep.subr.mxu0 0.0
  %6492 = vmatpush1.xpose.msra.mxu0 0.0
  %6493 = vmatprep.subr.mxu0 0.0
  %6494 = vmatpush1.xpose.msra.mxu0 0.0
  %6495 = vmatprep.subr.mxu0 0.0
  %6496 = vmatpush1.xpose.msra.mxu0 0.0
  %6497 = vmatprep.subr.mxu0 0.0
  %6498 = vmatpush1.xpose.msra.mxu0 0.0
  %6499 = vmatprep.subr.mxu0 0.0
  %6500 = vmatpush1.xpose.msra.mxu0 0.0
  %6501 = vmatprep.subr.mxu0 0.0
  %6502 = vmatpush1.xpose.msra.mxu0 0.0
  %6503 = vmatprep.subr.mxu0 0.0
  %6504 = vmatpush1.xpose.msra.mxu0 0.0
  %6505 = vmatprep.subr.mxu0 0.0
  %6506 = vmatpush1.xpose.msra.mxu0 0.0
  %6507 = vmatprep.subr.mxu0 0.0
  %6508 = vmatpush1.xpose.msra.mxu0 0.0
  %6509 = vmatprep.subr.mxu0 0.0
  %6510 = vmatpush1.xpose.msra.mxu0 0.0
  %6511 = vmatprep.subr.mxu0 0.0
  %6512 = vmatpush1.xpose.msra.mxu0 0.0
  %6513 = vmatprep.subr.mxu0 0.0
  %6514 = vmatpush1.xpose.msra.mxu0 0.0
  %6515 = vmatprep.subr.mxu0 0.0
  %6516 = vmatpush1.xpose.msra.mxu0 0.0
  %6517 = vmatprep.subr.mxu0 0.0
  %6518 = vmatpush1.xpose.msra.mxu0 0.0
  %6519 = vmatprep.subr.mxu0 0.0
  %6520 = vmatpush1.xpose.msra.mxu0 0.0
  %6521 = vmatprep.subr.mxu0 0.0
  %6522 = vmatpush1.xpose.msra.mxu0 0.0
  %6523 = vmatprep.mubr.f32.mxu0 0.0
  %6524 = vmatmul.mubr.f32.gmra.mrb[0].mxu0 %v6455
  %v6525 = vpop.f32.mrb[0].mxu0
  %v6526 = vadd.f32 %v5801, %v6525
  %v6527 = vpop.f32.mrb[0].mxu0
  %6528 = vdwg.mxu0
  %6530 = vrot.lane.b32.xlu0 %v5786, 112
  %v6531 = vpop.permute.xlu0 %6530
  %6533 = vrot.lane.b32.xlu0 %v5770, 80
  %v6534 = vpop.permute.xlu0 %6533
  %v6535 = vsel %vm306, %v6531, 0
  %v6537 = vsel %vm306, %v6534, 0
  %6539 = vmatprep.subr.mxu0 0.0
  %6540 = vmatpush1.xpose.msra.mxu0 %v6537
  %6541 = vmatprep.subr.mxu0 0.0
  %6542 = vmatpush1.xpose.msra.mxu0 0.0
  %6543 = vmatprep.subr.mxu0 0.0
  %6544 = vmatpush1.xpose.msra.mxu0 0.0
  %6545 = vmatprep.subr.mxu0 0.0
  %6546 = vmatpush1.xpose.msra.mxu0 0.0
  %6547 = vmatprep.subr.mxu0 0.0
  %6548 = vmatpush1.xpose.msra.mxu0 0.0
  %6549 = vmatprep.subr.mxu0 0.0
  %6550 = vmatpush1.xpose.msra.mxu0 0.0
  %6551 = vmatprep.subr.mxu0 0.0
  %6552 = vmatpush1.xpose.msra.mxu0 0.0
  %6553 = vmatprep.subr.mxu0 0.0
  %6554 = vmatpush1.xpose.msra.mxu0 0.0
  %6555 = vmatprep.subr.mxu0 0.0
  %6556 = vmatpush1.xpose.msra.mxu0 0.0
  %6557 = vmatprep.subr.mxu0 0.0
  %6558 = vmatpush1.xpose.msra.mxu0 0.0
  %6559 = vmatprep.subr.mxu0 0.0
  %6560 = vmatpush1.xpose.msra.mxu0 0.0
  %6561 = vmatprep.subr.mxu0 0.0
  %6562 = vmatpush1.xpose.msra.mxu0 0.0
  %6563 = vmatprep.subr.mxu0 0.0
  %6564 = vmatpush1.xpose.msra.mxu0 0.0
  %6565 = vmatprep.subr.mxu0 0.0
  %6566 = vmatpush1.xpose.msra.mxu0 0.0
  %6567 = vmatprep.subr.mxu0 0.0
  %6568 = vmatpush1.xpose.msra.mxu0 0.0
  %6569 = vmatprep.subr.mxu0 0.0
  %6570 = vmatpush1.xpose.msra.mxu0 0.0
  %6571 = vmatprep.subr.mxu0 0.0
  %6572 = vmatpush1.xpose.msra.mxu0 0.0
  %6573 = vmatprep.subr.mxu0 0.0
  %6574 = vmatpush1.xpose.msra.mxu0 0.0
  %6575 = vmatprep.subr.mxu0 0.0
  %6576 = vmatpush1.xpose.msra.mxu0 0.0
  %6577 = vmatprep.subr.mxu0 0.0
  %6578 = vmatpush1.xpose.msra.mxu0 0.0
  %6579 = vmatprep.subr.mxu0 0.0
  %6580 = vmatpush1.xpose.msra.mxu0 0.0
  %6581 = vmatprep.subr.mxu0 0.0
  %6582 = vmatpush1.xpose.msra.mxu0 0.0
  %6583 = vmatprep.subr.mxu0 0.0
  %6584 = vmatpush1.xpose.msra.mxu0 0.0
  %6585 = vmatprep.subr.mxu0 0.0
  %6586 = vmatpush1.xpose.msra.mxu0 0.0
  %6587 = vmatprep.subr.mxu0 0.0
  %6588 = vmatpush1.xpose.msra.mxu0 0.0
  %6589 = vmatprep.subr.mxu0 0.0
  %6590 = vmatpush1.xpose.msra.mxu0 0.0
  %6591 = vmatprep.subr.mxu0 0.0
  %6592 = vmatpush1.xpose.msra.mxu0 0.0
  %6593 = vmatprep.subr.mxu0 0.0
  %6594 = vmatpush1.xpose.msra.mxu0 0.0
  %6595 = vmatprep.subr.mxu0 0.0
  %6596 = vmatpush1.xpose.msra.mxu0 0.0
  %6597 = vmatprep.subr.mxu0 0.0
  %6598 = vmatpush1.xpose.msra.mxu0 0.0
  %6599 = vmatprep.subr.mxu0 0.0
  %6600 = vmatpush1.xpose.msra.mxu0 0.0
  %6601 = vmatprep.subr.mxu0 0.0
  %6602 = vmatpush1.xpose.msra.mxu0 0.0
  %6603 = vmatprep.mubr.f32.mxu0 0.0
  %6604 = vmatmul.mubr.f32.gmra.mrb[0].mxu0 %v6535
  %v6605 = vpop.f32.mrb[0].mxu0
  %v6606 = vadd.f32 %v5802, %v6605
  %v6607 = vpop.f32.mrb[0].mxu0
  %6608 = vdwg.mxu0
  %6610 = vrot.lane.b32.xlu0 %v5787, 112
  %v6611 = vpop.permute.xlu0 %6610
  %6613 = vrot.lane.b32.xlu0 %v5771, 80
  %v6614 = vpop.permute.xlu0 %6613
  %v6615 = vsel %vm306, %v6611, 0
  %v6617 = vsel %vm306, %v6614, 0
  %6619 = vmatprep.subr.mxu0 0.0
  %6620 = vmatpush1.xpose.msra.mxu0 %v6617
  %6621 = vmatprep.subr.mxu0 0.0
  %6622 = vmatpush1.xpose.msra.mxu0 0.0
  %6623 = vmatprep.subr.mxu0 0.0
  %6624 = vmatpush1.xpose.msra.mxu0 0.0
  %6625 = vmatprep.subr.mxu0 0.0
  %6626 = vmatpush1.xpose.msra.mxu0 0.0
  %6627 = vmatprep.subr.mxu0 0.0
  %6628 = vmatpush1.xpose.msra.mxu0 0.0
  %6629 = vmatprep.subr.mxu0 0.0
  %6630 = vmatpush1.xpose.msra.mxu0 0.0
  %6631 = vmatprep.subr.mxu0 0.0
  %6632 = vmatpush1.xpose.msra.mxu0 0.0
  %6633 = vmatprep.subr.mxu0 0.0
  %6634 = vmatpush1.xpose.msra.mxu0 0.0
  %6635 = vmatprep.subr.mxu0 0.0
  %6636 = vmatpush1.xpose.msra.mxu0 0.0
  %6637 = vmatprep.subr.mxu0 0.0
  %6638 = vmatpush1.xpose.msra.mxu0 0.0
  %6639 = vmatprep.subr.mxu0 0.0
  %6640 = vmatpush1.xpose.msra.mxu0 0.0
  %6641 = vmatprep.subr.mxu0 0.0
  %6642 = vmatpush1.xpose.msra.mxu0 0.0
  %6643 = vmatprep.subr.mxu0 0.0
  %6644 = vmatpush1.xpose.msra.mxu0 0.0
  %6645 = vmatprep.subr.mxu0 0.0
  %6646 = vmatpush1.xpose.msra.mxu0 0.0
  %6647 = vmatprep.subr.mxu0 0.0
  %6648 = vmatpush1.xpose.msra.mxu0 0.0
  %6649 = vmatprep.subr.mxu0 0.0
  %6650 = vmatpush1.xpose.msra.mxu0 0.0
  %6651 = vmatprep.subr.mxu0 0.0
  %6652 = vmatpush1.xpose.msra.mxu0 0.0
  %6653 = vmatprep.subr.mxu0 0.0
  %6654 = vmatpush1.xpose.msra.mxu0 0.0
  %6655 = vmatprep.subr.mxu0 0.0
  %6656 = vmatpush1.xpose.msra.mxu0 0.0
  %6657 = vmatprep.subr.mxu0 0.0
  %6658 = vmatpush1.xpose.msra.mxu0 0.0
  %6659 = vmatprep.subr.mxu0 0.0
  %6660 = vmatpush1.xpose.msra.mxu0 0.0
  %6661 = vmatprep.subr.mxu0 0.0
  %6662 = vmatpush1.xpose.msra.mxu0 0.0
  %6663 = vmatprep.subr.mxu0 0.0
  %6664 = vmatpush1.xpose.msra.mxu0 0.0
  %6665 = vmatprep.subr.mxu0 0.0
  %6666 = vmatpush1.xpose.msra.mxu0 0.0
  %6667 = vmatprep.subr.mxu0 0.0
  %6668 = vmatpush1.xpose.msra.mxu0 0.0
  %6669 = vmatprep.subr.mxu0 0.0
  %6670 = vmatpush1.xpose.msra.mxu0 0.0
  %6671 = vmatprep.subr.mxu0 0.0
  %6672 = vmatpush1.xpose.msra.mxu0 0.0
  %6673 = vmatprep.subr.mxu0 0.0
  %6674 = vmatpush1.xpose.msra.mxu0 0.0
  %6675 = vmatprep.subr.mxu0 0.0
  %6676 = vmatpush1.xpose.msra.mxu0 0.0
  %6677 = vmatprep.subr.mxu0 0.0
  %6678 = vmatpush1.xpose.msra.mxu0 0.0
  %6679 = vmatprep.subr.mxu0 0.0
  %6680 = vmatpush1.xpose.msra.mxu0 0.0
  %6681 = vmatprep.subr.mxu0 0.0
  %6682 = vmatpush1.xpose.msra.mxu0 0.0
  %6683 = vmatprep.mubr.f32.mxu0 0.0
  %6684 = vmatmul.mubr.f32.gmra.mrb[0].mxu0 %v6615
  %v6685 = vpop.f32.mrb[0].mxu0
  %v6686 = vadd.f32 %v5803, %v6685
  %v6687 = vpop.f32.mrb[0].mxu0
  %6688 = vdwg.mxu0
  %6690 = vrot.lane.b32.xlu0 %v5788, 112
  %v6691 = vpop.permute.xlu0 %6690
  %6693 = vrot.lane.b32.xlu0 %v5772, 80
  %v6694 = vpop.permute.xlu0 %6693
  %v6695 = vsel %vm306, %v6691, 0
  %v6697 = vsel %vm306, %v6694, 0
  %6699 = vmatprep.subr.mxu0 0.0
  %6700 = vmatpush1.xpose.msra.mxu0 %v6697
  %6701 = vmatprep.subr.mxu0 0.0
  %6702 = vmatpush1.xpose.msra.mxu0 0.0
  %6703 = vmatprep.subr.mxu0 0.0
  %6704 = vmatpush1.xpose.msra.mxu0 0.0
  %6705 = vmatprep.subr.mxu0 0.0
  %6706 = vmatpush1.xpose.msra.mxu0 0.0
  %6707 = vmatprep.subr.mxu0 0.0
  %6708 = vmatpush1.xpose.msra.mxu0 0.0
  %6709 = vmatprep.subr.mxu0 0.0
  %6710 = vmatpush1.xpose.msra.mxu0 0.0
  %6711 = vmatprep.subr.mxu0 0.0
  %6712 = vmatpush1.xpose.msra.mxu0 0.0
  %6713 = vmatprep.subr.mxu0 0.0
  %6714 = vmatpush1.xpose.msra.mxu0 0.0
  %6715 = vmatprep.subr.mxu0 0.0
  %6716 = vmatpush1.xpose.msra.mxu0 0.0
  %6717 = vmatprep.subr.mxu0 0.0
  %6718 = vmatpush1.xpose.msra.mxu0 0.0
  %6719 = vmatprep.subr.mxu0 0.0
  %6720 = vmatpush1.xpose.msra.mxu0 0.0
  %6721 = vmatprep.subr.mxu0 0.0
  %6722 = vmatpush1.xpose.msra.mxu0 0.0
  %6723 = vmatprep.subr.mxu0 0.0
  %6724 = vmatpush1.xpose.msra.mxu0 0.0
  %6725 = vmatprep.subr.mxu0 0.0
  %6726 = vmatpush1.xpose.msra.mxu0 0.0
  %6727 = vmatprep.subr.mxu0 0.0
  %6728 = vmatpush1.xpose.msra.mxu0 0.0
  %6729 = vmatprep.subr.mxu0 0.0
  %6730 = vmatpush1.xpose.msra.mxu0 0.0
  %6731 = vmatprep.subr.mxu0 0.0
  %6732 = vmatpush1.xpose.msra.mxu0 0.0
  %6733 = vmatprep.subr.mxu0 0.0
  %6734 = vmatpush1.xpose.msra.mxu0 0.0
  %6735 = vmatprep.subr.mxu0 0.0
  %6736 = vmatpush1.xpose.msra.mxu0 0.0
  %6737 = vmatprep.subr.mxu0 0.0
  %6738 = vmatpush1.xpose.msra.mxu0 0.0
  %6739 = vmatprep.subr.mxu0 0.0
  %6740 = vmatpush1.xpose.msra.mxu0 0.0
  %6741 = vmatprep.subr.mxu0 0.0
  %6742 = vmatpush1.xpose.msra.mxu0 0.0
  %6743 = vmatprep.subr.mxu0 0.0
  %6744 = vmatpush1.xpose.msra.mxu0 0.0
  %6745 = vmatprep.subr.mxu0 0.0
  %6746 = vmatpush1.xpose.msra.mxu0 0.0
  %6747 = vmatprep.subr.mxu0 0.0
  %6748 = vmatpush1.xpose.msra.mxu0 0.0
  %6749 = vmatprep.subr.mxu0 0.0
  %6750 = vmatpush1.xpose.msra.mxu0 0.0
  %6751 = vmatprep.subr.mxu0 0.0
  %6752 = vmatpush1.xpose.msra.mxu0 0.0
  %6753 = vmatprep.subr.mxu0 0.0
  %6754 = vmatpush1.xpose.msra.mxu0 0.0
  %6755 = vmatprep.subr.mxu0 0.0
  %6756 = vmatpush1.xpose.msra.mxu0 0.0
  %6757 = vmatprep.subr.mxu0 0.0
  %6758 = vmatpush1.xpose.msra.mxu0 0.0
  %6759 = vmatprep.subr.mxu0 0.0
  %6760 = vmatpush1.xpose.msra.mxu0 0.0
  %6761 = vmatprep.subr.mxu0 0.0
  %6762 = vmatpush1.xpose.msra.mxu0 0.0
  %6763 = vmatprep.mubr.f32.mxu0 0.0
  %6764 = vmatmul.mubr.f32.gmra.mrb[0].mxu0 %v6695
  %v6765 = vpop.f32.mrb[0].mxu0
  %v6766 = vadd.f32 %v5804, %v6765
  %v6767 = vpop.f32.mrb[0].mxu0
  %6768 = vdwg.mxu0
  %6770 = vrot.lane.b32.xlu0 %v5789, 112
  %v6771 = vpop.permute.xlu0 %6770
  %6773 = vrot.lane.b32.xlu0 %v5773, 80
  %v6774 = vpop.permute.xlu0 %6773
  %v6775 = vsel %vm306, %v6771, 0
  %v6777 = vsel %vm306, %v6774, 0
  %6779 = vmatprep.subr.mxu0 0.0
  %6780 = vmatpush1.xpose.msra.mxu0 %v6777
  %6781 = vmatprep.subr.mxu0 0.0
  %6782 = vmatpush1.xpose.msra.mxu0 0.0
  %6783 = vmatprep.subr.mxu0 0.0
  %6784 = vmatpush1.xpose.msra.mxu0 0.0
  %6785 = vmatprep.subr.mxu0 0.0
  %6786 = vmatpush1.xpose.msra.mxu0 0.0
  %6787 = vmatprep.subr.mxu0 0.0
  %6788 = vmatpush1.xpose.msra.mxu0 0.0
  %6789 = vmatprep.subr.mxu0 0.0
  %6790 = vmatpush1.xpose.msra.mxu0 0.0
  %6791 = vmatprep.subr.mxu0 0.0
  %6792 = vmatpush1.xpose.msra.mxu0 0.0
  %6793 = vmatprep.subr.mxu0 0.0
  %6794 = vmatpush1.xpose.msra.mxu0 0.0
  %6795 = vmatprep.subr.mxu0 0.0
  %6796 = vmatpush1.xpose.msra.mxu0 0.0
  %6797 = vmatprep.subr.mxu0 0.0
  %6798 = vmatpush1.xpose.msra.mxu0 0.0
  %6799 = vmatprep.subr.mxu0 0.0
  %6800 = vmatpush1.xpose.msra.mxu0 0.0
  %6801 = vmatprep.subr.mxu0 0.0
  %6802 = vmatpush1.xpose.msra.mxu0 0.0
  %6803 = vmatprep.subr.mxu0 0.0
  %6804 = vmatpush1.xpose.msra.mxu0 0.0
  %6805 = vmatprep.subr.mxu0 0.0
  %6806 = vmatpush1.xpose.msra.mxu0 0.0
  %6807 = vmatprep.subr.mxu0 0.0
  %6808 = vmatpush1.xpose.msra.mxu0 0.0
  %6809 = vmatprep.subr.mxu0 0.0
  %6810 = vmatpush1.xpose.msra.mxu0 0.0
  %6811 = vmatprep.subr.mxu0 0.0
  %6812 = vmatpush1.xpose.msra.mxu0 0.0
  %6813 = vmatprep.subr.mxu0 0.0
  %6814 = vmatpush1.xpose.msra.mxu0 0.0
  %6815 = vmatprep.subr.mxu0 0.0
  %6816 = vmatpush1.xpose.msra.mxu0 0.0
  %6817 = vmatprep.subr.mxu0 0.0
  %6818 = vmatpush1.xpose.msra.mxu0 0.0
  %6819 = vmatprep.subr.mxu0 0.0
  %6820 = vmatpush1.xpose.msra.mxu0 0.0
  %6821 = vmatprep.subr.mxu0 0.0
  %6822 = vmatpush1.xpose.msra.mxu0 0.0
  %6823 = vmatprep.subr.mxu0 0.0
  %6824 = vmatpush1.xpose.msra.mxu0 0.0
  %6825 = vmatprep.subr.mxu0 0.0
  %6826 = vmatpush1.xpose.msra.mxu0 0.0
  %6827 = vmatprep.subr.mxu0 0.0
  %6828 = vmatpush1.xpose.msra.mxu0 0.0
  %6829 = vmatprep.subr.mxu0 0.0
  %6830 = vmatpush1.xpose.msra.mxu0 0.0
  %6831 = vmatprep.subr.mxu0 0.0
  %6832 = vmatpush1.xpose.msra.mxu0 0.0
  %6833 = vmatprep.subr.mxu0 0.0
  %6834 = vmatpush1.xpose.msra.mxu0 0.0
  %6835 = vmatprep.subr.mxu0 0.0
  %6836 = vmatpush1.xpose.msra.mxu0 0.0
  %6837 = vmatprep.subr.mxu0 0.0
  %6838 = vmatpush1.xpose.msra.mxu0 0.0
  %6839 = vmatprep.subr.mxu0 0.0
  %6840 = vmatpush1.xpose.msra.mxu0 0.0
  %6841 = vmatprep.subr.mxu0 0.0
  %6842 = vmatpush1.xpose.msra.mxu0 0.0
  %6843 = vmatprep.mubr.f32.mxu0 0.0
  %6844 = vmatmul.mubr.f32.gmra.mrb[0].mxu0 %v6775
  %v6845 = vpop.f32.mrb[0].mxu0
  %v6846 = vadd.f32 %v5805, %v6845
  %v6847 = vpop.f32.mrb[0].mxu0
  %6848 = vdwg.mxu0
  %6850 = vrot.lane.b32.xlu0 %v5790, 112
  %v6851 = vpop.permute.xlu0 %6850
  %6853 = vrot.lane.b32.xlu0 %v5774, 80
  %v6854 = vpop.permute.xlu0 %6853
  %v6855 = vsel %vm306, %v6851, 0
  %v6857 = vsel %vm306, %v6854, 0
  %6859 = vmatprep.subr.mxu0 0.0
  %6860 = vmatpush1.xpose.msra.mxu0 %v6857
  %6861 = vmatprep.subr.mxu0 0.0
  %6862 = vmatpush1.xpose.msra.mxu0 0.0
  %6863 = vmatprep.subr.mxu0 0.0
  %6864 = vmatpush1.xpose.msra.mxu0 0.0
  %6865 = vmatprep.subr.mxu0 0.0
  %6866 = vmatpush1.xpose.msra.mxu0 0.0
  %6867 = vmatprep.subr.mxu0 0.0
  %6868 = vmatpush1.xpose.msra.mxu0 0.0
  %6869 = vmatprep.subr.mxu0 0.0
  %6870 = vmatpush1.xpose.msra.mxu0 0.0
  %6871 = vmatprep.subr.mxu0 0.0
  %6872 = vmatpush1.xpose.msra.mxu0 0.0
  %6873 = vmatprep.subr.mxu0 0.0
  %6874 = vmatpush1.xpose.msra.mxu0 0.0
  %6875 = vmatprep.subr.mxu0 0.0
  %6876 = vmatpush1.xpose.msra.mxu0 0.0
  %6877 = vmatprep.subr.mxu0 0.0
  %6878 = vmatpush1.xpose.msra.mxu0 0.0
  %6879 = vmatprep.subr.mxu0 0.0
  %6880 = vmatpush1.xpose.msra.mxu0 0.0
  %6881 = vmatprep.subr.mxu0 0.0
  %6882 = vmatpush1.xpose.msra.mxu0 0.0
  %6883 = vmatprep.subr.mxu0 0.0
  %6884 = vmatpush1.xpose.msra.mxu0 0.0
  %6885 = vmatprep.subr.mxu0 0.0
  %6886 = vmatpush1.xpose.msra.mxu0 0.0
  %6887 = vmatprep.subr.mxu0 0.0
  %6888 = vmatpush1.xpose.msra.mxu0 0.0
  %6889 = vmatprep.subr.mxu0 0.0
  %6890 = vmatpush1.xpose.msra.mxu0 0.0
  %6891 = vmatprep.subr.mxu0 0.0
  %6892 = vmatpush1.xpose.msra.mxu0 0.0
  %6893 = vmatprep.subr.mxu0 0.0
  %6894 = vmatpush1.xpose.msra.mxu0 0.0
  %6895 = vmatprep.subr.mxu0 0.0
  %6896 = vmatpush1.xpose.msra.mxu0 0.0
  %6897 = vmatprep.subr.mxu0 0.0
  %6898 = vmatpush1.xpose.msra.mxu0 0.0
  %6899 = vmatprep.subr.mxu0 0.0
  %6900 = vmatpush1.xpose.msra.mxu0 0.0
  %6901 = vmatprep.subr.mxu0 0.0
  %6902 = vmatpush1.xpose.msra.mxu0 0.0
  %6903 = vmatprep.subr.mxu0 0.0
  %6904 = vmatpush1.xpose.msra.mxu0 0.0
  %6905 = vmatprep.subr.mxu0 0.0
  %6906 = vmatpush1.xpose.msra.mxu0 0.0
  %6907 = vmatprep.subr.mxu0 0.0
  %6908 = vmatpush1.xpose.msra.mxu0 0.0
  %6909 = vmatprep.subr.mxu0 0.0
  %6910 = vmatpush1.xpose.msra.mxu0 0.0
  %6911 = vmatprep.subr.mxu0 0.0
  %6912 = vmatpush1.xpose.msra.mxu0 0.0
  %6913 = vmatprep.subr.mxu0 0.0
  %6914 = vmatpush1.xpose.msra.mxu0 0.0
  %6915 = vmatprep.subr.mxu0 0.0
  %6916 = vmatpush1.xpose.msra.mxu0 0.0
  %6917 = vmatprep.subr.mxu0 0.0
  %6918 = vmatpush1.xpose.msra.mxu0 0.0
  %6919 = vmatprep.subr.mxu0 0.0
  %6920 = vmatpush1.xpose.msra.mxu0 0.0
  %6921 = vmatprep.subr.mxu0 0.0
  %6922 = vmatpush1.xpose.msra.mxu0 0.0
  %6923 = vmatprep.mubr.f32.mxu0 0.0
  %6924 = vmatmul.mubr.f32.gmra.mrb[0].mxu0 %v6855
  %v6925 = vpop.f32.mrb[0].mxu0
  %v6926 = vadd.f32 %v5806, %v6925
  %v6927 = vpop.f32.mrb[0].mxu0
  %6928 = vdwg.mxu0
  %6930 = vrot.lane.b32.xlu0 %v5791, 112
  %v6931 = vpop.permute.xlu0 %6930
  %6933 = vrot.lane.b32.xlu0 %v5775, 80
  %v6934 = vpop.permute.xlu0 %6933
  %v6935 = vsel %vm306, %v6931, 0
  %v6937 = vsel %vm306, %v6934, 0
  %6939 = vmatprep.subr.mxu0 0.0
  %6940 = vmatpush1.xpose.msra.mxu0 %v6937
  %6941 = vmatprep.subr.mxu0 0.0
  %6942 = vmatpush1.xpose.msra.mxu0 0.0
  %6943 = vmatprep.subr.mxu0 0.0
  %6944 = vmatpush1.xpose.msra.mxu0 0.0
  %6945 = vmatprep.subr.mxu0 0.0
  %6946 = vmatpush1.xpose.msra.mxu0 0.0
  %6947 = vmatprep.subr.mxu0 0.0
  %6948 = vmatpush1.xpose.msra.mxu0 0.0
  %6949 = vmatprep.subr.mxu0 0.0
  %6950 = vmatpush1.xpose.msra.mxu0 0.0
  %6951 = vmatprep.subr.mxu0 0.0
  %6952 = vmatpush1.xpose.msra.mxu0 0.0
  %6953 = vmatprep.subr.mxu0 0.0
  %6954 = vmatpush1.xpose.msra.mxu0 0.0
  %6955 = vmatprep.subr.mxu0 0.0
  %6956 = vmatpush1.xpose.msra.mxu0 0.0
  %6957 = vmatprep.subr.mxu0 0.0
  %6958 = vmatpush1.xpose.msra.mxu0 0.0
  %6959 = vmatprep.subr.mxu0 0.0
  %6960 = vmatpush1.xpose.msra.mxu0 0.0
  %6961 = vmatprep.subr.mxu0 0.0
  %6962 = vmatpush1.xpose.msra.mxu0 0.0
  %6963 = vmatprep.subr.mxu0 0.0
  %6964 = vmatpush1.xpose.msra.mxu0 0.0
  %6965 = vmatprep.subr.mxu0 0.0
  %6966 = vmatpush1.xpose.msra.mxu0 0.0
  %6967 = vmatprep.subr.mxu0 0.0
  %6968 = vmatpush1.xpose.msra.mxu0 0.0
  %6969 = vmatprep.subr.mxu0 0.0
  %6970 = vmatpush1.xpose.msra.mxu0 0.0
  %6971 = vmatprep.subr.mxu0 0.0
  %6972 = vmatpush1.xpose.msra.mxu0 0.0
  %6973 = vmatprep.subr.mxu0 0.0
  %6974 = vmatpush1.xpose.msra.mxu0 0.0
  %6975 = vmatprep.subr.mxu0 0.0
  %6976 = vmatpush1.xpose.msra.mxu0 0.0
  %6977 = vmatprep.subr.mxu0 0.0
  %6978 = vmatpush1.xpose.msra.mxu0 0.0
  %6979 = vmatprep.subr.mxu0 0.0
  %6980 = vmatpush1.xpose.msra.mxu0 0.0
  %6981 = vmatprep.subr.mxu0 0.0
  %6982 = vmatpush1.xpose.msra.mxu0 0.0
  %6983 = vmatprep.subr.mxu0 0.0
  %6984 = vmatpush1.xpose.msra.mxu0 0.0
  %6985 = vmatprep.subr.mxu0 0.0
  %6986 = vmatpush1.xpose.msra.mxu0 0.0
  %6987 = vmatprep.subr.mxu0 0.0
  %6988 = vmatpush1.xpose.msra.mxu0 0.0
  %6989 = vmatprep.subr.mxu0 0.0
  %6990 = vmatpush1.xpose.msra.mxu0 0.0
  %6991 = vmatprep.subr.mxu0 0.0
  %6992 = vmatpush1.xpose.msra.mxu0 0.0
  %6993 = vmatprep.subr.mxu0 0.0
  %6994 = vmatpush1.xpose.msra.mxu0 0.0
  %6995 = vmatprep.subr.mxu0 0.0
  %6996 = vmatpush1.xpose.msra.mxu0 0.0
  %6997 = vmatprep.subr.mxu0 0.0
  %6998 = vmatpush1.xpose.msra.mxu0 0.0
  %6999 = vmatprep.subr.mxu0 0.0
  %7000 = vmatpush1.xpose.msra.mxu0 0.0
  %7001 = vmatprep.subr.mxu0 0.0
  %7002 = vmatpush1.xpose.msra.mxu0 0.0
  %7003 = vmatprep.mubr.f32.mxu0 0.0
  %7004 = vmatmul.mubr.f32.gmra.mrb[0].mxu0 %v6935
  %v7005 = vpop.f32.mrb[0].mxu0
  %v7006 = vadd.f32 %v5807, %v7005
  %v7007 = vpop.f32.mrb[0].mxu0
  %7008 = vdwg.mxu0
  %7010 = vrot.lane.b32.xlu0 %v5792, 112
  %v7011 = vpop.permute.xlu0 %7010
  %7013 = vrot.lane.b32.xlu0 %v5776, 80
  %v7014 = vpop.permute.xlu0 %7013
  %v7015 = vsel %vm306, %v7011, 0
  %v7017 = vsel %vm306, %v7014, 0
  %7019 = vmatprep.subr.mxu0 0.0
  %7020 = vmatpush1.xpose.msra.mxu0 %v7017
  %7021 = vmatprep.subr.mxu0 0.0
  %7022 = vmatpush1.xpose.msra.mxu0 0.0
  %7023 = vmatprep.subr.mxu0 0.0
  %7024 = vmatpush1.xpose.msra.mxu0 0.0
  %7025 = vmatprep.subr.mxu0 0.0
  %7026 = vmatpush1.xpose.msra.mxu0 0.0
  %7027 = vmatprep.subr.mxu0 0.0
  %7028 = vmatpush1.xpose.msra.mxu0 0.0
  %7029 = vmatprep.subr.mxu0 0.0
  %7030 = vmatpush1.xpose.msra.mxu0 0.0
  %7031 = vmatprep.subr.mxu0 0.0
  %7032 = vmatpush1.xpose.msra.mxu0 0.0
  %7033 = vmatprep.subr.mxu0 0.0
  %7034 = vmatpush1.xpose.msra.mxu0 0.0
  %7035 = vmatprep.subr.mxu0 0.0
  %7036 = vmatpush1.xpose.msra.mxu0 0.0
  %7037 = vmatprep.subr.mxu0 0.0
  %7038 = vmatpush1.xpose.msra.mxu0 0.0
  %7039 = vmatprep.subr.mxu0 0.0
  %7040 = vmatpush1.xpose.msra.mxu0 0.0
  %7041 = vmatprep.subr.mxu0 0.0
  %7042 = vmatpush1.xpose.msra.mxu0 0.0
  %7043 = vmatprep.subr.mxu0 0.0
  %7044 = vmatpush1.xpose.msra.mxu0 0.0
  %7045 = vmatprep.subr.mxu0 0.0
  %7046 = vmatpush1.xpose.msra.mxu0 0.0
  %7047 = vmatprep.subr.mxu0 0.0
  %7048 = vmatpush1.xpose.msra.mxu0 0.0
  %7049 = vmatprep.subr.mxu0 0.0
  %7050 = vmatpush1.xpose.msra.mxu0 0.0
  %7051 = vmatprep.subr.mxu0 0.0
  %7052 = vmatpush1.xpose.msra.mxu0 0.0
  %7053 = vmatprep.subr.mxu0 0.0
  %7054 = vmatpush1.xpose.msra.mxu0 0.0
  %7055 = vmatprep.subr.mxu0 0.0
  %7056 = vmatpush1.xpose.msra.mxu0 0.0
  %7057 = vmatprep.subr.mxu0 0.0
  %7058 = vmatpush1.xpose.msra.mxu0 0.0
  %7059 = vmatprep.subr.mxu0 0.0
  %7060 = vmatpush1.xpose.msra.mxu0 0.0
  %7061 = vmatprep.subr.mxu0 0.0
  %7062 = vmatpush1.xpose.msra.mxu0 0.0
  %7063 = vmatprep.subr.mxu0 0.0
  %7064 = vmatpush1.xpose.msra.mxu0 0.0
  %7065 = vmatprep.subr.mxu0 0.0
  %7066 = vmatpush1.xpose.msra.mxu0 0.0
  %7067 = vmatprep.subr.mxu0 0.0
  %7068 = vmatpush1.xpose.msra.mxu0 0.0
  %7069 = vmatprep.subr.mxu0 0.0
  %7070 = vmatpush1.xpose.msra.mxu0 0.0
  %7071 = vmatprep.subr.mxu0 0.0
  %7072 = vmatpush1.xpose.msra.mxu0 0.0
  %7073 = vmatprep.subr.mxu0 0.0
  %7074 = vmatpush1.xpose.msra.mxu0 0.0
  %7075 = vmatprep.subr.mxu0 0.0
  %7076 = vmatpush1.xpose.msra.mxu0 0.0
  %7077 = vmatprep.subr.mxu0 0.0
  %7078 = vmatpush1.xpose.msra.mxu0 0.0
  %7079 = vmatprep.subr.mxu0 0.0
  %7080 = vmatpush1.xpose.msra.mxu0 0.0
  %7081 = vmatprep.subr.mxu0 0.0
  %7082 = vmatpush1.xpose.msra.mxu0 0.0
  %7083 = vmatprep.mubr.f32.mxu0 0.0
  %7084 = vmatmul.mubr.f32.gmra.mrb[0].mxu0 %v7015
  %v7085 = vpop.f32.mrb[0].mxu0
  %v7086 = vadd.f32 %v5808, %v7085
  %v7087 = vpop.f32.mrb[0].mxu0
  %7088 = vdwg.mxu0
  %v7089 = vsel %vm306, %v5886, -inf
  %7090 = vmax.xlane.f32.xlu0 %v7089
  %v7091 = vpop.xlane.xlu0 %7090
  %v7092 = vsel %vm306, %v5966, -inf
  %7093 = vmax.xlane.f32.xlu0 %v7092
  %v7094 = vpop.xlane.xlu0 %7093
  %v7095 = vsel %vm306, %v6046, -inf
  %7096 = vmax.xlane.f32.xlu0 %v7095
  %v7097 = vpop.xlane.xlu0 %7096
  %v7098 = vsel %vm306, %v6126, -inf
  %7099 = vmax.xlane.f32.xlu0 %v7098
  %v7100 = vpop.xlane.xlu0 %7099
  %v7101 = vsel %vm306, %v6206, -inf
  %7102 = vmax.xlane.f32.xlu0 %v7101
  %v7103 = vpop.xlane.xlu0 %7102
  %v7104 = vsel %vm306, %v6286, -inf
  %7105 = vmax.xlane.f32.xlu0 %v7104
  %v7106 = vpop.xlane.xlu0 %7105
  %v7107 = vsel %vm306, %v6366, -inf
  %7108 = vmax.xlane.f32.xlu0 %v7107
  %v7109 = vpop.xlane.xlu0 %7108
  %v7110 = vsel %vm306, %v6446, -inf
  %7111 = vmax.xlane.f32.xlu0 %v7110
  %v7112 = vpop.xlane.xlu0 %7111
  %v7113 = vsel %vm306, %v6526, -inf
  %7114 = vmax.xlane.f32.xlu0 %v7113
  %v7115 = vpop.xlane.xlu0 %7114
  %v7116 = vsel %vm306, %v6606, -inf
  %7117 = vmax.xlane.f32.xlu0 %v7116
  %v7118 = vpop.xlane.xlu0 %7117
  %v7119 = vsel %vm306, %v6686, -inf
  %7120 = vmax.xlane.f32.xlu0 %v7119
  %v7121 = vpop.xlane.xlu0 %7120
  %v7122 = vsel %vm306, %v6766, -inf
  %7123 = vmax.xlane.f32.xlu0 %v7122
  %v7124 = vpop.xlane.xlu0 %7123
  %v7125 = vsel %vm306, %v6846, -inf
  %7126 = vmax.xlane.f32.xlu0 %v7125
  %v7127 = vpop.xlane.xlu0 %7126
  %v7128 = vsel %vm306, %v6926, -inf
  %7129 = vmax.xlane.f32.xlu0 %v7128
  %v7130 = vpop.xlane.xlu0 %7129
  %v7131 = vsel %vm306, %v7006, -inf
  %7132 = vmax.xlane.f32.xlu0 %v7131
  %v7133 = vpop.xlane.xlu0 %7132
  %v7134 = vsel %vm306, %v7086, -inf
  %7135 = vmax.xlane.f32.xlu0 %v7134
  %v7136 = vpop.xlane.xlu0 %7135
  %v7137 = vsub.f32 %v5886, %v7091
  %v7138 = vsub.f32 %v5966, %v7094
  %v7139 = vsub.f32 %v6046, %v7097
  %v7140 = vsub.f32 %v6126, %v7100
  %v7141 = vsub.f32 %v6206, %v7103
  %v7142 = vsub.f32 %v6286, %v7106
  %v7143 = vsub.f32 %v6366, %v7109
  %v7144 = vsub.f32 %v6446, %v7112
  %v7145 = vsub.f32 %v6526, %v7115
  %v7146 = vsub.f32 %v6606, %v7118
  %v7147 = vsub.f32 %v6686, %v7121
  %v7148 = vsub.f32 %v6766, %v7124
  %v7149 = vsub.f32 %v6846, %v7127
  %v7150 = vsub.f32 %v6926, %v7130
  %v7151 = vsub.f32 %v7006, %v7133
  %v7152 = vsub.f32 %v7086, %v7136
  %v7153 = vmul.f32 %v7137, 1.442695
  %v7154 = vpow.pop %v7153
  %v7155 = vmul.f32 %v7138, 1.442695
  %v7156 = vpow.pop %v7155
  %v7157 = vmul.f32 %v7139, 1.442695
  %v7158 = vpow.pop %v7157
  %v7159 = vmul.f32 %v7140, 1.442695
  %v7160 = vpow.pop %v7159
  %v7161 = vmul.f32 %v7141, 1.442695
  %v7162 = vpow.pop %v7161
  %v7163 = vmul.f32 %v7142, 1.442695
  %v7164 = vpow.pop %v7163
  %v7165 = vmul.f32 %v7143, 1.442695
  %v7166 = vpow.pop %v7165
  %v7167 = vmul.f32 %v7144, 1.442695
  %v7168 = vpow.pop %v7167
  %v7169 = vmul.f32 %v7145, 1.442695
  %v7170 = vpow.pop %v7169
  %v7171 = vmul.f32 %v7146, 1.442695
  %v7172 = vpow.pop %v7171
  %v7173 = vmul.f32 %v7147, 1.442695
  %v7174 = vpow.pop %v7173
  %v7175 = vmul.f32 %v7148, 1.442695
  %v7176 = vpow.pop %v7175
  %v7177 = vmul.f32 %v7149, 1.442695
  %v7178 = vpow.pop %v7177
  %v7179 = vmul.f32 %v7150, 1.442695
  %v7180 = vpow.pop %v7179
  %v7181 = vmul.f32 %v7151, 1.442695
  %v7182 = vpow.pop %v7181
  %v7183 = vmul.f32 %v7152, 1.442695
  %v7184 = vpow.pop %v7183
  %v7185 = vsel %vm306, %v7154, 0.0
  %7186 = vadd.xlane.f32.xlu0 %v7185
  %v7187 = vpop.xlane.xlu0 %7186
  %v7188 = vsel %vm306, %v7156, 0.0
  %7189 = vadd.xlane.f32.xlu0 %v7188
  %v7190 = vpop.xlane.xlu0 %7189
  %v7191 = vsel %vm306, %v7158, 0.0
  %7192 = vadd.xlane.f32.xlu0 %v7191
  %v7193 = vpop.xlane.xlu0 %7192
  %v7194 = vsel %vm306, %v7160, 0.0
  %7195 = vadd.xlane.f32.xlu0 %v7194
  %v7196 = vpop.xlane.xlu0 %7195
  %v7197 = vsel %vm306, %v7162, 0.0
  %7198 = vadd.xlane.f32.xlu0 %v7197
  %v7199 = vpop.xlane.xlu0 %7198
  %v7200 = vsel %vm306, %v7164, 0.0
  %7201 = vadd.xlane.f32.xlu0 %v7200
  %v7202 = vpop.xlane.xlu0 %7201
  %v7203 = vsel %vm306, %v7166, 0.0
  %7204 = vadd.xlane.f32.xlu0 %v7203
  %v7205 = vpop.xlane.xlu0 %7204
  %v7206 = vsel %vm306, %v7168, 0.0
  %7207 = vadd.xlane.f32.xlu0 %v7206
  %v7208 = vpop.xlane.xlu0 %7207
  %v7209 = vsel %vm306, %v7170, 0.0
  %7210 = vadd.xlane.f32.xlu0 %v7209
  %v7211 = vpop.xlane.xlu0 %7210
  %v7212 = vsel %vm306, %v7172, 0.0
  %7213 = vadd.xlane.f32.xlu0 %v7212
  %v7214 = vpop.xlane.xlu0 %7213
  %v7215 = vsel %vm306, %v7174, 0.0
  %7216 = vadd.xlane.f32.xlu0 %v7215
  %v7217 = vpop.xlane.xlu0 %7216
  %v7218 = vsel %vm306, %v7176, 0.0
  %7219 = vadd.xlane.f32.xlu0 %v7218
  %v7220 = vpop.xlane.xlu0 %7219
  %v7221 = vsel %vm306, %v7178, 0.0
  %7222 = vadd.xlane.f32.xlu0 %v7221
  %v7223 = vpop.xlane.xlu0 %7222
  %v7224 = vsel %vm306, %v7180, 0.0
  %7225 = vadd.xlane.f32.xlu0 %v7224
  %v7226 = vpop.xlane.xlu0 %7225
  %v7227 = vsel %vm306, %v7182, 0.0
  %7228 = vadd.xlane.f32.xlu0 %v7227
  %v7229 = vpop.xlane.xlu0 %7228
  %v7230 = vsel %vm306, %v7184, 0.0
  %7231 = vadd.xlane.f32.xlu0 %v7230
  %v7232 = vpop.xlane.xlu0 %7231
  %v7233 = vrcp.pop %v7187
  %v7234 = vrcp.pop %v7190
  %v7235 = vrcp.pop %v7193
  %v7236 = vrcp.pop %v7196
  %v7237 = vrcp.pop %v7199
  %v7238 = vrcp.pop %v7202
  %v7239 = vrcp.pop %v7205
  %v7240 = vrcp.pop %v7208
  %v7241 = vrcp.pop %v7211
  %v7242 = vrcp.pop %v7214
  %v7243 = vrcp.pop %v7217
  %v7244 = vrcp.pop %v7220
  %v7245 = vrcp.pop %v7223
  %v7246 = vrcp.pop %v7226
  %v7247 = vrcp.pop %v7229
  %v7248 = vrcp.pop %v7232
  %v7249 = vmul.f32 %v7154, %v7233
  %v7250 = vmul.f32 %v7156, %v7234
  %v7251 = vmul.f32 %v7158, %v7235
  %v7252 = vmul.f32 %v7160, %v7236
  %v7253 = vmul.f32 %v7162, %v7237
  %v7254 = vmul.f32 %v7164, %v7238
  %v7255 = vmul.f32 %v7166, %v7239
  %v7256 = vmul.f32 %v7168, %v7240
  %v7257 = vmul.f32 %v7170, %v7241
  %v7258 = vmul.f32 %v7172, %v7242
  %v7259 = vmul.f32 %v7174, %v7243
  %v7260 = vmul.f32 %v7176, %v7244
  %v7261 = vmul.f32 %v7178, %v7245
  %v7262 = vmul.f32 %v7180, %v7246
  %v7263 = vmul.f32 %v7182, %v7247
  %v7264 = vmul.f32 %v7184, %v7248
  %7265 = vrot.lane.b32.xlu0 %v5761, 48
  %v7266 = vpop.permute.xlu0 %7265
  %v7269 = vsel %vm306, %v7249, 0
  %7271 = vmatprep.subr.mxu0 0.0
  %7272 = vmatpush1.msra.mxu0 %v7266
  %7273 = vmatprep.subr.mxu0 0.0
  %7274 = vmatpush1.msra.mxu0 0.0
  %7275 = vmatprep.subr.mxu0 0.0
  %7276 = vmatpush1.msra.mxu0 0.0
  %7277 = vmatprep.subr.mxu0 0.0
  %7278 = vmatpush1.msra.mxu0 0.0
  %7279 = vmatprep.subr.mxu0 0.0
  %7280 = vmatpush1.msra.mxu0 0.0
  %7281 = vmatprep.subr.mxu0 0.0
  %7282 = vmatpush1.msra.mxu0 0.0
  %7283 = vmatprep.subr.mxu0 0.0
  %7284 = vmatpush1.msra.mxu0 0.0
  %7285 = vmatprep.subr.mxu0 0.0
  %7286 = vmatpush1.msra.mxu0 0.0
  %7287 = vmatprep.subr.mxu0 0.0
  %7288 = vmatpush1.msra.mxu0 0.0
  %7289 = vmatprep.subr.mxu0 0.0
  %7290 = vmatpush1.msra.mxu0 0.0
  %7291 = vmatprep.subr.mxu0 0.0
  %7292 = vmatpush1.msra.mxu0 0.0
  %7293 = vmatprep.subr.mxu0 0.0
  %7294 = vmatpush1.msra.mxu0 0.0
  %7295 = vmatprep.subr.mxu0 0.0
  %7296 = vmatpush1.msra.mxu0 0.0
  %7297 = vmatprep.subr.mxu0 0.0
  %7298 = vmatpush1.msra.mxu0 0.0
  %7299 = vmatprep.subr.mxu0 0.0
  %7300 = vmatpush1.msra.mxu0 0.0
  %7301 = vmatprep.subr.mxu0 0.0
  %7302 = vmatpush1.msra.mxu0 0.0
  %7303 = vmatprep.subr.mxu0 0.0
  %7304 = vmatpush1.msra.mxu0 0.0
  %7305 = vmatprep.subr.mxu0 0.0
  %7306 = vmatpush1.msra.mxu0 0.0
  %7307 = vmatprep.subr.mxu0 0.0
  %7308 = vmatpush1.msra.mxu0 0.0
  %7309 = vmatprep.subr.mxu0 0.0
  %7310 = vmatpush1.msra.mxu0 0.0
  %7311 = vmatprep.subr.mxu0 0.0
  %7312 = vmatpush1.msra.mxu0 0.0
  %7313 = vmatprep.subr.mxu0 0.0
  %7314 = vmatpush1.msra.mxu0 0.0
  %7315 = vmatprep.subr.mxu0 0.0
  %7316 = vmatpush1.msra.mxu0 0.0
  %7317 = vmatprep.subr.mxu0 0.0
  %7318 = vmatpush1.msra.mxu0 0.0
  %7319 = vmatprep.subr.mxu0 0.0
  %7320 = vmatpush1.msra.mxu0 0.0
  %7321 = vmatprep.subr.mxu0 0.0
  %7322 = vmatpush1.msra.mxu0 0.0
  %7323 = vmatprep.subr.mxu0 0.0
  %7324 = vmatpush1.msra.mxu0 0.0
  %7325 = vmatprep.subr.mxu0 0.0
  %7326 = vmatpush1.msra.mxu0 0.0
  %7327 = vmatprep.subr.mxu0 0.0
  %7328 = vmatpush1.msra.mxu0 0.0
  %7329 = vmatprep.subr.mxu0 0.0
  %7330 = vmatpush1.msra.mxu0 0.0
  %7331 = vmatprep.subr.mxu0 0.0
  %7332 = vmatpush1.msra.mxu0 0.0
  %7333 = vmatprep.subr.mxu0 0.0
  %7334 = vmatpush1.msra.mxu0 0.0
  %7335 = vmatprep.mubr.f32.mxu0 0.0
  %7336 = vmatmul.mubr.f32.gmra.mrb[0].mxu0 %v7269
  %v7337 = vpop.f32.mrb[0].mxu0
  %v7338 = vadd.f32 0.0, %v7337
  %v7339 = vpop.f32.mrb[0].mxu0
  %7340 = vdwg.mxu0
  %7341 = vrot.lane.b32.xlu0 %v5762, 48
  %v7342 = vpop.permute.xlu0 %7341
  %v7345 = vsel %vm306, %v7250, 0
  %7347 = vmatprep.subr.mxu0 0.0
  %7348 = vmatpush1.msra.mxu0 %v7342
  %7349 = vmatprep.subr.mxu0 0.0
  %7350 = vmatpush1.msra.mxu0 0.0
  %7351 = vmatprep.subr.mxu0 0.0
  %7352 = vmatpush1.msra.mxu0 0.0
  %7353 = vmatprep.subr.mxu0 0.0
  %7354 = vmatpush1.msra.mxu0 0.0
  %7355 = vmatprep.subr.mxu0 0.0
  %7356 = vmatpush1.msra.mxu0 0.0
  %7357 = vmatprep.subr.mxu0 0.0
  %7358 = vmatpush1.msra.mxu0 0.0
  %7359 = vmatprep.subr.mxu0 0.0
  %7360 = vmatpush1.msra.mxu0 0.0
  %7361 = vmatprep.subr.mxu0 0.0
  %7362 = vmatpush1.msra.mxu0 0.0
  %7363 = vmatprep.subr.mxu0 0.0
  %7364 = vmatpush1.msra.mxu0 0.0
  %7365 = vmatprep.subr.mxu0 0.0
  %7366 = vmatpush1.msra.mxu0 0.0
  %7367 = vmatprep.subr.mxu0 0.0
  %7368 = vmatpush1.msra.mxu0 0.0
  %7369 = vmatprep.subr.mxu0 0.0
  %7370 = vmatpush1.msra.mxu0 0.0
  %7371 = vmatprep.subr.mxu0 0.0
  %7372 = vmatpush1.msra.mxu0 0.0
  %7373 = vmatprep.subr.mxu0 0.0
  %7374 = vmatpush1.msra.mxu0 0.0
  %7375 = vmatprep.subr.mxu0 0.0
  %7376 = vmatpush1.msra.mxu0 0.0
  %7377 = vmatprep.subr.mxu0 0.0
  %7378 = vmatpush1.msra.mxu0 0.0
  %7379 = vmatprep.subr.mxu0 0.0
  %7380 = vmatpush1.msra.mxu0 0.0
  %7381 = vmatprep.subr.mxu0 0.0
  %7382 = vmatpush1.msra.mxu0 0.0
  %7383 = vmatprep.subr.mxu0 0.0
  %7384 = vmatpush1.msra.mxu0 0.0
  %7385 = vmatprep.subr.mxu0 0.0
  %7386 = vmatpush1.msra.mxu0 0.0
  %7387 = vmatprep.subr.mxu0 0.0
  %7388 = vmatpush1.msra.mxu0 0.0
  %7389 = vmatprep.subr.mxu0 0.0
  %7390 = vmatpush1.msra.mxu0 0.0
  %7391 = vmatprep.subr.mxu0 0.0
  %7392 = vmatpush1.msra.mxu0 0.0
  %7393 = vmatprep.subr.mxu0 0.0
  %7394 = vmatpush1.msra.mxu0 0.0
  %7395 = vmatprep.subr.mxu0 0.0
  %7396 = vmatpush1.msra.mxu0 0.0
  %7397 = vmatprep.subr.mxu0 0.0
  %7398 = vmatpush1.msra.mxu0 0.0
  %7399 = vmatprep.subr.mxu0 0.0
  %7400 = vmatpush1.msra.mxu0 0.0
  %7401 = vmatprep.subr.mxu0 0.0
  %7402 = vmatpush1.msra.mxu0 0.0
  %7403 = vmatprep.subr.mxu0 0.0
  %7404 = vmatpush1.msra.mxu0 0.0
  %7405 = vmatprep.subr.mxu0 0.0
  %7406 = vmatpush1.msra.mxu0 0.0
  %7407 = vmatprep.subr.mxu0 0.0
  %7408 = vmatpush1.msra.mxu0 0.0
  %7409 = vmatprep.subr.mxu0 0.0
  %7410 = vmatpush1.msra.mxu0 0.0
  %7411 = vmatprep.mubr.f32.mxu0 0.0
  %7412 = vmatmul.mubr.f32.gmra.mrb[0].mxu0 %v7345
  %v7413 = vpop.f32.mrb[0].mxu0
  %v7414 = vadd.f32 0.0, %v7413
  %v7415 = vpop.f32.mrb[0].mxu0
  %7416 = vdwg.mxu0
  %7417 = vrot.lane.b32.xlu0 %v5763, 48
  %v7418 = vpop.permute.xlu0 %7417
  %v7421 = vsel %vm306, %v7251, 0
  %7423 = vmatprep.subr.mxu0 0.0
  %7424 = vmatpush1.msra.mxu0 %v7418
  %7425 = vmatprep.subr.mxu0 0.0
  %7426 = vmatpush1.msra.mxu0 0.0
  %7427 = vmatprep.subr.mxu0 0.0
  %7428 = vmatpush1.msra.mxu0 0.0
  %7429 = vmatprep.subr.mxu0 0.0
  %7430 = vmatpush1.msra.mxu0 0.0
  %7431 = vmatprep.subr.mxu0 0.0
  %7432 = vmatpush1.msra.mxu0 0.0
  %7433 = vmatprep.subr.mxu0 0.0
  %7434 = vmatpush1.msra.mxu0 0.0
  %7435 = vmatprep.subr.mxu0 0.0
  %7436 = vmatpush1.msra.mxu0 0.0
  %7437 = vmatprep.subr.mxu0 0.0
  %7438 = vmatpush1.msra.mxu0 0.0
  %7439 = vmatprep.subr.mxu0 0.0
  %7440 = vmatpush1.msra.mxu0 0.0
  %7441 = vmatprep.subr.mxu0 0.0
  %7442 = vmatpush1.msra.mxu0 0.0
  %7443 = vmatprep.subr.mxu0 0.0
  %7444 = vmatpush1.msra.mxu0 0.0
  %7445 = vmatprep.subr.mxu0 0.0
  %7446 = vmatpush1.msra.mxu0 0.0
  %7447 = vmatprep.subr.mxu0 0.0
  %7448 = vmatpush1.msra.mxu0 0.0
  %7449 = vmatprep.subr.mxu0 0.0
  %7450 = vmatpush1.msra.mxu0 0.0
  %7451 = vmatprep.subr.mxu0 0.0
  %7452 = vmatpush1.msra.mxu0 0.0
  %7453 = vmatprep.subr.mxu0 0.0
  %7454 = vmatpush1.msra.mxu0 0.0
  %7455 = vmatprep.subr.mxu0 0.0
  %7456 = vmatpush1.msra.mxu0 0.0
  %7457 = vmatprep.subr.mxu0 0.0
  %7458 = vmatpush1.msra.mxu0 0.0
  %7459 = vmatprep.subr.mxu0 0.0
  %7460 = vmatpush1.msra.mxu0 0.0
  %7461 = vmatprep.subr.mxu0 0.0
  %7462 = vmatpush1.msra.mxu0 0.0
  %7463 = vmatprep.subr.mxu0 0.0
  %7464 = vmatpush1.msra.mxu0 0.0
  %7465 = vmatprep.subr.mxu0 0.0
  %7466 = vmatpush1.msra.mxu0 0.0
  %7467 = vmatprep.subr.mxu0 0.0
  %7468 = vmatpush1.msra.mxu0 0.0
  %7469 = vmatprep.subr.mxu0 0.0
  %7470 = vmatpush1.msra.mxu0 0.0
  %7471 = vmatprep.subr.mxu0 0.0
  %7472 = vmatpush1.msra.mxu0 0.0
  %7473 = vmatprep.subr.mxu0 0.0
  %7474 = vmatpush1.msra.mxu0 0.0
  %7475 = vmatprep.subr.mxu0 0.0
  %7476 = vmatpush1.msra.mxu0 0.0
  %7477 = vmatprep.subr.mxu0 0.0
  %7478 = vmatpush1.msra.mxu0 0.0
  %7479 = vmatprep.subr.mxu0 0.0
  %7480 = vmatpush1.msra.mxu0 0.0
  %7481 = vmatprep.subr.mxu0 0.0
  %7482 = vmatpush1.msra.mxu0 0.0
  %7483 = vmatprep.subr.mxu0 0.0
  %7484 = vmatpush1.msra.mxu0 0.0
  %7485 = vmatprep.subr.mxu0 0.0
  %7486 = vmatpush1.msra.mxu0 0.0
  %7487 = vmatprep.mubr.f32.mxu0 0.0
  %7488 = vmatmul.mubr.f32.gmra.mrb[0].mxu0 %v7421
  %v7489 = vpop.f32.mrb[0].mxu0
  %v7490 = vadd.f32 0.0, %v7489
  %v7491 = vpop.f32.mrb[0].mxu0
  %7492 = vdwg.mxu0
  %7493 = vrot.lane.b32.xlu0 %v5764, 48
  %v7494 = vpop.permute.xlu0 %7493
  %v7497 = vsel %vm306, %v7252, 0
  %7499 = vmatprep.subr.mxu0 0.0
  %7500 = vmatpush1.msra.mxu0 %v7494
  %7501 = vmatprep.subr.mxu0 0.0
  %7502 = vmatpush1.msra.mxu0 0.0
  %7503 = vmatprep.subr.mxu0 0.0
  %7504 = vmatpush1.msra.mxu0 0.0
  %7505 = vmatprep.subr.mxu0 0.0
  %7506 = vmatpush1.msra.mxu0 0.0
  %7507 = vmatprep.subr.mxu0 0.0
  %7508 = vmatpush1.msra.mxu0 0.0
  %7509 = vmatprep.subr.mxu0 0.0
  %7510 = vmatpush1.msra.mxu0 0.0
  %7511 = vmatprep.subr.mxu0 0.0
  %7512 = vmatpush1.msra.mxu0 0.0
  %7513 = vmatprep.subr.mxu0 0.0
  %7514 = vmatpush1.msra.mxu0 0.0
  %7515 = vmatprep.subr.mxu0 0.0
  %7516 = vmatpush1.msra.mxu0 0.0
  %7517 = vmatprep.subr.mxu0 0.0
  %7518 = vmatpush1.msra.mxu0 0.0
  %7519 = vmatprep.subr.mxu0 0.0
  %7520 = vmatpush1.msra.mxu0 0.0
  %7521 = vmatprep.subr.mxu0 0.0
  %7522 = vmatpush1.msra.mxu0 0.0
  %7523 = vmatprep.subr.mxu0 0.0
  %7524 = vmatpush1.msra.mxu0 0.0
  %7525 = vmatprep.subr.mxu0 0.0
  %7526 = vmatpush1.msra.mxu0 0.0
  %7527 = vmatprep.subr.mxu0 0.0
  %7528 = vmatpush1.msra.mxu0 0.0
  %7529 = vmatprep.subr.mxu0 0.0
  %7530 = vmatpush1.msra.mxu0 0.0
  %7531 = vmatprep.subr.mxu0 0.0
  %7532 = vmatpush1.msra.mxu0 0.0
  %7533 = vmatprep.subr.mxu0 0.0
  %7534 = vmatpush1.msra.mxu0 0.0
  %7535 = vmatprep.subr.mxu0 0.0
  %7536 = vmatpush1.msra.mxu0 0.0
  %7537 = vmatprep.subr.mxu0 0.0
  %7538 = vmatpush1.msra.mxu0 0.0
  %7539 = vmatprep.subr.mxu0 0.0
  %7540 = vmatpush1.msra.mxu0 0.0
  %7541 = vmatprep.subr.mxu0 0.0
  %7542 = vmatpush1.msra.mxu0 0.0
  %7543 = vmatprep.subr.mxu0 0.0
  %7544 = vmatpush1.msra.mxu0 0.0
  %7545 = vmatprep.subr.mxu0 0.0
  %7546 = vmatpush1.msra.mxu0 0.0
  %7547 = vmatprep.subr.mxu0 0.0
  %7548 = vmatpush1.msra.mxu0 0.0
  %7549 = vmatprep.subr.mxu0 0.0
  %7550 = vmatpush1.msra.mxu0 0.0
  %7551 = vmatprep.subr.mxu0 0.0
  %7552 = vmatpush1.msra.mxu0 0.0
  %7553 = vmatprep.subr.mxu0 0.0
  %7554 = vmatpush1.msra.mxu0 0.0
  %7555 = vmatprep.subr.mxu0 0.0
  %7556 = vmatpush1.msra.mxu0 0.0
  %7557 = vmatprep.subr.mxu0 0.0
  %7558 = vmatpush1.msra.mxu0 0.0
  %7559 = vmatprep.subr.mxu0 0.0
  %7560 = vmatpush1.msra.mxu0 0.0
  %7561 = vmatprep.subr.mxu0 0.0
  %7562 = vmatpush1.msra.mxu0 0.0
  %7563 = vmatprep.mubr.f32.mxu0 0.0
  %7564 = vmatmul.mubr.f32.gmra.mrb[0].mxu0 %v7497
  %v7565 = vpop.f32.mrb[0].mxu0
  %v7566 = vadd.f32 0.0, %v7565
  %v7567 = vpop.f32.mrb[0].mxu0
  %7568 = vdwg.mxu0
  %7569 = vrot.lane.b32.xlu0 %v5765, 48
  %v7570 = vpop.permute.xlu0 %7569
  %v7573 = vsel %vm306, %v7253, 0
  %7575 = vmatprep.subr.mxu0 0.0
  %7576 = vmatpush1.msra.mxu0 %v7570
  %7577 = vmatprep.subr.mxu0 0.0
  %7578 = vmatpush1.msra.mxu0 0.0
  %7579 = vmatprep.subr.mxu0 0.0
  %7580 = vmatpush1.msra.mxu0 0.0
  %7581 = vmatprep.subr.mxu0 0.0
  %7582 = vmatpush1.msra.mxu0 0.0
  %7583 = vmatprep.subr.mxu0 0.0
  %7584 = vmatpush1.msra.mxu0 0.0
  %7585 = vmatprep.subr.mxu0 0.0
  %7586 = vmatpush1.msra.mxu0 0.0
  %7587 = vmatprep.subr.mxu0 0.0
  %7588 = vmatpush1.msra.mxu0 0.0
  %7589 = vmatprep.subr.mxu0 0.0
  %7590 = vmatpush1.msra.mxu0 0.0
  %7591 = vmatprep.subr.mxu0 0.0
  %7592 = vmatpush1.msra.mxu0 0.0
  %7593 = vmatprep.subr.mxu0 0.0
  %7594 = vmatpush1.msra.mxu0 0.0
  %7595 = vmatprep.subr.mxu0 0.0
  %7596 = vmatpush1.msra.mxu0 0.0
  %7597 = vmatprep.subr.mxu0 0.0
  %7598 = vmatpush1.msra.mxu0 0.0
  %7599 = vmatprep.subr.mxu0 0.0
  %7600 = vmatpush1.msra.mxu0 0.0
  %7601 = vmatprep.subr.mxu0 0.0
  %7602 = vmatpush1.msra.mxu0 0.0
  %7603 = vmatprep.subr.mxu0 0.0
  %7604 = vmatpush1.msra.mxu0 0.0
  %7605 = vmatprep.subr.mxu0 0.0
  %7606 = vmatpush1.msra.mxu0 0.0
  %7607 = vmatprep.subr.mxu0 0.0
  %7608 = vmatpush1.msra.mxu0 0.0
  %7609 = vmatprep.subr.mxu0 0.0
  %7610 = vmatpush1.msra.mxu0 0.0
  %7611 = vmatprep.subr.mxu0 0.0
  %7612 = vmatpush1.msra.mxu0 0.0
  %7613 = vmatprep.subr.mxu0 0.0
  %7614 = vmatpush1.msra.mxu0 0.0
  %7615 = vmatprep.subr.mxu0 0.0
  %7616 = vmatpush1.msra.mxu0 0.0
  %7617 = vmatprep.subr.mxu0 0.0
  %7618 = vmatpush1.msra.mxu0 0.0
  %7619 = vmatprep.subr.mxu0 0.0
  %7620 = vmatpush1.msra.mxu0 0.0
  %7621 = vmatprep.subr.mxu0 0.0
  %7622 = vmatpush1.msra.mxu0 0.0
  %7623 = vmatprep.subr.mxu0 0.0
  %7624 = vmatpush1.msra.mxu0 0.0
  %7625 = vmatprep.subr.mxu0 0.0
  %7626 = vmatpush1.msra.mxu0 0.0
  %7627 = vmatprep.subr.mxu0 0.0
  %7628 = vmatpush1.msra.mxu0 0.0
  %7629 = vmatprep.subr.mxu0 0.0
  %7630 = vmatpush1.msra.mxu0 0.0
  %7631 = vmatprep.subr.mxu0 0.0
  %7632 = vmatpush1.msra.mxu0 0.0
  %7633 = vmatprep.subr.mxu0 0.0
  %7634 = vmatpush1.msra.mxu0 0.0
  %7635 = vmatprep.subr.mxu0 0.0
  %7636 = vmatpush1.msra.mxu0 0.0
  %7637 = vmatprep.subr.mxu0 0.0
  %7638 = vmatpush1.msra.mxu0 0.0
  %7639 = vmatprep.mubr.f32.mxu0 0.0
  %7640 = vmatmul.mubr.f32.gmra.mrb[0].mxu0 %v7573
  %v7641 = vpop.f32.mrb[0].mxu0
  %v7642 = vadd.f32 0.0, %v7641
  %v7643 = vpop.f32.mrb[0].mxu0
  %7644 = vdwg.mxu0
  %7645 = vrot.lane.b32.xlu0 %v5766, 48
  %v7646 = vpop.permute.xlu0 %7645
  %v7649 = vsel %vm306, %v7254, 0
  %7651 = vmatprep.subr.mxu0 0.0
  %7652 = vmatpush1.msra.mxu0 %v7646
  %7653 = vmatprep.subr.mxu0 0.0
  %7654 = vmatpush1.msra.mxu0 0.0
  %7655 = vmatprep.subr.mxu0 0.0
  %7656 = vmatpush1.msra.mxu0 0.0
  %7657 = vmatprep.subr.mxu0 0.0
  %7658 = vmatpush1.msra.mxu0 0.0
  %7659 = vmatprep.subr.mxu0 0.0
  %7660 = vmatpush1.msra.mxu0 0.0
  %7661 = vmatprep.subr.mxu0 0.0
  %7662 = vmatpush1.msra.mxu0 0.0
  %7663 = vmatprep.subr.mxu0 0.0
  %7664 = vmatpush1.msra.mxu0 0.0
  %7665 = vmatprep.subr.mxu0 0.0
  %7666 = vmatpush1.msra.mxu0 0.0
  %7667 = vmatprep.subr.mxu0 0.0
  %7668 = vmatpush1.msra.mxu0 0.0
  %7669 = vmatprep.subr.mxu0 0.0
  %7670 = vmatpush1.msra.mxu0 0.0
  %7671 = vmatprep.subr.mxu0 0.0
  %7672 = vmatpush1.msra.mxu0 0.0
  %7673 = vmatprep.subr.mxu0 0.0
  %7674 = vmatpush1.msra.mxu0 0.0
  %7675 = vmatprep.subr.mxu0 0.0
  %7676 = vmatpush1.msra.mxu0 0.0
  %7677 = vmatprep.subr.mxu0 0.0
  %7678 = vmatpush1.msra.mxu0 0.0
  %7679 = vmatprep.subr.mxu0 0.0
  %7680 = vmatpush1.msra.mxu0 0.0
  %7681 = vmatprep.subr.mxu0 0.0
  %7682 = vmatpush1.msra.mxu0 0.0
  %7683 = vmatprep.subr.mxu0 0.0
  %7684 = vmatpush1.msra.mxu0 0.0
  %7685 = vmatprep.subr.mxu0 0.0
  %7686 = vmatpush1.msra.mxu0 0.0
  %7687 = vmatprep.subr.mxu0 0.0
  %7688 = vmatpush1.msra.mxu0 0.0
  %7689 = vmatprep.subr.mxu0 0.0
  %7690 = vmatpush1.msra.mxu0 0.0
  %7691 = vmatprep.subr.mxu0 0.0
  %7692 = vmatpush1.msra.mxu0 0.0
  %7693 = vmatprep.subr.mxu0 0.0
  %7694 = vmatpush1.msra.mxu0 0.0
  %7695 = vmatprep.subr.mxu0 0.0
  %7696 = vmatpush1.msra.mxu0 0.0
  %7697 = vmatprep.subr.mxu0 0.0
  %7698 = vmatpush1.msra.mxu0 0.0
  %7699 = vmatprep.subr.mxu0 0.0
  %7700 = vmatpush1.msra.mxu0 0.0
  %7701 = vmatprep.subr.mxu0 0.0
  %7702 = vmatpush1.msra.mxu0 0.0
  %7703 = vmatprep.subr.mxu0 0.0
  %7704 = vmatpush1.msra.mxu0 0.0
  %7705 = vmatprep.subr.mxu0 0.0
  %7706 = vmatpush1.msra.mxu0 0.0
  %7707 = vmatprep.subr.mxu0 0.0
  %7708 = vmatpush1.msra.mxu0 0.0
  %7709 = vmatprep.subr.mxu0 0.0
  %7710 = vmatpush1.msra.mxu0 0.0
  %7711 = vmatprep.subr.mxu0 0.0
  %7712 = vmatpush1.msra.mxu0 0.0
  %7713 = vmatprep.subr.mxu0 0.0
  %7714 = vmatpush1.msra.mxu0 0.0
  %7715 = vmatprep.mubr.f32.mxu0 0.0
  %7716 = vmatmul.mubr.f32.gmra.mrb[0].mxu0 %v7649
  %v7717 = vpop.f32.mrb[0].mxu0
  %v7718 = vadd.f32 0.0, %v7717
  %v7719 = vpop.f32.mrb[0].mxu0
  %7720 = vdwg.mxu0
  %7721 = vrot.lane.b32.xlu0 %v5767, 48
  %v7722 = vpop.permute.xlu0 %7721
  %v7725 = vsel %vm306, %v7255, 0
  %7727 = vmatprep.subr.mxu0 0.0
  %7728 = vmatpush1.msra.mxu0 %v7722
  %7729 = vmatprep.subr.mxu0 0.0
  %7730 = vmatpush1.msra.mxu0 0.0
  %7731 = vmatprep.subr.mxu0 0.0
  %7732 = vmatpush1.msra.mxu0 0.0
  %7733 = vmatprep.subr.mxu0 0.0
  %7734 = vmatpush1.msra.mxu0 0.0
  %7735 = vmatprep.subr.mxu0 0.0
  %7736 = vmatpush1.msra.mxu0 0.0
  %7737 = vmatprep.subr.mxu0 0.0
  %7738 = vmatpush1.msra.mxu0 0.0
  %7739 = vmatprep.subr.mxu0 0.0
  %7740 = vmatpush1.msra.mxu0 0.0
  %7741 = vmatprep.subr.mxu0 0.0
  %7742 = vmatpush1.msra.mxu0 0.0
  %7743 = vmatprep.subr.mxu0 0.0
  %7744 = vmatpush1.msra.mxu0 0.0
  %7745 = vmatprep.subr.mxu0 0.0
  %7746 = vmatpush1.msra.mxu0 0.0
  %7747 = vmatprep.subr.mxu0 0.0
  %7748 = vmatpush1.msra.mxu0 0.0
  %7749 = vmatprep.subr.mxu0 0.0
  %7750 = vmatpush1.msra.mxu0 0.0
  %7751 = vmatprep.subr.mxu0 0.0
  %7752 = vmatpush1.msra.mxu0 0.0
  %7753 = vmatprep.subr.mxu0 0.0
  %7754 = vmatpush1.msra.mxu0 0.0
  %7755 = vmatprep.subr.mxu0 0.0
  %7756 = vmatpush1.msra.mxu0 0.0
  %7757 = vmatprep.subr.mxu0 0.0
  %7758 = vmatpush1.msra.mxu0 0.0
  %7759 = vmatprep.subr.mxu0 0.0
  %7760 = vmatpush1.msra.mxu0 0.0
  %7761 = vmatprep.subr.mxu0 0.0
  %7762 = vmatpush1.msra.mxu0 0.0
  %7763 = vmatprep.subr.mxu0 0.0
  %7764 = vmatpush1.msra.mxu0 0.0
  %7765 = vmatprep.subr.mxu0 0.0
  %7766 = vmatpush1.msra.mxu0 0.0
  %7767 = vmatprep.subr.mxu0 0.0
  %7768 = vmatpush1.msra.mxu0 0.0
  %7769 = vmatprep.subr.mxu0 0.0
  %7770 = vmatpush1.msra.mxu0 0.0
  %7771 = vmatprep.subr.mxu0 0.0
  %7772 = vmatpush1.msra.mxu0 0.0
  %7773 = vmatprep.subr.mxu0 0.0
  %7774 = vmatpush1.msra.mxu0 0.0
  %7775 = vmatprep.subr.mxu0 0.0
  %7776 = vmatpush1.msra.mxu0 0.0
  %7777 = vmatprep.subr.mxu0 0.0
  %7778 = vmatpush1.msra.mxu0 0.0
  %7779 = vmatprep.subr.mxu0 0.0
  %7780 = vmatpush1.msra.mxu0 0.0
  %7781 = vmatprep.subr.mxu0 0.0
  %7782 = vmatpush1.msra.mxu0 0.0
  %7783 = vmatprep.subr.mxu0 0.0
  %7784 = vmatpush1.msra.mxu0 0.0
  %7785 = vmatprep.subr.mxu0 0.0
  %7786 = vmatpush1.msra.mxu0 0.0
  %7787 = vmatprep.subr.mxu0 0.0
  %7788 = vmatpush1.msra.mxu0 0.0
  %7789 = vmatprep.subr.mxu0 0.0
  %7790 = vmatpush1.msra.mxu0 0.0
  %7791 = vmatprep.mubr.f32.mxu0 0.0
  %7792 = vmatmul.mubr.f32.gmra.mrb[0].mxu0 %v7725
  %v7793 = vpop.f32.mrb[0].mxu0
  %v7794 = vadd.f32 0.0, %v7793
  %v7795 = vpop.f32.mrb[0].mxu0
  %7796 = vdwg.mxu0
  %7797 = vrot.lane.b32.xlu0 %v5768, 48
  %v7798 = vpop.permute.xlu0 %7797
  %v7801 = vsel %vm306, %v7256, 0
  %7803 = vmatprep.subr.mxu0 0.0
  %7804 = vmatpush1.msra.mxu0 %v7798
  %7805 = vmatprep.subr.mxu0 0.0
  %7806 = vmatpush1.msra.mxu0 0.0
  %7807 = vmatprep.subr.mxu0 0.0
  %7808 = vmatpush1.msra.mxu0 0.0
  %7809 = vmatprep.subr.mxu0 0.0
  %7810 = vmatpush1.msra.mxu0 0.0
  %7811 = vmatprep.subr.mxu0 0.0
  %7812 = vmatpush1.msra.mxu0 0.0
  %7813 = vmatprep.subr.mxu0 0.0
  %7814 = vmatpush1.msra.mxu0 0.0
  %7815 = vmatprep.subr.mxu0 0.0
  %7816 = vmatpush1.msra.mxu0 0.0
  %7817 = vmatprep.subr.mxu0 0.0
  %7818 = vmatpush1.msra.mxu0 0.0
  %7819 = vmatprep.subr.mxu0 0.0
  %7820 = vmatpush1.msra.mxu0 0.0
  %7821 = vmatprep.subr.mxu0 0.0
  %7822 = vmatpush1.msra.mxu0 0.0
  %7823 = vmatprep.subr.mxu0 0.0
  %7824 = vmatpush1.msra.mxu0 0.0
  %7825 = vmatprep.subr.mxu0 0.0
  %7826 = vmatpush1.msra.mxu0 0.0
  %7827 = vmatprep.subr.mxu0 0.0
  %7828 = vmatpush1.msra.mxu0 0.0
  %7829 = vmatprep.subr.mxu0 0.0
  %7830 = vmatpush1.msra.mxu0 0.0
  %7831 = vmatprep.subr.mxu0 0.0
  %7832 = vmatpush1.msra.mxu0 0.0
  %7833 = vmatprep.subr.mxu0 0.0
  %7834 = vmatpush1.msra.mxu0 0.0
  %7835 = vmatprep.subr.mxu0 0.0
  %7836 = vmatpush1.msra.mxu0 0.0
  %7837 = vmatprep.subr.mxu0 0.0
  %7838 = vmatpush1.msra.mxu0 0.0
  %7839 = vmatprep.subr.mxu0 0.0
  %7840 = vmatpush1.msra.mxu0 0.0
  %7841 = vmatprep.subr.mxu0 0.0
  %7842 = vmatpush1.msra.mxu0 0.0
  %7843 = vmatprep.subr.mxu0 0.0
  %7844 = vmatpush1.msra.mxu0 0.0
  %7845 = vmatprep.subr.mxu0 0.0
  %7846 = vmatpush1.msra.mxu0 0.0
  %7847 = vmatprep.subr.mxu0 0.0
  %7848 = vmatpush1.msra.mxu0 0.0
  %7849 = vmatprep.subr.mxu0 0.0
  %7850 = vmatpush1.msra.mxu0 0.0
  %7851 = vmatprep.subr.mxu0 0.0
  %7852 = vmatpush1.msra.mxu0 0.0
  %7853 = vmatprep.subr.mxu0 0.0
  %7854 = vmatpush1.msra.mxu0 0.0
  %7855 = vmatprep.subr.mxu0 0.0
  %7856 = vmatpush1.msra.mxu0 0.0
  %7857 = vmatprep.subr.mxu0 0.0
  %7858 = vmatpush1.msra.mxu0 0.0
  %7859 = vmatprep.subr.mxu0 0.0
  %7860 = vmatpush1.msra.mxu0 0.0
  %7861 = vmatprep.subr.mxu0 0.0
  %7862 = vmatpush1.msra.mxu0 0.0
  %7863 = vmatprep.subr.mxu0 0.0
  %7864 = vmatpush1.msra.mxu0 0.0
  %7865 = vmatprep.subr.mxu0 0.0
  %7866 = vmatpush1.msra.mxu0 0.0
  %7867 = vmatprep.mubr.f32.mxu0 0.0
  %7868 = vmatmul.mubr.f32.gmra.mrb[0].mxu0 %v7801
  %v7869 = vpop.f32.mrb[0].mxu0
  %v7870 = vadd.f32 0.0, %v7869
  %v7871 = vpop.f32.mrb[0].mxu0
  %7872 = vdwg.mxu0
  %7873 = vrot.lane.b32.xlu0 %v5769, 48
  %v7874 = vpop.permute.xlu0 %7873
  %v7877 = vsel %vm306, %v7257, 0
  %7879 = vmatprep.subr.mxu0 0.0
  %7880 = vmatpush1.msra.mxu0 %v7874
  %7881 = vmatprep.subr.mxu0 0.0
  %7882 = vmatpush1.msra.mxu0 0.0
  %7883 = vmatprep.subr.mxu0 0.0
  %7884 = vmatpush1.msra.mxu0 0.0
  %7885 = vmatprep.subr.mxu0 0.0
  %7886 = vmatpush1.msra.mxu0 0.0
  %7887 = vmatprep.subr.mxu0 0.0
  %7888 = vmatpush1.msra.mxu0 0.0
  %7889 = vmatprep.subr.mxu0 0.0
  %7890 = vmatpush1.msra.mxu0 0.0
  %7891 = vmatprep.subr.mxu0 0.0
  %7892 = vmatpush1.msra.mxu0 0.0
  %7893 = vmatprep.subr.mxu0 0.0
  %7894 = vmatpush1.msra.mxu0 0.0
  %7895 = vmatprep.subr.mxu0 0.0
  %7896 = vmatpush1.msra.mxu0 0.0
  %7897 = vmatprep.subr.mxu0 0.0
  %7898 = vmatpush1.msra.mxu0 0.0
  %7899 = vmatprep.subr.mxu0 0.0
  %7900 = vmatpush1.msra.mxu0 0.0
  %7901 = vmatprep.subr.mxu0 0.0
  %7902 = vmatpush1.msra.mxu0 0.0
  %7903 = vmatprep.subr.mxu0 0.0
  %7904 = vmatpush1.msra.mxu0 0.0
  %7905 = vmatprep.subr.mxu0 0.0
  %7906 = vmatpush1.msra.mxu0 0.0
  %7907 = vmatprep.subr.mxu0 0.0
  %7908 = vmatpush1.msra.mxu0 0.0
  %7909 = vmatprep.subr.mxu0 0.0
  %7910 = vmatpush1.msra.mxu0 0.0
  %7911 = vmatprep.subr.mxu0 0.0
  %7912 = vmatpush1.msra.mxu0 0.0
  %7913 = vmatprep.subr.mxu0 0.0
  %7914 = vmatpush1.msra.mxu0 0.0
  %7915 = vmatprep.subr.mxu0 0.0
  %7916 = vmatpush1.msra.mxu0 0.0
  %7917 = vmatprep.subr.mxu0 0.0
  %7918 = vmatpush1.msra.mxu0 0.0
  %7919 = vmatprep.subr.mxu0 0.0
  %7920 = vmatpush1.msra.mxu0 0.0
  %7921 = vmatprep.subr.mxu0 0.0
  %7922 = vmatpush1.msra.mxu0 0.0
  %7923 = vmatprep.subr.mxu0 0.0
  %7924 = vmatpush1.msra.mxu0 0.0
  %7925 = vmatprep.subr.mxu0 0.0
  %7926 = vmatpush1.msra.mxu0 0.0
  %7927 = vmatprep.subr.mxu0 0.0
  %7928 = vmatpush1.msra.mxu0 0.0
  %7929 = vmatprep.subr.mxu0 0.0
  %7930 = vmatpush1.msra.mxu0 0.0
  %7931 = vmatprep.subr.mxu0 0.0
  %7932 = vmatpush1.msra.mxu0 0.0
  %7933 = vmatprep.subr.mxu0 0.0
  %7934 = vmatpush1.msra.mxu0 0.0
  %7935 = vmatprep.subr.mxu0 0.0
  %7936 = vmatpush1.msra.mxu0 0.0
  %7937 = vmatprep.subr.mxu0 0.0
  %7938 = vmatpush1.msra.mxu0 0.0
  %7939 = vmatprep.subr.mxu0 0.0
  %7940 = vmatpush1.msra.mxu0 0.0
  %7941 = vmatprep.subr.mxu0 0.0
  %7942 = vmatpush1.msra.mxu0 0.0
  %7943 = vmatprep.mubr.f32.mxu0 0.0
  %7944 = vmatmul.mubr.f32.gmra.mrb[0].mxu0 %v7877
  %v7945 = vpop.f32.mrb[0].mxu0
  %v7946 = vadd.f32 0.0, %v7945
  %v7947 = vpop.f32.mrb[0].mxu0
  %7948 = vdwg.mxu0
  %7949 = vrot.lane.b32.xlu0 %v5770, 48
  %v7950 = vpop.permute.xlu0 %7949
  %v7953 = vsel %vm306, %v7258, 0
  %7955 = vmatprep.subr.mxu0 0.0
  %7956 = vmatpush1.msra.mxu0 %v7950
  %7957 = vmatprep.subr.mxu0 0.0
  %7958 = vmatpush1.msra.mxu0 0.0
  %7959 = vmatprep.subr.mxu0 0.0
  %7960 = vmatpush1.msra.mxu0 0.0
  %7961 = vmatprep.subr.mxu0 0.0
  %7962 = vmatpush1.msra.mxu0 0.0
  %7963 = vmatprep.subr.mxu0 0.0
  %7964 = vmatpush1.msra.mxu0 0.0
  %7965 = vmatprep.subr.mxu0 0.0
  %7966 = vmatpush1.msra.mxu0 0.0
  %7967 = vmatprep.subr.mxu0 0.0
  %7968 = vmatpush1.msra.mxu0 0.0
  %7969 = vmatprep.subr.mxu0 0.0
  %7970 = vmatpush1.msra.mxu0 0.0
  %7971 = vmatprep.subr.mxu0 0.0
  %7972 = vmatpush1.msra.mxu0 0.0
  %7973 = vmatprep.subr.mxu0 0.0
  %7974 = vmatpush1.msra.mxu0 0.0
  %7975 = vmatprep.subr.mxu0 0.0
  %7976 = vmatpush1.msra.mxu0 0.0
  %7977 = vmatprep.subr.mxu0 0.0
  %7978 = vmatpush1.msra.mxu0 0.0
  %7979 = vmatprep.subr.mxu0 0.0
  %7980 = vmatpush1.msra.mxu0 0.0
  %7981 = vmatprep.subr.mxu0 0.0
  %7982 = vmatpush1.msra.mxu0 0.0
  %7983 = vmatprep.subr.mxu0 0.0
  %7984 = vmatpush1.msra.mxu0 0.0
  %7985 = vmatprep.subr.mxu0 0.0
  %7986 = vmatpush1.msra.mxu0 0.0
  %7987 = vmatprep.subr.mxu0 0.0
  %7988 = vmatpush1.msra.mxu0 0.0
  %7989 = vmatprep.subr.mxu0 0.0
  %7990 = vmatpush1.msra.mxu0 0.0
  %7991 = vmatprep.subr.mxu0 0.0
  %7992 = vmatpush1.msra.mxu0 0.0
  %7993 = vmatprep.subr.mxu0 0.0
  %7994 = vmatpush1.msra.mxu0 0.0
  %7995 = vmatprep.subr.mxu0 0.0
  %7996 = vmatpush1.msra.mxu0 0.0
  %7997 = vmatprep.subr.mxu0 0.0
  %7998 = vmatpush1.msra.mxu0 0.0
  %7999 = vmatprep.subr.mxu0 0.0
  %8000 = vmatpush1.msra.mxu0 0.0
  %8001 = vmatprep.subr.mxu0 0.0
  %8002 = vmatpush1.msra.mxu0 0.0
  %8003 = vmatprep.subr.mxu0 0.0
  %8004 = vmatpush1.msra.mxu0 0.0
  %8005 = vmatprep.subr.mxu0 0.0
  %8006 = vmatpush1.msra.mxu0 0.0
  %8007 = vmatprep.subr.mxu0 0.0
  %8008 = vmatpush1.msra.mxu0 0.0
  %8009 = vmatprep.subr.mxu0 0.0
  %8010 = vmatpush1.msra.mxu0 0.0
  %8011 = vmatprep.subr.mxu0 0.0
  %8012 = vmatpush1.msra.mxu0 0.0
  %8013 = vmatprep.subr.mxu0 0.0
  %8014 = vmatpush1.msra.mxu0 0.0
  %8015 = vmatprep.subr.mxu0 0.0
  %8016 = vmatpush1.msra.mxu0 0.0
  %8017 = vmatprep.subr.mxu0 0.0
  %8018 = vmatpush1.msra.mxu0 0.0
  %8019 = vmatprep.mubr.f32.mxu0 0.0
  %8020 = vmatmul.mubr.f32.gmra.mrb[0].mxu0 %v7953
  %v8021 = vpop.f32.mrb[0].mxu0
  %v8022 = vadd.f32 0.0, %v8021
  %v8023 = vpop.f32.mrb[0].mxu0
  %8024 = vdwg.mxu0
  %8025 = vrot.lane.b32.xlu0 %v5771, 48
  %v8026 = vpop.permute.xlu0 %8025
  %v8029 = vsel %vm306, %v7259, 0
  %8031 = vmatprep.subr.mxu0 0.0
  %8032 = vmatpush1.msra.mxu0 %v8026
  %8033 = vmatprep.subr.mxu0 0.0
  %8034 = vmatpush1.msra.mxu0 0.0
  %8035 = vmatprep.subr.mxu0 0.0
  %8036 = vmatpush1.msra.mxu0 0.0
  %8037 = vmatprep.subr.mxu0 0.0
  %8038 = vmatpush1.msra.mxu0 0.0
  %8039 = vmatprep.subr.mxu0 0.0
  %8040 = vmatpush1.msra.mxu0 0.0
  %8041 = vmatprep.subr.mxu0 0.0
  %8042 = vmatpush1.msra.mxu0 0.0
  %8043 = vmatprep.subr.mxu0 0.0
  %8044 = vmatpush1.msra.mxu0 0.0
  %8045 = vmatprep.subr.mxu0 0.0
  %8046 = vmatpush1.msra.mxu0 0.0
  %8047 = vmatprep.subr.mxu0 0.0
  %8048 = vmatpush1.msra.mxu0 0.0
  %8049 = vmatprep.subr.mxu0 0.0
  %8050 = vmatpush1.msra.mxu0 0.0
  %8051 = vmatprep.subr.mxu0 0.0
  %8052 = vmatpush1.msra.mxu0 0.0
  %8053 = vmatprep.subr.mxu0 0.0
  %8054 = vmatpush1.msra.mxu0 0.0
  %8055 = vmatprep.subr.mxu0 0.0
  %8056 = vmatpush1.msra.mxu0 0.0
  %8057 = vmatprep.subr.mxu0 0.0
  %8058 = vmatpush1.msra.mxu0 0.0
  %8059 = vmatprep.subr.mxu0 0.0
  %8060 = vmatpush1.msra.mxu0 0.0
  %8061 = vmatprep.subr.mxu0 0.0
  %8062 = vmatpush1.msra.mxu0 0.0
  %8063 = vmatprep.subr.mxu0 0.0
  %8064 = vmatpush1.msra.mxu0 0.0
  %8065 = vmatprep.subr.mxu0 0.0
  %8066 = vmatpush1.msra.mxu0 0.0
  %8067 = vmatprep.subr.mxu0 0.0
  %8068 = vmatpush1.msra.mxu0 0.0
  %8069 = vmatprep.subr.mxu0 0.0
  %8070 = vmatpush1.msra.mxu0 0.0
  %8071 = vmatprep.subr.mxu0 0.0
  %8072 = vmatpush1.msra.mxu0 0.0
  %8073 = vmatprep.subr.mxu0 0.0
  %8074 = vmatpush1.msra.mxu0 0.0
  %8075 = vmatprep.subr.mxu0 0.0
  %8076 = vmatpush1.msra.mxu0 0.0
  %8077 = vmatprep.subr.mxu0 0.0
  %8078 = vmatpush1.msra.mxu0 0.0
  %8079 = vmatprep.subr.mxu0 0.0
  %8080 = vmatpush1.msra.mxu0 0.0
  %8081 = vmatprep.subr.mxu0 0.0
  %8082 = vmatpush1.msra.mxu0 0.0
  %8083 = vmatprep.subr.mxu0 0.0
  %8084 = vmatpush1.msra.mxu0 0.0
  %8085 = vmatprep.subr.mxu0 0.0
  %8086 = vmatpush1.msra.mxu0 0.0
  %8087 = vmatprep.subr.mxu0 0.0
  %8088 = vmatpush1.msra.mxu0 0.0
  %8089 = vmatprep.subr.mxu0 0.0
  %8090 = vmatpush1.msra.mxu0 0.0
  %8091 = vmatprep.subr.mxu0 0.0
  %8092 = vmatpush1.msra.mxu0 0.0
  %8093 = vmatprep.subr.mxu0 0.0
  %8094 = vmatpush1.msra.mxu0 0.0
  %8095 = vmatprep.mubr.f32.mxu0 0.0
  %8096 = vmatmul.mubr.f32.gmra.mrb[0].mxu0 %v8029
  %v8097 = vpop.f32.mrb[0].mxu0
  %v8098 = vadd.f32 0.0, %v8097
  %v8099 = vpop.f32.mrb[0].mxu0
  %8100 = vdwg.mxu0
  %8101 = vrot.lane.b32.xlu0 %v5772, 48
  %v8102 = vpop.permute.xlu0 %8101
  %v8105 = vsel %vm306, %v7260, 0
  %8107 = vmatprep.subr.mxu0 0.0
  %8108 = vmatpush1.msra.mxu0 %v8102
  %8109 = vmatprep.subr.mxu0 0.0
  %8110 = vmatpush1.msra.mxu0 0.0
  %8111 = vmatprep.subr.mxu0 0.0
  %8112 = vmatpush1.msra.mxu0 0.0
  %8113 = vmatprep.subr.mxu0 0.0
  %8114 = vmatpush1.msra.mxu0 0.0
  %8115 = vmatprep.subr.mxu0 0.0
  %8116 = vmatpush1.msra.mxu0 0.0
  %8117 = vmatprep.subr.mxu0 0.0
  %8118 = vmatpush1.msra.mxu0 0.0
  %8119 = vmatprep.subr.mxu0 0.0
  %8120 = vmatpush1.msra.mxu0 0.0
  %8121 = vmatprep.subr.mxu0 0.0
  %8122 = vmatpush1.msra.mxu0 0.0
  %8123 = vmatprep.subr.mxu0 0.0
  %8124 = vmatpush1.msra.mxu0 0.0
  %8125 = vmatprep.subr.mxu0 0.0
  %8126 = vmatpush1.msra.mxu0 0.0
  %8127 = vmatprep.subr.mxu0 0.0
  %8128 = vmatpush1.msra.mxu0 0.0
  %8129 = vmatprep.subr.mxu0 0.0
  %8130 = vmatpush1.msra.mxu0 0.0
  %8131 = vmatprep.subr.mxu0 0.0
  %8132 = vmatpush1.msra.mxu0 0.0
  %8133 = vmatprep.subr.mxu0 0.0
  %8134 = vmatpush1.msra.mxu0 0.0
  %8135 = vmatprep.subr.mxu0 0.0
  %8136 = vmatpush1.msra.mxu0 0.0
  %8137 = vmatprep.subr.mxu0 0.0
  %8138 = vmatpush1.msra.mxu0 0.0
  %8139 = vmatprep.subr.mxu0 0.0
  %8140 = vmatpush1.msra.mxu0 0.0
  %8141 = vmatprep.subr.mxu0 0.0
  %8142 = vmatpush1.msra.mxu0 0.0
  %8143 = vmatprep.subr.mxu0 0.0
  %8144 = vmatpush1.msra.mxu0 0.0
  %8145 = vmatprep.subr.mxu0 0.0
  %8146 = vmatpush1.msra.mxu0 0.0
  %8147 = vmatprep.subr.mxu0 0.0
  %8148 = vmatpush1.msra.mxu0 0.0
  %8149 = vmatprep.subr.mxu0 0.0
  %8150 = vmatpush1.msra.mxu0 0.0
  %8151 = vmatprep.subr.mxu0 0.0
  %8152 = vmatpush1.msra.mxu0 0.0
  %8153 = vmatprep.subr.mxu0 0.0
  %8154 = vmatpush1.msra.mxu0 0.0
  %8155 = vmatprep.subr.mxu0 0.0
  %8156 = vmatpush1.msra.mxu0 0.0
  %8157 = vmatprep.subr.mxu0 0.0
  %8158 = vmatpush1.msra.mxu0 0.0
  %8159 = vmatprep.subr.mxu0 0.0
  %8160 = vmatpush1.msra.mxu0 0.0
  %8161 = vmatprep.subr.mxu0 0.0
  %8162 = vmatpush1.msra.mxu0 0.0
  %8163 = vmatprep.subr.mxu0 0.0
  %8164 = vmatpush1.msra.mxu0 0.0
  %8165 = vmatprep.subr.mxu0 0.0
  %8166 = vmatpush1.msra.mxu0 0.0
  %8167 = vmatprep.subr.mxu0 0.0
  %8168 = vmatpush1.msra.mxu0 0.0
  %8169 = vmatprep.subr.mxu0 0.0
  %8170 = vmatpush1.msra.mxu0 0.0
  %8171 = vmatprep.mubr.f32.mxu0 0.0
  %8172 = vmatmul.mubr.f32.gmra.mrb[0].mxu0 %v8105
  %v8173 = vpop.f32.mrb[0].mxu0
  %v8174 = vadd.f32 0.0, %v8173
  %v8175 = vpop.f32.mrb[0].mxu0
  %8176 = vdwg.mxu0
  %8177 = vrot.lane.b32.xlu0 %v5773, 48
  %v8178 = vpop.permute.xlu0 %8177
  %v8181 = vsel %vm306, %v7261, 0
  %8183 = vmatprep.subr.mxu0 0.0
  %8184 = vmatpush1.msra.mxu0 %v8178
  %8185 = vmatprep.subr.mxu0 0.0
  %8186 = vmatpush1.msra.mxu0 0.0
  %8187 = vmatprep.subr.mxu0 0.0
  %8188 = vmatpush1.msra.mxu0 0.0
  %8189 = vmatprep.subr.mxu0 0.0
  %8190 = vmatpush1.msra.mxu0 0.0
  %8191 = vmatprep.subr.mxu0 0.0
  %8192 = vmatpush1.msra.mxu0 0.0
  %8193 = vmatprep.subr.mxu0 0.0
  %8194 = vmatpush1.msra.mxu0 0.0
  %8195 = vmatprep.subr.mxu0 0.0
  %8196 = vmatpush1.msra.mxu0 0.0
  %8197 = vmatprep.subr.mxu0 0.0
  %8198 = vmatpush1.msra.mxu0 0.0
  %8199 = vmatprep.subr.mxu0 0.0
  %8200 = vmatpush1.msra.mxu0 0.0
  %8201 = vmatprep.subr.mxu0 0.0
  %8202 = vmatpush1.msra.mxu0 0.0
  %8203 = vmatprep.subr.mxu0 0.0
  %8204 = vmatpush1.msra.mxu0 0.0
  %8205 = vmatprep.subr.mxu0 0.0
  %8206 = vmatpush1.msra.mxu0 0.0
  %8207 = vmatprep.subr.mxu0 0.0
  %8208 = vmatpush1.msra.mxu0 0.0
  %8209 = vmatprep.subr.mxu0 0.0
  %8210 = vmatpush1.msra.mxu0 0.0
  %8211 = vmatprep.subr.mxu0 0.0
  %8212 = vmatpush1.msra.mxu0 0.0
  %8213 = vmatprep.subr.mxu0 0.0
  %8214 = vmatpush1.msra.mxu0 0.0
  %8215 = vmatprep.subr.mxu0 0.0
  %8216 = vmatpush1.msra.mxu0 0.0
  %8217 = vmatprep.subr.mxu0 0.0
  %8218 = vmatpush1.msra.mxu0 0.0
  %8219 = vmatprep.subr.mxu0 0.0
  %8220 = vmatpush1.msra.mxu0 0.0
  %8221 = vmatprep.subr.mxu0 0.0
  %8222 = vmatpush1.msra.mxu0 0.0
  %8223 = vmatprep.subr.mxu0 0.0
  %8224 = vmatpush1.msra.mxu0 0.0
  %8225 = vmatprep.subr.mxu0 0.0
  %8226 = vmatpush1.msra.mxu0 0.0
  %8227 = vmatprep.subr.mxu0 0.0
  %8228 = vmatpush1.msra.mxu0 0.0
  %8229 = vmatprep.subr.mxu0 0.0
  %8230 = vmatpush1.msra.mxu0 0.0
  %8231 = vmatprep.subr.mxu0 0.0
  %8232 = vmatpush1.msra.mxu0 0.0
  %8233 = vmatprep.subr.mxu0 0.0
  %8234 = vmatpush1.msra.mxu0 0.0
  %8235 = vmatprep.subr.mxu0 0.0
  %8236 = vmatpush1.msra.mxu0 0.0
  %8237 = vmatprep.subr.mxu0 0.0
  %8238 = vmatpush1.msra.mxu0 0.0
  %8239 = vmatprep.subr.mxu0 0.0
  %8240 = vmatpush1.msra.mxu0 0.0
  %8241 = vmatprep.subr.mxu0 0.0
  %8242 = vmatpush1.msra.mxu0 0.0
  %8243 = vmatprep.subr.mxu0 0.0
  %8244 = vmatpush1.msra.mxu0 0.0
  %8245 = vmatprep.subr.mxu0 0.0
  %8246 = vmatpush1.msra.mxu0 0.0
  %8247 = vmatprep.mubr.f32.mxu0 0.0
  %8248 = vmatmul.mubr.f32.gmra.mrb[0].mxu0 %v8181
  %v8249 = vpop.f32.mrb[0].mxu0
  %v8250 = vadd.f32 0.0, %v8249
  %v8251 = vpop.f32.mrb[0].mxu0
  %8252 = vdwg.mxu0
  %8253 = vrot.lane.b32.xlu0 %v5774, 48
  %v8254 = vpop.permute.xlu0 %8253
  %v8257 = vsel %vm306, %v7262, 0
  %8259 = vmatprep.subr.mxu0 0.0
  %8260 = vmatpush1.msra.mxu0 %v8254
  %8261 = vmatprep.subr.mxu0 0.0
  %8262 = vmatpush1.msra.mxu0 0.0
  %8263 = vmatprep.subr.mxu0 0.0
  %8264 = vmatpush1.msra.mxu0 0.0
  %8265 = vmatprep.subr.mxu0 0.0
  %8266 = vmatpush1.msra.mxu0 0.0
  %8267 = vmatprep.subr.mxu0 0.0
  %8268 = vmatpush1.msra.mxu0 0.0
  %8269 = vmatprep.subr.mxu0 0.0
  %8270 = vmatpush1.msra.mxu0 0.0
  %8271 = vmatprep.subr.mxu0 0.0
  %8272 = vmatpush1.msra.mxu0 0.0
  %8273 = vmatprep.subr.mxu0 0.0
  %8274 = vmatpush1.msra.mxu0 0.0
  %8275 = vmatprep.subr.mxu0 0.0
  %8276 = vmatpush1.msra.mxu0 0.0
  %8277 = vmatprep.subr.mxu0 0.0
  %8278 = vmatpush1.msra.mxu0 0.0
  %8279 = vmatprep.subr.mxu0 0.0
  %8280 = vmatpush1.msra.mxu0 0.0
  %8281 = vmatprep.subr.mxu0 0.0
  %8282 = vmatpush1.msra.mxu0 0.0
  %8283 = vmatprep.subr.mxu0 0.0
  %8284 = vmatpush1.msra.mxu0 0.0
  %8285 = vmatprep.subr.mxu0 0.0
  %8286 = vmatpush1.msra.mxu0 0.0
  %8287 = vmatprep.subr.mxu0 0.0
  %8288 = vmatpush1.msra.mxu0 0.0
  %8289 = vmatprep.subr.mxu0 0.0
  %8290 = vmatpush1.msra.mxu0 0.0
  %8291 = vmatprep.subr.mxu0 0.0
  %8292 = vmatpush1.msra.mxu0 0.0
  %8293 = vmatprep.subr.mxu0 0.0
  %8294 = vmatpush1.msra.mxu0 0.0
  %8295 = vmatprep.subr.mxu0 0.0
  %8296 = vmatpush1.msra.mxu0 0.0
  %8297 = vmatprep.subr.mxu0 0.0
  %8298 = vmatpush1.msra.mxu0 0.0
  %8299 = vmatprep.subr.mxu0 0.0
  %8300 = vmatpush1.msra.mxu0 0.0
  %8301 = vmatprep.subr.mxu0 0.0
  %8302 = vmatpush1.msra.mxu0 0.0
  %8303 = vmatprep.subr.mxu0 0.0
  %8304 = vmatpush1.msra.mxu0 0.0
  %8305 = vmatprep.subr.mxu0 0.0
  %8306 = vmatpush1.msra.mxu0 0.0
  %8307 = vmatprep.subr.mxu0 0.0
  %8308 = vmatpush1.msra.mxu0 0.0
  %8309 = vmatprep.subr.mxu0 0.0
  %8310 = vmatpush1.msra.mxu0 0.0
  %8311 = vmatprep.subr.mxu0 0.0
  %8312 = vmatpush1.msra.mxu0 0.0
  %8313 = vmatprep.subr.mxu0 0.0
  %8314 = vmatpush1.msra.mxu0 0.0
  %8315 = vmatprep.subr.mxu0 0.0
  %8316 = vmatpush1.msra.mxu0 0.0
  %8317 = vmatprep.subr.mxu0 0.0
  %8318 = vmatpush1.msra.mxu0 0.0
  %8319 = vmatprep.subr.mxu0 0.0
  %8320 = vmatpush1.msra.mxu0 0.0
  %8321 = vmatprep.subr.mxu0 0.0
  %8322 = vmatpush1.msra.mxu0 0.0
  %8323 = vmatprep.mubr.f32.mxu0 0.0
  %8324 = vmatmul.mubr.f32.gmra.mrb[0].mxu0 %v8257
  %v8325 = vpop.f32.mrb[0].mxu0
  %v8326 = vadd.f32 0.0, %v8325
  %v8327 = vpop.f32.mrb[0].mxu0
  %8328 = vdwg.mxu0
  %8329 = vrot.lane.b32.xlu0 %v5775, 48
  %v8330 = vpop.permute.xlu0 %8329
  %v8333 = vsel %vm306, %v7263, 0
  %8335 = vmatprep.subr.mxu0 0.0
  %8336 = vmatpush1.msra.mxu0 %v8330
  %8337 = vmatprep.subr.mxu0 0.0
  %8338 = vmatpush1.msra.mxu0 0.0
  %8339 = vmatprep.subr.mxu0 0.0
  %8340 = vmatpush1.msra.mxu0 0.0
  %8341 = vmatprep.subr.mxu0 0.0
  %8342 = vmatpush1.msra.mxu0 0.0
  %8343 = vmatprep.subr.mxu0 0.0
  %8344 = vmatpush1.msra.mxu0 0.0
  %8345 = vmatprep.subr.mxu0 0.0
  %8346 = vmatpush1.msra.mxu0 0.0
  %8347 = vmatprep.subr.mxu0 0.0
  %8348 = vmatpush1.msra.mxu0 0.0
  %8349 = vmatprep.subr.mxu0 0.0
  %8350 = vmatpush1.msra.mxu0 0.0
  %8351 = vmatprep.subr.mxu0 0.0
  %8352 = vmatpush1.msra.mxu0 0.0
  %8353 = vmatprep.subr.mxu0 0.0
  %8354 = vmatpush1.msra.mxu0 0.0
  %8355 = vmatprep.subr.mxu0 0.0
  %8356 = vmatpush1.msra.mxu0 0.0
  %8357 = vmatprep.subr.mxu0 0.0
  %8358 = vmatpush1.msra.mxu0 0.0
  %8359 = vmatprep.subr.mxu0 0.0
  %8360 = vmatpush1.msra.mxu0 0.0
  %8361 = vmatprep.subr.mxu0 0.0
  %8362 = vmatpush1.msra.mxu0 0.0
  %8363 = vmatprep.subr.mxu0 0.0
  %8364 = vmatpush1.msra.mxu0 0.0
  %8365 = vmatprep.subr.mxu0 0.0
  %8366 = vmatpush1.msra.mxu0 0.0
  %8367 = vmatprep.subr.mxu0 0.0
  %8368 = vmatpush1.msra.mxu0 0.0
  %8369 = vmatprep.subr.mxu0 0.0
  %8370 = vmatpush1.msra.mxu0 0.0
  %8371 = vmatprep.subr.mxu0 0.0
  %8372 = vmatpush1.msra.mxu0 0.0
  %8373 = vmatprep.subr.mxu0 0.0
  %8374 = vmatpush1.msra.mxu0 0.0
  %8375 = vmatprep.subr.mxu0 0.0
  %8376 = vmatpush1.msra.mxu0 0.0
  %8377 = vmatprep.subr.mxu0 0.0
  %8378 = vmatpush1.msra.mxu0 0.0
  %8379 = vmatprep.subr.mxu0 0.0
  %8380 = vmatpush1.msra.mxu0 0.0
  %8381 = vmatprep.subr.mxu0 0.0
  %8382 = vmatpush1.msra.mxu0 0.0
  %8383 = vmatprep.subr.mxu0 0.0
  %8384 = vmatpush1.msra.mxu0 0.0
  %8385 = vmatprep.subr.mxu0 0.0
  %8386 = vmatpush1.msra.mxu0 0.0
  %8387 = vmatprep.subr.mxu0 0.0
  %8388 = vmatpush1.msra.mxu0 0.0
  %8389 = vmatprep.subr.mxu0 0.0
  %8390 = vmatpush1.msra.mxu0 0.0
  %8391 = vmatprep.subr.mxu0 0.0
  %8392 = vmatpush1.msra.mxu0 0.0
  %8393 = vmatprep.subr.mxu0 0.0
  %8394 = vmatpush1.msra.mxu0 0.0
  %8395 = vmatprep.subr.mxu0 0.0
  %8396 = vmatpush1.msra.mxu0 0.0
  %8397 = vmatprep.subr.mxu0 0.0
  %8398 = vmatpush1.msra.mxu0 0.0
  %8399 = vmatprep.mubr.f32.mxu0 0.0
  %8400 = vmatmul.mubr.f32.gmra.mrb[0].mxu0 %v8333
  %v8401 = vpop.f32.mrb[0].mxu0
  %v8402 = vadd.f32 0.0, %v8401
  %v8403 = vpop.f32.mrb[0].mxu0
  %8404 = vdwg.mxu0
  %8405 = vrot.lane.b32.xlu0 %v5776, 48
  %v8406 = vpop.permute.xlu0 %8405
  %v8409 = vsel %vm306, %v7264, 0
  %8411 = vmatprep.subr.mxu0 0.0
  %8412 = vmatpush1.msra.mxu0 %v8406
  %8413 = vmatprep.subr.mxu0 0.0
  %8414 = vmatpush1.msra.mxu0 0.0
  %8415 = vmatprep.subr.mxu0 0.0
  %8416 = vmatpush1.msra.mxu0 0.0
  %8417 = vmatprep.subr.mxu0 0.0
  %8418 = vmatpush1.msra.mxu0 0.0
  %8419 = vmatprep.subr.mxu0 0.0
  %8420 = vmatpush1.msra.mxu0 0.0
  %8421 = vmatprep.subr.mxu0 0.0
  %8422 = vmatpush1.msra.mxu0 0.0
  %8423 = vmatprep.subr.mxu0 0.0
  %8424 = vmatpush1.msra.mxu0 0.0
  %8425 = vmatprep.subr.mxu0 0.0
  %8426 = vmatpush1.msra.mxu0 0.0
  %8427 = vmatprep.subr.mxu0 0.0
  %8428 = vmatpush1.msra.mxu0 0.0
  %8429 = vmatprep.subr.mxu0 0.0
  %8430 = vmatpush1.msra.mxu0 0.0
  %8431 = vmatprep.subr.mxu0 0.0
  %8432 = vmatpush1.msra.mxu0 0.0
  %8433 = vmatprep.subr.mxu0 0.0
  %8434 = vmatpush1.msra.mxu0 0.0
  %8435 = vmatprep.subr.mxu0 0.0
  %8436 = vmatpush1.msra.mxu0 0.0
  %8437 = vmatprep.subr.mxu0 0.0
  %8438 = vmatpush1.msra.mxu0 0.0
  %8439 = vmatprep.subr.mxu0 0.0
  %8440 = vmatpush1.msra.mxu0 0.0
  %8441 = vmatprep.subr.mxu0 0.0
  %8442 = vmatpush1.msra.mxu0 0.0
  %8443 = vmatprep.subr.mxu0 0.0
  %8444 = vmatpush1.msra.mxu0 0.0
  %8445 = vmatprep.subr.mxu0 0.0
  %8446 = vmatpush1.msra.mxu0 0.0
  %8447 = vmatprep.subr.mxu0 0.0
  %8448 = vmatpush1.msra.mxu0 0.0
  %8449 = vmatprep.subr.mxu0 0.0
  %8450 = vmatpush1.msra.mxu0 0.0
  %8451 = vmatprep.subr.mxu0 0.0
  %8452 = vmatpush1.msra.mxu0 0.0
  %8453 = vmatprep.subr.mxu0 0.0
  %8454 = vmatpush1.msra.mxu0 0.0
  %8455 = vmatprep.subr.mxu0 0.0
  %8456 = vmatpush1.msra.mxu0 0.0
  %8457 = vmatprep.subr.mxu0 0.0
  %8458 = vmatpush1.msra.mxu0 0.0
  %8459 = vmatprep.subr.mxu0 0.0
  %8460 = vmatpush1.msra.mxu0 0.0
  %8461 = vmatprep.subr.mxu0 0.0
  %8462 = vmatpush1.msra.mxu0 0.0
  %8463 = vmatprep.subr.mxu0 0.0
  %8464 = vmatpush1.msra.mxu0 0.0
  %8465 = vmatprep.subr.mxu0 0.0
  %8466 = vmatpush1.msra.mxu0 0.0
  %8467 = vmatprep.subr.mxu0 0.0
  %8468 = vmatpush1.msra.mxu0 0.0
  %8469 = vmatprep.subr.mxu0 0.0
  %8470 = vmatpush1.msra.mxu0 0.0
  %8471 = vmatprep.subr.mxu0 0.0
  %8472 = vmatpush1.msra.mxu0 0.0
  %8473 = vmatprep.subr.mxu0 0.0
  %8474 = vmatpush1.msra.mxu0 0.0
  %8475 = vmatprep.mubr.f32.mxu0 0.0
  %8476 = vmatmul.mubr.f32.gmra.mrb[0].mxu0 %v8409
  %v8477 = vpop.f32.mrb[0].mxu0
  %v8478 = vadd.f32 0.0, %v8477
  %v8479 = vpop.f32.mrb[0].mxu0
  %8480 = vdwg.mxu0
  %8497 = vrot.lane.b32.xlu0 %v7338, 16
  %v8498 = vpop.permute.xlu0 %8497
  %8499 = vrot.lane.b32.xlu0 %v7414, 16
  %v8500 = vpop.permute.xlu0 %8499
  %8501 = vrot.lane.b32.xlu0 %v7490, 16
  %v8502 = vpop.permute.xlu0 %8501
  %8503 = vrot.lane.b32.xlu0 %v7566, 16
  %v8504 = vpop.permute.xlu0 %8503
  %8505 = vrot.lane.b32.xlu0 %v7642, 16
  %v8506 = vpop.permute.xlu0 %8505
  %8507 = vrot.lane.b32.xlu0 %v7718, 16
  %v8508 = vpop.permute.xlu0 %8507
  %8509 = vrot.lane.b32.xlu0 %v7794, 16
  %v8510 = vpop.permute.xlu0 %8509
  %8511 = vrot.lane.b32.xlu0 %v7870, 16
  %v8512 = vpop.permute.xlu0 %8511
  %8513 = vrot.lane.b32.xlu0 %v7946, 16
  %v8514 = vpop.permute.xlu0 %8513
  %8515 = vrot.lane.b32.xlu0 %v8022, 16
  %v8516 = vpop.permute.xlu0 %8515
  %8517 = vrot.lane.b32.xlu0 %v8098, 16
  %v8518 = vpop.permute.xlu0 %8517
  %8519 = vrot.lane.b32.xlu0 %v8174, 16
  %v8520 = vpop.permute.xlu0 %8519
  %8521 = vrot.lane.b32.xlu0 %v8250, 16
  %v8522 = vpop.permute.xlu0 %8521
  %8523 = vrot.lane.b32.xlu0 %v8326, 16
  %v8524 = vpop.permute.xlu0 %8523
  %8525 = vrot.lane.b32.xlu0 %v8402, 16
  %v8526 = vpop.permute.xlu0 %8525
  %8527 = vrot.lane.b32.xlu0 %v8478, 16
  %v8528 = vpop.permute.xlu0 %8527
  %vm8545 = vcmask 195712
  %8546 = vst.msk [vmem:[%s4] sm:$0xff] %vm8545, %v8498
  %8547 = vst.msk [vmem:[%s4 + $0x8] sm:$0xff] %vm8545, %v8500
  %8548 = vst.msk [vmem:[%s4 + $0x10] sm:$0xff] %vm8545, %v8502
  %8549 = vst.msk [vmem:[%s4 + $0x18] sm:$0xff] %vm8545, %v8504
  %8550 = vst.msk [vmem:[%s4 + $0x20] sm:$0xff] %vm8545, %v8506
  %8551 = vst.msk [vmem:[%s4 + $0x28] sm:$0xff] %vm8545, %v8508
  %8552 = vst.msk [vmem:[%s4 + $0x30] sm:$0xff] %vm8545, %v8510
  %8553 = vst.msk [vmem:[%s4 + $0x38] sm:$0xff] %vm8545, %v8512
  %8554 = vst.msk [vmem:[%s4 + $0x40] sm:$0xff] %vm8545, %v8514
  %8555 = vst.msk [vmem:[%s4 + $0x48] sm:$0xff] %vm8545, %v8516
  %8556 = vst.msk [vmem:[%s4 + $0x50] sm:$0xff] %vm8545, %v8518
  %8557 = vst.msk [vmem:[%s4 + $0x58] sm:$0xff] %vm8545, %v8520
  %8558 = vst.msk [vmem:[%s4 + $0x60] sm:$0xff] %vm8545, %v8522
  %8559 = vst.msk [vmem:[%s4 + $0x68] sm:$0xff] %vm8545, %v8524
  %8560 = vst.msk [vmem:[%s4 + $0x70] sm:$0xff] %vm8545, %v8526
  %8561 = vst.msk [vmem:[%s4 + $0x78] sm:$0xff] %vm8545, %v8528
  %v8562 = vld [vmem:[#allocation2] sm:$0xff]
  %v8563 = vld [vmem:[#allocation2 + $0x8] sm:$0xff]
  %v8564 = vld [vmem:[#allocation2 + $0x10] sm:$0xff]
  %v8565 = vld [vmem:[#allocation2 + $0x18] sm:$0xff]
  %v8566 = vld [vmem:[#allocation2 + $0x20] sm:$0xff]
  %v8567 = vld [vmem:[#allocation2 + $0x28] sm:$0xff]
  %v8568 = vld [vmem:[#allocation2 + $0x30] sm:$0xff]
  %v8569 = vld [vmem:[#allocation2 + $0x38] sm:$0xff]
  %v8570 = vld [vmem:[#allocation2 + $0x40] sm:$0xff]
  %v8571 = vld [vmem:[#allocation2 + $0x48] sm:$0xff]
  %v8572 = vld [vmem:[#allocation2 + $0x50] sm:$0xff]
  %v8573 = vld [vmem:[#allocation2 + $0x58] sm:$0xff]
  %v8574 = vld [vmem:[#allocation2 + $0x60] sm:$0xff]
  %v8575 = vld [vmem:[#allocation2 + $0x68] sm:$0xff]
  %v8576 = vld [vmem:[#allocation2 + $0x70] sm:$0xff]
  %v8577 = vld [vmem:[#allocation2 + $0x78] sm:$0xff]
  %v8578 = vmul.f32 %v8562, 0.35355338
  %v8579 = vmul.f32 %v8563, 0.35355338
  %v8580 = vmul.f32 %v8564, 0.35355338
  %v8581 = vmul.f32 %v8565, 0.35355338
  %v8582 = vmul.f32 %v8566, 0.35355338
  %v8583 = vmul.f32 %v8567, 0.35355338
  %v8584 = vmul.f32 %v8568, 0.35355338
  %v8585 = vmul.f32 %v8569, 0.35355338
  %v8586 = vmul.f32 %v8570, 0.35355338
  %v8587 = vmul.f32 %v8571, 0.35355338
  %v8588 = vmul.f32 %v8572, 0.35355338
  %v8589 = vmul.f32 %v8573, 0.35355338
  %v8590 = vmul.f32 %v8574, 0.35355338
  %v8591 = vmul.f32 %v8575, 0.35355338
  %v8592 = vmul.f32 %v8576, 0.35355338
  %v8593 = vmul.f32 %v8577, 0.35355338
  %v8594 = vld [vmem:[%s1] sm:$0xff]
  %v8595 = vld [vmem:[%s1 + $0x8] sm:$0xff]
  %v8596 = vld [vmem:[%s1 + $0x10] sm:$0xff]
  %v8597 = vld [vmem:[%s1 + $0x18] sm:$0xff]
  %v8598 = vld [vmem:[%s1 + $0x20] sm:$0xff]
  %v8599 = vld [vmem:[%s1 + $0x28] sm:$0xff]
  %v8600 = vld [vmem:[%s1 + $0x30] sm:$0xff]
  %v8601 = vld [vmem:[%s1 + $0x38] sm:$0xff]
  %v8602 = vld [vmem:[%s1 + $0x40] sm:$0xff]
  %v8603 = vld [vmem:[%s1 + $0x48] sm:$0xff]
  %v8604 = vld [vmem:[%s1 + $0x50] sm:$0xff]
  %v8605 = vld [vmem:[%s1 + $0x58] sm:$0xff]
  %v8606 = vld [vmem:[%s1 + $0x60] sm:$0xff]
  %v8607 = vld [vmem:[%s1 + $0x68] sm:$0xff]
  %v8608 = vld [vmem:[%s1 + $0x70] sm:$0xff]
  %v8609 = vld [vmem:[%s1 + $0x78] sm:$0xff]
  %8611 = vrot.lane.b32.xlu0 %v8578, 104
  %v8612 = vpop.permute.xlu0 %8611
  %8614 = vrot.lane.b32.xlu0 %v8562, 72
  %v8615 = vpop.permute.xlu0 %8614
  %v8616 = vsel %vm306, %v8612, 0
  %v8618 = vsel %vm306, %v8615, 0
  %8620 = vmatprep.subr.mxu0 0.0
  %8621 = vmatpush1.xpose.msra.mxu0 %v8618
  %8622 = vmatprep.subr.mxu0 0.0
  %8623 = vmatpush1.xpose.msra.mxu0 0.0
  %8624 = vmatprep.subr.mxu0 0.0
  %8625 = vmatpush1.xpose.msra.mxu0 0.0
  %8626 = vmatprep.subr.mxu0 0.0
  %8627 = vmatpush1.xpose.msra.mxu0 0.0
  %8628 = vmatprep.subr.mxu0 0.0
  %8629 = vmatpush1.xpose.msra.mxu0 0.0
  %8630 = vmatprep.subr.mxu0 0.0
  %8631 = vmatpush1.xpose.msra.mxu0 0.0
  %8632 = vmatprep.subr.mxu0 0.0
  %8633 = vmatpush1.xpose.msra.mxu0 0.0
  %8634 = vmatprep.subr.mxu0 0.0
  %8635 = vmatpush1.xpose.msra.mxu0 0.0
  %8636 = vmatprep.subr.mxu0 0.0
  %8637 = vmatpush1.xpose.msra.mxu0 0.0
  %8638 = vmatprep.subr.mxu0 0.0
  %8639 = vmatpush1.xpose.msra.mxu0 0.0
  %8640 = vmatprep.subr.mxu0 0.0
  %8641 = vmatpush1.xpose.msra.mxu0 0.0
  %8642 = vmatprep.subr.mxu0 0.0
  %8643 = vmatpush1.xpose.msra.mxu0 0.0
  %8644 = vmatprep.subr.mxu0 0.0
  %8645 = vmatpush1.xpose.msra.mxu0 0.0
  %8646 = vmatprep.subr.mxu0 0.0
  %8647 = vmatpush1.xpose.msra.mxu0 0.0
  %8648 = vmatprep.subr.mxu0 0.0
  %8649 = vmatpush1.xpose.msra.mxu0 0.0
  %8650 = vmatprep.subr.mxu0 0.0
  %8651 = vmatpush1.xpose.msra.mxu0 0.0
  %8652 = vmatprep.subr.mxu0 0.0
  %8653 = vmatpush1.xpose.msra.mxu0 0.0
  %8654 = vmatprep.subr.mxu0 0.0
  %8655 = vmatpush1.xpose.msra.mxu0 0.0
  %8656 = vmatprep.subr.mxu0 0.0
  %8657 = vmatpush1.xpose.msra.mxu0 0.0
  %8658 = vmatprep.subr.mxu0 0.0
  %8659 = vmatpush1.xpose.msra.mxu0 0.0
  %8660 = vmatprep.subr.mxu0 0.0
  %8661 = vmatpush1.xpose.msra.mxu0 0.0
  %8662 = vmatprep.subr.mxu0 0.0
  %8663 = vmatpush1.xpose.msra.mxu0 0.0
  %8664 = vmatprep.subr.mxu0 0.0
  %8665 = vmatpush1.xpose.msra.mxu0 0.0
  %8666 = vmatprep.subr.mxu0 0.0
  %8667 = vmatpush1.xpose.msra.mxu0 0.0
  %8668 = vmatprep.subr.mxu0 0.0
  %8669 = vmatpush1.xpose.msra.mxu0 0.0
  %8670 = vmatprep.subr.mxu0 0.0
  %8671 = vmatpush1.xpose.msra.mxu0 0.0
  %8672 = vmatprep.subr.mxu0 0.0
  %8673 = vmatpush1.xpose.msra.mxu0 0.0
  %8674 = vmatprep.subr.mxu0 0.0
  %8675 = vmatpush1.xpose.msra.mxu0 0.0
  %8676 = vmatprep.subr.mxu0 0.0
  %8677 = vmatpush1.xpose.msra.mxu0 0.0
  %8678 = vmatprep.subr.mxu0 0.0
  %8679 = vmatpush1.xpose.msra.mxu0 0.0
  %8680 = vmatprep.subr.mxu0 0.0
  %8681 = vmatpush1.xpose.msra.mxu0 0.0
  %8682 = vmatprep.subr.mxu0 0.0
  %8683 = vmatpush1.xpose.msra.mxu0 0.0
  %8684 = vmatprep.mubr.f32.mxu0 0.0
  %8685 = vmatmul.mubr.f32.gmra.mrb[0].mxu0 %v8616
  %v8686 = vpop.f32.mrb[0].mxu0
  %v8687 = vadd.f32 %v8594, %v8686
  %v8688 = vpop.f32.mrb[0].mxu0
  %8689 = vdwg.mxu0
  %8691 = vrot.lane.b32.xlu0 %v8579, 104
  %v8692 = vpop.permute.xlu0 %8691
  %8694 = vrot.lane.b32.xlu0 %v8563, 72
  %v8695 = vpop.permute.xlu0 %8694
  %v8696 = vsel %vm306, %v8692, 0
  %v8698 = vsel %vm306, %v8695, 0
  %8700 = vmatprep.subr.mxu0 0.0
  %8701 = vmatpush1.xpose.msra.mxu0 %v8698
  %8702 = vmatprep.subr.mxu0 0.0
  %8703 = vmatpush1.xpose.msra.mxu0 0.0
  %8704 = vmatprep.subr.mxu0 0.0
  %8705 = vmatpush1.xpose.msra.mxu0 0.0
  %8706 = vmatprep.subr.mxu0 0.0
  %8707 = vmatpush1.xpose.msra.mxu0 0.0
  %8708 = vmatprep.subr.mxu0 0.0
  %8709 = vmatpush1.xpose.msra.mxu0 0.0
  %8710 = vmatprep.subr.mxu0 0.0
  %8711 = vmatpush1.xpose.msra.mxu0 0.0
  %8712 = vmatprep.subr.mxu0 0.0
  %8713 = vmatpush1.xpose.msra.mxu0 0.0
  %8714 = vmatprep.subr.mxu0 0.0
  %8715 = vmatpush1.xpose.msra.mxu0 0.0
  %8716 = vmatprep.subr.mxu0 0.0
  %8717 = vmatpush1.xpose.msra.mxu0 0.0
  %8718 = vmatprep.subr.mxu0 0.0
  %8719 = vmatpush1.xpose.msra.mxu0 0.0
  %8720 = vmatprep.subr.mxu0 0.0
  %8721 = vmatpush1.xpose.msra.mxu0 0.0
  %8722 = vmatprep.subr.mxu0 0.0
  %8723 = vmatpush1.xpose.msra.mxu0 0.0
  %8724 = vmatprep.subr.mxu0 0.0
  %8725 = vmatpush1.xpose.msra.mxu0 0.0
  %8726 = vmatprep.subr.mxu0 0.0
  %8727 = vmatpush1.xpose.msra.mxu0 0.0
  %8728 = vmatprep.subr.mxu0 0.0
  %8729 = vmatpush1.xpose.msra.mxu0 0.0
  %8730 = vmatprep.subr.mxu0 0.0
  %8731 = vmatpush1.xpose.msra.mxu0 0.0
  %8732 = vmatprep.subr.mxu0 0.0
  %8733 = vmatpush1.xpose.msra.mxu0 0.0
  %8734 = vmatprep.subr.mxu0 0.0
  %8735 = vmatpush1.xpose.msra.mxu0 0.0
  %8736 = vmatprep.subr.mxu0 0.0
  %8737 = vmatpush1.xpose.msra.mxu0 0.0
  %8738 = vmatprep.subr.mxu0 0.0
  %8739 = vmatpush1.xpose.msra.mxu0 0.0
  %8740 = vmatprep.subr.mxu0 0.0
  %8741 = vmatpush1.xpose.msra.mxu0 0.0
  %8742 = vmatprep.subr.mxu0 0.0
  %8743 = vmatpush1.xpose.msra.mxu0 0.0
  %8744 = vmatprep.subr.mxu0 0.0
  %8745 = vmatpush1.xpose.msra.mxu0 0.0
  %8746 = vmatprep.subr.mxu0 0.0
  %8747 = vmatpush1.xpose.msra.mxu0 0.0
  %8748 = vmatprep.subr.mxu0 0.0
  %8749 = vmatpush1.xpose.msra.mxu0 0.0
  %8750 = vmatprep.subr.mxu0 0.0
  %8751 = vmatpush1.xpose.msra.mxu0 0.0
  %8752 = vmatprep.subr.mxu0 0.0
  %8753 = vmatpush1.xpose.msra.mxu0 0.0
  %8754 = vmatprep.subr.mxu0 0.0
  %8755 = vmatpush1.xpose.msra.mxu0 0.0
  %8756 = vmatprep.subr.mxu0 0.0
  %8757 = vmatpush1.xpose.msra.mxu0 0.0
  %8758 = vmatprep.subr.mxu0 0.0
  %8759 = vmatpush1.xpose.msra.mxu0 0.0
  %8760 = vmatprep.subr.mxu0 0.0
  %8761 = vmatpush1.xpose.msra.mxu0 0.0
  %8762 = vmatprep.subr.mxu0 0.0
  %8763 = vmatpush1.xpose.msra.mxu0 0.0
  %8764 = vmatprep.mubr.f32.mxu0 0.0
  %8765 = vmatmul.mubr.f32.gmra.mrb[0].mxu0 %v8696
  %v8766 = vpop.f32.mrb[0].mxu0
  %v8767 = vadd.f32 %v8595, %v8766
  %v8768 = vpop.f32.mrb[0].mxu0
  %8769 = vdwg.mxu0
  %8771 = vrot.lane.b32.xlu0 %v8580, 104
  %v8772 = vpop.permute.xlu0 %8771
  %8774 = vrot.lane.b32.xlu0 %v8564, 72
  %v8775 = vpop.permute.xlu0 %8774
  %v8776 = vsel %vm306, %v8772, 0
  %v8778 = vsel %vm306, %v8775, 0
  %8780 = vmatprep.subr.mxu0 0.0
  %8781 = vmatpush1.xpose.msra.mxu0 %v8778
  %8782 = vmatprep.subr.mxu0 0.0
  %8783 = vmatpush1.xpose.msra.mxu0 0.0
  %8784 = vmatprep.subr.mxu0 0.0
  %8785 = vmatpush1.xpose.msra.mxu0 0.0
  %8786 = vmatprep.subr.mxu0 0.0
  %8787 = vmatpush1.xpose.msra.mxu0 0.0
  %8788 = vmatprep.subr.mxu0 0.0
  %8789 = vmatpush1.xpose.msra.mxu0 0.0
  %8790 = vmatprep.subr.mxu0 0.0
  %8791 = vmatpush1.xpose.msra.mxu0 0.0
  %8792 = vmatprep.subr.mxu0 0.0
  %8793 = vmatpush1.xpose.msra.mxu0 0.0
  %8794 = vmatprep.subr.mxu0 0.0
  %8795 = vmatpush1.xpose.msra.mxu0 0.0
  %8796 = vmatprep.subr.mxu0 0.0
  %8797 = vmatpush1.xpose.msra.mxu0 0.0
  %8798 = vmatprep.subr.mxu0 0.0
  %8799 = vmatpush1.xpose.msra.mxu0 0.0
  %8800 = vmatprep.subr.mxu0 0.0
  %8801 = vmatpush1.xpose.msra.mxu0 0.0
  %8802 = vmatprep.subr.mxu0 0.0
  %8803 = vmatpush1.xpose.msra.mxu0 0.0
  %8804 = vmatprep.subr.mxu0 0.0
  %8805 = vmatpush1.xpose.msra.mxu0 0.0
  %8806 = vmatprep.subr.mxu0 0.0
  %8807 = vmatpush1.xpose.msra.mxu0 0.0
  %8808 = vmatprep.subr.mxu0 0.0
  %8809 = vmatpush1.xpose.msra.mxu0 0.0
  %8810 = vmatprep.subr.mxu0 0.0
  %8811 = vmatpush1.xpose.msra.mxu0 0.0
  %8812 = vmatprep.subr.mxu0 0.0
  %8813 = vmatpush1.xpose.msra.mxu0 0.0
  %8814 = vmatprep.subr.mxu0 0.0
  %8815 = vmatpush1.xpose.msra.mxu0 0.0
  %8816 = vmatprep.subr.mxu0 0.0
  %8817 = vmatpush1.xpose.msra.mxu0 0.0
  %8818 = vmatprep.subr.mxu0 0.0
  %8819 = vmatpush1.xpose.msra.mxu0 0.0
  %8820 = vmatprep.subr.mxu0 0.0
  %8821 = vmatpush1.xpose.msra.mxu0 0.0
  %8822 = vmatprep.subr.mxu0 0.0
  %8823 = vmatpush1.xpose.msra.mxu0 0.0
  %8824 = vmatprep.subr.mxu0 0.0
  %8825 = vmatpush1.xpose.msra.mxu0 0.0
  %8826 = vmatprep.subr.mxu0 0.0
  %8827 = vmatpush1.xpose.msra.mxu0 0.0
  %8828 = vmatprep.subr.mxu0 0.0
  %8829 = vmatpush1.xpose.msra.mxu0 0.0
  %8830 = vmatprep.subr.mxu0 0.0
  %8831 = vmatpush1.xpose.msra.mxu0 0.0
  %8832 = vmatprep.subr.mxu0 0.0
  %8833 = vmatpush1.xpose.msra.mxu0 0.0
  %8834 = vmatprep.subr.mxu0 0.0
  %8835 = vmatpush1.xpose.msra.mxu0 0.0
  %8836 = vmatprep.subr.mxu0 0.0
  %8837 = vmatpush1.xpose.msra.mxu0 0.0
  %8838 = vmatprep.subr.mxu0 0.0
  %8839 = vmatpush1.xpose.msra.mxu0 0.0
  %8840 = vmatprep.subr.mxu0 0.0
  %8841 = vmatpush1.xpose.msra.mxu0 0.0
  %8842 = vmatprep.subr.mxu0 0.0
  %8843 = vmatpush1.xpose.msra.mxu0 0.0
  %8844 = vmatprep.mubr.f32.mxu0 0.0
  %8845 = vmatmul.mubr.f32.gmra.mrb[0].mxu0 %v8776
  %v8846 = vpop.f32.mrb[0].mxu0
  %v8847 = vadd.f32 %v8596, %v8846
  %v8848 = vpop.f32.mrb[0].mxu0
  %8849 = vdwg.mxu0
  %8851 = vrot.lane.b32.xlu0 %v8581, 104
  %v8852 = vpop.permute.xlu0 %8851
  %8854 = vrot.lane.b32.xlu0 %v8565, 72
  %v8855 = vpop.permute.xlu0 %8854
  %v8856 = vsel %vm306, %v8852, 0
  %v8858 = vsel %vm306, %v8855, 0
  %8860 = vmatprep.subr.mxu0 0.0
  %8861 = vmatpush1.xpose.msra.mxu0 %v8858
  %8862 = vmatprep.subr.mxu0 0.0
  %8863 = vmatpush1.xpose.msra.mxu0 0.0
  %8864 = vmatprep.subr.mxu0 0.0
  %8865 = vmatpush1.xpose.msra.mxu0 0.0
  %8866 = vmatprep.subr.mxu0 0.0
  %8867 = vmatpush1.xpose.msra.mxu0 0.0
  %8868 = vmatprep.subr.mxu0 0.0
  %8869 = vmatpush1.xpose.msra.mxu0 0.0
  %8870 = vmatprep.subr.mxu0 0.0
  %8871 = vmatpush1.xpose.msra.mxu0 0.0
  %8872 = vmatprep.subr.mxu0 0.0
  %8873 = vmatpush1.xpose.msra.mxu0 0.0
  %8874 = vmatprep.subr.mxu0 0.0
  %8875 = vmatpush1.xpose.msra.mxu0 0.0
  %8876 = vmatprep.subr.mxu0 0.0
  %8877 = vmatpush1.xpose.msra.mxu0 0.0
  %8878 = vmatprep.subr.mxu0 0.0
  %8879 = vmatpush1.xpose.msra.mxu0 0.0
  %8880 = vmatprep.subr.mxu0 0.0
  %8881 = vmatpush1.xpose.msra.mxu0 0.0
  %8882 = vmatprep.subr.mxu0 0.0
  %8883 = vmatpush1.xpose.msra.mxu0 0.0
  %8884 = vmatprep.subr.mxu0 0.0
  %8885 = vmatpush1.xpose.msra.mxu0 0.0
  %8886 = vmatprep.subr.mxu0 0.0
  %8887 = vmatpush1.xpose.msra.mxu0 0.0
  %8888 = vmatprep.subr.mxu0 0.0
  %8889 = vmatpush1.xpose.msra.mxu0 0.0
  %8890 = vmatprep.subr.mxu0 0.0
  %8891 = vmatpush1.xpose.msra.mxu0 0.0
  %8892 = vmatprep.subr.mxu0 0.0
  %8893 = vmatpush1.xpose.msra.mxu0 0.0
  %8894 = vmatprep.subr.mxu0 0.0
  %8895 = vmatpush1.xpose.msra.mxu0 0.0
  %8896 = vmatprep.subr.mxu0 0.0
  %8897 = vmatpush1.xpose.msra.mxu0 0.0
  %8898 = vmatprep.subr.mxu0 0.0
  %8899 = vmatpush1.xpose.msra.mxu0 0.0
  %8900 = vmatprep.subr.mxu0 0.0
  %8901 = vmatpush1.xpose.msra.mxu0 0.0
  %8902 = vmatprep.subr.mxu0 0.0
  %8903 = vmatpush1.xpose.msra.mxu0 0.0
  %8904 = vmatprep.subr.mxu0 0.0
  %8905 = vmatpush1.xpose.msra.mxu0 0.0
  %8906 = vmatprep.subr.mxu0 0.0
  %8907 = vmatpush1.xpose.msra.mxu0 0.0
  %8908 = vmatprep.subr.mxu0 0.0
  %8909 = vmatpush1.xpose.msra.mxu0 0.0
  %8910 = vmatprep.subr.mxu0 0.0
  %8911 = vmatpush1.xpose.msra.mxu0 0.0
  %8912 = vmatprep.subr.mxu0 0.0
  %8913 = vmatpush1.xpose.msra.mxu0 0.0
  %8914 = vmatprep.subr.mxu0 0.0
  %8915 = vmatpush1.xpose.msra.mxu0 0.0
  %8916 = vmatprep.subr.mxu0 0.0
  %8917 = vmatpush1.xpose.msra.mxu0 0.0
  %8918 = vmatprep.subr.mxu0 0.0
  %8919 = vmatpush1.xpose.msra.mxu0 0.0
  %8920 = vmatprep.subr.mxu0 0.0
  %8921 = vmatpush1.xpose.msra.mxu0 0.0
  %8922 = vmatprep.subr.mxu0 0.0
  %8923 = vmatpush1.xpose.msra.mxu0 0.0
  %8924 = vmatprep.mubr.f32.mxu0 0.0
  %8925 = vmatmul.mubr.f32.gmra.mrb[0].mxu0 %v8856
  %v8926 = vpop.f32.mrb[0].mxu0
  %v8927 = vadd.f32 %v8597, %v8926
  %v8928 = vpop.f32.mrb[0].mxu0
  %8929 = vdwg.mxu0
  %8931 = vrot.lane.b32.xlu0 %v8582, 104
  %v8932 = vpop.permute.xlu0 %8931
  %8934 = vrot.lane.b32.xlu0 %v8566, 72
  %v8935 = vpop.permute.xlu0 %8934
  %v8936 = vsel %vm306, %v8932, 0
  %v8938 = vsel %vm306, %v8935, 0
  %8940 = vmatprep.subr.mxu0 0.0
  %8941 = vmatpush1.xpose.msra.mxu0 %v8938
  %8942 = vmatprep.subr.mxu0 0.0
  %8943 = vmatpush1.xpose.msra.mxu0 0.0
  %8944 = vmatprep.subr.mxu0 0.0
  %8945 = vmatpush1.xpose.msra.mxu0 0.0
  %8946 = vmatprep.subr.mxu0 0.0
  %8947 = vmatpush1.xpose.msra.mxu0 0.0
  %8948 = vmatprep.subr.mxu0 0.0
  %8949 = vmatpush1.xpose.msra.mxu0 0.0
  %8950 = vmatprep.subr.mxu0 0.0
  %8951 = vmatpush1.xpose.msra.mxu0 0.0
  %8952 = vmatprep.subr.mxu0 0.0
  %8953 = vmatpush1.xpose.msra.mxu0 0.0
  %8954 = vmatprep.subr.mxu0 0.0
  %8955 = vmatpush1.xpose.msra.mxu0 0.0
  %8956 = vmatprep.subr.mxu0 0.0
  %8957 = vmatpush1.xpose.msra.mxu0 0.0
  %8958 = vmatprep.subr.mxu0 0.0
  %8959 = vmatpush1.xpose.msra.mxu0 0.0
  %8960 = vmatprep.subr.mxu0 0.0
  %8961 = vmatpush1.xpose.msra.mxu0 0.0
  %8962 = vmatprep.subr.mxu0 0.0
  %8963 = vmatpush1.xpose.msra.mxu0 0.0
  %8964 = vmatprep.subr.mxu0 0.0
  %8965 = vmatpush1.xpose.msra.mxu0 0.0
  %8966 = vmatprep.subr.mxu0 0.0
  %8967 = vmatpush1.xpose.msra.mxu0 0.0
  %8968 = vmatprep.subr.mxu0 0.0
  %8969 = vmatpush1.xpose.msra.mxu0 0.0
  %8970 = vmatprep.subr.mxu0 0.0
  %8971 = vmatpush1.xpose.msra.mxu0 0.0
  %8972 = vmatprep.subr.mxu0 0.0
  %8973 = vmatpush1.xpose.msra.mxu0 0.0
  %8974 = vmatprep.subr.mxu0 0.0
  %8975 = vmatpush1.xpose.msra.mxu0 0.0
  %8976 = vmatprep.subr.mxu0 0.0
  %8977 = vmatpush1.xpose.msra.mxu0 0.0
  %8978 = vmatprep.subr.mxu0 0.0
  %8979 = vmatpush1.xpose.msra.mxu0 0.0
  %8980 = vmatprep.subr.mxu0 0.0
  %8981 = vmatpush1.xpose.msra.mxu0 0.0
  %8982 = vmatprep.subr.mxu0 0.0
  %8983 = vmatpush1.xpose.msra.mxu0 0.0
  %8984 = vmatprep.subr.mxu0 0.0
  %8985 = vmatpush1.xpose.msra.mxu0 0.0
  %8986 = vmatprep.subr.mxu0 0.0
  %8987 = vmatpush1.xpose.msra.mxu0 0.0
  %8988 = vmatprep.subr.mxu0 0.0
  %8989 = vmatpush1.xpose.msra.mxu0 0.0
  %8990 = vmatprep.subr.mxu0 0.0
  %8991 = vmatpush1.xpose.msra.mxu0 0.0
  %8992 = vmatprep.subr.mxu0 0.0
  %8993 = vmatpush1.xpose.msra.mxu0 0.0
  %8994 = vmatprep.subr.mxu0 0.0
  %8995 = vmatpush1.xpose.msra.mxu0 0.0
  %8996 = vmatprep.subr.mxu0 0.0
  %8997 = vmatpush1.xpose.msra.mxu0 0.0
  %8998 = vmatprep.subr.mxu0 0.0
  %8999 = vmatpush1.xpose.msra.mxu0 0.0
  %9000 = vmatprep.subr.mxu0 0.0
  %9001 = vmatpush1.xpose.msra.mxu0 0.0
  %9002 = vmatprep.subr.mxu0 0.0
  %9003 = vmatpush1.xpose.msra.mxu0 0.0
  %9004 = vmatprep.mubr.f32.mxu0 0.0
  %9005 = vmatmul.mubr.f32.gmra.mrb[0].mxu0 %v8936
  %v9006 = vpop.f32.mrb[0].mxu0
  %v9007 = vadd.f32 %v8598, %v9006
  %v9008 = vpop.f32.mrb[0].mxu0
  %9009 = vdwg.mxu0
  %9011 = vrot.lane.b32.xlu0 %v8583, 104
  %v9012 = vpop.permute.xlu0 %9011
  %9014 = vrot.lane.b32.xlu0 %v8567, 72
  %v9015 = vpop.permute.xlu0 %9014
  %v9016 = vsel %vm306, %v9012, 0
  %v9018 = vsel %vm306, %v9015, 0
  %9020 = vmatprep.subr.mxu0 0.0
  %9021 = vmatpush1.xpose.msra.mxu0 %v9018
  %9022 = vmatprep.subr.mxu0 0.0
  %9023 = vmatpush1.xpose.msra.mxu0 0.0
  %9024 = vmatprep.subr.mxu0 0.0
  %9025 = vmatpush1.xpose.msra.mxu0 0.0
  %9026 = vmatprep.subr.mxu0 0.0
  %9027 = vmatpush1.xpose.msra.mxu0 0.0
  %9028 = vmatprep.subr.mxu0 0.0
  %9029 = vmatpush1.xpose.msra.mxu0 0.0
  %9030 = vmatprep.subr.mxu0 0.0
  %9031 = vmatpush1.xpose.msra.mxu0 0.0
  %9032 = vmatprep.subr.mxu0 0.0
  %9033 = vmatpush1.xpose.msra.mxu0 0.0
  %9034 = vmatprep.subr.mxu0 0.0
  %9035 = vmatpush1.xpose.msra.mxu0 0.0
  %9036 = vmatprep.subr.mxu0 0.0
  %9037 = vmatpush1.xpose.msra.mxu0 0.0
  %9038 = vmatprep.subr.mxu0 0.0
  %9039 = vmatpush1.xpose.msra.mxu0 0.0
  %9040 = vmatprep.subr.mxu0 0.0
  %9041 = vmatpush1.xpose.msra.mxu0 0.0
  %9042 = vmatprep.subr.mxu0 0.0
  %9043 = vmatpush1.xpose.msra.mxu0 0.0
  %9044 = vmatprep.subr.mxu0 0.0
  %9045 = vmatpush1.xpose.msra.mxu0 0.0
  %9046 = vmatprep.subr.mxu0 0.0
  %9047 = vmatpush1.xpose.msra.mxu0 0.0
  %9048 = vmatprep.subr.mxu0 0.0
  %9049 = vmatpush1.xpose.msra.mxu0 0.0
  %9050 = vmatprep.subr.mxu0 0.0
  %9051 = vmatpush1.xpose.msra.mxu0 0.0
  %9052 = vmatprep.subr.mxu0 0.0
  %9053 = vmatpush1.xpose.msra.mxu0 0.0
  %9054 = vmatprep.subr.mxu0 0.0
  %9055 = vmatpush1.xpose.msra.mxu0 0.0
  %9056 = vmatprep.subr.mxu0 0.0
  %9057 = vmatpush1.xpose.msra.mxu0 0.0
  %9058 = vmatprep.subr.mxu0 0.0
  %9059 = vmatpush1.xpose.msra.mxu0 0.0
  %9060 = vmatprep.subr.mxu0 0.0
  %9061 = vmatpush1.xpose.msra.mxu0 0.0
  %9062 = vmatprep.subr.mxu0 0.0
  %9063 = vmatpush1.xpose.msra.mxu0 0.0
  %9064 = vmatprep.subr.mxu0 0.0
  %9065 = vmatpush1.xpose.msra.mxu0 0.0
  %9066 = vmatprep.subr.mxu0 0.0
  %9067 = vmatpush1.xpose.msra.mxu0 0.0
  %9068 = vmatprep.subr.mxu0 0.0
  %9069 = vmatpush1.xpose.msra.mxu0 0.0
  %9070 = vmatprep.subr.mxu0 0.0
  %9071 = vmatpush1.xpose.msra.mxu0 0.0
  %9072 = vmatprep.subr.mxu0 0.0
  %9073 = vmatpush1.xpose.msra.mxu0 0.0
  %9074 = vmatprep.subr.mxu0 0.0
  %9075 = vmatpush1.xpose.msra.mxu0 0.0
  %9076 = vmatprep.subr.mxu0 0.0
  %9077 = vmatpush1.xpose.msra.mxu0 0.0
  %9078 = vmatprep.subr.mxu0 0.0
  %9079 = vmatpush1.xpose.msra.mxu0 0.0
  %9080 = vmatprep.subr.mxu0 0.0
  %9081 = vmatpush1.xpose.msra.mxu0 0.0
  %9082 = vmatprep.subr.mxu0 0.0
  %9083 = vmatpush1.xpose.msra.mxu0 0.0
  %9084 = vmatprep.mubr.f32.mxu0 0.0
  %9085 = vmatmul.mubr.f32.gmra.mrb[0].mxu0 %v9016
  %v9086 = vpop.f32.mrb[0].mxu0
  %v9087 = vadd.f32 %v8599, %v9086
  %v9088 = vpop.f32.mrb[0].mxu0
  %9089 = vdwg.mxu0
  %9091 = vrot.lane.b32.xlu0 %v8584, 104
  %v9092 = vpop.permute.xlu0 %9091
  %9094 = vrot.lane.b32.xlu0 %v8568, 72
  %v9095 = vpop.permute.xlu0 %9094
  %v9096 = vsel %vm306, %v9092, 0
  %v9098 = vsel %vm306, %v9095, 0
  %9100 = vmatprep.subr.mxu0 0.0
  %9101 = vmatpush1.xpose.msra.mxu0 %v9098
  %9102 = vmatprep.subr.mxu0 0.0
  %9103 = vmatpush1.xpose.msra.mxu0 0.0
  %9104 = vmatprep.subr.mxu0 0.0
  %9105 = vmatpush1.xpose.msra.mxu0 0.0
  %9106 = vmatprep.subr.mxu0 0.0
  %9107 = vmatpush1.xpose.msra.mxu0 0.0
  %9108 = vmatprep.subr.mxu0 0.0
  %9109 = vmatpush1.xpose.msra.mxu0 0.0
  %9110 = vmatprep.subr.mxu0 0.0
  %9111 = vmatpush1.xpose.msra.mxu0 0.0
  %9112 = vmatprep.subr.mxu0 0.0
  %9113 = vmatpush1.xpose.msra.mxu0 0.0
  %9114 = vmatprep.subr.mxu0 0.0
  %9115 = vmatpush1.xpose.msra.mxu0 0.0
  %9116 = vmatprep.subr.mxu0 0.0
  %9117 = vmatpush1.xpose.msra.mxu0 0.0
  %9118 = vmatprep.subr.mxu0 0.0
  %9119 = vmatpush1.xpose.msra.mxu0 0.0
  %9120 = vmatprep.subr.mxu0 0.0
  %9121 = vmatpush1.xpose.msra.mxu0 0.0
  %9122 = vmatprep.subr.mxu0 0.0
  %9123 = vmatpush1.xpose.msra.mxu0 0.0
  %9124 = vmatprep.subr.mxu0 0.0
  %9125 = vmatpush1.xpose.msra.mxu0 0.0
  %9126 = vmatprep.subr.mxu0 0.0
  %9127 = vmatpush1.xpose.msra.mxu0 0.0
  %9128 = vmatprep.subr.mxu0 0.0
  %9129 = vmatpush1.xpose.msra.mxu0 0.0
  %9130 = vmatprep.subr.mxu0 0.0
  %9131 = vmatpush1.xpose.msra.mxu0 0.0
  %9132 = vmatprep.subr.mxu0 0.0
  %9133 = vmatpush1.xpose.msra.mxu0 0.0
  %9134 = vmatprep.subr.mxu0 0.0
  %9135 = vmatpush1.xpose.msra.mxu0 0.0
  %9136 = vmatprep.subr.mxu0 0.0
  %9137 = vmatpush1.xpose.msra.mxu0 0.0
  %9138 = vmatprep.subr.mxu0 0.0
  %9139 = vmatpush1.xpose.msra.mxu0 0.0
  %9140 = vmatprep.subr.mxu0 0.0
  %9141 = vmatpush1.xpose.msra.mxu0 0.0
  %9142 = vmatprep.subr.mxu0 0.0
  %9143 = vmatpush1.xpose.msra.mxu0 0.0
  %9144 = vmatprep.subr.mxu0 0.0
  %9145 = vmatpush1.xpose.msra.mxu0 0.0
  %9146 = vmatprep.subr.mxu0 0.0
  %9147 = vmatpush1.xpose.msra.mxu0 0.0
  %9148 = vmatprep.subr.mxu0 0.0
  %9149 = vmatpush1.xpose.msra.mxu0 0.0
  %9150 = vmatprep.subr.mxu0 0.0
  %9151 = vmatpush1.xpose.msra.mxu0 0.0
  %9152 = vmatprep.subr.mxu0 0.0
  %9153 = vmatpush1.xpose.msra.mxu0 0.0
  %9154 = vmatprep.subr.mxu0 0.0
  %9155 = vmatpush1.xpose.msra.mxu0 0.0
  %9156 = vmatprep.subr.mxu0 0.0
  %9157 = vmatpush1.xpose.msra.mxu0 0.0
  %9158 = vmatprep.subr.mxu0 0.0
  %9159 = vmatpush1.xpose.msra.mxu0 0.0
  %9160 = vmatprep.subr.mxu0 0.0
  %9161 = vmatpush1.xpose.msra.mxu0 0.0
  %9162 = vmatprep.subr.mxu0 0.0
  %9163 = vmatpush1.xpose.msra.mxu0 0.0
  %9164 = vmatprep.mubr.f32.mxu0 0.0
  %9165 = vmatmul.mubr.f32.gmra.mrb[0].mxu0 %v9096
  %v9166 = vpop.f32.mrb[0].mxu0
  %v9167 = vadd.f32 %v8600, %v9166
  %v9168 = vpop.f32.mrb[0].mxu0
  %9169 = vdwg.mxu0
  %9171 = vrot.lane.b32.xlu0 %v8585, 104
  %v9172 = vpop.permute.xlu0 %9171
  %9174 = vrot.lane.b32.xlu0 %v8569, 72
  %v9175 = vpop.permute.xlu0 %9174
  %v9176 = vsel %vm306, %v9172, 0
  %v9178 = vsel %vm306, %v9175, 0
  %9180 = vmatprep.subr.mxu0 0.0
  %9181 = vmatpush1.xpose.msra.mxu0 %v9178
  %9182 = vmatprep.subr.mxu0 0.0
  %9183 = vmatpush1.xpose.msra.mxu0 0.0
  %9184 = vmatprep.subr.mxu0 0.0
  %9185 = vmatpush1.xpose.msra.mxu0 0.0
  %9186 = vmatprep.subr.mxu0 0.0
  %9187 = vmatpush1.xpose.msra.mxu0 0.0
  %9188 = vmatprep.subr.mxu0 0.0
  %9189 = vmatpush1.xpose.msra.mxu0 0.0
  %9190 = vmatprep.subr.mxu0 0.0
  %9191 = vmatpush1.xpose.msra.mxu0 0.0
  %9192 = vmatprep.subr.mxu0 0.0
  %9193 = vmatpush1.xpose.msra.mxu0 0.0
  %9194 = vmatprep.subr.mxu0 0.0
  %9195 = vmatpush1.xpose.msra.mxu0 0.0
  %9196 = vmatprep.subr.mxu0 0.0
  %9197 = vmatpush1.xpose.msra.mxu0 0.0
  %9198 = vmatprep.subr.mxu0 0.0
  %9199 = vmatpush1.xpose.msra.mxu0 0.0
  %9200 = vmatprep.subr.mxu0 0.0
  %9201 = vmatpush1.xpose.msra.mxu0 0.0
  %9202 = vmatprep.subr.mxu0 0.0
  %9203 = vmatpush1.xpose.msra.mxu0 0.0
  %9204 = vmatprep.subr.mxu0 0.0
  %9205 = vmatpush1.xpose.msra.mxu0 0.0
  %9206 = vmatprep.subr.mxu0 0.0
  %9207 = vmatpush1.xpose.msra.mxu0 0.0
  %9208 = vmatprep.subr.mxu0 0.0
  %9209 = vmatpush1.xpose.msra.mxu0 0.0
  %9210 = vmatprep.subr.mxu0 0.0
  %9211 = vmatpush1.xpose.msra.mxu0 0.0
  %9212 = vmatprep.subr.mxu0 0.0
  %9213 = vmatpush1.xpose.msra.mxu0 0.0
  %9214 = vmatprep.subr.mxu0 0.0
  %9215 = vmatpush1.xpose.msra.mxu0 0.0
  %9216 = vmatprep.subr.mxu0 0.0
  %9217 = vmatpush1.xpose.msra.mxu0 0.0
  %9218 = vmatprep.subr.mxu0 0.0
  %9219 = vmatpush1.xpose.msra.mxu0 0.0
  %9220 = vmatprep.subr.mxu0 0.0
  %9221 = vmatpush1.xpose.msra.mxu0 0.0
  %9222 = vmatprep.subr.mxu0 0.0
  %9223 = vmatpush1.xpose.msra.mxu0 0.0
  %9224 = vmatprep.subr.mxu0 0.0
  %9225 = vmatpush1.xpose.msra.mxu0 0.0
  %9226 = vmatprep.subr.mxu0 0.0
  %9227 = vmatpush1.xpose.msra.mxu0 0.0
  %9228 = vmatprep.subr.mxu0 0.0
  %9229 = vmatpush1.xpose.msra.mxu0 0.0
  %9230 = vmatprep.subr.mxu0 0.0
  %9231 = vmatpush1.xpose.msra.mxu0 0.0
  %9232 = vmatprep.subr.mxu0 0.0
  %9233 = vmatpush1.xpose.msra.mxu0 0.0
  %9234 = vmatprep.subr.mxu0 0.0
  %9235 = vmatpush1.xpose.msra.mxu0 0.0
  %9236 = vmatprep.subr.mxu0 0.0
  %9237 = vmatpush1.xpose.msra.mxu0 0.0
  %9238 = vmatprep.subr.mxu0 0.0
  %9239 = vmatpush1.xpose.msra.mxu0 0.0
  %9240 = vmatprep.subr.mxu0 0.0
  %9241 = vmatpush1.xpose.msra.mxu0 0.0
  %9242 = vmatprep.subr.mxu0 0.0
  %9243 = vmatpush1.xpose.msra.mxu0 0.0
  %9244 = vmatprep.mubr.f32.mxu0 0.0
  %9245 = vmatmul.mubr.f32.gmra.mrb[0].mxu0 %v9176
  %v9246 = vpop.f32.mrb[0].mxu0
  %v9247 = vadd.f32 %v8601, %v9246
  %v9248 = vpop.f32.mrb[0].mxu0
  %9249 = vdwg.mxu0
  %9251 = vrot.lane.b32.xlu0 %v8586, 104
  %v9252 = vpop.permute.xlu0 %9251
  %9254 = vrot.lane.b32.xlu0 %v8570, 72
  %v9255 = vpop.permute.xlu0 %9254
  %v9256 = vsel %vm306, %v9252, 0
  %v9258 = vsel %vm306, %v9255, 0
  %9260 = vmatprep.subr.mxu0 0.0
  %9261 = vmatpush1.xpose.msra.mxu0 %v9258
  %9262 = vmatprep.subr.mxu0 0.0
  %9263 = vmatpush1.xpose.msra.mxu0 0.0
  %9264 = vmatprep.subr.mxu0 0.0
  %9265 = vmatpush1.xpose.msra.mxu0 0.0
  %9266 = vmatprep.subr.mxu0 0.0
  %9267 = vmatpush1.xpose.msra.mxu0 0.0
  %9268 = vmatprep.subr.mxu0 0.0
  %9269 = vmatpush1.xpose.msra.mxu0 0.0
  %9270 = vmatprep.subr.mxu0 0.0
  %9271 = vmatpush1.xpose.msra.mxu0 0.0
  %9272 = vmatprep.subr.mxu0 0.0
  %9273 = vmatpush1.xpose.msra.mxu0 0.0
  %9274 = vmatprep.subr.mxu0 0.0
  %9275 = vmatpush1.xpose.msra.mxu0 0.0
  %9276 = vmatprep.subr.mxu0 0.0
  %9277 = vmatpush1.xpose.msra.mxu0 0.0
  %9278 = vmatprep.subr.mxu0 0.0
  %9279 = vmatpush1.xpose.msra.mxu0 0.0
  %9280 = vmatprep.subr.mxu0 0.0
  %9281 = vmatpush1.xpose.msra.mxu0 0.0
  %9282 = vmatprep.subr.mxu0 0.0
  %9283 = vmatpush1.xpose.msra.mxu0 0.0
  %9284 = vmatprep.subr.mxu0 0.0
  %9285 = vmatpush1.xpose.msra.mxu0 0.0
  %9286 = vmatprep.subr.mxu0 0.0
  %9287 = vmatpush1.xpose.msra.mxu0 0.0
  %9288 = vmatprep.subr.mxu0 0.0
  %9289 = vmatpush1.xpose.msra.mxu0 0.0
  %9290 = vmatprep.subr.mxu0 0.0
  %9291 = vmatpush1.xpose.msra.mxu0 0.0
  %9292 = vmatprep.subr.mxu0 0.0
  %9293 = vmatpush1.xpose.msra.mxu0 0.0
  %9294 = vmatprep.subr.mxu0 0.0
  %9295 = vmatpush1.xpose.msra.mxu0 0.0
  %9296 = vmatprep.subr.mxu0 0.0
  %9297 = vmatpush1.xpose.msra.mxu0 0.0
  %9298 = vmatprep.subr.mxu0 0.0
  %9299 = vmatpush1.xpose.msra.mxu0 0.0
  %9300 = vmatprep.subr.mxu0 0.0
  %9301 = vmatpush1.xpose.msra.mxu0 0.0
  %9302 = vmatprep.subr.mxu0 0.0
  %9303 = vmatpush1.xpose.msra.mxu0 0.0
  %9304 = vmatprep.subr.mxu0 0.0
  %9305 = vmatpush1.xpose.msra.mxu0 0.0
  %9306 = vmatprep.subr.mxu0 0.0
  %9307 = vmatpush1.xpose.msra.mxu0 0.0
  %9308 = vmatprep.subr.mxu0 0.0
  %9309 = vmatpush1.xpose.msra.mxu0 0.0
  %9310 = vmatprep.subr.mxu0 0.0
  %9311 = vmatpush1.xpose.msra.mxu0 0.0
  %9312 = vmatprep.subr.mxu0 0.0
  %9313 = vmatpush1.xpose.msra.mxu0 0.0
  %9314 = vmatprep.subr.mxu0 0.0
  %9315 = vmatpush1.xpose.msra.mxu0 0.0
  %9316 = vmatprep.subr.mxu0 0.0
  %9317 = vmatpush1.xpose.msra.mxu0 0.0
  %9318 = vmatprep.subr.mxu0 0.0
  %9319 = vmatpush1.xpose.msra.mxu0 0.0
  %9320 = vmatprep.subr.mxu0 0.0
  %9321 = vmatpush1.xpose.msra.mxu0 0.0
  %9322 = vmatprep.subr.mxu0 0.0
  %9323 = vmatpush1.xpose.msra.mxu0 0.0
  %9324 = vmatprep.mubr.f32.mxu0 0.0
  %9325 = vmatmul.mubr.f32.gmra.mrb[0].mxu0 %v9256
  %v9326 = vpop.f32.mrb[0].mxu0
  %v9327 = vadd.f32 %v8602, %v9326
  %v9328 = vpop.f32.mrb[0].mxu0
  %9329 = vdwg.mxu0
  %9331 = vrot.lane.b32.xlu0 %v8587, 104
  %v9332 = vpop.permute.xlu0 %9331
  %9334 = vrot.lane.b32.xlu0 %v8571, 72
  %v9335 = vpop.permute.xlu0 %9334
  %v9336 = vsel %vm306, %v9332, 0
  %v9338 = vsel %vm306, %v9335, 0
  %9340 = vmatprep.subr.mxu0 0.0
  %9341 = vmatpush1.xpose.msra.mxu0 %v9338
  %9342 = vmatprep.subr.mxu0 0.0
  %9343 = vmatpush1.xpose.msra.mxu0 0.0
  %9344 = vmatprep.subr.mxu0 0.0
  %9345 = vmatpush1.xpose.msra.mxu0 0.0
  %9346 = vmatprep.subr.mxu0 0.0
  %9347 = vmatpush1.xpose.msra.mxu0 0.0
  %9348 = vmatprep.subr.mxu0 0.0
  %9349 = vmatpush1.xpose.msra.mxu0 0.0
  %9350 = vmatprep.subr.mxu0 0.0
  %9351 = vmatpush1.xpose.msra.mxu0 0.0
  %9352 = vmatprep.subr.mxu0 0.0
  %9353 = vmatpush1.xpose.msra.mxu0 0.0
  %9354 = vmatprep.subr.mxu0 0.0
  %9355 = vmatpush1.xpose.msra.mxu0 0.0
  %9356 = vmatprep.subr.mxu0 0.0
  %9357 = vmatpush1.xpose.msra.mxu0 0.0
  %9358 = vmatprep.subr.mxu0 0.0
  %9359 = vmatpush1.xpose.msra.mxu0 0.0
  %9360 = vmatprep.subr.mxu0 0.0
  %9361 = vmatpush1.xpose.msra.mxu0 0.0
  %9362 = vmatprep.subr.mxu0 0.0
  %9363 = vmatpush1.xpose.msra.mxu0 0.0
  %9364 = vmatprep.subr.mxu0 0.0
  %9365 = vmatpush1.xpose.msra.mxu0 0.0
  %9366 = vmatprep.subr.mxu0 0.0
  %9367 = vmatpush1.xpose.msra.mxu0 0.0
  %9368 = vmatprep.subr.mxu0 0.0
  %9369 = vmatpush1.xpose.msra.mxu0 0.0
  %9370 = vmatprep.subr.mxu0 0.0
  %9371 = vmatpush1.xpose.msra.mxu0 0.0
  %9372 = vmatprep.subr.mxu0 0.0
  %9373 = vmatpush1.xpose.msra.mxu0 0.0
  %9374 = vmatprep.subr.mxu0 0.0
  %9375 = vmatpush1.xpose.msra.mxu0 0.0
  %9376 = vmatprep.subr.mxu0 0.0
  %9377 = vmatpush1.xpose.msra.mxu0 0.0
  %9378 = vmatprep.subr.mxu0 0.0
  %9379 = vmatpush1.xpose.msra.mxu0 0.0
  %9380 = vmatprep.subr.mxu0 0.0
  %9381 = vmatpush1.xpose.msra.mxu0 0.0
  %9382 = vmatprep.subr.mxu0 0.0
  %9383 = vmatpush1.xpose.msra.mxu0 0.0
  %9384 = vmatprep.subr.mxu0 0.0
  %9385 = vmatpush1.xpose.msra.mxu0 0.0
  %9386 = vmatprep.subr.mxu0 0.0
  %9387 = vmatpush1.xpose.msra.mxu0 0.0
  %9388 = vmatprep.subr.mxu0 0.0
  %9389 = vmatpush1.xpose.msra.mxu0 0.0
  %9390 = vmatprep.subr.mxu0 0.0
  %9391 = vmatpush1.xpose.msra.mxu0 0.0
  %9392 = vmatprep.subr.mxu0 0.0
  %9393 = vmatpush1.xpose.msra.mxu0 0.0
  %9394 = vmatprep.subr.mxu0 0.0
  %9395 = vmatpush1.xpose.msra.mxu0 0.0
  %9396 = vmatprep.subr.mxu0 0.0
  %9397 = vmatpush1.xpose.msra.mxu0 0.0
  %9398 = vmatprep.subr.mxu0 0.0
  %9399 = vmatpush1.xpose.msra.mxu0 0.0
  %9400 = vmatprep.subr.mxu0 0.0
  %9401 = vmatpush1.xpose.msra.mxu0 0.0
  %9402 = vmatprep.subr.mxu0 0.0
  %9403 = vmatpush1.xpose.msra.mxu0 0.0
  %9404 = vmatprep.mubr.f32.mxu0 0.0
  %9405 = vmatmul.mubr.f32.gmra.mrb[0].mxu0 %v9336
  %v9406 = vpop.f32.mrb[0].mxu0
  %v9407 = vadd.f32 %v8603, %v9406
  %v9408 = vpop.f32.mrb[0].mxu0
  %9409 = vdwg.mxu0
  %9411 = vrot.lane.b32.xlu0 %v8588, 104
  %v9412 = vpop.permute.xlu0 %9411
  %9414 = vrot.lane.b32.xlu0 %v8572, 72
  %v9415 = vpop.permute.xlu0 %9414
  %v9416 = vsel %vm306, %v9412, 0
  %v9418 = vsel %vm306, %v9415, 0
  %9420 = vmatprep.subr.mxu0 0.0
  %9421 = vmatpush1.xpose.msra.mxu0 %v9418
  %9422 = vmatprep.subr.mxu0 0.0
  %9423 = vmatpush1.xpose.msra.mxu0 0.0
  %9424 = vmatprep.subr.mxu0 0.0
  %9425 = vmatpush1.xpose.msra.mxu0 0.0
  %9426 = vmatprep.subr.mxu0 0.0
  %9427 = vmatpush1.xpose.msra.mxu0 0.0
  %9428 = vmatprep.subr.mxu0 0.0
  %9429 = vmatpush1.xpose.msra.mxu0 0.0
  %9430 = vmatprep.subr.mxu0 0.0
  %9431 = vmatpush1.xpose.msra.mxu0 0.0
  %9432 = vmatprep.subr.mxu0 0.0
  %9433 = vmatpush1.xpose.msra.mxu0 0.0
  %9434 = vmatprep.subr.mxu0 0.0
  %9435 = vmatpush1.xpose.msra.mxu0 0.0
  %9436 = vmatprep.subr.mxu0 0.0
  %9437 = vmatpush1.xpose.msra.mxu0 0.0
  %9438 = vmatprep.subr.mxu0 0.0
  %9439 = vmatpush1.xpose.msra.mxu0 0.0
  %9440 = vmatprep.subr.mxu0 0.0
  %9441 = vmatpush1.xpose.msra.mxu0 0.0
  %9442 = vmatprep.subr.mxu0 0.0
  %9443 = vmatpush1.xpose.msra.mxu0 0.0
  %9444 = vmatprep.subr.mxu0 0.0
  %9445 = vmatpush1.xpose.msra.mxu0 0.0
  %9446 = vmatprep.subr.mxu0 0.0
  %9447 = vmatpush1.xpose.msra.mxu0 0.0
  %9448 = vmatprep.subr.mxu0 0.0
  %9449 = vmatpush1.xpose.msra.mxu0 0.0
  %9450 = vmatprep.subr.mxu0 0.0
  %9451 = vmatpush1.xpose.msra.mxu0 0.0
  %9452 = vmatprep.subr.mxu0 0.0
  %9453 = vmatpush1.xpose.msra.mxu0 0.0
  %9454 = vmatprep.subr.mxu0 0.0
  %9455 = vmatpush1.xpose.msra.mxu0 0.0
  %9456 = vmatprep.subr.mxu0 0.0
  %9457 = vmatpush1.xpose.msra.mxu0 0.0
  %9458 = vmatprep.subr.mxu0 0.0
  %9459 = vmatpush1.xpose.msra.mxu0 0.0
  %9460 = vmatprep.subr.mxu0 0.0
  %9461 = vmatpush1.xpose.msra.mxu0 0.0
  %9462 = vmatprep.subr.mxu0 0.0
  %9463 = vmatpush1.xpose.msra.mxu0 0.0
  %9464 = vmatprep.subr.mxu0 0.0
  %9465 = vmatpush1.xpose.msra.mxu0 0.0
  %9466 = vmatprep.subr.mxu0 0.0
  %9467 = vmatpush1.xpose.msra.mxu0 0.0
  %9468 = vmatprep.subr.mxu0 0.0
  %9469 = vmatpush1.xpose.msra.mxu0 0.0
  %9470 = vmatprep.subr.mxu0 0.0
  %9471 = vmatpush1.xpose.msra.mxu0 0.0
  %9472 = vmatprep.subr.mxu0 0.0
  %9473 = vmatpush1.xpose.msra.mxu0 0.0
  %9474 = vmatprep.subr.mxu0 0.0
  %9475 = vmatpush1.xpose.msra.mxu0 0.0
  %9476 = vmatprep.subr.mxu0 0.0
  %9477 = vmatpush1.xpose.msra.mxu0 0.0
  %9478 = vmatprep.subr.mxu0 0.0
  %9479 = vmatpush1.xpose.msra.mxu0 0.0
  %9480 = vmatprep.subr.mxu0 0.0
  %9481 = vmatpush1.xpose.msra.mxu0 0.0
  %9482 = vmatprep.subr.mxu0 0.0
  %9483 = vmatpush1.xpose.msra.mxu0 0.0
  %9484 = vmatprep.mubr.f32.mxu0 0.0
  %9485 = vmatmul.mubr.f32.gmra.mrb[0].mxu0 %v9416
  %v9486 = vpop.f32.mrb[0].mxu0
  %v9487 = vadd.f32 %v8604, %v9486
  %v9488 = vpop.f32.mrb[0].mxu0
  %9489 = vdwg.mxu0
  %9491 = vrot.lane.b32.xlu0 %v8589, 104
  %v9492 = vpop.permute.xlu0 %9491
  %9494 = vrot.lane.b32.xlu0 %v8573, 72
  %v9495 = vpop.permute.xlu0 %9494
  %v9496 = vsel %vm306, %v9492, 0
  %v9498 = vsel %vm306, %v9495, 0
  %9500 = vmatprep.subr.mxu0 0.0
  %9501 = vmatpush1.xpose.msra.mxu0 %v9498
  %9502 = vmatprep.subr.mxu0 0.0
  %9503 = vmatpush1.xpose.msra.mxu0 0.0
  %9504 = vmatprep.subr.mxu0 0.0
  %9505 = vmatpush1.xpose.msra.mxu0 0.0
  %9506 = vmatprep.subr.mxu0 0.0
  %9507 = vmatpush1.xpose.msra.mxu0 0.0
  %9508 = vmatprep.subr.mxu0 0.0
  %9509 = vmatpush1.xpose.msra.mxu0 0.0
  %9510 = vmatprep.subr.mxu0 0.0
  %9511 = vmatpush1.xpose.msra.mxu0 0.0
  %9512 = vmatprep.subr.mxu0 0.0
  %9513 = vmatpush1.xpose.msra.mxu0 0.0
  %9514 = vmatprep.subr.mxu0 0.0
  %9515 = vmatpush1.xpose.msra.mxu0 0.0
  %9516 = vmatprep.subr.mxu0 0.0
  %9517 = vmatpush1.xpose.msra.mxu0 0.0
  %9518 = vmatprep.subr.mxu0 0.0
  %9519 = vmatpush1.xpose.msra.mxu0 0.0
  %9520 = vmatprep.subr.mxu0 0.0
  %9521 = vmatpush1.xpose.msra.mxu0 0.0
  %9522 = vmatprep.subr.mxu0 0.0
  %9523 = vmatpush1.xpose.msra.mxu0 0.0
  %9524 = vmatprep.subr.mxu0 0.0
  %9525 = vmatpush1.xpose.msra.mxu0 0.0
  %9526 = vmatprep.subr.mxu0 0.0
  %9527 = vmatpush1.xpose.msra.mxu0 0.0
  %9528 = vmatprep.subr.mxu0 0.0
  %9529 = vmatpush1.xpose.msra.mxu0 0.0
  %9530 = vmatprep.subr.mxu0 0.0
  %9531 = vmatpush1.xpose.msra.mxu0 0.0
  %9532 = vmatprep.subr.mxu0 0.0
  %9533 = vmatpush1.xpose.msra.mxu0 0.0
  %9534 = vmatprep.subr.mxu0 0.0
  %9535 = vmatpush1.xpose.msra.mxu0 0.0
  %9536 = vmatprep.subr.mxu0 0.0
  %9537 = vmatpush1.xpose.msra.mxu0 0.0
  %9538 = vmatprep.subr.mxu0 0.0
  %9539 = vmatpush1.xpose.msra.mxu0 0.0
  %9540 = vmatprep.subr.mxu0 0.0
  %9541 = vmatpush1.xpose.msra.mxu0 0.0
  %9542 = vmatprep.subr.mxu0 0.0
  %9543 = vmatpush1.xpose.msra.mxu0 0.0
  %9544 = vmatprep.subr.mxu0 0.0
  %9545 = vmatpush1.xpose.msra.mxu0 0.0
  %9546 = vmatprep.subr.mxu0 0.0
  %9547 = vmatpush1.xpose.msra.mxu0 0.0
  %9548 = vmatprep.subr.mxu0 0.0
  %9549 = vmatpush1.xpose.msra.mxu0 0.0
  %9550 = vmatprep.subr.mxu0 0.0
  %9551 = vmatpush1.xpose.msra.mxu0 0.0
  %9552 = vmatprep.subr.mxu0 0.0
  %9553 = vmatpush1.xpose.msra.mxu0 0.0
  %9554 = vmatprep.subr.mxu0 0.0
  %9555 = vmatpush1.xpose.msra.mxu0 0.0
  %9556 = vmatprep.subr.mxu0 0.0
  %9557 = vmatpush1.xpose.msra.mxu0 0.0
  %9558 = vmatprep.subr.mxu0 0.0
  %9559 = vmatpush1.xpose.msra.mxu0 0.0
  %9560 = vmatprep.subr.mxu0 0.0
  %9561 = vmatpush1.xpose.msra.mxu0 0.0
  %9562 = vmatprep.subr.mxu0 0.0
  %9563 = vmatpush1.xpose.msra.mxu0 0.0
  %9564 = vmatprep.mubr.f32.mxu0 0.0
  %9565 = vmatmul.mubr.f32.gmra.mrb[0].mxu0 %v9496
  %v9566 = vpop.f32.mrb[0].mxu0
  %v9567 = vadd.f32 %v8605, %v9566
  %v9568 = vpop.f32.mrb[0].mxu0
  %9569 = vdwg.mxu0
  %9571 = vrot.lane.b32.xlu0 %v8590, 104
  %v9572 = vpop.permute.xlu0 %9571
  %9574 = vrot.lane.b32.xlu0 %v8574, 72
  %v9575 = vpop.permute.xlu0 %9574
  %v9576 = vsel %vm306, %v9572, 0
  %v9578 = vsel %vm306, %v9575, 0
  %9580 = vmatprep.subr.mxu0 0.0
  %9581 = vmatpush1.xpose.msra.mxu0 %v9578
  %9582 = vmatprep.subr.mxu0 0.0
  %9583 = vmatpush1.xpose.msra.mxu0 0.0
  %9584 = vmatprep.subr.mxu0 0.0
  %9585 = vmatpush1.xpose.msra.mxu0 0.0
  %9586 = vmatprep.subr.mxu0 0.0
  %9587 = vmatpush1.xpose.msra.mxu0 0.0
  %9588 = vmatprep.subr.mxu0 0.0
  %9589 = vmatpush1.xpose.msra.mxu0 0.0
  %9590 = vmatprep.subr.mxu0 0.0
  %9591 = vmatpush1.xpose.msra.mxu0 0.0
  %9592 = vmatprep.subr.mxu0 0.0
  %9593 = vmatpush1.xpose.msra.mxu0 0.0
  %9594 = vmatprep.subr.mxu0 0.0
  %9595 = vmatpush1.xpose.msra.mxu0 0.0
  %9596 = vmatprep.subr.mxu0 0.0
  %9597 = vmatpush1.xpose.msra.mxu0 0.0
  %9598 = vmatprep.subr.mxu0 0.0
  %9599 = vmatpush1.xpose.msra.mxu0 0.0
  %9600 = vmatprep.subr.mxu0 0.0
  %9601 = vmatpush1.xpose.msra.mxu0 0.0
  %9602 = vmatprep.subr.mxu0 0.0
  %9603 = vmatpush1.xpose.msra.mxu0 0.0
  %9604 = vmatprep.subr.mxu0 0.0
  %9605 = vmatpush1.xpose.msra.mxu0 0.0
  %9606 = vmatprep.subr.mxu0 0.0
  %9607 = vmatpush1.xpose.msra.mxu0 0.0
  %9608 = vmatprep.subr.mxu0 0.0
  %9609 = vmatpush1.xpose.msra.mxu0 0.0
  %9610 = vmatprep.subr.mxu0 0.0
  %9611 = vmatpush1.xpose.msra.mxu0 0.0
  %9612 = vmatprep.subr.mxu0 0.0
  %9613 = vmatpush1.xpose.msra.mxu0 0.0
  %9614 = vmatprep.subr.mxu0 0.0
  %9615 = vmatpush1.xpose.msra.mxu0 0.0
  %9616 = vmatprep.subr.mxu0 0.0
  %9617 = vmatpush1.xpose.msra.mxu0 0.0
  %9618 = vmatprep.subr.mxu0 0.0
  %9619 = vmatpush1.xpose.msra.mxu0 0.0
  %9620 = vmatprep.subr.mxu0 0.0
  %9621 = vmatpush1.xpose.msra.mxu0 0.0
  %9622 = vmatprep.subr.mxu0 0.0
  %9623 = vmatpush1.xpose.msra.mxu0 0.0
  %9624 = vmatprep.subr.mxu0 0.0
  %9625 = vmatpush1.xpose.msra.mxu0 0.0
  %9626 = vmatprep.subr.mxu0 0.0
  %9627 = vmatpush1.xpose.msra.mxu0 0.0
  %9628 = vmatprep.subr.mxu0 0.0
  %9629 = vmatpush1.xpose.msra.mxu0 0.0
  %9630 = vmatprep.subr.mxu0 0.0
  %9631 = vmatpush1.xpose.msra.mxu0 0.0
  %9632 = vmatprep.subr.mxu0 0.0
  %9633 = vmatpush1.xpose.msra.mxu0 0.0
  %9634 = vmatprep.subr.mxu0 0.0
  %9635 = vmatpush1.xpose.msra.mxu0 0.0
  %9636 = vmatprep.subr.mxu0 0.0
  %9637 = vmatpush1.xpose.msra.mxu0 0.0
  %9638 = vmatprep.subr.mxu0 0.0
  %9639 = vmatpush1.xpose.msra.mxu0 0.0
  %9640 = vmatprep.subr.mxu0 0.0
  %9641 = vmatpush1.xpose.msra.mxu0 0.0
  %9642 = vmatprep.subr.mxu0 0.0
  %9643 = vmatpush1.xpose.msra.mxu0 0.0
  %9644 = vmatprep.mubr.f32.mxu0 0.0
  %9645 = vmatmul.mubr.f32.gmra.mrb[0].mxu0 %v9576
  %v9646 = vpop.f32.mrb[0].mxu0
  %v9647 = vadd.f32 %v8606, %v9646
  %v9648 = vpop.f32.mrb[0].mxu0
  %9649 = vdwg.mxu0
  %9651 = vrot.lane.b32.xlu0 %v8591, 104
  %v9652 = vpop.permute.xlu0 %9651
  %9654 = vrot.lane.b32.xlu0 %v8575, 72
  %v9655 = vpop.permute.xlu0 %9654
  %v9656 = vsel %vm306, %v9652, 0
  %v9658 = vsel %vm306, %v9655, 0
  %9660 = vmatprep.subr.mxu0 0.0
  %9661 = vmatpush1.xpose.msra.mxu0 %v9658
  %9662 = vmatprep.subr.mxu0 0.0
  %9663 = vmatpush1.xpose.msra.mxu0 0.0
  %9664 = vmatprep.subr.mxu0 0.0
  %9665 = vmatpush1.xpose.msra.mxu0 0.0
  %9666 = vmatprep.subr.mxu0 0.0
  %9667 = vmatpush1.xpose.msra.mxu0 0.0
  %9668 = vmatprep.subr.mxu0 0.0
  %9669 = vmatpush1.xpose.msra.mxu0 0.0
  %9670 = vmatprep.subr.mxu0 0.0
  %9671 = vmatpush1.xpose.msra.mxu0 0.0
  %9672 = vmatprep.subr.mxu0 0.0
  %9673 = vmatpush1.xpose.msra.mxu0 0.0
  %9674 = vmatprep.subr.mxu0 0.0
  %9675 = vmatpush1.xpose.msra.mxu0 0.0
  %9676 = vmatprep.subr.mxu0 0.0
  %9677 = vmatpush1.xpose.msra.mxu0 0.0
  %9678 = vmatprep.subr.mxu0 0.0
  %9679 = vmatpush1.xpose.msra.mxu0 0.0
  %9680 = vmatprep.subr.mxu0 0.0
  %9681 = vmatpush1.xpose.msra.mxu0 0.0
  %9682 = vmatprep.subr.mxu0 0.0
  %9683 = vmatpush1.xpose.msra.mxu0 0.0
  %9684 = vmatprep.subr.mxu0 0.0
  %9685 = vmatpush1.xpose.msra.mxu0 0.0
  %9686 = vmatprep.subr.mxu0 0.0
  %9687 = vmatpush1.xpose.msra.mxu0 0.0
  %9688 = vmatprep.subr.mxu0 0.0
  %9689 = vmatpush1.xpose.msra.mxu0 0.0
  %9690 = vmatprep.subr.mxu0 0.0
  %9691 = vmatpush1.xpose.msra.mxu0 0.0
  %9692 = vmatprep.subr.mxu0 0.0
  %9693 = vmatpush1.xpose.msra.mxu0 0.0
  %9694 = vmatprep.subr.mxu0 0.0
  %9695 = vmatpush1.xpose.msra.mxu0 0.0
  %9696 = vmatprep.subr.mxu0 0.0
  %9697 = vmatpush1.xpose.msra.mxu0 0.0
  %9698 = vmatprep.subr.mxu0 0.0
  %9699 = vmatpush1.xpose.msra.mxu0 0.0
  %9700 = vmatprep.subr.mxu0 0.0
  %9701 = vmatpush1.xpose.msra.mxu0 0.0
  %9702 = vmatprep.subr.mxu0 0.0
  %9703 = vmatpush1.xpose.msra.mxu0 0.0
  %9704 = vmatprep.subr.mxu0 0.0
  %9705 = vmatpush1.xpose.msra.mxu0 0.0
  %9706 = vmatprep.subr.mxu0 0.0
  %9707 = vmatpush1.xpose.msra.mxu0 0.0
  %9708 = vmatprep.subr.mxu0 0.0
  %9709 = vmatpush1.xpose.msra.mxu0 0.0
  %9710 = vmatprep.subr.mxu0 0.0
  %9711 = vmatpush1.xpose.msra.mxu0 0.0
  %9712 = vmatprep.subr.mxu0 0.0
  %9713 = vmatpush1.xpose.msra.mxu0 0.0
  %9714 = vmatprep.subr.mxu0 0.0
  %9715 = vmatpush1.xpose.msra.mxu0 0.0
  %9716 = vmatprep.subr.mxu0 0.0
  %9717 = vmatpush1.xpose.msra.mxu0 0.0
  %9718 = vmatprep.subr.mxu0 0.0
  %9719 = vmatpush1.xpose.msra.mxu0 0.0
  %9720 = vmatprep.subr.mxu0 0.0
  %9721 = vmatpush1.xpose.msra.mxu0 0.0
  %9722 = vmatprep.subr.mxu0 0.0
  %9723 = vmatpush1.xpose.msra.mxu0 0.0
  %9724 = vmatprep.mubr.f32.mxu0 0.0
  %9725 = vmatmul.mubr.f32.gmra.mrb[0].mxu0 %v9656
  %v9726 = vpop.f32.mrb[0].mxu0
  %v9727 = vadd.f32 %v8607, %v9726
  %v9728 = vpop.f32.mrb[0].mxu0
  %9729 = vdwg.mxu0
  %9731 = vrot.lane.b32.xlu0 %v8592, 104
  %v9732 = vpop.permute.xlu0 %9731
  %9734 = vrot.lane.b32.xlu0 %v8576, 72
  %v9735 = vpop.permute.xlu0 %9734
  %v9736 = vsel %vm306, %v9732, 0
  %v9738 = vsel %vm306, %v9735, 0
  %9740 = vmatprep.subr.mxu0 0.0
  %9741 = vmatpush1.xpose.msra.mxu0 %v9738
  %9742 = vmatprep.subr.mxu0 0.0
  %9743 = vmatpush1.xpose.msra.mxu0 0.0
  %9744 = vmatprep.subr.mxu0 0.0
  %9745 = vmatpush1.xpose.msra.mxu0 0.0
  %9746 = vmatprep.subr.mxu0 0.0
  %9747 = vmatpush1.xpose.msra.mxu0 0.0
  %9748 = vmatprep.subr.mxu0 0.0
  %9749 = vmatpush1.xpose.msra.mxu0 0.0
  %9750 = vmatprep.subr.mxu0 0.0
  %9751 = vmatpush1.xpose.msra.mxu0 0.0
  %9752 = vmatprep.subr.mxu0 0.0
  %9753 = vmatpush1.xpose.msra.mxu0 0.0
  %9754 = vmatprep.subr.mxu0 0.0
  %9755 = vmatpush1.xpose.msra.mxu0 0.0
  %9756 = vmatprep.subr.mxu0 0.0
  %9757 = vmatpush1.xpose.msra.mxu0 0.0
  %9758 = vmatprep.subr.mxu0 0.0
  %9759 = vmatpush1.xpose.msra.mxu0 0.0
  %9760 = vmatprep.subr.mxu0 0.0
  %9761 = vmatpush1.xpose.msra.mxu0 0.0
  %9762 = vmatprep.subr.mxu0 0.0
  %9763 = vmatpush1.xpose.msra.mxu0 0.0
  %9764 = vmatprep.subr.mxu0 0.0
  %9765 = vmatpush1.xpose.msra.mxu0 0.0
  %9766 = vmatprep.subr.mxu0 0.0
  %9767 = vmatpush1.xpose.msra.mxu0 0.0
  %9768 = vmatprep.subr.mxu0 0.0
  %9769 = vmatpush1.xpose.msra.mxu0 0.0
  %9770 = vmatprep.subr.mxu0 0.0
  %9771 = vmatpush1.xpose.msra.mxu0 0.0
  %9772 = vmatprep.subr.mxu0 0.0
  %9773 = vmatpush1.xpose.msra.mxu0 0.0
  %9774 = vmatprep.subr.mxu0 0.0
  %9775 = vmatpush1.xpose.msra.mxu0 0.0
  %9776 = vmatprep.subr.mxu0 0.0
  %9777 = vmatpush1.xpose.msra.mxu0 0.0
  %9778 = vmatprep.subr.mxu0 0.0
  %9779 = vmatpush1.xpose.msra.mxu0 0.0
  %9780 = vmatprep.subr.mxu0 0.0
  %9781 = vmatpush1.xpose.msra.mxu0 0.0
  %9782 = vmatprep.subr.mxu0 0.0
  %9783 = vmatpush1.xpose.msra.mxu0 0.0
  %9784 = vmatprep.subr.mxu0 0.0
  %9785 = vmatpush1.xpose.msra.mxu0 0.0
  %9786 = vmatprep.subr.mxu0 0.0
  %9787 = vmatpush1.xpose.msra.mxu0 0.0
  %9788 = vmatprep.subr.mxu0 0.0
  %9789 = vmatpush1.xpose.msra.mxu0 0.0
  %9790 = vmatprep.subr.mxu0 0.0
  %9791 = vmatpush1.xpose.msra.mxu0 0.0
  %9792 = vmatprep.subr.mxu0 0.0
  %9793 = vmatpush1.xpose.msra.mxu0 0.0
  %9794 = vmatprep.subr.mxu0 0.0
  %9795 = vmatpush1.xpose.msra.mxu0 0.0
  %9796 = vmatprep.subr.mxu0 0.0
  %9797 = vmatpush1.xpose.msra.mxu0 0.0
  %9798 = vmatprep.subr.mxu0 0.0
  %9799 = vmatpush1.xpose.msra.mxu0 0.0
  %9800 = vmatprep.subr.mxu0 0.0
  %9801 = vmatpush1.xpose.msra.mxu0 0.0
  %9802 = vmatprep.subr.mxu0 0.0
  %9803 = vmatpush1.xpose.msra.mxu0 0.0
  %9804 = vmatprep.mubr.f32.mxu0 0.0
  %9805 = vmatmul.mubr.f32.gmra.mrb[0].mxu0 %v9736
  %v9806 = vpop.f32.mrb[0].mxu0
  %v9807 = vadd.f32 %v8608, %v9806
  %v9808 = vpop.f32.mrb[0].mxu0
  %9809 = vdwg.mxu0
  %9811 = vrot.lane.b32.xlu0 %v8593, 104
  %v9812 = vpop.permute.xlu0 %9811
  %9814 = vrot.lane.b32.xlu0 %v8577, 72
  %v9815 = vpop.permute.xlu0 %9814
  %v9816 = vsel %vm306, %v9812, 0
  %v9818 = vsel %vm306, %v9815, 0
  %9820 = vmatprep.subr.mxu0 0.0
  %9821 = vmatpush1.xpose.msra.mxu0 %v9818
  %9822 = vmatprep.subr.mxu0 0.0
  %9823 = vmatpush1.xpose.msra.mxu0 0.0
  %9824 = vmatprep.subr.mxu0 0.0
  %9825 = vmatpush1.xpose.msra.mxu0 0.0
  %9826 = vmatprep.subr.mxu0 0.0
  %9827 = vmatpush1.xpose.msra.mxu0 0.0
  %9828 = vmatprep.subr.mxu0 0.0
  %9829 = vmatpush1.xpose.msra.mxu0 0.0
  %9830 = vmatprep.subr.mxu0 0.0
  %9831 = vmatpush1.xpose.msra.mxu0 0.0
  %9832 = vmatprep.subr.mxu0 0.0
  %9833 = vmatpush1.xpose.msra.mxu0 0.0
  %9834 = vmatprep.subr.mxu0 0.0
  %9835 = vmatpush1.xpose.msra.mxu0 0.0
  %9836 = vmatprep.subr.mxu0 0.0
  %9837 = vmatpush1.xpose.msra.mxu0 0.0
  %9838 = vmatprep.subr.mxu0 0.0
  %9839 = vmatpush1.xpose.msra.mxu0 0.0
  %9840 = vmatprep.subr.mxu0 0.0
  %9841 = vmatpush1.xpose.msra.mxu0 0.0
  %9842 = vmatprep.subr.mxu0 0.0
  %9843 = vmatpush1.xpose.msra.mxu0 0.0
  %9844 = vmatprep.subr.mxu0 0.0
  %9845 = vmatpush1.xpose.msra.mxu0 0.0
  %9846 = vmatprep.subr.mxu0 0.0
  %9847 = vmatpush1.xpose.msra.mxu0 0.0
  %9848 = vmatprep.subr.mxu0 0.0
  %9849 = vmatpush1.xpose.msra.mxu0 0.0
  %9850 = vmatprep.subr.mxu0 0.0
  %9851 = vmatpush1.xpose.msra.mxu0 0.0
  %9852 = vmatprep.subr.mxu0 0.0
  %9853 = vmatpush1.xpose.msra.mxu0 0.0
  %9854 = vmatprep.subr.mxu0 0.0
  %9855 = vmatpush1.xpose.msra.mxu0 0.0
  %9856 = vmatprep.subr.mxu0 0.0
  %9857 = vmatpush1.xpose.msra.mxu0 0.0
  %9858 = vmatprep.subr.mxu0 0.0
  %9859 = vmatpush1.xpose.msra.mxu0 0.0
  %9860 = vmatprep.subr.mxu0 0.0
  %9861 = vmatpush1.xpose.msra.mxu0 0.0
  %9862 = vmatprep.subr.mxu0 0.0
  %9863 = vmatpush1.xpose.msra.mxu0 0.0
  %9864 = vmatprep.subr.mxu0 0.0
  %9865 = vmatpush1.xpose.msra.mxu0 0.0
  %9866 = vmatprep.subr.mxu0 0.0
  %9867 = vmatpush1.xpose.msra.mxu0 0.0
  %9868 = vmatprep.subr.mxu0 0.0
  %9869 = vmatpush1.xpose.msra.mxu0 0.0
  %9870 = vmatprep.subr.mxu0 0.0
  %9871 = vmatpush1.xpose.msra.mxu0 0.0
  %9872 = vmatprep.subr.mxu0 0.0
  %9873 = vmatpush1.xpose.msra.mxu0 0.0
  %9874 = vmatprep.subr.mxu0 0.0
  %9875 = vmatpush1.xpose.msra.mxu0 0.0
  %9876 = vmatprep.subr.mxu0 0.0
  %9877 = vmatpush1.xpose.msra.mxu0 0.0
  %9878 = vmatprep.subr.mxu0 0.0
  %9879 = vmatpush1.xpose.msra.mxu0 0.0
  %9880 = vmatprep.subr.mxu0 0.0
  %9881 = vmatpush1.xpose.msra.mxu0 0.0
  %9882 = vmatprep.subr.mxu0 0.0
  %9883 = vmatpush1.xpose.msra.mxu0 0.0
  %9884 = vmatprep.mubr.f32.mxu0 0.0
  %9885 = vmatmul.mubr.f32.gmra.mrb[0].mxu0 %v9816
  %v9886 = vpop.f32.mrb[0].mxu0
  %v9887 = vadd.f32 %v8609, %v9886
  %v9888 = vpop.f32.mrb[0].mxu0
  %9889 = vdwg.mxu0
  %v9890 = vsel %vm306, %v8687, -inf
  %9891 = vmax.xlane.f32.xlu0 %v9890
  %v9892 = vpop.xlane.xlu0 %9891
  %v9893 = vsel %vm306, %v8767, -inf
  %9894 = vmax.xlane.f32.xlu0 %v9893
  %v9895 = vpop.xlane.xlu0 %9894
  %v9896 = vsel %vm306, %v8847, -inf
  %9897 = vmax.xlane.f32.xlu0 %v9896
  %v9898 = vpop.xlane.xlu0 %9897
  %v9899 = vsel %vm306, %v8927, -inf
  %9900 = vmax.xlane.f32.xlu0 %v9899
  %v9901 = vpop.xlane.xlu0 %9900
  %v9902 = vsel %vm306, %v9007, -inf
  %9903 = vmax.xlane.f32.xlu0 %v9902
  %v9904 = vpop.xlane.xlu0 %9903
  %v9905 = vsel %vm306, %v9087, -inf
  %9906 = vmax.xlane.f32.xlu0 %v9905
  %v9907 = vpop.xlane.xlu0 %9906
  %v9908 = vsel %vm306, %v9167, -inf
  %9909 = vmax.xlane.f32.xlu0 %v9908
  %v9910 = vpop.xlane.xlu0 %9909
  %v9911 = vsel %vm306, %v9247, -inf
  %9912 = vmax.xlane.f32.xlu0 %v9911
  %v9913 = vpop.xlane.xlu0 %9912
  %v9914 = vsel %vm306, %v9327, -inf
  %9915 = vmax.xlane.f32.xlu0 %v9914
  %v9916 = vpop.xlane.xlu0 %9915
  %v9917 = vsel %vm306, %v9407, -inf
  %9918 = vmax.xlane.f32.xlu0 %v9917
  %v9919 = vpop.xlane.xlu0 %9918
  %v9920 = vsel %vm306, %v9487, -inf
  %9921 = vmax.xlane.f32.xlu0 %v9920
  %v9922 = vpop.xlane.xlu0 %9921
  %v9923 = vsel %vm306, %v9567, -inf
  %9924 = vmax.xlane.f32.xlu0 %v9923
  %v9925 = vpop.xlane.xlu0 %9924
  %v9926 = vsel %vm306, %v9647, -inf
  %9927 = vmax.xlane.f32.xlu0 %v9926
  %v9928 = vpop.xlane.xlu0 %9927
  %v9929 = vsel %vm306, %v9727, -inf
  %9930 = vmax.xlane.f32.xlu0 %v9929
  %v9931 = vpop.xlane.xlu0 %9930
  %v9932 = vsel %vm306, %v9807, -inf
  %9933 = vmax.xlane.f32.xlu0 %v9932
  %v9934 = vpop.xlane.xlu0 %9933
  %v9935 = vsel %vm306, %v9887, -inf
  %9936 = vmax.xlane.f32.xlu0 %v9935
  %v9937 = vpop.xlane.xlu0 %9936
  %v9938 = vsub.f32 %v8687, %v9892
  %v9939 = vsub.f32 %v8767, %v9895
  %v9940 = vsub.f32 %v8847, %v9898
  %v9941 = vsub.f32 %v8927, %v9901
  %v9942 = vsub.f32 %v9007, %v9904
  %v9943 = vsub.f32 %v9087, %v9907
  %v9944 = vsub.f32 %v9167, %v9910
  %v9945 = vsub.f32 %v9247, %v9913
  %v9946 = vsub.f32 %v9327, %v9916
  %v9947 = vsub.f32 %v9407, %v9919
  %v9948 = vsub.f32 %v9487, %v9922
  %v9949 = vsub.f32 %v9567, %v9925
  %v9950 = vsub.f32 %v9647, %v9928
  %v9951 = vsub.f32 %v9727, %v9931
  %v9952 = vsub.f32 %v9807, %v9934
  %v9953 = vsub.f32 %v9887, %v9937
  %v9954 = vmul.f32 %v9938, 1.442695
  %v9955 = vpow.pop %v9954
  %v9956 = vmul.f32 %v9939, 1.442695
  %v9957 = vpow.pop %v9956
  %v9958 = vmul.f32 %v9940, 1.442695
  %v9959 = vpow.pop %v9958
  %v9960 = vmul.f32 %v9941, 1.442695
  %v9961 = vpow.pop %v9960
  %v9962 = vmul.f32 %v9942, 1.442695
  %v9963 = vpow.pop %v9962
  %v9964 = vmul.f32 %v9943, 1.442695
  %v9965 = vpow.pop %v9964
  %v9966 = vmul.f32 %v9944, 1.442695
  %v9967 = vpow.pop %v9966
  %v9968 = vmul.f32 %v9945, 1.442695
  %v9969 = vpow.pop %v9968
  %v9970 = vmul.f32 %v9946, 1.442695
  %v9971 = vpow.pop %v9970
  %v9972 = vmul.f32 %v9947, 1.442695
  %v9973 = vpow.pop %v9972
  %v9974 = vmul.f32 %v9948, 1.442695
  %v9975 = vpow.pop %v9974
  %v9976 = vmul.f32 %v9949, 1.442695
  %v9977 = vpow.pop %v9976
  %v9978 = vmul.f32 %v9950, 1.442695
  %v9979 = vpow.pop %v9978
  %v9980 = vmul.f32 %v9951, 1.442695
  %v9981 = vpow.pop %v9980
  %v9982 = vmul.f32 %v9952, 1.442695
  %v9983 = vpow.pop %v9982
  %v9984 = vmul.f32 %v9953, 1.442695
  %v9985 = vpow.pop %v9984
  %v9986 = vsel %vm306, %v9955, 0.0
  %9987 = vadd.xlane.f32.xlu0 %v9986
  %v9988 = vpop.xlane.xlu0 %9987
  %v9989 = vsel %vm306, %v9957, 0.0
  %9990 = vadd.xlane.f32.xlu0 %v9989
  %v9991 = vpop.xlane.xlu0 %9990
  %v9992 = vsel %vm306, %v9959, 0.0
  %9993 = vadd.xlane.f32.xlu0 %v9992
  %v9994 = vpop.xlane.xlu0 %9993
  %v9995 = vsel %vm306, %v9961, 0.0
  %9996 = vadd.xlane.f32.xlu0 %v9995
  %v9997 = vpop.xlane.xlu0 %9996
  %v9998 = vsel %vm306, %v9963, 0.0
  %9999 = vadd.xlane.f32.xlu0 %v9998
  %v10000 = vpop.xlane.xlu0 %9999
  %v10001 = vsel %vm306, %v9965, 0.0
  %10002 = vadd.xlane.f32.xlu0 %v10001
  %v10003 = vpop.xlane.xlu0 %10002
  %v10004 = vsel %vm306, %v9967, 0.0
  %10005 = vadd.xlane.f32.xlu0 %v10004
  %v10006 = vpop.xlane.xlu0 %10005
  %v10007 = vsel %vm306, %v9969, 0.0
  %10008 = vadd.xlane.f32.xlu0 %v10007
  %v10009 = vpop.xlane.xlu0 %10008
  %v10010 = vsel %vm306, %v9971, 0.0
  %10011 = vadd.xlane.f32.xlu0 %v10010
  %v10012 = vpop.xlane.xlu0 %10011
  %v10013 = vsel %vm306, %v9973, 0.0
  %10014 = vadd.xlane.f32.xlu0 %v10013
  %v10015 = vpop.xlane.xlu0 %10014
  %v10016 = vsel %vm306, %v9975, 0.0
  %10017 = vadd.xlane.f32.xlu0 %v10016
  %v10018 = vpop.xlane.xlu0 %10017
  %v10019 = vsel %vm306, %v9977, 0.0
  %10020 = vadd.xlane.f32.xlu0 %v10019
  %v10021 = vpop.xlane.xlu0 %10020
  %v10022 = vsel %vm306, %v9979, 0.0
  %10023 = vadd.xlane.f32.xlu0 %v10022
  %v10024 = vpop.xlane.xlu0 %10023
  %v10025 = vsel %vm306, %v9981, 0.0
  %10026 = vadd.xlane.f32.xlu0 %v10025
  %v10027 = vpop.xlane.xlu0 %10026
  %v10028 = vsel %vm306, %v9983, 0.0
  %10029 = vadd.xlane.f32.xlu0 %v10028
  %v10030 = vpop.xlane.xlu0 %10029
  %v10031 = vsel %vm306, %v9985, 0.0
  %10032 = vadd.xlane.f32.xlu0 %v10031
  %v10033 = vpop.xlane.xlu0 %10032
  %v10034 = vrcp.pop %v9988
  %v10035 = vrcp.pop %v9991
  %v10036 = vrcp.pop %v9994
  %v10037 = vrcp.pop %v9997
  %v10038 = vrcp.pop %v10000
  %v10039 = vrcp.pop %v10003
  %v10040 = vrcp.pop %v10006
  %v10041 = vrcp.pop %v10009
  %v10042 = vrcp.pop %v10012
  %v10043 = vrcp.pop %v10015
  %v10044 = vrcp.pop %v10018
  %v10045 = vrcp.pop %v10021
  %v10046 = vrcp.pop %v10024
  %v10047 = vrcp.pop %v10027
  %v10048 = vrcp.pop %v10030
  %v10049 = vrcp.pop %v10033
  %v10050 = vmul.f32 %v9955, %v10034
  %v10051 = vmul.f32 %v9957, %v10035
  %v10052 = vmul.f32 %v9959, %v10036
  %v10053 = vmul.f32 %v9961, %v10037
  %v10054 = vmul.f32 %v9963, %v10038
  %v10055 = vmul.f32 %v9965, %v10039
  %v10056 = vmul.f32 %v9967, %v10040
  %v10057 = vmul.f32 %v9969, %v10041
  %v10058 = vmul.f32 %v9971, %v10042
  %v10059 = vmul.f32 %v9973, %v10043
  %v10060 = vmul.f32 %v9975, %v10044
  %v10061 = vmul.f32 %v9977, %v10045
  %v10062 = vmul.f32 %v9979, %v10046
  %v10063 = vmul.f32 %v9981, %v10047
  %v10064 = vmul.f32 %v9983, %v10048
  %v10065 = vmul.f32 %v9985, %v10049
  %10066 = vrot.lane.b32.xlu0 %v8562, 40
  %v10067 = vpop.permute.xlu0 %10066
  %v10070 = vsel %vm306, %v10050, 0
  %10072 = vmatprep.subr.mxu0 0.0
  %10073 = vmatpush1.msra.mxu0 %v10067
  %10074 = vmatprep.subr.mxu0 0.0
  %10075 = vmatpush1.msra.mxu0 0.0
  %10076 = vmatprep.subr.mxu0 0.0
  %10077 = vmatpush1.msra.mxu0 0.0
  %10078 = vmatprep.subr.mxu0 0.0
  %10079 = vmatpush1.msra.mxu0 0.0
  %10080 = vmatprep.subr.mxu0 0.0
  %10081 = vmatpush1.msra.mxu0 0.0
  %10082 = vmatprep.subr.mxu0 0.0
  %10083 = vmatpush1.msra.mxu0 0.0
  %10084 = vmatprep.subr.mxu0 0.0
  %10085 = vmatpush1.msra.mxu0 0.0
  %10086 = vmatprep.subr.mxu0 0.0
  %10087 = vmatpush1.msra.mxu0 0.0
  %10088 = vmatprep.subr.mxu0 0.0
  %10089 = vmatpush1.msra.mxu0 0.0
  %10090 = vmatprep.subr.mxu0 0.0
  %10091 = vmatpush1.msra.mxu0 0.0
  %10092 = vmatprep.subr.mxu0 0.0
  %10093 = vmatpush1.msra.mxu0 0.0
  %10094 = vmatprep.subr.mxu0 0.0
  %10095 = vmatpush1.msra.mxu0 0.0
  %10096 = vmatprep.subr.mxu0 0.0
  %10097 = vmatpush1.msra.mxu0 0.0
  %10098 = vmatprep.subr.mxu0 0.0
  %10099 = vmatpush1.msra.mxu0 0.0
  %10100 = vmatprep.subr.mxu0 0.0
  %10101 = vmatpush1.msra.mxu0 0.0
  %10102 = vmatprep.subr.mxu0 0.0
  %10103 = vmatpush1.msra.mxu0 0.0
  %10104 = vmatprep.subr.mxu0 0.0
  %10105 = vmatpush1.msra.mxu0 0.0
  %10106 = vmatprep.subr.mxu0 0.0
  %10107 = vmatpush1.msra.mxu0 0.0
  %10108 = vmatprep.subr.mxu0 0.0
  %10109 = vmatpush1.msra.mxu0 0.0
  %10110 = vmatprep.subr.mxu0 0.0
  %10111 = vmatpush1.msra.mxu0 0.0
  %10112 = vmatprep.subr.mxu0 0.0
  %10113 = vmatpush1.msra.mxu0 0.0
  %10114 = vmatprep.subr.mxu0 0.0
  %10115 = vmatpush1.msra.mxu0 0.0
  %10116 = vmatprep.subr.mxu0 0.0
  %10117 = vmatpush1.msra.mxu0 0.0
  %10118 = vmatprep.subr.mxu0 0.0
  %10119 = vmatpush1.msra.mxu0 0.0
  %10120 = vmatprep.subr.mxu0 0.0
  %10121 = vmatpush1.msra.mxu0 0.0
  %10122 = vmatprep.subr.mxu0 0.0
  %10123 = vmatpush1.msra.mxu0 0.0
  %10124 = vmatprep.subr.mxu0 0.0
  %10125 = vmatpush1.msra.mxu0 0.0
  %10126 = vmatprep.subr.mxu0 0.0
  %10127 = vmatpush1.msra.mxu0 0.0
  %10128 = vmatprep.subr.mxu0 0.0
  %10129 = vmatpush1.msra.mxu0 0.0
  %10130 = vmatprep.subr.mxu0 0.0
  %10131 = vmatpush1.msra.mxu0 0.0
  %10132 = vmatprep.subr.mxu0 0.0
  %10133 = vmatpush1.msra.mxu0 0.0
  %10134 = vmatprep.subr.mxu0 0.0
  %10135 = vmatpush1.msra.mxu0 0.0
  %10136 = vmatprep.mubr.f32.mxu0 0.0
  %10137 = vmatmul.mubr.f32.gmra.mrb[0].mxu0 %v10070
  %v10138 = vpop.f32.mrb[0].mxu0
  %v10139 = vadd.f32 0.0, %v10138
  %v10140 = vpop.f32.mrb[0].mxu0
  %10141 = vdwg.mxu0
  %10142 = vrot.lane.b32.xlu0 %v8563, 40
  %v10143 = vpop.permute.xlu0 %10142
  %v10146 = vsel %vm306, %v10051, 0
  %10148 = vmatprep.subr.mxu0 0.0
  %10149 = vmatpush1.msra.mxu0 %v10143
  %10150 = vmatprep.subr.mxu0 0.0
  %10151 = vmatpush1.msra.mxu0 0.0
  %10152 = vmatprep.subr.mxu0 0.0
  %10153 = vmatpush1.msra.mxu0 0.0
  %10154 = vmatprep.subr.mxu0 0.0
  %10155 = vmatpush1.msra.mxu0 0.0
  %10156 = vmatprep.subr.mxu0 0.0
  %10157 = vmatpush1.msra.mxu0 0.0
  %10158 = vmatprep.subr.mxu0 0.0
  %10159 = vmatpush1.msra.mxu0 0.0
  %10160 = vmatprep.subr.mxu0 0.0
  %10161 = vmatpush1.msra.mxu0 0.0
  %10162 = vmatprep.subr.mxu0 0.0
  %10163 = vmatpush1.msra.mxu0 0.0
  %10164 = vmatprep.subr.mxu0 0.0
  %10165 = vmatpush1.msra.mxu0 0.0
  %10166 = vmatprep.subr.mxu0 0.0
  %10167 = vmatpush1.msra.mxu0 0.0
  %10168 = vmatprep.subr.mxu0 0.0
  %10169 = vmatpush1.msra.mxu0 0.0
  %10170 = vmatprep.subr.mxu0 0.0
  %10171 = vmatpush1.msra.mxu0 0.0
  %10172 = vmatprep.subr.mxu0 0.0
  %10173 = vmatpush1.msra.mxu0 0.0
  %10174 = vmatprep.subr.mxu0 0.0
  %10175 = vmatpush1.msra.mxu0 0.0
  %10176 = vmatprep.subr.mxu0 0.0
  %10177 = vmatpush1.msra.mxu0 0.0
  %10178 = vmatprep.subr.mxu0 0.0
  %10179 = vmatpush1.msra.mxu0 0.0
  %10180 = vmatprep.subr.mxu0 0.0
  %10181 = vmatpush1.msra.mxu0 0.0
  %10182 = vmatprep.subr.mxu0 0.0
  %10183 = vmatpush1.msra.mxu0 0.0
  %10184 = vmatprep.subr.mxu0 0.0
  %10185 = vmatpush1.msra.mxu0 0.0
  %10186 = vmatprep.subr.mxu0 0.0
  %10187 = vmatpush1.msra.mxu0 0.0
  %10188 = vmatprep.subr.mxu0 0.0
  %10189 = vmatpush1.msra.mxu0 0.0
  %10190 = vmatprep.subr.mxu0 0.0
  %10191 = vmatpush1.msra.mxu0 0.0
  %10192 = vmatprep.subr.mxu0 0.0
  %10193 = vmatpush1.msra.mxu0 0.0
  %10194 = vmatprep.subr.mxu0 0.0
  %10195 = vmatpush1.msra.mxu0 0.0
  %10196 = vmatprep.subr.mxu0 0.0
  %10197 = vmatpush1.msra.mxu0 0.0
  %10198 = vmatprep.subr.mxu0 0.0
  %10199 = vmatpush1.msra.mxu0 0.0
  %10200 = vmatprep.subr.mxu0 0.0
  %10201 = vmatpush1.msra.mxu0 0.0
  %10202 = vmatprep.subr.mxu0 0.0
  %10203 = vmatpush1.msra.mxu0 0.0
  %10204 = vmatprep.subr.mxu0 0.0
  %10205 = vmatpush1.msra.mxu0 0.0
  %10206 = vmatprep.subr.mxu0 0.0
  %10207 = vmatpush1.msra.mxu0 0.0
  %10208 = vmatprep.subr.mxu0 0.0
  %10209 = vmatpush1.msra.mxu0 0.0
  %10210 = vmatprep.subr.mxu0 0.0
  %10211 = vmatpush1.msra.mxu0 0.0
  %10212 = vmatprep.mubr.f32.mxu0 0.0
  %10213 = vmatmul.mubr.f32.gmra.mrb[0].mxu0 %v10146
  %v10214 = vpop.f32.mrb[0].mxu0
  %v10215 = vadd.f32 0.0, %v10214
  %v10216 = vpop.f32.mrb[0].mxu0
  %10217 = vdwg.mxu0
  %10218 = vrot.lane.b32.xlu0 %v8564, 40
  %v10219 = vpop.permute.xlu0 %10218
  %v10222 = vsel %vm306, %v10052, 0
  %10224 = vmatprep.subr.mxu0 0.0
  %10225 = vmatpush1.msra.mxu0 %v10219
  %10226 = vmatprep.subr.mxu0 0.0
  %10227 = vmatpush1.msra.mxu0 0.0
  %10228 = vmatprep.subr.mxu0 0.0
  %10229 = vmatpush1.msra.mxu0 0.0
  %10230 = vmatprep.subr.mxu0 0.0
  %10231 = vmatpush1.msra.mxu0 0.0
  %10232 = vmatprep.subr.mxu0 0.0
  %10233 = vmatpush1.msra.mxu0 0.0
  %10234 = vmatprep.subr.mxu0 0.0
  %10235 = vmatpush1.msra.mxu0 0.0
  %10236 = vmatprep.subr.mxu0 0.0
  %10237 = vmatpush1.msra.mxu0 0.0
  %10238 = vmatprep.subr.mxu0 0.0
  %10239 = vmatpush1.msra.mxu0 0.0
  %10240 = vmatprep.subr.mxu0 0.0
  %10241 = vmatpush1.msra.mxu0 0.0
  %10242 = vmatprep.subr.mxu0 0.0
  %10243 = vmatpush1.msra.mxu0 0.0
  %10244 = vmatprep.subr.mxu0 0.0
  %10245 = vmatpush1.msra.mxu0 0.0
  %10246 = vmatprep.subr.mxu0 0.0
  %10247 = vmatpush1.msra.mxu0 0.0
  %10248 = vmatprep.subr.mxu0 0.0
  %10249 = vmatpush1.msra.mxu0 0.0
  %10250 = vmatprep.subr.mxu0 0.0
  %10251 = vmatpush1.msra.mxu0 0.0
  %10252 = vmatprep.subr.mxu0 0.0
  %10253 = vmatpush1.msra.mxu0 0.0
  %10254 = vmatprep.subr.mxu0 0.0
  %10255 = vmatpush1.msra.mxu0 0.0
  %10256 = vmatprep.subr.mxu0 0.0
  %10257 = vmatpush1.msra.mxu0 0.0
  %10258 = vmatprep.subr.mxu0 0.0
  %10259 = vmatpush1.msra.mxu0 0.0
  %10260 = vmatprep.subr.mxu0 0.0
  %10261 = vmatpush1.msra.mxu0 0.0
  %10262 = vmatprep.subr.mxu0 0.0
  %10263 = vmatpush1.msra.mxu0 0.0
  %10264 = vmatprep.subr.mxu0 0.0
  %10265 = vmatpush1.msra.mxu0 0.0
  %10266 = vmatprep.subr.mxu0 0.0
  %10267 = vmatpush1.msra.mxu0 0.0
  %10268 = vmatprep.subr.mxu0 0.0
  %10269 = vmatpush1.msra.mxu0 0.0
  %10270 = vmatprep.subr.mxu0 0.0
  %10271 = vmatpush1.msra.mxu0 0.0
  %10272 = vmatprep.subr.mxu0 0.0
  %10273 = vmatpush1.msra.mxu0 0.0
  %10274 = vmatprep.subr.mxu0 0.0
  %10275 = vmatpush1.msra.mxu0 0.0
  %10276 = vmatprep.subr.mxu0 0.0
  %10277 = vmatpush1.msra.mxu0 0.0
  %10278 = vmatprep.subr.mxu0 0.0
  %10279 = vmatpush1.msra.mxu0 0.0
  %10280 = vmatprep.subr.mxu0 0.0
  %10281 = vmatpush1.msra.mxu0 0.0
  %10282 = vmatprep.subr.mxu0 0.0
  %10283 = vmatpush1.msra.mxu0 0.0
  %10284 = vmatprep.subr.mxu0 0.0
  %10285 = vmatpush1.msra.mxu0 0.0
  %10286 = vmatprep.subr.mxu0 0.0
  %10287 = vmatpush1.msra.mxu0 0.0
  %10288 = vmatprep.mubr.f32.mxu0 0.0
  %10289 = vmatmul.mubr.f32.gmra.mrb[0].mxu0 %v10222
  %v10290 = vpop.f32.mrb[0].mxu0
  %v10291 = vadd.f32 0.0, %v10290
  %v10292 = vpop.f32.mrb[0].mxu0
  %10293 = vdwg.mxu0
  %10294 = vrot.lane.b32.xlu0 %v8565, 40
  %v10295 = vpop.permute.xlu0 %10294
  %v10298 = vsel %vm306, %v10053, 0
  %10300 = vmatprep.subr.mxu0 0.0
  %10301 = vmatpush1.msra.mxu0 %v10295
  %10302 = vmatprep.subr.mxu0 0.0
  %10303 = vmatpush1.msra.mxu0 0.0
  %10304 = vmatprep.subr.mxu0 0.0
  %10305 = vmatpush1.msra.mxu0 0.0
  %10306 = vmatprep.subr.mxu0 0.0
  %10307 = vmatpush1.msra.mxu0 0.0
  %10308 = vmatprep.subr.mxu0 0.0
  %10309 = vmatpush1.msra.mxu0 0.0
  %10310 = vmatprep.subr.mxu0 0.0
  %10311 = vmatpush1.msra.mxu0 0.0
  %10312 = vmatprep.subr.mxu0 0.0
  %10313 = vmatpush1.msra.mxu0 0.0
  %10314 = vmatprep.subr.mxu0 0.0
  %10315 = vmatpush1.msra.mxu0 0.0
  %10316 = vmatprep.subr.mxu0 0.0
  %10317 = vmatpush1.msra.mxu0 0.0
  %10318 = vmatprep.subr.mxu0 0.0
  %10319 = vmatpush1.msra.mxu0 0.0
  %10320 = vmatprep.subr.mxu0 0.0
  %10321 = vmatpush1.msra.mxu0 0.0
  %10322 = vmatprep.subr.mxu0 0.0
  %10323 = vmatpush1.msra.mxu0 0.0
  %10324 = vmatprep.subr.mxu0 0.0
  %10325 = vmatpush1.msra.mxu0 0.0
  %10326 = vmatprep.subr.mxu0 0.0
  %10327 = vmatpush1.msra.mxu0 0.0
  %10328 = vmatprep.subr.mxu0 0.0
  %10329 = vmatpush1.msra.mxu0 0.0
  %10330 = vmatprep.subr.mxu0 0.0
  %10331 = vmatpush1.msra.mxu0 0.0
  %10332 = vmatprep.subr.mxu0 0.0
  %10333 = vmatpush1.msra.mxu0 0.0
  %10334 = vmatprep.subr.mxu0 0.0
  %10335 = vmatpush1.msra.mxu0 0.0
  %10336 = vmatprep.subr.mxu0 0.0
  %10337 = vmatpush1.msra.mxu0 0.0
  %10338 = vmatprep.subr.mxu0 0.0
  %10339 = vmatpush1.msra.mxu0 0.0
  %10340 = vmatprep.subr.mxu0 0.0
  %10341 = vmatpush1.msra.mxu0 0.0
  %10342 = vmatprep.subr.mxu0 0.0
  %10343 = vmatpush1.msra.mxu0 0.0
  %10344 = vmatprep.subr.mxu0 0.0
  %10345 = vmatpush1.msra.mxu0 0.0
  %10346 = vmatprep.subr.mxu0 0.0
  %10347 = vmatpush1.msra.mxu0 0.0
  %10348 = vmatprep.subr.mxu0 0.0
  %10349 = vmatpush1.msra.mxu0 0.0
  %10350 = vmatprep.subr.mxu0 0.0
  %10351 = vmatpush1.msra.mxu0 0.0
  %10352 = vmatprep.subr.mxu0 0.0
  %10353 = vmatpush1.msra.mxu0 0.0
  %10354 = vmatprep.subr.mxu0 0.0
  %10355 = vmatpush1.msra.mxu0 0.0
  %10356 = vmatprep.subr.mxu0 0.0
  %10357 = vmatpush1.msra.mxu0 0.0
  %10358 = vmatprep.subr.mxu0 0.0
  %10359 = vmatpush1.msra.mxu0 0.0
  %10360 = vmatprep.subr.mxu0 0.0
  %10361 = vmatpush1.msra.mxu0 0.0
  %10362 = vmatprep.subr.mxu0 0.0
  %10363 = vmatpush1.msra.mxu0 0.0
  %10364 = vmatprep.mubr.f32.mxu0 0.0
  %10365 = vmatmul.mubr.f32.gmra.mrb[0].mxu0 %v10298
  %v10366 = vpop.f32.mrb[0].mxu0
  %v10367 = vadd.f32 0.0, %v10366
  %v10368 = vpop.f32.mrb[0].mxu0
  %10369 = vdwg.mxu0
  %10370 = vrot.lane.b32.xlu0 %v8566, 40
  %v10371 = vpop.permute.xlu0 %10370
  %v10374 = vsel %vm306, %v10054, 0
  %10376 = vmatprep.subr.mxu0 0.0
  %10377 = vmatpush1.msra.mxu0 %v10371
  %10378 = vmatprep.subr.mxu0 0.0
  %10379 = vmatpush1.msra.mxu0 0.0
  %10380 = vmatprep.subr.mxu0 0.0
  %10381 = vmatpush1.msra.mxu0 0.0
  %10382 = vmatprep.subr.mxu0 0.0
  %10383 = vmatpush1.msra.mxu0 0.0
  %10384 = vmatprep.subr.mxu0 0.0
  %10385 = vmatpush1.msra.mxu0 0.0
  %10386 = vmatprep.subr.mxu0 0.0
  %10387 = vmatpush1.msra.mxu0 0.0
  %10388 = vmatprep.subr.mxu0 0.0
  %10389 = vmatpush1.msra.mxu0 0.0
  %10390 = vmatprep.subr.mxu0 0.0
  %10391 = vmatpush1.msra.mxu0 0.0
  %10392 = vmatprep.subr.mxu0 0.0
  %10393 = vmatpush1.msra.mxu0 0.0
  %10394 = vmatprep.subr.mxu0 0.0
  %10395 = vmatpush1.msra.mxu0 0.0
  %10396 = vmatprep.subr.mxu0 0.0
  %10397 = vmatpush1.msra.mxu0 0.0
  %10398 = vmatprep.subr.mxu0 0.0
  %10399 = vmatpush1.msra.mxu0 0.0
  %10400 = vmatprep.subr.mxu0 0.0
  %10401 = vmatpush1.msra.mxu0 0.0
  %10402 = vmatprep.subr.mxu0 0.0
  %10403 = vmatpush1.msra.mxu0 0.0
  %10404 = vmatprep.subr.mxu0 0.0
  %10405 = vmatpush1.msra.mxu0 0.0
  %10406 = vmatprep.subr.mxu0 0.0
  %10407 = vmatpush1.msra.mxu0 0.0
  %10408 = vmatprep.subr.mxu0 0.0
  %10409 = vmatpush1.msra.mxu0 0.0
  %10410 = vmatprep.subr.mxu0 0.0
  %10411 = vmatpush1.msra.mxu0 0.0
  %10412 = vmatprep.subr.mxu0 0.0
  %10413 = vmatpush1.msra.mxu0 0.0
  %10414 = vmatprep.subr.mxu0 0.0
  %10415 = vmatpush1.msra.mxu0 0.0
  %10416 = vmatprep.subr.mxu0 0.0
  %10417 = vmatpush1.msra.mxu0 0.0
  %10418 = vmatprep.subr.mxu0 0.0
  %10419 = vmatpush1.msra.mxu0 0.0
  %10420 = vmatprep.subr.mxu0 0.0
  %10421 = vmatpush1.msra.mxu0 0.0
  %10422 = vmatprep.subr.mxu0 0.0
  %10423 = vmatpush1.msra.mxu0 0.0
  %10424 = vmatprep.subr.mxu0 0.0
  %10425 = vmatpush1.msra.mxu0 0.0
  %10426 = vmatprep.subr.mxu0 0.0
  %10427 = vmatpush1.msra.mxu0 0.0
  %10428 = vmatprep.subr.mxu0 0.0
  %10429 = vmatpush1.msra.mxu0 0.0
  %10430 = vmatprep.subr.mxu0 0.0
  %10431 = vmatpush1.msra.mxu0 0.0
  %10432 = vmatprep.subr.mxu0 0.0
  %10433 = vmatpush1.msra.mxu0 0.0
  %10434 = vmatprep.subr.mxu0 0.0
  %10435 = vmatpush1.msra.mxu0 0.0
  %10436 = vmatprep.subr.mxu0 0.0
  %10437 = vmatpush1.msra.mxu0 0.0
  %10438 = vmatprep.subr.mxu0 0.0
  %10439 = vmatpush1.msra.mxu0 0.0
  %10440 = vmatprep.mubr.f32.mxu0 0.0
  %10441 = vmatmul.mubr.f32.gmra.mrb[0].mxu0 %v10374
  %v10442 = vpop.f32.mrb[0].mxu0
  %v10443 = vadd.f32 0.0, %v10442
  %v10444 = vpop.f32.mrb[0].mxu0
  %10445 = vdwg.mxu0
  %10446 = vrot.lane.b32.xlu0 %v8567, 40
  %v10447 = vpop.permute.xlu0 %10446
  %v10450 = vsel %vm306, %v10055, 0
  %10452 = vmatprep.subr.mxu0 0.0
  %10453 = vmatpush1.msra.mxu0 %v10447
  %10454 = vmatprep.subr.mxu0 0.0
  %10455 = vmatpush1.msra.mxu0 0.0
  %10456 = vmatprep.subr.mxu0 0.0
  %10457 = vmatpush1.msra.mxu0 0.0
  %10458 = vmatprep.subr.mxu0 0.0
  %10459 = vmatpush1.msra.mxu0 0.0
  %10460 = vmatprep.subr.mxu0 0.0
  %10461 = vmatpush1.msra.mxu0 0.0
  %10462 = vmatprep.subr.mxu0 0.0
  %10463 = vmatpush1.msra.mxu0 0.0
  %10464 = vmatprep.subr.mxu0 0.0
  %10465 = vmatpush1.msra.mxu0 0.0
  %10466 = vmatprep.subr.mxu0 0.0
  %10467 = vmatpush1.msra.mxu0 0.0
  %10468 = vmatprep.subr.mxu0 0.0
  %10469 = vmatpush1.msra.mxu0 0.0
  %10470 = vmatprep.subr.mxu0 0.0
  %10471 = vmatpush1.msra.mxu0 0.0
  %10472 = vmatprep.subr.mxu0 0.0
  %10473 = vmatpush1.msra.mxu0 0.0
  %10474 = vmatprep.subr.mxu0 0.0
  %10475 = vmatpush1.msra.mxu0 0.0
  %10476 = vmatprep.subr.mxu0 0.0
  %10477 = vmatpush1.msra.mxu0 0.0
  %10478 = vmatprep.subr.mxu0 0.0
  %10479 = vmatpush1.msra.mxu0 0.0
  %10480 = vmatprep.subr.mxu0 0.0
  %10481 = vmatpush1.msra.mxu0 0.0
  %10482 = vmatprep.subr.mxu0 0.0
  %10483 = vmatpush1.msra.mxu0 0.0
  %10484 = vmatprep.subr.mxu0 0.0
  %10485 = vmatpush1.msra.mxu0 0.0
  %10486 = vmatprep.subr.mxu0 0.0
  %10487 = vmatpush1.msra.mxu0 0.0
  %10488 = vmatprep.subr.mxu0 0.0
  %10489 = vmatpush1.msra.mxu0 0.0
  %10490 = vmatprep.subr.mxu0 0.0
  %10491 = vmatpush1.msra.mxu0 0.0
  %10492 = vmatprep.subr.mxu0 0.0
  %10493 = vmatpush1.msra.mxu0 0.0
  %10494 = vmatprep.subr.mxu0 0.0
  %10495 = vmatpush1.msra.mxu0 0.0
  %10496 = vmatprep.subr.mxu0 0.0
  %10497 = vmatpush1.msra.mxu0 0.0
  %10498 = vmatprep.subr.mxu0 0.0
  %10499 = vmatpush1.msra.mxu0 0.0
  %10500 = vmatprep.subr.mxu0 0.0
  %10501 = vmatpush1.msra.mxu0 0.0
  %10502 = vmatprep.subr.mxu0 0.0
  %10503 = vmatpush1.msra.mxu0 0.0
  %10504 = vmatprep.subr.mxu0 0.0
  %10505 = vmatpush1.msra.mxu0 0.0
  %10506 = vmatprep.subr.mxu0 0.0
  %10507 = vmatpush1.msra.mxu0 0.0
  %10508 = vmatprep.subr.mxu0 0.0
  %10509 = vmatpush1.msra.mxu0 0.0
  %10510 = vmatprep.subr.mxu0 0.0
  %10511 = vmatpush1.msra.mxu0 0.0
  %10512 = vmatprep.subr.mxu0 0.0
  %10513 = vmatpush1.msra.mxu0 0.0
  %10514 = vmatprep.subr.mxu0 0.0
  %10515 = vmatpush1.msra.mxu0 0.0
  %10516 = vmatprep.mubr.f32.mxu0 0.0
  %10517 = vmatmul.mubr.f32.gmra.mrb[0].mxu0 %v10450
  %v10518 = vpop.f32.mrb[0].mxu0
  %v10519 = vadd.f32 0.0, %v10518
  %v10520 = vpop.f32.mrb[0].mxu0
  %10521 = vdwg.mxu0
  %10522 = vrot.lane.b32.xlu0 %v8568, 40
  %v10523 = vpop.permute.xlu0 %10522
  %v10526 = vsel %vm306, %v10056, 0
  %10528 = vmatprep.subr.mxu0 0.0
  %10529 = vmatpush1.msra.mxu0 %v10523
  %10530 = vmatprep.subr.mxu0 0.0
  %10531 = vmatpush1.msra.mxu0 0.0
  %10532 = vmatprep.subr.mxu0 0.0
  %10533 = vmatpush1.msra.mxu0 0.0
  %10534 = vmatprep.subr.mxu0 0.0
  %10535 = vmatpush1.msra.mxu0 0.0
  %10536 = vmatprep.subr.mxu0 0.0
  %10537 = vmatpush1.msra.mxu0 0.0
  %10538 = vmatprep.subr.mxu0 0.0
  %10539 = vmatpush1.msra.mxu0 0.0
  %10540 = vmatprep.subr.mxu0 0.0
  %10541 = vmatpush1.msra.mxu0 0.0
  %10542 = vmatprep.subr.mxu0 0.0
  %10543 = vmatpush1.msra.mxu0 0.0
  %10544 = vmatprep.subr.mxu0 0.0
  %10545 = vmatpush1.msra.mxu0 0.0
  %10546 = vmatprep.subr.mxu0 0.0
  %10547 = vmatpush1.msra.mxu0 0.0
  %10548 = vmatprep.subr.mxu0 0.0
  %10549 = vmatpush1.msra.mxu0 0.0
  %10550 = vmatprep.subr.mxu0 0.0
  %10551 = vmatpush1.msra.mxu0 0.0
  %10552 = vmatprep.subr.mxu0 0.0
  %10553 = vmatpush1.msra.mxu0 0.0
  %10554 = vmatprep.subr.mxu0 0.0
  %10555 = vmatpush1.msra.mxu0 0.0
  %10556 = vmatprep.subr.mxu0 0.0
  %10557 = vmatpush1.msra.mxu0 0.0
  %10558 = vmatprep.subr.mxu0 0.0
  %10559 = vmatpush1.msra.mxu0 0.0
  %10560 = vmatprep.subr.mxu0 0.0
  %10561 = vmatpush1.msra.mxu0 0.0
  %10562 = vmatprep.subr.mxu0 0.0
  %10563 = vmatpush1.msra.mxu0 0.0
  %10564 = vmatprep.subr.mxu0 0.0
  %10565 = vmatpush1.msra.mxu0 0.0
  %10566 = vmatprep.subr.mxu0 0.0
  %10567 = vmatpush1.msra.mxu0 0.0
  %10568 = vmatprep.subr.mxu0 0.0
  %10569 = vmatpush1.msra.mxu0 0.0
  %10570 = vmatprep.subr.mxu0 0.0
  %10571 = vmatpush1.msra.mxu0 0.0
  %10572 = vmatprep.subr.mxu0 0.0
  %10573 = vmatpush1.msra.mxu0 0.0
  %10574 = vmatprep.subr.mxu0 0.0
  %10575 = vmatpush1.msra.mxu0 0.0
  %10576 = vmatprep.subr.mxu0 0.0
  %10577 = vmatpush1.msra.mxu0 0.0
  %10578 = vmatprep.subr.mxu0 0.0
  %10579 = vmatpush1.msra.mxu0 0.0
  %10580 = vmatprep.subr.mxu0 0.0
  %10581 = vmatpush1.msra.mxu0 0.0
  %10582 = vmatprep.subr.mxu0 0.0
  %10583 = vmatpush1.msra.mxu0 0.0
  %10584 = vmatprep.subr.mxu0 0.0
  %10585 = vmatpush1.msra.mxu0 0.0
  %10586 = vmatprep.subr.mxu0 0.0
  %10587 = vmatpush1.msra.mxu0 0.0
  %10588 = vmatprep.subr.mxu0 0.0
  %10589 = vmatpush1.msra.mxu0 0.0
  %10590 = vmatprep.subr.mxu0 0.0
  %10591 = vmatpush1.msra.mxu0 0.0
  %10592 = vmatprep.mubr.f32.mxu0 0.0
  %10593 = vmatmul.mubr.f32.gmra.mrb[0].mxu0 %v10526
  %v10594 = vpop.f32.mrb[0].mxu0
  %v10595 = vadd.f32 0.0, %v10594
  %v10596 = vpop.f32.mrb[0].mxu0
  %10597 = vdwg.mxu0
  %10598 = vrot.lane.b32.xlu0 %v8569, 40
  %v10599 = vpop.permute.xlu0 %10598
  %v10602 = vsel %vm306, %v10057, 0
  %10604 = vmatprep.subr.mxu0 0.0
  %10605 = vmatpush1.msra.mxu0 %v10599
  %10606 = vmatprep.subr.mxu0 0.0
  %10607 = vmatpush1.msra.mxu0 0.0
  %10608 = vmatprep.subr.mxu0 0.0
  %10609 = vmatpush1.msra.mxu0 0.0
  %10610 = vmatprep.subr.mxu0 0.0
  %10611 = vmatpush1.msra.mxu0 0.0
  %10612 = vmatprep.subr.mxu0 0.0
  %10613 = vmatpush1.msra.mxu0 0.0
  %10614 = vmatprep.subr.mxu0 0.0
  %10615 = vmatpush1.msra.mxu0 0.0
  %10616 = vmatprep.subr.mxu0 0.0
  %10617 = vmatpush1.msra.mxu0 0.0
  %10618 = vmatprep.subr.mxu0 0.0
  %10619 = vmatpush1.msra.mxu0 0.0
  %10620 = vmatprep.subr.mxu0 0.0
  %10621 = vmatpush1.msra.mxu0 0.0
  %10622 = vmatprep.subr.mxu0 0.0
  %10623 = vmatpush1.msra.mxu0 0.0
  %10624 = vmatprep.subr.mxu0 0.0
  %10625 = vmatpush1.msra.mxu0 0.0
  %10626 = vmatprep.subr.mxu0 0.0
  %10627 = vmatpush1.msra.mxu0 0.0
  %10628 = vmatprep.subr.mxu0 0.0
  %10629 = vmatpush1.msra.mxu0 0.0
  %10630 = vmatprep.subr.mxu0 0.0
  %10631 = vmatpush1.msra.mxu0 0.0
  %10632 = vmatprep.subr.mxu0 0.0
  %10633 = vmatpush1.msra.mxu0 0.0
  %10634 = vmatprep.subr.mxu0 0.0
  %10635 = vmatpush1.msra.mxu0 0.0
  %10636 = vmatprep.subr.mxu0 0.0
  %10637 = vmatpush1.msra.mxu0 0.0
  %10638 = vmatprep.subr.mxu0 0.0
  %10639 = vmatpush1.msra.mxu0 0.0
  %10640 = vmatprep.subr.mxu0 0.0
  %10641 = vmatpush1.msra.mxu0 0.0
  %10642 = vmatprep.subr.mxu0 0.0
  %10643 = vmatpush1.msra.mxu0 0.0
  %10644 = vmatprep.subr.mxu0 0.0
  %10645 = vmatpush1.msra.mxu0 0.0
  %10646 = vmatprep.subr.mxu0 0.0
  %10647 = vmatpush1.msra.mxu0 0.0
  %10648 = vmatprep.subr.mxu0 0.0
  %10649 = vmatpush1.msra.mxu0 0.0
  %10650 = vmatprep.subr.mxu0 0.0
  %10651 = vmatpush1.msra.mxu0 0.0
  %10652 = vmatprep.subr.mxu0 0.0
  %10653 = vmatpush1.msra.mxu0 0.0
  %10654 = vmatprep.subr.mxu0 0.0
  %10655 = vmatpush1.msra.mxu0 0.0
  %10656 = vmatprep.subr.mxu0 0.0
  %10657 = vmatpush1.msra.mxu0 0.0
  %10658 = vmatprep.subr.mxu0 0.0
  %10659 = vmatpush1.msra.mxu0 0.0
  %10660 = vmatprep.subr.mxu0 0.0
  %10661 = vmatpush1.msra.mxu0 0.0
  %10662 = vmatprep.subr.mxu0 0.0
  %10663 = vmatpush1.msra.mxu0 0.0
  %10664 = vmatprep.subr.mxu0 0.0
  %10665 = vmatpush1.msra.mxu0 0.0
  %10666 = vmatprep.subr.mxu0 0.0
  %10667 = vmatpush1.msra.mxu0 0.0
  %10668 = vmatprep.mubr.f32.mxu0 0.0
  %10669 = vmatmul.mubr.f32.gmra.mrb[0].mxu0 %v10602
  %v10670 = vpop.f32.mrb[0].mxu0
  %v10671 = vadd.f32 0.0, %v10670
  %v10672 = vpop.f32.mrb[0].mxu0
  %10673 = vdwg.mxu0
  %10674 = vrot.lane.b32.xlu0 %v8570, 40
  %v10675 = vpop.permute.xlu0 %10674
  %v10678 = vsel %vm306, %v10058, 0
  %10680 = vmatprep.subr.mxu0 0.0
  %10681 = vmatpush1.msra.mxu0 %v10675
  %10682 = vmatprep.subr.mxu0 0.0
  %10683 = vmatpush1.msra.mxu0 0.0
  %10684 = vmatprep.subr.mxu0 0.0
  %10685 = vmatpush1.msra.mxu0 0.0
  %10686 = vmatprep.subr.mxu0 0.0
  %10687 = vmatpush1.msra.mxu0 0.0
  %10688 = vmatprep.subr.mxu0 0.0
  %10689 = vmatpush1.msra.mxu0 0.0
  %10690 = vmatprep.subr.mxu0 0.0
  %10691 = vmatpush1.msra.mxu0 0.0
  %10692 = vmatprep.subr.mxu0 0.0
  %10693 = vmatpush1.msra.mxu0 0.0
  %10694 = vmatprep.subr.mxu0 0.0
  %10695 = vmatpush1.msra.mxu0 0.0
  %10696 = vmatprep.subr.mxu0 0.0
  %10697 = vmatpush1.msra.mxu0 0.0
  %10698 = vmatprep.subr.mxu0 0.0
  %10699 = vmatpush1.msra.mxu0 0.0
  %10700 = vmatprep.subr.mxu0 0.0
  %10701 = vmatpush1.msra.mxu0 0.0
  %10702 = vmatprep.subr.mxu0 0.0
  %10703 = vmatpush1.msra.mxu0 0.0
  %10704 = vmatprep.subr.mxu0 0.0
  %10705 = vmatpush1.msra.mxu0 0.0
  %10706 = vmatprep.subr.mxu0 0.0
  %10707 = vmatpush1.msra.mxu0 0.0
  %10708 = vmatprep.subr.mxu0 0.0
  %10709 = vmatpush1.msra.mxu0 0.0
  %10710 = vmatprep.subr.mxu0 0.0
  %10711 = vmatpush1.msra.mxu0 0.0
  %10712 = vmatprep.subr.mxu0 0.0
  %10713 = vmatpush1.msra.mxu0 0.0
  %10714 = vmatprep.subr.mxu0 0.0
  %10715 = vmatpush1.msra.mxu0 0.0
  %10716 = vmatprep.subr.mxu0 0.0
  %10717 = vmatpush1.msra.mxu0 0.0
  %10718 = vmatprep.subr.mxu0 0.0
  %10719 = vmatpush1.msra.mxu0 0.0
  %10720 = vmatprep.subr.mxu0 0.0
  %10721 = vmatpush1.msra.mxu0 0.0
  %10722 = vmatprep.subr.mxu0 0.0
  %10723 = vmatpush1.msra.mxu0 0.0
  %10724 = vmatprep.subr.mxu0 0.0
  %10725 = vmatpush1.msra.mxu0 0.0
  %10726 = vmatprep.subr.mxu0 0.0
  %10727 = vmatpush1.msra.mxu0 0.0
  %10728 = vmatprep.subr.mxu0 0.0
  %10729 = vmatpush1.msra.mxu0 0.0
  %10730 = vmatprep.subr.mxu0 0.0
  %10731 = vmatpush1.msra.mxu0 0.0
  %10732 = vmatprep.subr.mxu0 0.0
  %10733 = vmatpush1.msra.mxu0 0.0
  %10734 = vmatprep.subr.mxu0 0.0
  %10735 = vmatpush1.msra.mxu0 0.0
  %10736 = vmatprep.subr.mxu0 0.0
  %10737 = vmatpush1.msra.mxu0 0.0
  %10738 = vmatprep.subr.mxu0 0.0
  %10739 = vmatpush1.msra.mxu0 0.0
  %10740 = vmatprep.subr.mxu0 0.0
  %10741 = vmatpush1.msra.mxu0 0.0
  %10742 = vmatprep.subr.mxu0 0.0
  %10743 = vmatpush1.msra.mxu0 0.0
  %10744 = vmatprep.mubr.f32.mxu0 0.0
  %10745 = vmatmul.mubr.f32.gmra.mrb[0].mxu0 %v10678
  %v10746 = vpop.f32.mrb[0].mxu0
  %v10747 = vadd.f32 0.0, %v10746
  %v10748 = vpop.f32.mrb[0].mxu0
  %10749 = vdwg.mxu0
  %10750 = vrot.lane.b32.xlu0 %v8571, 40
  %v10751 = vpop.permute.xlu0 %10750
  %v10754 = vsel %vm306, %v10059, 0
  %10756 = vmatprep.subr.mxu0 0.0
  %10757 = vmatpush1.msra.mxu0 %v10751
  %10758 = vmatprep.subr.mxu0 0.0
  %10759 = vmatpush1.msra.mxu0 0.0
  %10760 = vmatprep.subr.mxu0 0.0
  %10761 = vmatpush1.msra.mxu0 0.0
  %10762 = vmatprep.subr.mxu0 0.0
  %10763 = vmatpush1.msra.mxu0 0.0
  %10764 = vmatprep.subr.mxu0 0.0
  %10765 = vmatpush1.msra.mxu0 0.0
  %10766 = vmatprep.subr.mxu0 0.0
  %10767 = vmatpush1.msra.mxu0 0.0
  %10768 = vmatprep.subr.mxu0 0.0
  %10769 = vmatpush1.msra.mxu0 0.0
  %10770 = vmatprep.subr.mxu0 0.0
  %10771 = vmatpush1.msra.mxu0 0.0
  %10772 = vmatprep.subr.mxu0 0.0
  %10773 = vmatpush1.msra.mxu0 0.0
  %10774 = vmatprep.subr.mxu0 0.0
  %10775 = vmatpush1.msra.mxu0 0.0
  %10776 = vmatprep.subr.mxu0 0.0
  %10777 = vmatpush1.msra.mxu0 0.0
  %10778 = vmatprep.subr.mxu0 0.0
  %10779 = vmatpush1.msra.mxu0 0.0
  %10780 = vmatprep.subr.mxu0 0.0
  %10781 = vmatpush1.msra.mxu0 0.0
  %10782 = vmatprep.subr.mxu0 0.0
  %10783 = vmatpush1.msra.mxu0 0.0
  %10784 = vmatprep.subr.mxu0 0.0
  %10785 = vmatpush1.msra.mxu0 0.0
  %10786 = vmatprep.subr.mxu0 0.0
  %10787 = vmatpush1.msra.mxu0 0.0
  %10788 = vmatprep.subr.mxu0 0.0
  %10789 = vmatpush1.msra.mxu0 0.0
  %10790 = vmatprep.subr.mxu0 0.0
  %10791 = vmatpush1.msra.mxu0 0.0
  %10792 = vmatprep.subr.mxu0 0.0
  %10793 = vmatpush1.msra.mxu0 0.0
  %10794 = vmatprep.subr.mxu0 0.0
  %10795 = vmatpush1.msra.mxu0 0.0
  %10796 = vmatprep.subr.mxu0 0.0
  %10797 = vmatpush1.msra.mxu0 0.0
  %10798 = vmatprep.subr.mxu0 0.0
  %10799 = vmatpush1.msra.mxu0 0.0
  %10800 = vmatprep.subr.mxu0 0.0
  %10801 = vmatpush1.msra.mxu0 0.0
  %10802 = vmatprep.subr.mxu0 0.0
  %10803 = vmatpush1.msra.mxu0 0.0
  %10804 = vmatprep.subr.mxu0 0.0
  %10805 = vmatpush1.msra.mxu0 0.0
  %10806 = vmatprep.subr.mxu0 0.0
  %10807 = vmatpush1.msra.mxu0 0.0
  %10808 = vmatprep.subr.mxu0 0.0
  %10809 = vmatpush1.msra.mxu0 0.0
  %10810 = vmatprep.subr.mxu0 0.0
  %10811 = vmatpush1.msra.mxu0 0.0
  %10812 = vmatprep.subr.mxu0 0.0
  %10813 = vmatpush1.msra.mxu0 0.0
  %10814 = vmatprep.subr.mxu0 0.0
  %10815 = vmatpush1.msra.mxu0 0.0
  %10816 = vmatprep.subr.mxu0 0.0
  %10817 = vmatpush1.msra.mxu0 0.0
  %10818 = vmatprep.subr.mxu0 0.0
  %10819 = vmatpush1.msra.mxu0 0.0
  %10820 = vmatprep.mubr.f32.mxu0 0.0
  %10821 = vmatmul.mubr.f32.gmra.mrb[0].mxu0 %v10754
  %v10822 = vpop.f32.mrb[0].mxu0
  %v10823 = vadd.f32 0.0, %v10822
  %v10824 = vpop.f32.mrb[0].mxu0
  %10825 = vdwg.mxu0
  %10826 = vrot.lane.b32.xlu0 %v8572, 40
  %v10827 = vpop.permute.xlu0 %10826
  %v10830 = vsel %vm306, %v10060, 0
  %10832 = vmatprep.subr.mxu0 0.0
  %10833 = vmatpush1.msra.mxu0 %v10827
  %10834 = vmatprep.subr.mxu0 0.0
  %10835 = vmatpush1.msra.mxu0 0.0
  %10836 = vmatprep.subr.mxu0 0.0
  %10837 = vmatpush1.msra.mxu0 0.0
  %10838 = vmatprep.subr.mxu0 0.0
  %10839 = vmatpush1.msra.mxu0 0.0
  %10840 = vmatprep.subr.mxu0 0.0
  %10841 = vmatpush1.msra.mxu0 0.0
  %10842 = vmatprep.subr.mxu0 0.0
  %10843 = vmatpush1.msra.mxu0 0.0
  %10844 = vmatprep.subr.mxu0 0.0
  %10845 = vmatpush1.msra.mxu0 0.0
  %10846 = vmatprep.subr.mxu0 0.0
  %10847 = vmatpush1.msra.mxu0 0.0
  %10848 = vmatprep.subr.mxu0 0.0
  %10849 = vmatpush1.msra.mxu0 0.0
  %10850 = vmatprep.subr.mxu0 0.0
  %10851 = vmatpush1.msra.mxu0 0.0
  %10852 = vmatprep.subr.mxu0 0.0
  %10853 = vmatpush1.msra.mxu0 0.0
  %10854 = vmatprep.subr.mxu0 0.0
  %10855 = vmatpush1.msra.mxu0 0.0
  %10856 = vmatprep.subr.mxu0 0.0
  %10857 = vmatpush1.msra.mxu0 0.0
  %10858 = vmatprep.subr.mxu0 0.0
  %10859 = vmatpush1.msra.mxu0 0.0
  %10860 = vmatprep.subr.mxu0 0.0
  %10861 = vmatpush1.msra.mxu0 0.0
  %10862 = vmatprep.subr.mxu0 0.0
  %10863 = vmatpush1.msra.mxu0 0.0
  %10864 = vmatprep.subr.mxu0 0.0
  %10865 = vmatpush1.msra.mxu0 0.0
  %10866 = vmatprep.subr.mxu0 0.0
  %10867 = vmatpush1.msra.mxu0 0.0
  %10868 = vmatprep.subr.mxu0 0.0
  %10869 = vmatpush1.msra.mxu0 0.0
  %10870 = vmatprep.subr.mxu0 0.0
  %10871 = vmatpush1.msra.mxu0 0.0
  %10872 = vmatprep.subr.mxu0 0.0
  %10873 = vmatpush1.msra.mxu0 0.0
  %10874 = vmatprep.subr.mxu0 0.0
  %10875 = vmatpush1.msra.mxu0 0.0
  %10876 = vmatprep.subr.mxu0 0.0
  %10877 = vmatpush1.msra.mxu0 0.0
  %10878 = vmatprep.subr.mxu0 0.0
  %10879 = vmatpush1.msra.mxu0 0.0
  %10880 = vmatprep.subr.mxu0 0.0
  %10881 = vmatpush1.msra.mxu0 0.0
  %10882 = vmatprep.subr.mxu0 0.0
  %10883 = vmatpush1.msra.mxu0 0.0
  %10884 = vmatprep.subr.mxu0 0.0
  %10885 = vmatpush1.msra.mxu0 0.0
  %10886 = vmatprep.subr.mxu0 0.0
  %10887 = vmatpush1.msra.mxu0 0.0
  %10888 = vmatprep.subr.mxu0 0.0
  %10889 = vmatpush1.msra.mxu0 0.0
  %10890 = vmatprep.subr.mxu0 0.0
  %10891 = vmatpush1.msra.mxu0 0.0
  %10892 = vmatprep.subr.mxu0 0.0
  %10893 = vmatpush1.msra.mxu0 0.0
  %10894 = vmatprep.subr.mxu0 0.0
  %10895 = vmatpush1.msra.mxu0 0.0
  %10896 = vmatprep.mubr.f32.mxu0 0.0
  %10897 = vmatmul.mubr.f32.gmra.mrb[0].mxu0 %v10830
  %v10898 = vpop.f32.mrb[0].mxu0
  %v10899 = vadd.f32 0.0, %v10898
  %v10900 = vpop.f32.mrb[0].mxu0
  %10901 = vdwg.mxu0
  %10902 = vrot.lane.b32.xlu0 %v8573, 40
  %v10903 = vpop.permute.xlu0 %10902
  %v10906 = vsel %vm306, %v10061, 0
  %10908 = vmatprep.subr.mxu0 0.0
  %10909 = vmatpush1.msra.mxu0 %v10903
  %10910 = vmatprep.subr.mxu0 0.0
  %10911 = vmatpush1.msra.mxu0 0.0
  %10912 = vmatprep.subr.mxu0 0.0
  %10913 = vmatpush1.msra.mxu0 0.0
  %10914 = vmatprep.subr.mxu0 0.0
  %10915 = vmatpush1.msra.mxu0 0.0
  %10916 = vmatprep.subr.mxu0 0.0
  %10917 = vmatpush1.msra.mxu0 0.0
  %10918 = vmatprep.subr.mxu0 0.0
  %10919 = vmatpush1.msra.mxu0 0.0
  %10920 = vmatprep.subr.mxu0 0.0
  %10921 = vmatpush1.msra.mxu0 0.0
  %10922 = vmatprep.subr.mxu0 0.0
  %10923 = vmatpush1.msra.mxu0 0.0
  %10924 = vmatprep.subr.mxu0 0.0
  %10925 = vmatpush1.msra.mxu0 0.0
  %10926 = vmatprep.subr.mxu0 0.0
  %10927 = vmatpush1.msra.mxu0 0.0
  %10928 = vmatprep.subr.mxu0 0.0
  %10929 = vmatpush1.msra.mxu0 0.0
  %10930 = vmatprep.subr.mxu0 0.0
  %10931 = vmatpush1.msra.mxu0 0.0
  %10932 = vmatprep.subr.mxu0 0.0
  %10933 = vmatpush1.msra.mxu0 0.0
  %10934 = vmatprep.subr.mxu0 0.0
  %10935 = vmatpush1.msra.mxu0 0.0
  %10936 = vmatprep.subr.mxu0 0.0
  %10937 = vmatpush1.msra.mxu0 0.0
  %10938 = vmatprep.subr.mxu0 0.0
  %10939 = vmatpush1.msra.mxu0 0.0
  %10940 = vmatprep.subr.mxu0 0.0
  %10941 = vmatpush1.msra.mxu0 0.0
  %10942 = vmatprep.subr.mxu0 0.0
  %10943 = vmatpush1.msra.mxu0 0.0
  %10944 = vmatprep.subr.mxu0 0.0
  %10945 = vmatpush1.msra.mxu0 0.0
  %10946 = vmatprep.subr.mxu0 0.0
  %10947 = vmatpush1.msra.mxu0 0.0
  %10948 = vmatprep.subr.mxu0 0.0
  %10949 = vmatpush1.msra.mxu0 0.0
  %10950 = vmatprep.subr.mxu0 0.0
  %10951 = vmatpush1.msra.mxu0 0.0
  %10952 = vmatprep.subr.mxu0 0.0
  %10953 = vmatpush1.msra.mxu0 0.0
  %10954 = vmatprep.subr.mxu0 0.0
  %10955 = vmatpush1.msra.mxu0 0.0
  %10956 = vmatprep.subr.mxu0 0.0
  %10957 = vmatpush1.msra.mxu0 0.0
  %10958 = vmatprep.subr.mxu0 0.0
  %10959 = vmatpush1.msra.mxu0 0.0
  %10960 = vmatprep.subr.mxu0 0.0
  %10961 = vmatpush1.msra.mxu0 0.0
  %10962 = vmatprep.subr.mxu0 0.0
  %10963 = vmatpush1.msra.mxu0 0.0
  %10964 = vmatprep.subr.mxu0 0.0
  %10965 = vmatpush1.msra.mxu0 0.0
  %10966 = vmatprep.subr.mxu0 0.0
  %10967 = vmatpush1.msra.mxu0 0.0
  %10968 = vmatprep.subr.mxu0 0.0
  %10969 = vmatpush1.msra.mxu0 0.0
  %10970 = vmatprep.subr.mxu0 0.0
  %10971 = vmatpush1.msra.mxu0 0.0
  %10972 = vmatprep.mubr.f32.mxu0 0.0
  %10973 = vmatmul.mubr.f32.gmra.mrb[0].mxu0 %v10906
  %v10974 = vpop.f32.mrb[0].mxu0
  %v10975 = vadd.f32 0.0, %v10974
  %v10976 = vpop.f32.mrb[0].mxu0
  %10977 = vdwg.mxu0
  %10978 = vrot.lane.b32.xlu0 %v8574, 40
  %v10979 = vpop.permute.xlu0 %10978
  %v10982 = vsel %vm306, %v10062, 0
  %10984 = vmatprep.subr.mxu0 0.0
  %10985 = vmatpush1.msra.mxu0 %v10979
  %10986 = vmatprep.subr.mxu0 0.0
  %10987 = vmatpush1.msra.mxu0 0.0
  %10988 = vmatprep.subr.mxu0 0.0
  %10989 = vmatpush1.msra.mxu0 0.0
  %10990 = vmatprep.subr.mxu0 0.0
  %10991 = vmatpush1.msra.mxu0 0.0
  %10992 = vmatprep.subr.mxu0 0.0
  %10993 = vmatpush1.msra.mxu0 0.0
  %10994 = vmatprep.subr.mxu0 0.0
  %10995 = vmatpush1.msra.mxu0 0.0
  %10996 = vmatprep.subr.mxu0 0.0
  %10997 = vmatpush1.msra.mxu0 0.0
  %10998 = vmatprep.subr.mxu0 0.0
  %10999 = vmatpush1.msra.mxu0 0.0
  %11000 = vmatprep.subr.mxu0 0.0
  %11001 = vmatpush1.msra.mxu0 0.0
  %11002 = vmatprep.subr.mxu0 0.0
  %11003 = vmatpush1.msra.mxu0 0.0
  %11004 = vmatprep.subr.mxu0 0.0
  %11005 = vmatpush1.msra.mxu0 0.0
  %11006 = vmatprep.subr.mxu0 0.0
  %11007 = vmatpush1.msra.mxu0 0.0
  %11008 = vmatprep.subr.mxu0 0.0
  %11009 = vmatpush1.msra.mxu0 0.0
  %11010 = vmatprep.subr.mxu0 0.0
  %11011 = vmatpush1.msra.mxu0 0.0
  %11012 = vmatprep.subr.mxu0 0.0
  %11013 = vmatpush1.msra.mxu0 0.0
  %11014 = vmatprep.subr.mxu0 0.0
  %11015 = vmatpush1.msra.mxu0 0.0
  %11016 = vmatprep.subr.mxu0 0.0
  %11017 = vmatpush1.msra.mxu0 0.0
  %11018 = vmatprep.subr.mxu0 0.0
  %11019 = vmatpush1.msra.mxu0 0.0
  %11020 = vmatprep.subr.mxu0 0.0
  %11021 = vmatpush1.msra.mxu0 0.0
  %11022 = vmatprep.subr.mxu0 0.0
  %11023 = vmatpush1.msra.mxu0 0.0
  %11024 = vmatprep.subr.mxu0 0.0
  %11025 = vmatpush1.msra.mxu0 0.0
  %11026 = vmatprep.subr.mxu0 0.0
  %11027 = vmatpush1.msra.mxu0 0.0
  %11028 = vmatprep.subr.mxu0 0.0
  %11029 = vmatpush1.msra.mxu0 0.0
  %11030 = vmatprep.subr.mxu0 0.0
  %11031 = vmatpush1.msra.mxu0 0.0
  %11032 = vmatprep.subr.mxu0 0.0
  %11033 = vmatpush1.msra.mxu0 0.0
  %11034 = vmatprep.subr.mxu0 0.0
  %11035 = vmatpush1.msra.mxu0 0.0
  %11036 = vmatprep.subr.mxu0 0.0
  %11037 = vmatpush1.msra.mxu0 0.0
  %11038 = vmatprep.subr.mxu0 0.0
  %11039 = vmatpush1.msra.mxu0 0.0
  %11040 = vmatprep.subr.mxu0 0.0
  %11041 = vmatpush1.msra.mxu0 0.0
  %11042 = vmatprep.subr.mxu0 0.0
  %11043 = vmatpush1.msra.mxu0 0.0
  %11044 = vmatprep.subr.mxu0 0.0
  %11045 = vmatpush1.msra.mxu0 0.0
  %11046 = vmatprep.subr.mxu0 0.0
  %11047 = vmatpush1.msra.mxu0 0.0
  %11048 = vmatprep.mubr.f32.mxu0 0.0
  %11049 = vmatmul.mubr.f32.gmra.mrb[0].mxu0 %v10982
  %v11050 = vpop.f32.mrb[0].mxu0
  %v11051 = vadd.f32 0.0, %v11050
  %v11052 = vpop.f32.mrb[0].mxu0
  %11053 = vdwg.mxu0
  %11054 = vrot.lane.b32.xlu0 %v8575, 40
  %v11055 = vpop.permute.xlu0 %11054
  %v11058 = vsel %vm306, %v10063, 0
  %11060 = vmatprep.subr.mxu0 0.0
  %11061 = vmatpush1.msra.mxu0 %v11055
  %11062 = vmatprep.subr.mxu0 0.0
  %11063 = vmatpush1.msra.mxu0 0.0
  %11064 = vmatprep.subr.mxu0 0.0
  %11065 = vmatpush1.msra.mxu0 0.0
  %11066 = vmatprep.subr.mxu0 0.0
  %11067 = vmatpush1.msra.mxu0 0.0
  %11068 = vmatprep.subr.mxu0 0.0
  %11069 = vmatpush1.msra.mxu0 0.0
  %11070 = vmatprep.subr.mxu0 0.0
  %11071 = vmatpush1.msra.mxu0 0.0
  %11072 = vmatprep.subr.mxu0 0.0
  %11073 = vmatpush1.msra.mxu0 0.0
  %11074 = vmatprep.subr.mxu0 0.0
  %11075 = vmatpush1.msra.mxu0 0.0
  %11076 = vmatprep.subr.mxu0 0.0
  %11077 = vmatpush1.msra.mxu0 0.0
  %11078 = vmatprep.subr.mxu0 0.0
  %11079 = vmatpush1.msra.mxu0 0.0
  %11080 = vmatprep.subr.mxu0 0.0
  %11081 = vmatpush1.msra.mxu0 0.0
  %11082 = vmatprep.subr.mxu0 0.0
  %11083 = vmatpush1.msra.mxu0 0.0
  %11084 = vmatprep.subr.mxu0 0.0
  %11085 = vmatpush1.msra.mxu0 0.0
  %11086 = vmatprep.subr.mxu0 0.0
  %11087 = vmatpush1.msra.mxu0 0.0
  %11088 = vmatprep.subr.mxu0 0.0
  %11089 = vmatpush1.msra.mxu0 0.0
  %11090 = vmatprep.subr.mxu0 0.0
  %11091 = vmatpush1.msra.mxu0 0.0
  %11092 = vmatprep.subr.mxu0 0.0
  %11093 = vmatpush1.msra.mxu0 0.0
  %11094 = vmatprep.subr.mxu0 0.0
  %11095 = vmatpush1.msra.mxu0 0.0
  %11096 = vmatprep.subr.mxu0 0.0
  %11097 = vmatpush1.msra.mxu0 0.0
  %11098 = vmatprep.subr.mxu0 0.0
  %11099 = vmatpush1.msra.mxu0 0.0
  %11100 = vmatprep.subr.mxu0 0.0
  %11101 = vmatpush1.msra.mxu0 0.0
  %11102 = vmatprep.subr.mxu0 0.0
  %11103 = vmatpush1.msra.mxu0 0.0
  %11104 = vmatprep.subr.mxu0 0.0
  %11105 = vmatpush1.msra.mxu0 0.0
  %11106 = vmatprep.subr.mxu0 0.0
  %11107 = vmatpush1.msra.mxu0 0.0
  %11108 = vmatprep.subr.mxu0 0.0
  %11109 = vmatpush1.msra.mxu0 0.0
  %11110 = vmatprep.subr.mxu0 0.0
  %11111 = vmatpush1.msra.mxu0 0.0
  %11112 = vmatprep.subr.mxu0 0.0
  %11113 = vmatpush1.msra.mxu0 0.0
  %11114 = vmatprep.subr.mxu0 0.0
  %11115 = vmatpush1.msra.mxu0 0.0
  %11116 = vmatprep.subr.mxu0 0.0
  %11117 = vmatpush1.msra.mxu0 0.0
  %11118 = vmatprep.subr.mxu0 0.0
  %11119 = vmatpush1.msra.mxu0 0.0
  %11120 = vmatprep.subr.mxu0 0.0
  %11121 = vmatpush1.msra.mxu0 0.0
  %11122 = vmatprep.subr.mxu0 0.0
  %11123 = vmatpush1.msra.mxu0 0.0
  %11124 = vmatprep.mubr.f32.mxu0 0.0
  %11125 = vmatmul.mubr.f32.gmra.mrb[0].mxu0 %v11058
  %v11126 = vpop.f32.mrb[0].mxu0
  %v11127 = vadd.f32 0.0, %v11126
  %v11128 = vpop.f32.mrb[0].mxu0
  %11129 = vdwg.mxu0
  %11130 = vrot.lane.b32.xlu0 %v8576, 40
  %v11131 = vpop.permute.xlu0 %11130
  %v11134 = vsel %vm306, %v10064, 0
  %11136 = vmatprep.subr.mxu0 0.0
  %11137 = vmatpush1.msra.mxu0 %v11131
  %11138 = vmatprep.subr.mxu0 0.0
  %11139 = vmatpush1.msra.mxu0 0.0
  %11140 = vmatprep.subr.mxu0 0.0
  %11141 = vmatpush1.msra.mxu0 0.0
  %11142 = vmatprep.subr.mxu0 0.0
  %11143 = vmatpush1.msra.mxu0 0.0
  %11144 = vmatprep.subr.mxu0 0.0
  %11145 = vmatpush1.msra.mxu0 0.0
  %11146 = vmatprep.subr.mxu0 0.0
  %11147 = vmatpush1.msra.mxu0 0.0
  %11148 = vmatprep.subr.mxu0 0.0
  %11149 = vmatpush1.msra.mxu0 0.0
  %11150 = vmatprep.subr.mxu0 0.0
  %11151 = vmatpush1.msra.mxu0 0.0
  %11152 = vmatprep.subr.mxu0 0.0
  %11153 = vmatpush1.msra.mxu0 0.0
  %11154 = vmatprep.subr.mxu0 0.0
  %11155 = vmatpush1.msra.mxu0 0.0
  %11156 = vmatprep.subr.mxu0 0.0
  %11157 = vmatpush1.msra.mxu0 0.0
  %11158 = vmatprep.subr.mxu0 0.0
  %11159 = vmatpush1.msra.mxu0 0.0
  %11160 = vmatprep.subr.mxu0 0.0
  %11161 = vmatpush1.msra.mxu0 0.0
  %11162 = vmatprep.subr.mxu0 0.0
  %11163 = vmatpush1.msra.mxu0 0.0
  %11164 = vmatprep.subr.mxu0 0.0
  %11165 = vmatpush1.msra.mxu0 0.0
  %11166 = vmatprep.subr.mxu0 0.0
  %11167 = vmatpush1.msra.mxu0 0.0
  %11168 = vmatprep.subr.mxu0 0.0
  %11169 = vmatpush1.msra.mxu0 0.0
  %11170 = vmatprep.subr.mxu0 0.0
  %11171 = vmatpush1.msra.mxu0 0.0
  %11172 = vmatprep.subr.mxu0 0.0
  %11173 = vmatpush1.msra.mxu0 0.0
  %11174 = vmatprep.subr.mxu0 0.0
  %11175 = vmatpush1.msra.mxu0 0.0
  %11176 = vmatprep.subr.mxu0 0.0
  %11177 = vmatpush1.msra.mxu0 0.0
  %11178 = vmatprep.subr.mxu0 0.0
  %11179 = vmatpush1.msra.mxu0 0.0
  %11180 = vmatprep.subr.mxu0 0.0
  %11181 = vmatpush1.msra.mxu0 0.0
  %11182 = vmatprep.subr.mxu0 0.0
  %11183 = vmatpush1.msra.mxu0 0.0
  %11184 = vmatprep.subr.mxu0 0.0
  %11185 = vmatpush1.msra.mxu0 0.0
  %11186 = vmatprep.subr.mxu0 0.0
  %11187 = vmatpush1.msra.mxu0 0.0
  %11188 = vmatprep.subr.mxu0 0.0
  %11189 = vmatpush1.msra.mxu0 0.0
  %11190 = vmatprep.subr.mxu0 0.0
  %11191 = vmatpush1.msra.mxu0 0.0
  %11192 = vmatprep.subr.mxu0 0.0
  %11193 = vmatpush1.msra.mxu0 0.0
  %11194 = vmatprep.subr.mxu0 0.0
  %11195 = vmatpush1.msra.mxu0 0.0
  %11196 = vmatprep.subr.mxu0 0.0
  %11197 = vmatpush1.msra.mxu0 0.0
  %11198 = vmatprep.subr.mxu0 0.0
  %11199 = vmatpush1.msra.mxu0 0.0
  %11200 = vmatprep.mubr.f32.mxu0 0.0
  %11201 = vmatmul.mubr.f32.gmra.mrb[0].mxu0 %v11134
  %v11202 = vpop.f32.mrb[0].mxu0
  %v11203 = vadd.f32 0.0, %v11202
  %v11204 = vpop.f32.mrb[0].mxu0
  %11205 = vdwg.mxu0
  %11206 = vrot.lane.b32.xlu0 %v8577, 40
  %v11207 = vpop.permute.xlu0 %11206
  %v11210 = vsel %vm306, %v10065, 0
  %11212 = vmatprep.subr.mxu0 0.0
  %11213 = vmatpush1.msra.mxu0 %v11207
  %11214 = vmatprep.subr.mxu0 0.0
  %11215 = vmatpush1.msra.mxu0 0.0
  %11216 = vmatprep.subr.mxu0 0.0
  %11217 = vmatpush1.msra.mxu0 0.0
  %11218 = vmatprep.subr.mxu0 0.0
  %11219 = vmatpush1.msra.mxu0 0.0
  %11220 = vmatprep.subr.mxu0 0.0
  %11221 = vmatpush1.msra.mxu0 0.0
  %11222 = vmatprep.subr.mxu0 0.0
  %11223 = vmatpush1.msra.mxu0 0.0
  %11224 = vmatprep.subr.mxu0 0.0
  %11225 = vmatpush1.msra.mxu0 0.0
  %11226 = vmatprep.subr.mxu0 0.0
  %11227 = vmatpush1.msra.mxu0 0.0
  %11228 = vmatprep.subr.mxu0 0.0
  %11229 = vmatpush1.msra.mxu0 0.0
  %11230 = vmatprep.subr.mxu0 0.0
  %11231 = vmatpush1.msra.mxu0 0.0
  %11232 = vmatprep.subr.mxu0 0.0
  %11233 = vmatpush1.msra.mxu0 0.0
  %11234 = vmatprep.subr.mxu0 0.0
  %11235 = vmatpush1.msra.mxu0 0.0
  %11236 = vmatprep.subr.mxu0 0.0
  %11237 = vmatpush1.msra.mxu0 0.0
  %11238 = vmatprep.subr.mxu0 0.0
  %11239 = vmatpush1.msra.mxu0 0.0
  %11240 = vmatprep.subr.mxu0 0.0
  %11241 = vmatpush1.msra.mxu0 0.0
  %11242 = vmatprep.subr.mxu0 0.0
  %11243 = vmatpush1.msra.mxu0 0.0
  %11244 = vmatprep.subr.mxu0 0.0
  %11245 = vmatpush1.msra.mxu0 0.0
  %11246 = vmatprep.subr.mxu0 0.0
  %11247 = vmatpush1.msra.mxu0 0.0
  %11248 = vmatprep.subr.mxu0 0.0
  %11249 = vmatpush1.msra.mxu0 0.0
  %11250 = vmatprep.subr.mxu0 0.0
  %11251 = vmatpush1.msra.mxu0 0.0
  %11252 = vmatprep.subr.mxu0 0.0
  %11253 = vmatpush1.msra.mxu0 0.0
  %11254 = vmatprep.subr.mxu0 0.0
  %11255 = vmatpush1.msra.mxu0 0.0
  %11256 = vmatprep.subr.mxu0 0.0
  %11257 = vmatpush1.msra.mxu0 0.0
  %11258 = vmatprep.subr.mxu0 0.0
  %11259 = vmatpush1.msra.mxu0 0.0
  %11260 = vmatprep.subr.mxu0 0.0
  %11261 = vmatpush1.msra.mxu0 0.0
  %11262 = vmatprep.subr.mxu0 0.0
  %11263 = vmatpush1.msra.mxu0 0.0
  %11264 = vmatprep.subr.mxu0 0.0
  %11265 = vmatpush1.msra.mxu0 0.0
  %11266 = vmatprep.subr.mxu0 0.0
  %11267 = vmatpush1.msra.mxu0 0.0
  %11268 = vmatprep.subr.mxu0 0.0
  %11269 = vmatpush1.msra.mxu0 0.0
  %11270 = vmatprep.subr.mxu0 0.0
  %11271 = vmatpush1.msra.mxu0 0.0
  %11272 = vmatprep.subr.mxu0 0.0
  %11273 = vmatpush1.msra.mxu0 0.0
  %11274 = vmatprep.subr.mxu0 0.0
  %11275 = vmatpush1.msra.mxu0 0.0
  %11276 = vmatprep.mubr.f32.mxu0 0.0
  %11277 = vmatmul.mubr.f32.gmra.mrb[0].mxu0 %v11210
  %v11278 = vpop.f32.mrb[0].mxu0
  %v11279 = vadd.f32 0.0, %v11278
  %v11280 = vpop.f32.mrb[0].mxu0
  %11281 = vdwg.mxu0
  %11298 = vrot.lane.b32.xlu0 %v10139, 24
  %v11299 = vpop.permute.xlu0 %11298
  %11300 = vrot.lane.b32.xlu0 %v10215, 24
  %v11301 = vpop.permute.xlu0 %11300
  %11302 = vrot.lane.b32.xlu0 %v10291, 24
  %v11303 = vpop.permute.xlu0 %11302
  %11304 = vrot.lane.b32.xlu0 %v10367, 24
  %v11305 = vpop.permute.xlu0 %11304
  %11306 = vrot.lane.b32.xlu0 %v10443, 24
  %v11307 = vpop.permute.xlu0 %11306
  %11308 = vrot.lane.b32.xlu0 %v10519, 24
  %v11309 = vpop.permute.xlu0 %11308
  %11310 = vrot.lane.b32.xlu0 %v10595, 24
  %v11311 = vpop.permute.xlu0 %11310
  %11312 = vrot.lane.b32.xlu0 %v10671, 24
  %v11313 = vpop.permute.xlu0 %11312
  %11314 = vrot.lane.b32.xlu0 %v10747, 24
  %v11315 = vpop.permute.xlu0 %11314
  %11316 = vrot.lane.b32.xlu0 %v10823, 24
  %v11317 = vpop.permute.xlu0 %11316
  %11318 = vrot.lane.b32.xlu0 %v10899, 24
  %v11319 = vpop.permute.xlu0 %11318
  %11320 = vrot.lane.b32.xlu0 %v10975, 24
  %v11321 = vpop.permute.xlu0 %11320
  %11322 = vrot.lane.b32.xlu0 %v11051, 24
  %v11323 = vpop.permute.xlu0 %11322
  %11324 = vrot.lane.b32.xlu0 %v11127, 24
  %v11325 = vpop.permute.xlu0 %11324
  %11326 = vrot.lane.b32.xlu0 %v11203, 24
  %v11327 = vpop.permute.xlu0 %11326
  %11328 = vrot.lane.b32.xlu0 %v11279, 24
  %v11329 = vpop.permute.xlu0 %11328
  %vm11346 = vcmask 261312
  %11347 = vst.msk [vmem:[%s4] sm:$0xff] %vm11346, %v11299
  %11348 = vst.msk [vmem:[%s4 + $0x8] sm:$0xff] %vm11346, %v11301
  %11349 = vst.msk [vmem:[%s4 + $0x10] sm:$0xff] %vm11346, %v11303
  %11350 = vst.msk [vmem:[%s4 + $0x18] sm:$0xff] %vm11346, %v11305
  %11351 = vst.msk [vmem:[%s4 + $0x20] sm:$0xff] %vm11346, %v11307
  %11352 = vst.msk [vmem:[%s4 + $0x28] sm:$0xff] %vm11346, %v11309
  %11353 = vst.msk [vmem:[%s4 + $0x30] sm:$0xff] %vm11346, %v11311
  %11354 = vst.msk [vmem:[%s4 + $0x38] sm:$0xff] %vm11346, %v11313
  %11355 = vst.msk [vmem:[%s4 + $0x40] sm:$0xff] %vm11346, %v11315
  %11356 = vst.msk [vmem:[%s4 + $0x48] sm:$0xff] %vm11346, %v11317
  %11357 = vst.msk [vmem:[%s4 + $0x50] sm:$0xff] %vm11346, %v11319
  %11358 = vst.msk [vmem:[%s4 + $0x58] sm:$0xff] %vm11346, %v11321
  %11359 = vst.msk [vmem:[%s4 + $0x60] sm:$0xff] %vm11346, %v11323
  %11360 = vst.msk [vmem:[%s4 + $0x68] sm:$0xff] %vm11346, %v11325
  %11361 = vst.msk [vmem:[%s4 + $0x70] sm:$0xff] %vm11346, %v11327
  %11362 = vst.msk [vmem:[%s4 + $0x78] sm:$0xff] %vm11346, %v11329
  // Predicated region
  $region18: #{swin_block_forward.2} parent=0 // pred_check
    _
  $region19: #{swin_block_forward.2} parent=0 // pred_check_branch
    %11364 = sbr.rel (0) target = $region21
  $region20: #{swin_block_forward.2} parent=0 // pred_region
    _
  $region21: #{swin_block_forward.2} parent=0 // pred_fallthru
    _
  // Predicated region
  $region22: #{swin_block_forward.2} parent=0 // pred_check
    _
  $region23: #{swin_block_forward.2} parent=0 // pred_check_branch
    %11366 = sbr.rel (0) target = $region25
  $region24: #{swin_block_forward.2} parent=0 // pred_region
    _
  $region25: #{swin_block_forward.2} parent=0 // pred_fallthru
    _

</llo_original>
